<compile_context>
chip_gen: v5e
topology: v5e:2x2
jax: 0.10.0
libtpu: 0.0.40
codegen_flags: <defaults>
</compile_context>

<pallas_src>
import math
from functools import partial

import numpy as np
import jax
import jax.numpy as jnp
from jax import lax
from jax.experimental import pallas as pl
from jax.experimental.pallas import tpu as pltpu


# ---------------------------------------------------------------------------
# Pallas kernels
# ---------------------------------------------------------------------------

def _splat_kernel(feat_ref, idx_ref, wts_ref, out_ref, *, tile_g):
    """Trilinear voxel splat (du.splat_feat_nd):
         voxels[f, g] = round( sum_p feat[f, p] * S[p, g] ),
         S[p, g] = sum_corners w_c[p] * (idx_c[p] == g).
    The one-hot is built transposed, (tile_g, npt), so the corner idx/wts stay
    lane-dense and no transpose is needed; the contraction runs on the MXU in
    NT form.  The point axis is the innermost ("arbitrary") grid axis and
    out_ref is the resident accumulator (init at first chunk, round at last).
    The tile offset g0 is folded onto the small (1, npt) index vectors rather
    than added to the (tile_g, npt) iota."""
    kp = pl.program_id(2)
    g0 = pl.program_id(1) * tile_g

    @pl.when(kp == 0)
    def _init():
        out_ref[...] = jnp.zeros_like(out_ref)

    n_cnr = idx_ref.shape[1]
    npt_t = idx_ref.shape[2]
    row = lax.broadcasted_iota(jnp.int32, (tile_g, npt_t), 0)
    s_t = jnp.zeros((tile_g, npt_t), jnp.float32)
    for c in range(n_cnr):
        ic = idx_ref[0, c:c + 1, :] - g0                # (1, npt_t) int32
        wc = wts_ref[0, c:c + 1, :]                     # (1, npt_t) f32
        s_t = s_t + jnp.where(row == ic, wc, jnp.float32(0.0))
    acc = lax.dot_general(feat_ref[0], s_t,
                          dimension_numbers=(((1,), (1,)), ((), ())),
                          preferred_element_type=jnp.float32)
    out_ref[0] = out_ref[0] + acc

    @pl.when(kp == pl.num_programs(2) - 1)
    def _finalize():
        out_ref[0] = jnp.round(out_ref[0])              # torch.round in splat_feat_nd


def _proj_kernel(vox_ref, out_ref, *, min_z, max_z, mid_z,
                 map_thr, exp_thr, cat_thr):
    """Height projections: masked reductions over the z axis of a
    (F, n_z, tile_q) block (Q dense on lanes) + threshold / clamp.
    Masks are built per-sublane ((1, n_z, 1)) and broadcast across lanes;
    the stair/exp sums only touch channel 0 (the only consumer)."""
    v = vox_ref[0]                                      # (F, n_z, tile_q)
    n_z = v.shape[1]
    zi = lax.broadcasted_iota(jnp.int32, (1, n_z, 1), 1)
    m_ah = ((zi >= min_z) & (zi < max_z)).astype(jnp.float32)
    m_st = ((zi >= mid_z - 5) & (zi < mid_z)).astype(jnp.float32)
    v0 = v[0:1]                                         # channel 0 only
    ah = jnp.sum(v * m_ah, axis=1)                      # agent_height_proj   (F, tq)
    st = jnp.sum(v0 * m_st, axis=1)                     # agent_height_stair_proj (1, tq)
    al = jnp.sum(v0, axis=1)                            # all_height_proj         (1, tq)
    out_ref[0, 0:1, :] = jnp.clip(ah[0:1] / map_thr, 0.0, 1.0)   # fp_map_pred
    out_ref[0, 1:2, :] = jnp.clip(al / exp_thr, 0.0, 1.0)        # fp_exp_pred
    out_ref[0, 2:3, :] = jnp.clip(st / map_thr, 0.0, 1.0)        # fp_stair_pred
    out_ref[0, 3:, :] = jnp.clip(ah[1:] / cat_thr, 0.0, 1.0)     # category channels


def _gsample_kernel(img_ref, idx_ref, wts_ref, out_ref, *, tile_g):
    """Bilinear grid_sample as gather-via-one-hot matmul, chunked over source
    pixels (innermost "arbitrary" grid axis), accumulating into out_ref:
        out[:, p] += img[:, g0:g0+tile_g] @ A_chunk,
        A_chunk[g, p] = sum_corners w_c[p] * (idx_c[p] == g0 + g)."""
    k = pl.program_id(2)
    g0 = k * tile_g

    @pl.when(k == 0)
    def _init():
        out_ref[...] = jnp.zeros_like(out_ref)

    tile_p = idx_ref.shape[2]
    row = lax.broadcasted_iota(jnp.int32, (tile_g, tile_p), 0)
    a = jnp.zeros((tile_g, tile_p), jnp.float32)
    for c in range(4):
        ic = idx_ref[0, c:c + 1, :] - g0                # (1, tile_p)
        wc = wts_ref[0, c:c + 1, :]
        a = a + jnp.where(row == ic, wc, jnp.float32(0.0))
    out_ref[0] = out_ref[0] + jnp.dot(img_ref[0], a,
                                      preferred_element_type=jnp.float32)


def _combine_pool_kernel(eve_ref, trans_ref, pad_ref, maps_ref, out_ref, *, m):
    """Separable 3x3 max-pool of the obstacle channel + (exp - pooled) > 0.8
    mask + max with maps_last; obstacle channel zeroed where eve_angle == 0
    and the mask fires (channel-0-only select)."""
    b = pl.program_id(0)
    t = trans_ref[0]                                    # (C, M, M)
    p = pad_ref[0]                                      # (M+2, M+2), -inf border
    colmax = jnp.maximum(jnp.maximum(p[0:m, :], p[1:m + 1, :]), p[2:m + 2, :])
    pooled = jnp.maximum(jnp.maximum(colmax[:, 0:m], colmax[:, 1:m + 1]),
                         colmax[:, 2:m + 2])
    d_mask = (t[1] - pooled) > 0.8                      # final diff_ob_ex mask
    mp = jnp.maximum(maps_ref[0], t)                    # torch.max(maps2, 1)
    cond = jnp.logical_and(eve_ref[b] == 1, d_mask)
    out_ref[0, 1:] = mp[1:]
    out_ref[0, 0:1] = jnp.where(cond, jnp.float32(0.0), mp[0:1])


def _combine_nopool_kernel(eve_ref, trans_ref, maps_ref, out_ref):
    """Stair-path merge: diff = exp - obstacle (no pooling), then same merge."""
    b = pl.program_id(0)
    t = trans_ref[0]
    d_mask = (t[1] - t[0]) > 0.8
    mp = jnp.maximum(maps_ref[0], t)
    cond = jnp.logical_and(eve_ref[b] == 1, d_mask)
    out_ref[0, 1:] = mp[1:]
    out_ref[0, 0:1] = jnp.where(cond, jnp.float32(0.0), mp[0:1])


# ---------------------------------------------------------------------------
# Pallas wrappers
# ---------------------------------------------------------------------------

def _pick_tile(n, candidates):
    """Largest candidate dividing n; else use the full dim when it is small
    enough to be a single block; else fail loudly (never build a huge temp)."""
    for c in candidates:
        if n % c == 0:
            return c
    if n <= max(candidates):
        return n
    raise ValueError(f"dimension {n} has no suitable tile among {candidates}; "
                     "pad the input or extend the candidate list")


def splat_pallas(feat, idx, wts, g_total):
    bs, f, npt = feat.shape
    n_cnr = idx.shape[1]
    tile_g = _pick_tile(g_total, (256, 128))        # keeps one-hot ~256 KB
    tile_np = _pick_tile(npt, (256, 128))
    return pl.pallas_call(
        partial(_splat_kernel, tile_g=tile_g),
        out_shape=jax.ShapeDtypeStruct((bs, f, g_total), jnp.float32),
        grid=(bs, g_total // tile_g, npt // tile_np),
        in_specs=[
            pl.BlockSpec((1, f, tile_np), lambda b, g, p: (b, 0, p)),
            pl.BlockSpec((1, n_cnr, tile_np), lambda b, g, p: (b, 0, p)),
            pl.BlockSpec((1, n_cnr, tile_np), lambda b, g, p: (b, 0, p)),
        ],
        out_specs=pl.BlockSpec((1, f, tile_g), lambda b, g, p: (b, 0, g)),
        compiler_params=pltpu.CompilerParams(
            dimension_semantics=("parallel", "parallel", "arbitrary")),
    )(feat, idx, wts)


def proj_pallas(vox, *, min_z, max_z, mid_z, map_thr, exp_thr, cat_thr):
    bs, f, n_z, q = vox.shape
    tile_q = _pick_tile(q, (512, 256, 128))
    return pl.pallas_call(
        partial(_proj_kernel, min_z=min_z, max_z=max_z, mid_z=mid_z,
                map_thr=map_thr, exp_thr=exp_thr, cat_thr=cat_thr),
        out_shape=jax.ShapeDtypeStruct((bs, f + 2, q), jnp.float32),
        grid=(bs, q // tile_q),
        in_specs=[pl.BlockSpec((1, f, n_z, tile_q), lambda b, qi: (b, 0, 0, qi))],
        out_specs=pl.BlockSpec((1, f + 2, tile_q), lambda b, qi: (b, 0, qi)),
        compiler_params=pltpu.CompilerParams(
            dimension_semantics=("parallel", "parallel")),
    )(vox)


def _bilinear_idx_wts(grid_xy, h_in, w_in):
    """grid_sample(align_corners=True, padding_mode='zeros') corner idx/weights."""
    gx = grid_xy[..., 0]
    gy = grid_xy[..., 1]
    ix = (gx + 1.0) * 0.5 * (w_in - 1)
    iy = (gy + 1.0) * 0.5 * (h_in - 1)
    x0 = jnp.floor(ix)
    y0 = jnp.floor(iy)
    x1 = x0 + 1.0
    y1 = y0 + 1.0
    wx1 = ix - x0
    wx0 = 1.0 - wx1
    wy1 = iy - y0
    wy0 = 1.0 - wy1
    idx_list, wts_list = [], []
    for yy, wy in ((y0, wy0), (y1, wy1)):
        for xx, wx in ((x0, wx0), (x1, wx1)):
            valid = ((xx >= 0) & (xx <= w_in - 1) & (yy >= 0) & (yy <= h_in - 1))
            valid_f = valid.astype(jnp.float32)
            wts_list.append(wx * wy * valid_f)
            idx_list.append((yy * w_in + xx) * valid_f)
    bs = grid_xy.shape[0]
    idx = jnp.stack(idx_list, axis=1).reshape(bs, 4, -1).astype(jnp.int32)
    wts = jnp.stack(wts_list, axis=1).reshape(bs, 4, -1).astype(jnp.float32)
    return idx, wts


def grid_sample_pallas(img, grid_xy):
    bs, ch, h, w = img.shape
    g_in = h * w
    h_out, w_out = grid_xy.shape[1], grid_xy.shape[2]
    p_total = h_out * w_out
    idx, wts = _bilinear_idx_wts(grid_xy, h, w)
    img_flat = img.reshape(bs, ch, g_in)
    tile_p = _pick_tile(p_total, (256, 128))        # 256-wide output for 256-wide MXU
    tile_g = _pick_tile(g_in, (512, 256, 128))      # chunked one-hot, ~0.5 MB max
    out = pl.pallas_call(
        partial(_gsample_kernel, tile_g=tile_g),
        out_shape=jax.ShapeDtypeStruct((bs, ch, p_total), jnp.float32),
        grid=(bs, p_total // tile_p, g_in // tile_g),
        in_specs=[
            pl.BlockSpec((1, ch, tile_g), lambda b, p, k: (b, 0, k)),
            pl.BlockSpec((1, 4, tile_p), lambda b, p, k: (b, 0, p)),
            pl.BlockSpec((1, 4, tile_p), lambda b, p, k: (b, 0, p)),
        ],
        out_specs=pl.BlockSpec((1, ch, tile_p), lambda b, p, k: (b, 0, p)),
        compiler_params=pltpu.CompilerParams(
            dimension_semantics=("parallel", "parallel", "arbitrary")),
    )(img_flat, idx, wts)
    return out.reshape(bs, ch, h_out, w_out)


def combine_pool_pallas(eve_is_zero, translated, ch0_pad, maps_last):
    bs, ch, m, _ = translated.shape
    return pl.pallas_call(
        partial(_combine_pool_kernel, m=m),
        out_shape=jax.ShapeDtypeStruct((bs, ch, m, m), jnp.float32),
        grid_spec=pltpu.PrefetchScalarGridSpec(
            num_scalar_prefetch=1,
            grid=(bs,),
            in_specs=[
                pl.BlockSpec((1, ch, m, m), lambda b, ev: (b, 0, 0, 0)),
                pl.BlockSpec((1, m + 2, m + 2), lambda b, ev: (b, 0, 0)),
                pl.BlockSpec((1, ch, m, m), lambda b, ev: (b, 0, 0, 0)),
            ],
            out_specs=pl.BlockSpec((1, ch, m, m), lambda b, ev: (b, 0, 0, 0)),
        ),
        compiler_params=pltpu.CompilerParams(dimension_semantics=("parallel",)),
    )(eve_is_zero, translated, ch0_pad, maps_last)


def combine_nopool_pallas(eve_is_zero, translated, maps_last):
    bs, ch, m, _ = translated.shape
    return pl.pallas_call(
        _combine_nopool_kernel,
        out_shape=jax.ShapeDtypeStruct((bs, ch, m, m), jnp.float32),
        grid_spec=pltpu.PrefetchScalarGridSpec(
            num_scalar_prefetch=1,
            grid=(bs,),
            in_specs=[
                pl.BlockSpec((1, ch, m, m), lambda b, ev: (b, 0, 0, 0)),
                pl.BlockSpec((1, ch, m, m), lambda b, ev: (b, 0, 0, 0)),
            ],
            out_specs=pl.BlockSpec((1, ch, m, m), lambda b, ev: (b, 0, 0, 0)),
        ),
        compiler_params=pltpu.CompilerParams(dimension_semantics=("parallel",)),
    )(eve_is_zero, translated, maps_last)


# ---------------------------------------------------------------------------
# Glue: depth utils, splat coordinates, pose math, stair mask
# ---------------------------------------------------------------------------

def _splat_idx_wts(coords, vr, n_z):
    """du.splat_feat_nd corner indices / weights, lane-dense (bs, 8, npt).
    Flat voxel index is z*(vr*vr) + y*vr + x (z slowest), so the splat output
    reshapes to (bs, F, n_z, vr*vr) with Q = y*x on lanes; the (y, x) ordering
    bakes in the reference's voxels.transpose(2, 3)."""
    dims = (float(vr), float(vr), float(n_z))
    pos_opts, wts_opts = [], []
    for d in range(3):
        gd = dims[d]
        pos = coords[:, d, :] * (gd / 2.0) + gd / 2.0
        p_d, w_d = [], []
        for ix in (0, 1):
            pos_ix = jnp.floor(pos) + ix
            safe = ((pos_ix > 0) & (pos_ix < gd)).astype(jnp.float32)
            w_ix = (1.0 - jnp.abs(pos - pos_ix)) * safe
            p_d.append(pos_ix * safe)
            w_d.append(w_ix)
        pos_opts.append(p_d)
        wts_opts.append(w_d)
    idx_list, wts_list = [], []
    for i0 in (0, 1):            # x corner
        for i1 in (0, 1):        # y corner
            for i2 in (0, 1):    # z corner
                flat = (pos_opts[2][i2] * (vr * vr)
                        + pos_opts[1][i1] * vr + pos_opts[0][i0])
                wgt = wts_opts[0][i0] * wts_opts[1][i1] * wts_opts[2][i2]
                idx_list.append(flat)
                wts_list.append(wgt)
    idx = jnp.stack(idx_list, axis=1).astype(jnp.int32)     # (bs, 8, npt)
    wts = jnp.stack(wts_list, axis=1).astype(jnp.float32)
    return idx, wts


def _circle_mask(step_size):
    size = int(step_size) * 2
    i = np.arange(size)[:, None]
    j = np.arange(size)[None, :]
    m = ((i + 0.5 - size // 2) ** 2 + (j + 0.5 - size // 2) ** 2) <= step_size ** 2
    return m.astype(np.float32)


def semantic_mapping_forward(cfg, obs, pose_obs, maps_last, poses_last, eve_angle):
    bs, c, h, w = obs.shape
    res = cfg["map_resolution"]
    z_res = res
    vr = cfg["vision_range"]
    du = cfg["du_scale"]
    map_size_cm = cfg["map_size_cm"] // cfg["global_downscaling"]
    M = map_size_cm // res
    max_h = int(200 / z_res)
    min_h = int(-40 / z_res)
    n_z = max_h - min_h
    agent_height = cfg["camera_height"] * 100.0

    # camera matrix (du.get_camera_matrix)
    xc = (cfg["frame_width"] - 1.0) / 2.0
    zc = (cfg["frame_height"] - 1.0) / 2.0
    fl = (cfg["frame_width"] / 2.0) / math.tan(math.radians(cfg["hfov"] / 2.0))

    depth = obs[:, 3, :, :]
    # du.get_point_cloud_from_z_t
    gx = jnp.broadcast_to(jnp.arange(w, dtype=jnp.float32)[None, None, :], (bs, h, w))
    gz = jnp.broadcast_to(jnp.arange(h - 1, -1, -1, dtype=jnp.float32)[None, :, None],
                          (bs, h, w))
    d_s = depth[:, ::du, ::du]
    X = (gx[:, ::du, ::du] - xc) * d_s / fl
    Z = (gz[:, ::du, ::du] - zc) * d_s / fl

    # du.transform_camera_view_t : rotate about x-axis by eve_angle (per batch)
    ang = jnp.deg2rad(eve_angle.astype(jnp.float32))[:, None, None]
    ca, sa = jnp.cos(ang), jnp.sin(ang)
    Yr = ca * d_s - sa * Z
    Zr = sa * d_s + ca * Z + agent_height

    # du.transform_pose_t with shift_loc = [vr*res//2, 0, pi/2] -> rotation angle 0
    shift0 = float(vr * res // 2)
    Xp = X + shift0
    Yp = Yr
    Zp = Zr

    # normalize to [-1, 1] voxel coordinates
    x_std = (Xp / res - (vr // 2.0)) / vr * 2.0
    y_std = (Yp / res - (vr // 2.0)) / vr * 2.0
    z_std = (Zp / z_res - ((max_h + min_h) // 2.0)) / (max_h - min_h) * 2.0
    coords = jnp.stack([x_std, y_std, z_std], axis=-1)
    coords = jnp.transpose(coords, (0, 3, 1, 2)).reshape(bs, 3, -1)

    # feat: channel 0 = ones (self.feat buffer), rest = avg-pooled semantic channels
    hd, wd = h // du, w // du
    npix = hd * wd
    sem = obs[:, 4:, :, :].reshape(bs, c - 4, hd, du, wd, du).mean(axis=(3, 5))
    feat = jnp.concatenate(
        [jnp.ones((bs, 1, npix), jnp.float32), sem.reshape(bs, c - 4, npix)], axis=1)

    # du.splat_feat_nd (Pallas kernel), z-slowest flat ordering
    idx, wts = _splat_idx_wts(coords, vr, n_z)
    n_feat = c - 3
    voxels = splat_pallas(feat, idx, wts, vr * vr * n_z)
    voxels = voxels.reshape(bs, n_feat, n_z, vr * vr)       # Q = vr*vr on lanes

    min_z = int(25 / z_res - min_h)
    max_z = int((agent_height + 50) / z_res - min_h)
    mid_z = int(agent_height / z_res - min_h)
    proj = proj_pallas(voxels, min_z=min_z, max_z=max_z, mid_z=mid_z,
                       map_thr=float(cfg["map_pred_threshold"]),
                       exp_thr=float(cfg["exp_pred_threshold"]),
                       cat_thr=float(cfg["cat_pred_threshold"]))
    proj = proj.reshape(bs, n_feat + 2, vr, vr)
    fp_map, fp_exp, fp_stair, cat = proj[:, 0], proj[:, 1], proj[:, 2], proj[:, 3:]

    x1 = map_size_cm // (res * 2) - vr // 2
    x2 = x1 + vr
    y1 = map_size_cm // (res * 2)
    y2 = y1 + vr
    agent_view = jnp.zeros((bs, c, M, M), jnp.float32)
    agent_view = agent_view.at[:, 0, y1:y2, x1:x2].set(fp_map)
    agent_view = agent_view.at[:, 1, y1:y2, x1:x2].set(fp_exp)
    agent_view = agent_view.at[:, 4:, y1:y2, x1:x2].set(cat)
    # The stair map differs from agent_view only in channel 0; warp that single
    # extra channel alongside agent_view so the one-hot gather matrix is built
    # once per tile for all C+1 channels instead of twice.
    stair_ch = jnp.zeros((bs, 1, M, M), jnp.float32)
    stair_ch = stair_ch.at[:, 0, y1:y2, x1:x2].set(fp_stair)
    agent_view_all = jnp.concatenate([agent_view, stair_ch], axis=1)   # (bs, C+1, M, M)

    # get_new_pose_batch
    th = poses_last[:, 2] / 57.29577951308232
    new_y = poses_last[:, 1] + pose_obs[:, 0] * jnp.sin(th) + pose_obs[:, 1] * jnp.cos(th)
    new_x = poses_last[:, 0] + pose_obs[:, 0] * jnp.cos(th) - pose_obs[:, 1] * jnp.sin(th)
    new_t = poses_last[:, 2] + pose_obs[:, 2] * 57.29577951308232
    new_t = jnp.fmod(new_t - 180.0, 360.0) + 180.0
    new_t = jnp.fmod(new_t + 180.0, 360.0) - 180.0
    current_poses = jnp.stack([new_x, new_y, new_t], axis=1)

    half = map_size_cm // (res * 2)
    st_xy = -(current_poses[:, :2] * 100.0 / res - half) / half
    st_t = 90.0 - current_poses[:, 2]

    # get_grid: affine grids.  Base grid uses align_corners=False (current torch
    # default of F.affine_grid); sampling uses align_corners=True (explicit).
    tt = st_t * (np.pi / 180.0)
    ct, stn = jnp.cos(tt), jnp.sin(tt)
    lin = (2.0 * jnp.arange(M, dtype=jnp.float32) + 1.0) / M - 1.0
    bx = jnp.broadcast_to(lin[None, None, :], (bs, M, M))
    by = jnp.broadcast_to(lin[None, :, None], (bs, M, M))
    rot_grid = jnp.stack([ct[:, None, None] * bx - stn[:, None, None] * by,
                          stn[:, None, None] * bx + ct[:, None, None] * by], axis=-1)
    trans_grid = jnp.stack([bx + st_xy[:, 0][:, None, None],
                            by + st_xy[:, 1][:, None, None]], axis=-1)

    # TODO(synk): rotation+translation could be composed into a single warp
    # (one resample), but the reference applies two successive bilinear
    # grid_samples, so that numerics-changing fusion is intentionally not done.
    rotated_all = grid_sample_pallas(agent_view_all, rot_grid)
    translated_all = grid_sample_pallas(rotated_all, trans_grid)
    translated = translated_all[:, :c]
    stair_ch0 = translated_all[:, c:c + 1]

    eve_is_zero = (eve_angle == 0).astype(jnp.int32)

    # main map merge (separable maxpool inside kernel)
    ch0_pad = jnp.pad(translated[:, 0], ((0, 0), (1, 1), (1, 1)),
                      constant_values=-1e30)
    map_pred = combine_pool_pallas(eve_is_zero, translated, ch0_pad, maps_last)

    # stair path: channels 1..C-1 of agent_view_stair equal agent_view, so the
    # already-warped channels are reused exactly.
    translated_stair = jnp.concatenate([stair_ch0, translated[:, 1:]], axis=1)

    # circular stair mask placed at current pose of env 0
    # (reference hard-codes 5 cm-per-cell, matching map_resolution here)
    r = cfg["stair_mask_radius"]
    circ = jnp.asarray(_circle_mask(r), jnp.float32)
    s_y = (current_poses[0, 1] * 100.0 / 5.0).astype(jnp.int32)
    s_x = (current_poses[0, 0] * 100.0 / 5.0).astype(jnp.int32)
    limit_up = M - r - 1
    s_y = jnp.clip(s_y, r, limit_up)
    s_x = jnp.clip(s_x, r, limit_up)
    # TODO(synk): data-dependent mask placement kept in glue (lax.dynamic_update_slice)
    stair_mask = lax.dynamic_update_slice(jnp.zeros((M, M), jnp.float32), circ,
                                          (s_y - r, s_x - r))
    translated_stair = translated_stair.at[0, 0].multiply(stair_mask)
    translated_stair = translated_stair.at[0, 1].multiply(stair_mask)

    map_pred_stair = combine_nopool_pallas(eve_is_zero, translated_stair, maps_last)

    return translated, map_pred, map_pred_stair, current_poses


# ---------------------------------------------------------------------------
# Demo
# ---------------------------------------------------------------------------

if __name__ == "__main__":
    cfg = dict(
        frame_height=16, frame_width=16, map_resolution=5, map_size_cm=480,
        global_downscaling=1, vision_range=8, hfov=79.0, du_scale=1,
        cat_pred_threshold=5.0, exp_pred_threshold=1.0, map_pred_threshold=1.0,
        num_sem_categories=4, camera_height=0.88, stair_mask_radius=30,
    )
    bs = 2
    c = 4 + cfg["num_sem_categories"]
    h, w = cfg["frame_height"], cfg["frame_width"]
    M = (cfg["map_size_cm"] // cfg["global_downscaling"]) // cfg["map_resolution"]

    key = jax.random.PRNGKey(0)
    k = jax.random.split(key, 6)
    rgb = jax.random.uniform(k[0], (bs, 3, h, w), jnp.float32)
    depth = jax.random.uniform(k[1], (bs, 1, h, w), jnp.float32, minval=5.0, maxval=45.0)
    sem_obs = (jax.random.uniform(k[2], (bs, cfg["num_sem_categories"], h, w)) > 0.7
               ).astype(jnp.float32)
    obs = jnp.concatenate([rgb, depth, sem_obs], axis=1)        # (bs, c, h, w)
    pose_obs = jax.random.uniform(k[3], (bs, 3), jnp.float32, minval=-0.05, maxval=0.05)
    poses_last = jnp.array([[2.4, 2.4, 0.0], [2.2, 2.6, 30.0]], jnp.float32)
    maps_last = jax.random.uniform(k[4], (bs, c, M, M), jnp.float32)
    eve_angle = jnp.array([0.0, 30.0], jnp.float32)

    fwd = jax.jit(partial(semantic_mapping_forward, cfg))
    out = fwd(obs, pose_obs, maps_last, poses_last, eve_angle)
    out = jax.block_until_ready(out)
    translated, map_pred, map_pred_stair, current_poses = out
    assert translated.shape == (bs, c, M, M)
    assert map_pred.shape == (bs, c, M, M)
    assert map_pred_stair.shape == (bs, c, M, M)
    assert current_poses.shape == (bs, 3)
    print("KERNEL_OK")
</pallas_src>

<mosaic_0001>
module attributes {stable_mosaic.version = 11 : i64} {
  func.func @_splat_kernel(%arg0: i32, %arg1: i32, %arg2: i32, %arg3: memref<1x5x256xf32, #tpu.memory_space<vmem>>, %arg4: memref<1x8x256xi32, #tpu.memory_space<vmem>>, %arg5: memref<1x8x256xf32, #tpu.memory_space<vmem>>, %arg6: memref<1x5x256xf32, #tpu.memory_space<vmem>>) attributes {dimension_semantics = [#tpu.dimension_semantics<parallel>, #tpu.dimension_semantics<parallel>, #tpu.dimension_semantics<arbitrary>], iteration_bounds = array<i64: 2, 12, 1>, scalar_prefetch = 0 : i64, scratch_operands = 0 : i64, tpu.core_type = #tpu.core_type<tc>, window_params = [{transform_indices = @transform_0, window_bounds = array<i64: 1, 5, 256>}, {transform_indices = @transform_1, window_bounds = array<i64: 1, 8, 256>}, {transform_indices = @transform_2, window_bounds = array<i64: 1, 8, 256>}, {transform_indices = @transform_3, window_bounds = array<i64: 1, 5, 256>}]} {
    %c256_i32 = arith.constant 256 : i32
    %0 = arith.muli %arg1, %c256_i32 : i32
    %c0_i32 = arith.constant 0 : i32
    %1 = arith.cmpi eq, %arg2, %c0_i32 : i32
    %2 = arith.extui %1 : i1 to i32
    %c0_i32_0 = arith.constant 0 : i32
    %3 = arith.cmpi ne, %2, %c0_i32_0 : i32
    scf.if %3 {
      %cst_61 = arith.constant 0.000000e+00 : f32
      %122 = vector.broadcast %cst_61 : f32 to vector<1x5x256xf32>
      %c0_62 = arith.constant 0 : index
      %c0_63 = arith.constant 0 : index
      %c0_64 = arith.constant 0 : index
      %123 = vector.load %arg6[%c0_62, %c0_63, %c0_64] : memref<1x5x256xf32, #tpu.memory_space<vmem>>, vector<1x5x256xf32>
      tpu.vector_store %arg6[%c0_62, %c0_63, %c0_64], %122 {strides = array<i32>} : memref<1x5x256xf32, #tpu.memory_space<vmem>>, vector<1x5x256xf32>,
    } else {
    }
    %4 = tpu.iota {dimensions = array<i32: 0>} : vector<256x256xi32>
    %cst = arith.constant 0.000000e+00 : f32
    %5 = vector.broadcast %cst : f32 to vector<256x256xf32>
    %c0 = arith.constant 0 : index
    %c0_1 = arith.constant 0 : index
    %c0_2 = arith.constant 0 : index
    %6 = vector.load %arg4[%c0, %c0_1, %c0_2] : memref<1x8x256xi32, #tpu.memory_space<vmem>>, vector<1x1x256xi32>
    %7 = vector.shape_cast %6 : vector<1x1x256xi32> to vector<1x256xi32>
    %8 = vector.broadcast %0 : i32 to vector<1x256xi32>
    %9 = arith.subi %7, %8 : vector<1x256xi32>
    %c0_3 = arith.constant 0 : index
    %c0_4 = arith.constant 0 : index
    %c0_5 = arith.constant 0 : index
    %10 = vector.load %arg5[%c0_3, %c0_4, %c0_5] : memref<1x8x256xf32, #tpu.memory_space<vmem>>, vector<1x1x256xf32>
    %11 = vector.shape_cast %10 : vector<1x1x256xf32> to vector<1x256xf32>
    %12 = vector.broadcast %9 : vector<1x256xi32> to vector<256x256xi32>
    %13 = arith.cmpi eq, %4, %12 : vector<256x256xi32>
    %cst_6 = arith.constant 0.000000e+00 : f32
    %14 = vector.shape_cast %11 : vector<1x256xf32> to vector<1x256xf32>
    %15 = vector.broadcast %14 : vector<1x256xf32> to vector<256x256xf32>
    %16 = vector.broadcast %cst_6 : f32 to vector<256x256xf32>
    %17 = arith.select %13, %15, %16 : vector<256x256xi1>, vector<256x256xf32>
    %18 = arith.addf %5, %17 : vector<256x256xf32>
    %c0_7 = arith.constant 0 : index
    %c1 = arith.constant 1 : index
    %c0_8 = arith.constant 0 : index
    %19 = vector.load %arg4[%c0_7, %c1, %c0_8] : memref<1x8x256xi32, #tpu.memory_space<vmem>>, vector<1x1x256xi32>
    %20 = vector.shape_cast %19 : vector<1x1x256xi32> to vector<1x256xi32>
    %21 = vector.broadcast %0 : i32 to vector<1x256xi32>
    %22 = arith.subi %20, %21 : vector<1x256xi32>
    %c0_9 = arith.constant 0 : index
    %c1_10 = arith.constant 1 : index
    %c0_11 = arith.constant 0 : index
    %23 = vector.load %arg5[%c0_9, %c1_10, %c0_11] : memref<1x8x256xf32, #tpu.memory_space<vmem>>, vector<1x1x256xf32>
    %24 = vector.shape_cast %23 : vector<1x1x256xf32> to vector<1x256xf32>
    %25 = vector.broadcast %22 : vector<1x256xi32> to vector<256x256xi32>
    %26 = arith.cmpi eq, %4, %25 : vector<256x256xi32>
    %cst_12 = arith.constant 0.000000e+00 : f32
    %27 = vector.shape_cast %24 : vector<1x256xf32> to vector<1x256xf32>
    %28 = vector.broadcast %27 : vector<1x256xf32> to vector<256x256xf32>
    %29 = vector.broadcast %cst_12 : f32 to vector<256x256xf32>
    %30 = arith.select %26, %28, %29 : vector<256x256xi1>, vector<256x256xf32>
    %31 = arith.addf %18, %30 : vector<256x256xf32>
    %c0_13 = arith.constant 0 : index
    %c2 = arith.constant 2 : index
    %c0_14 = arith.constant 0 : index
    %32 = vector.load %arg4[%c0_13, %c2, %c0_14] : memref<1x8x256xi32, #tpu.memory_space<vmem>>, vector<1x1x256xi32>
    %33 = vector.shape_cast %32 : vector<1x1x256xi32> to vector<1x256xi32>
    %34 = vector.broadcast %0 : i32 to vector<1x256xi32>
    %35 = arith.subi %33, %34 : vector<1x256xi32>
    %c0_15 = arith.constant 0 : index
    %c2_16 = arith.constant 2 : index
    %c0_17 = arith.constant 0 : index
    %36 = vector.load %arg5[%c0_15, %c2_16, %c0_17] : memref<1x8x256xf32, #tpu.memory_space<vmem>>, vector<1x1x256xf32>
    %37 = vector.shape_cast %36 : vector<1x1x256xf32> to vector<1x256xf32>
    %38 = vector.broadcast %35 : vector<1x256xi32> to vector<256x256xi32>
    %39 = arith.cmpi eq, %4, %38 : vector<256x256xi32>
    %cst_18 = arith.constant 0.000000e+00 : f32
    %40 = vector.shape_cast %37 : vector<1x256xf32> to vector<1x256xf32>
    %41 = vector.broadcast %40 : vector<1x256xf32> to vector<256x256xf32>
    %42 = vector.broadcast %cst_18 : f32 to vector<256x256xf32>
    %43 = arith.select %39, %41, %42 : vector<256x256xi1>, vector<256x256xf32>
    %44 = arith.addf %31, %43 : vector<256x256xf32>
    %c0_19 = arith.constant 0 : index
    %c3 = arith.constant 3 : index
    %c0_20 = arith.constant 0 : index
    %45 = vector.load %arg4[%c0_19, %c3, %c0_20] : memref<1x8x256xi32, #tpu.memory_space<vmem>>, vector<1x1x256xi32>
    %46 = vector.shape_cast %45 : vector<1x1x256xi32> to vector<1x256xi32>
    %47 = vector.broadcast %0 : i32 to vector<1x256xi32>
    %48 = arith.subi %46, %47 : vector<1x256xi32>
    %c0_21 = arith.constant 0 : index
    %c3_22 = arith.constant 3 : index
    %c0_23 = arith.constant 0 : index
    %49 = vector.load %arg5[%c0_21, %c3_22, %c0_23] : memref<1x8x256xf32, #tpu.memory_space<vmem>>, vector<1x1x256xf32>
    %50 = vector.shape_cast %49 : vector<1x1x256xf32> to vector<1x256xf32>
    %51 = vector.broadcast %48 : vector<1x256xi32> to vector<256x256xi32>
    %52 = arith.cmpi eq, %4, %51 : vector<256x256xi32>
    %cst_24 = arith.constant 0.000000e+00 : f32
    %53 = vector.shape_cast %50 : vector<1x256xf32> to vector<1x256xf32>
    %54 = vector.broadcast %53 : vector<1x256xf32> to vector<256x256xf32>
    %55 = vector.broadcast %cst_24 : f32 to vector<256x256xf32>
    %56 = arith.select %52, %54, %55 : vector<256x256xi1>, vector<256x256xf32>
    %57 = arith.addf %44, %56 : vector<256x256xf32>
    %c0_25 = arith.constant 0 : index
    %c4 = arith.constant 4 : index
    %c0_26 = arith.constant 0 : index
    %58 = vector.load %arg4[%c0_25, %c4, %c0_26] : memref<1x8x256xi32, #tpu.memory_space<vmem>>, vector<1x1x256xi32>
    %59 = vector.shape_cast %58 : vector<1x1x256xi32> to vector<1x256xi32>
    %60 = vector.broadcast %0 : i32 to vector<1x256xi32>
    %61 = arith.subi %59, %60 : vector<1x256xi32>
    %c0_27 = arith.constant 0 : index
    %c4_28 = arith.constant 4 : index
    %c0_29 = arith.constant 0 : index
    %62 = vector.load %arg5[%c0_27, %c4_28, %c0_29] : memref<1x8x256xf32, #tpu.memory_space<vmem>>, vector<1x1x256xf32>
    %63 = vector.shape_cast %62 : vector<1x1x256xf32> to vector<1x256xf32>
    %64 = vector.broadcast %61 : vector<1x256xi32> to vector<256x256xi32>
    %65 = arith.cmpi eq, %4, %64 : vector<256x256xi32>
    %cst_30 = arith.constant 0.000000e+00 : f32
    %66 = vector.shape_cast %63 : vector<1x256xf32> to vector<1x256xf32>
    %67 = vector.broadcast %66 : vector<1x256xf32> to vector<256x256xf32>
    %68 = vector.broadcast %cst_30 : f32 to vector<256x256xf32>
    %69 = arith.select %65, %67, %68 : vector<256x256xi1>, vector<256x256xf32>
    %70 = arith.addf %57, %69 : vector<256x256xf32>
    %c0_31 = arith.constant 0 : index
    %c5 = arith.constant 5 : index
    %c0_32 = arith.constant 0 : index
    %71 = vector.load %arg4[%c0_31, %c5, %c0_32] : memref<1x8x256xi32, #tpu.memory_space<vmem>>, vector<1x1x256xi32>
    %72 = vector.shape_cast %71 : vector<1x1x256xi32> to vector<1x256xi32>
    %73 = vector.broadcast %0 : i32 to vector<1x256xi32>
    %74 = arith.subi %72, %73 : vector<1x256xi32>
    %c0_33 = arith.constant 0 : index
    %c5_34 = arith.constant 5 : index
    %c0_35 = arith.constant 0 : index
    %75 = vector.load %arg5[%c0_33, %c5_34, %c0_35] : memref<1x8x256xf32, #tpu.memory_space<vmem>>, vector<1x1x256xf32>
    %76 = vector.shape_cast %75 : vector<1x1x256xf32> to vector<1x256xf32>
    %77 = vector.broadcast %74 : vector<1x256xi32> to vector<256x256xi32>
    %78 = arith.cmpi eq, %4, %77 : vector<256x256xi32>
    %cst_36 = arith.constant 0.000000e+00 : f32
    %79 = vector.shape_cast %76 : vector<1x256xf32> to vector<1x256xf32>
    %80 = vector.broadcast %79 : vector<1x256xf32> to vector<256x256xf32>
    %81 = vector.broadcast %cst_36 : f32 to vector<256x256xf32>
    %82 = arith.select %78, %80, %81 : vector<256x256xi1>, vector<256x256xf32>
    %83 = arith.addf %70, %82 : vector<256x256xf32>
    %c0_37 = arith.constant 0 : index
    %c6 = arith.constant 6 : index
    %c0_38 = arith.constant 0 : index
    %84 = vector.load %arg4[%c0_37, %c6, %c0_38] : memref<1x8x256xi32, #tpu.memory_space<vmem>>, vector<1x1x256xi32>
    %85 = vector.shape_cast %84 : vector<1x1x256xi32> to vector<1x256xi32>
    %86 = vector.broadcast %0 : i32 to vector<1x256xi32>
    %87 = arith.subi %85, %86 : vector<1x256xi32>
    %c0_39 = arith.constant 0 : index
    %c6_40 = arith.constant 6 : index
    %c0_41 = arith.constant 0 : index
    %88 = vector.load %arg5[%c0_39, %c6_40, %c0_41] : memref<1x8x256xf32, #tpu.memory_space<vmem>>, vector<1x1x256xf32>
    %89 = vector.shape_cast %88 : vector<1x1x256xf32> to vector<1x256xf32>
    %90 = vector.broadcast %87 : vector<1x256xi32> to vector<256x256xi32>
    %91 = arith.cmpi eq, %4, %90 : vector<256x256xi32>
    %cst_42 = arith.constant 0.000000e+00 : f32
    %92 = vector.shape_cast %89 : vector<1x256xf32> to vector<1x256xf32>
    %93 = vector.broadcast %92 : vector<1x256xf32> to vector<256x256xf32>
    %94 = vector.broadcast %cst_42 : f32 to vector<256x256xf32>
    %95 = arith.select %91, %93, %94 : vector<256x256xi1>, vector<256x256xf32>
    %96 = arith.addf %83, %95 : vector<256x256xf32>
    %c0_43 = arith.constant 0 : index
    %c7 = arith.constant 7 : index
    %c0_44 = arith.constant 0 : index
    %97 = vector.load %arg4[%c0_43, %c7, %c0_44] : memref<1x8x256xi32, #tpu.memory_space<vmem>>, vector<1x1x256xi32>
    %98 = vector.shape_cast %97 : vector<1x1x256xi32> to vector<1x256xi32>
    %99 = vector.broadcast %0 : i32 to vector<1x256xi32>
    %100 = arith.subi %98, %99 : vector<1x256xi32>
    %c0_45 = arith.constant 0 : index
    %c7_46 = arith.constant 7 : index
    %c0_47 = arith.constant 0 : index
    %101 = vector.load %arg5[%c0_45, %c7_46, %c0_47] : memref<1x8x256xf32, #tpu.memory_space<vmem>>, vector<1x1x256xf32>
    %102 = vector.shape_cast %101 : vector<1x1x256xf32> to vector<1x256xf32>
    %103 = vector.broadcast %100 : vector<1x256xi32> to vector<256x256xi32>
    %104 = arith.cmpi eq, %4, %103 : vector<256x256xi32>
    %cst_48 = arith.constant 0.000000e+00 : f32
    %105 = vector.shape_cast %102 : vector<1x256xf32> to vector<1x256xf32>
    %106 = vector.broadcast %105 : vector<1x256xf32> to vector<256x256xf32>
    %107 = vector.broadcast %cst_48 : f32 to vector<256x256xf32>
    %108 = arith.select %104, %106, %107 : vector<256x256xi1>, vector<256x256xf32>
    %109 = arith.addf %96, %108 : vector<256x256xf32>
    %c0_49 = arith.constant 0 : index
    %c0_50 = arith.constant 0 : index
    %c0_51 = arith.constant 0 : index
    %110 = vector.load %arg3[%c0_49, %c0_50, %c0_51] : memref<1x5x256xf32, #tpu.memory_space<vmem>>, vector<1x5x256xf32>
    %111 = vector.shape_cast %110 : vector<1x5x256xf32> to vector<5x256xf32>
    %cst_52 = arith.constant dense<0.000000e+00> : vector<5x256xf32>
    %112 = tpu.matmul %111, %109, %cst_52 {dimension_numbers = #tpu.dot_dimension_numbers<[1], [1], [0], [0], [0, 0, 1, 0], [], []>} : vector<5x256xf32>, vector<256x256xf32>, vector<5x256xf32> -> vector<5x256xf32>
    %c0_53 = arith.constant 0 : index
    %c0_54 = arith.constant 0 : index
    %c0_55 = arith.constant 0 : index
    %113 = vector.load %arg6[%c0_53, %c0_54, %c0_55] : memref<1x5x256xf32, #tpu.memory_space<vmem>>, vector<1x5x256xf32>
    %114 = vector.shape_cast %113 : vector<1x5x256xf32> to vector<5x256xf32>
    %115 = arith.addf %114, %112 : vector<5x256xf32>
    %c0_56 = arith.constant 0 : index
    %c0_57 = arith.constant 0 : index
    %c0_58 = arith.constant 0 : index
    %116 = vector.load %arg6[%c0_56, %c0_57, %c0_58] : memref<1x5x256xf32, #tpu.memory_space<vmem>>, vector<1x5x256xf32>
    %117 = vector.shape_cast %116 : vector<1x5x256xf32> to vector<5x256xf32>
    %118 = vector.shape_cast %115 : vector<5x256xf32> to vector<1x5x256xf32>
    tpu.vector_store %arg6[%c0_56, %c0_57, %c0_58], %118 {strides = array<i32>} : memref<1x5x256xf32, #tpu.memory_space<vmem>>, vector<1x5x256xf32>,
    %c0_i32_59 = arith.constant 0 : i32
    %119 = arith.cmpi eq, %arg2, %c0_i32_59 : i32
    %120 = arith.extui %119 : i1 to i32
    %c0_i32_60 = arith.constant 0 : i32
    %121 = arith.cmpi ne, %120, %c0_i32_60 : i32
    scf.if %121 {
      %c0_61 = arith.constant 0 : index
      %c0_62 = arith.constant 0 : index
      %c0_63 = arith.constant 0 : index
      %122 = vector.load %arg6[%c0_61, %c0_62, %c0_63] : memref<1x5x256xf32, #tpu.memory_space<vmem>>, vector<1x5x256xf32>
      %123 = vector.shape_cast %122 : vector<1x5x256xf32> to vector<5x256xf32>
      %124 = math.roundeven %123 : vector<5x256xf32>
      %c0_64 = arith.constant 0 : index
      %c0_65 = arith.constant 0 : index
      %c0_66 = arith.constant 0 : index
      %125 = vector.load %arg6[%c0_64, %c0_65, %c0_66] : memref<1x5x256xf32, #tpu.memory_space<vmem>>, vector<1x5x256xf32>
      %126 = vector.shape_cast %125 : vector<1x5x256xf32> to vector<5x256xf32>
      %127 = vector.shape_cast %124 : vector<5x256xf32> to vector<1x5x256xf32>
      tpu.vector_store %arg6[%c0_64, %c0_65, %c0_66], %127 {strides = array<i32>} : memref<1x5x256xf32, #tpu.memory_space<vmem>>, vector<1x5x256xf32>,
    } else {
    }
    return
  }
  func.func @transform_0(%arg0: i32, %arg1: i32, %arg2: i32) -> (i32, i32, i32) {
    %c0_i32 = arith.constant 0 : i32
    %c0_i32_0 = arith.constant 0 : i32
    return %arg0, %c0_i32, %arg2 : i32, i32, i32
  }
  func.func @transform_1(%arg0: i32, %arg1: i32, %arg2: i32) -> (i32, i32, i32) {
    %c0_i32 = arith.constant 0 : i32
    %c0_i32_0 = arith.constant 0 : i32
    return %arg0, %c0_i32, %arg2 : i32, i32, i32
  }
  func.func @transform_2(%arg0: i32, %arg1: i32, %arg2: i32) -> (i32, i32, i32) {
    %c0_i32 = arith.constant 0 : i32
    %c0_i32_0 = arith.constant 0 : i32
    return %arg0, %c0_i32, %arg2 : i32, i32, i32
  }
  func.func @transform_3(%arg0: i32, %arg1: i32, %arg2: i32) -> (i32, i32, i32) {
    %c0_i32 = arith.constant 0 : i32
    %c0_i32_0 = arith.constant 0 : i32
    return %arg0, %c0_i32, %arg1 : i32, i32, i32
  }
}

module attributes {stable_mosaic.version = 11 : i64} {
  func.func @_proj_kernel(%arg0: i32, %arg1: i32, %arg2: memref<1x5x48x64xf32, #tpu.memory_space<vmem>>, %arg3: memref<1x7x64xf32, #tpu.memory_space<vmem>>) attributes {dimension_semantics = [#tpu.dimension_semantics<parallel>, #tpu.dimension_semantics<parallel>], iteration_bounds = array<i64: 2, 1>, scalar_prefetch = 0 : i64, scratch_operands = 0 : i64, tpu.core_type = #tpu.core_type<tc>, window_params = [{transform_indices = @transform_0, window_bounds = array<i64: 1, 5, 48, 64>}, {transform_indices = @transform_1, window_bounds = array<i64: 1, 7, 64>}]} {
    %c0 = arith.constant 0 : index
    %c0_0 = arith.constant 0 : index
    %c0_1 = arith.constant 0 : index
    %c0_2 = arith.constant 0 : index
    %0 = vector.load %arg2[%c0, %c0_0, %c0_1, %c0_2] : memref<1x5x48x64xf32, #tpu.memory_space<vmem>>, vector<1x5x48x64xf32>
    %1 = vector.shape_cast %0 : vector<1x5x48x64xf32> to vector<5x48x64xf32>
    %2 = tpu.iota {dimensions = array<i32: 1>} : vector<1x48x1xi32>
    %c13_i32 = arith.constant 13 : i32
    %3 = vector.broadcast %c13_i32 : i32 to vector<1x48x1xi32>
    %4 = arith.cmpi sge, %2, %3 : vector<1x48x1xi32>
    %c35_i32 = arith.constant 35 : i32
    %5 = vector.broadcast %c35_i32 : i32 to vector<1x48x1xi32>
    %6 = arith.cmpi slt, %2, %5 : vector<1x48x1xi32>
    %7 = arith.andi %4, %6 : vector<1x48x1xi1>
    %8 = arith.extui %7 : vector<1x48x1xi1> to vector<1x48x1xi32>
    %9 = arith.sitofp %8 : vector<1x48x1xi32> to vector<1x48x1xf32>
    %c20_i32 = arith.constant 20 : i32
    %10 = vector.broadcast %c20_i32 : i32 to vector<1x48x1xi32>
    %11 = arith.cmpi sge, %2, %10 : vector<1x48x1xi32>
    %c25_i32 = arith.constant 25 : i32
    %12 = vector.broadcast %c25_i32 : i32 to vector<1x48x1xi32>
    %13 = arith.cmpi slt, %2, %12 : vector<1x48x1xi32>
    %14 = arith.andi %11, %13 : vector<1x48x1xi1>
    %15 = arith.extui %14 : vector<1x48x1xi1> to vector<1x48x1xi32>
    %16 = arith.sitofp %15 : vector<1x48x1xi32> to vector<1x48x1xf32>
    %17 = vector.extract_strided_slice %1 {offsets = [0, 0, 0], sizes = [1, 48, 64], strides = [1, 1, 1]} : vector<5x48x64xf32> to vector<1x48x64xf32>
    %18 = vector.broadcast %9 : vector<1x48x1xf32> to vector<5x48x64xf32>
    %19 = arith.mulf %1, %18 : vector<5x48x64xf32>
    %cst = arith.constant dense<0.000000e+00> : vector<5x64xf32>
    %20 = vector.multi_reduction <add>, %19, %cst [1] : vector<5x48x64xf32> to vector<5x64xf32>
    %21 = vector.broadcast %16 : vector<1x48x1xf32> to vector<1x48x64xf32>
    %22 = arith.mulf %17, %21 : vector<1x48x64xf32>
    %cst_3 = arith.constant dense<0.000000e+00> : vector<1x64xf32>
    %23 = vector.multi_reduction <add>, %22, %cst_3 [1] : vector<1x48x64xf32> to vector<1x64xf32>
    %cst_4 = arith.constant dense<0.000000e+00> : vector<1x64xf32>
    %24 = vector.multi_reduction <add>, %17, %cst_4 [1] : vector<1x48x64xf32> to vector<1x64xf32>
    %25 = vector.extract_strided_slice %20 {offsets = [0, 0], sizes = [1, 64], strides = [1, 1]} : vector<5x64xf32> to vector<1x64xf32>
    %cst_5 = arith.constant 1.000000e+00 : f32
    %26 = vector.broadcast %cst_5 : f32 to vector<1x64xf32>
    %27 = arith.divf %25, %26 : vector<1x64xf32>
    %cst_6 = arith.constant 0.000000e+00 : f32
    %cst_7 = arith.constant 1.000000e+00 : f32
    %28 = vector.broadcast %cst_6 : f32 to vector<1x64xf32>
    %29 = arith.maximumf %28, %27 : vector<1x64xf32>
    %30 = vector.broadcast %cst_7 : f32 to vector<1x64xf32>
    %31 = arith.minimumf %30, %29 : vector<1x64xf32>
    %c0_8 = arith.constant 0 : index
    %c0_9 = arith.constant 0 : index
    %c0_10 = arith.constant 0 : index
    %32 = vector.load %arg3[%c0_8, %c0_9, %c0_10] : memref<1x7x64xf32, #tpu.memory_space<vmem>>, vector<1x1x64xf32>
    %33 = vector.shape_cast %32 : vector<1x1x64xf32> to vector<1x64xf32>
    %34 = vector.shape_cast %31 : vector<1x64xf32> to vector<1x1x64xf32>
    tpu.vector_store %arg3[%c0_8, %c0_9, %c0_10], %34 {strides = array<i32>} : memref<1x7x64xf32, #tpu.memory_space<vmem>>, vector<1x1x64xf32>,
    %cst_11 = arith.constant 1.000000e+00 : f32
    %35 = vector.broadcast %cst_11 : f32 to vector<1x64xf32>
    %36 = arith.divf %24, %35 : vector<1x64xf32>
    %cst_12 = arith.constant 0.000000e+00 : f32
    %cst_13 = arith.constant 1.000000e+00 : f32
    %37 = vector.broadcast %cst_12 : f32 to vector<1x64xf32>
    %38 = arith.maximumf %37, %36 : vector<1x64xf32>
    %39 = vector.broadcast %cst_13 : f32 to vector<1x64xf32>
    %40 = arith.minimumf %39, %38 : vector<1x64xf32>
    %c0_14 = arith.constant 0 : index
    %c1 = arith.constant 1 : index
    %c0_15 = arith.constant 0 : index
    %41 = vector.load %arg3[%c0_14, %c1, %c0_15] : memref<1x7x64xf32, #tpu.memory_space<vmem>>, vector<1x1x64xf32>
    %42 = vector.shape_cast %41 : vector<1x1x64xf32> to vector<1x64xf32>
    %43 = vector.shape_cast %40 : vector<1x64xf32> to vector<1x1x64xf32>
    tpu.vector_store %arg3[%c0_14, %c1, %c0_15], %43 {strides = array<i32>} : memref<1x7x64xf32, #tpu.memory_space<vmem>>, vector<1x1x64xf32>,
    %cst_16 = arith.constant 1.000000e+00 : f32
    %44 = vector.broadcast %cst_16 : f32 to vector<1x64xf32>
    %45 = arith.divf %23, %44 : vector<1x64xf32>
    %cst_17 = arith.constant 0.000000e+00 : f32
    %cst_18 = arith.constant 1.000000e+00 : f32
    %46 = vector.broadcast %cst_17 : f32 to vector<1x64xf32>
    %47 = arith.maximumf %46, %45 : vector<1x64xf32>
    %48 = vector.broadcast %cst_18 : f32 to vector<1x64xf32>
    %49 = arith.minimumf %48, %47 : vector<1x64xf32>
    %c0_19 = arith.constant 0 : index
    %c2 = arith.constant 2 : index
    %c0_20 = arith.constant 0 : index
    %50 = vector.load %arg3[%c0_19, %c2, %c0_20] : memref<1x7x64xf32, #tpu.memory_space<vmem>>, vector<1x1x64xf32>
    %51 = vector.shape_cast %50 : vector<1x1x64xf32> to vector<1x64xf32>
    %52 = vector.shape_cast %49 : vector<1x64xf32> to vector<1x1x64xf32>
    tpu.vector_store %arg3[%c0_19, %c2, %c0_20], %52 {strides = array<i32>} : memref<1x7x64xf32, #tpu.memory_space<vmem>>, vector<1x1x64xf32>,
    %53 = vector.extract_strided_slice %20 {offsets = [1, 0], sizes = [4, 64], strides = [1, 1]} : vector<5x64xf32> to vector<4x64xf32>
    %cst_21 = arith.constant 5.000000e+00 : f32
    %54 = vector.broadcast %cst_21 : f32 to vector<4x64xf32>
    %55 = arith.divf %53, %54 : vector<4x64xf32>
    %cst_22 = arith.constant 0.000000e+00 : f32
    %cst_23 = arith.constant 1.000000e+00 : f32
    %56 = vector.broadcast %cst_22 : f32 to vector<4x64xf32>
    %57 = arith.maximumf %56, %55 : vector<4x64xf32>
    %58 = vector.broadcast %cst_23 : f32 to vector<4x64xf32>
    %59 = arith.minimumf %58, %57 : vector<4x64xf32>
    %c0_24 = arith.constant 0 : index
    %c3 = arith.constant 3 : index
    %c0_25 = arith.constant 0 : index
    %60 = vector.load %arg3[%c0_24, %c3, %c0_25] : memref<1x7x64xf32, #tpu.memory_space<vmem>>, vector<1x4x64xf32>
    %61 = vector.shape_cast %60 : vector<1x4x64xf32> to vector<4x64xf32>
    %62 = vector.shape_cast %59 : vector<4x64xf32> to vector<1x4x64xf32>
    tpu.vector_store %arg3[%c0_24, %c3, %c0_25], %62 {strides = array<i32>} : memref<1x7x64xf32, #tpu.memory_space<vmem>>, vector<1x4x64xf32>,
    return
  }
  func.func @transform_0(%arg0: i32, %arg1: i32) -> (i32, i32, i32, i32) {
    %c0_i32 = arith.constant 0 : i32
    %c0_i32_0 = arith.constant 0 : i32
    %c0_i32_1 = arith.constant 0 : i32
    return %arg0, %c0_i32, %c0_i32_0, %arg1 : i32, i32, i32, i32
  }
  func.func @transform_1(%arg0: i32, %arg1: i32) -> (i32, i32, i32) {
    %c0_i32 = arith.constant 0 : i32
    %c0_i32_0 = arith.constant 0 : i32
    return %arg0, %c0_i32, %arg1 : i32, i32, i32
  }
}

module attributes {stable_mosaic.version = 11 : i64} {
  func.func @_gsample_kernel(%arg0: i32, %arg1: i32, %arg2: i32, %arg3: memref<1x9x512xf32, #tpu.memory_space<vmem>>, %arg4: memref<1x4x256xi32, #tpu.memory_space<vmem>>, %arg5: memref<1x4x256xf32, #tpu.memory_space<vmem>>, %arg6: memref<1x9x256xf32, #tpu.memory_space<vmem>>) attributes {dimension_semantics = [#tpu.dimension_semantics<parallel>, #tpu.dimension_semantics<parallel>, #tpu.dimension_semantics<arbitrary>], iteration_bounds = array<i64: 2, 36, 18>, scalar_prefetch = 0 : i64, scratch_operands = 0 : i64, tpu.core_type = #tpu.core_type<tc>, window_params = [{transform_indices = @transform_0, window_bounds = array<i64: 1, 9, 512>}, {transform_indices = @transform_1, window_bounds = array<i64: 1, 4, 256>}, {transform_indices = @transform_2, window_bounds = array<i64: 1, 4, 256>}, {transform_indices = @transform_3, window_bounds = array<i64: 1, 9, 256>}]} {
    %c512_i32 = arith.constant 512 : i32
    %0 = arith.muli %arg2, %c512_i32 : i32
    %c0_i32 = arith.constant 0 : i32
    %1 = arith.cmpi eq, %arg2, %c0_i32 : i32
    %2 = arith.extui %1 : i1 to i32
    %c0_i32_0 = arith.constant 0 : i32
    %3 = arith.cmpi ne, %2, %c0_i32_0 : i32
    scf.if %3 {
      %cst_35 = arith.constant 0.000000e+00 : f32
      %67 = vector.broadcast %cst_35 : f32 to vector<1x9x256xf32>
      %c0_36 = arith.constant 0 : index
      %c0_37 = arith.constant 0 : index
      %c0_38 = arith.constant 0 : index
      %68 = vector.load %arg6[%c0_36, %c0_37, %c0_38] : memref<1x9x256xf32, #tpu.memory_space<vmem>>, vector<1x9x256xf32>
      tpu.vector_store %arg6[%c0_36, %c0_37, %c0_38], %67 {strides = array<i32>} : memref<1x9x256xf32, #tpu.memory_space<vmem>>, vector<1x9x256xf32>,
    } else {
    }
    %4 = tpu.iota {dimensions = array<i32: 0>} : vector<512x256xi32>
    %cst = arith.constant 0.000000e+00 : f32
    %5 = vector.broadcast %cst : f32 to vector<512x256xf32>
    %c0 = arith.constant 0 : index
    %c0_1 = arith.constant 0 : index
    %c0_2 = arith.constant 0 : index
    %6 = vector.load %arg4[%c0, %c0_1, %c0_2] : memref<1x4x256xi32, #tpu.memory_space<vmem>>, vector<1x1x256xi32>
    %7 = vector.shape_cast %6 : vector<1x1x256xi32> to vector<1x256xi32>
    %8 = vector.broadcast %0 : i32 to vector<1x256xi32>
    %9 = arith.subi %7, %8 : vector<1x256xi32>
    %c0_3 = arith.constant 0 : index
    %c0_4 = arith.constant 0 : index
    %c0_5 = arith.constant 0 : index
    %10 = vector.load %arg5[%c0_3, %c0_4, %c0_5] : memref<1x4x256xf32, #tpu.memory_space<vmem>>, vector<1x1x256xf32>
    %11 = vector.shape_cast %10 : vector<1x1x256xf32> to vector<1x256xf32>
    %12 = vector.broadcast %9 : vector<1x256xi32> to vector<512x256xi32>
    %13 = arith.cmpi eq, %4, %12 : vector<512x256xi32>
    %cst_6 = arith.constant 0.000000e+00 : f32
    %14 = vector.shape_cast %11 : vector<1x256xf32> to vector<1x256xf32>
    %15 = vector.broadcast %14 : vector<1x256xf32> to vector<512x256xf32>
    %16 = vector.broadcast %cst_6 : f32 to vector<512x256xf32>
    %17 = arith.select %13, %15, %16 : vector<512x256xi1>, vector<512x256xf32>
    %18 = arith.addf %5, %17 : vector<512x256xf32>
    %c0_7 = arith.constant 0 : index
    %c1 = arith.constant 1 : index
    %c0_8 = arith.constant 0 : index
    %19 = vector.load %arg4[%c0_7, %c1, %c0_8] : memref<1x4x256xi32, #tpu.memory_space<vmem>>, vector<1x1x256xi32>
    %20 = vector.shape_cast %19 : vector<1x1x256xi32> to vector<1x256xi32>
    %21 = vector.broadcast %0 : i32 to vector<1x256xi32>
    %22 = arith.subi %20, %21 : vector<1x256xi32>
    %c0_9 = arith.constant 0 : index
    %c1_10 = arith.constant 1 : index
    %c0_11 = arith.constant 0 : index
    %23 = vector.load %arg5[%c0_9, %c1_10, %c0_11] : memref<1x4x256xf32, #tpu.memory_space<vmem>>, vector<1x1x256xf32>
    %24 = vector.shape_cast %23 : vector<1x1x256xf32> to vector<1x256xf32>
    %25 = vector.broadcast %22 : vector<1x256xi32> to vector<512x256xi32>
    %26 = arith.cmpi eq, %4, %25 : vector<512x256xi32>
    %cst_12 = arith.constant 0.000000e+00 : f32
    %27 = vector.shape_cast %24 : vector<1x256xf32> to vector<1x256xf32>
    %28 = vector.broadcast %27 : vector<1x256xf32> to vector<512x256xf32>
    %29 = vector.broadcast %cst_12 : f32 to vector<512x256xf32>
    %30 = arith.select %26, %28, %29 : vector<512x256xi1>, vector<512x256xf32>
    %31 = arith.addf %18, %30 : vector<512x256xf32>
    %c0_13 = arith.constant 0 : index
    %c2 = arith.constant 2 : index
    %c0_14 = arith.constant 0 : index
    %32 = vector.load %arg4[%c0_13, %c2, %c0_14] : memref<1x4x256xi32, #tpu.memory_space<vmem>>, vector<1x1x256xi32>
    %33 = vector.shape_cast %32 : vector<1x1x256xi32> to vector<1x256xi32>
    %34 = vector.broadcast %0 : i32 to vector<1x256xi32>
    %35 = arith.subi %33, %34 : vector<1x256xi32>
    %c0_15 = arith.constant 0 : index
    %c2_16 = arith.constant 2 : index
    %c0_17 = arith.constant 0 : index
    %36 = vector.load %arg5[%c0_15, %c2_16, %c0_17] : memref<1x4x256xf32, #tpu.memory_space<vmem>>, vector<1x1x256xf32>
    %37 = vector.shape_cast %36 : vector<1x1x256xf32> to vector<1x256xf32>
    %38 = vector.broadcast %35 : vector<1x256xi32> to vector<512x256xi32>
    %39 = arith.cmpi eq, %4, %38 : vector<512x256xi32>
    %cst_18 = arith.constant 0.000000e+00 : f32
    %40 = vector.shape_cast %37 : vector<1x256xf32> to vector<1x256xf32>
    %41 = vector.broadcast %40 : vector<1x256xf32> to vector<512x256xf32>
    %42 = vector.broadcast %cst_18 : f32 to vector<512x256xf32>
    %43 = arith.select %39, %41, %42 : vector<512x256xi1>, vector<512x256xf32>
    %44 = arith.addf %31, %43 : vector<512x256xf32>
    %c0_19 = arith.constant 0 : index
    %c3 = arith.constant 3 : index
    %c0_20 = arith.constant 0 : index
    %45 = vector.load %arg4[%c0_19, %c3, %c0_20] : memref<1x4x256xi32, #tpu.memory_space<vmem>>, vector<1x1x256xi32>
    %46 = vector.shape_cast %45 : vector<1x1x256xi32> to vector<1x256xi32>
    %47 = vector.broadcast %0 : i32 to vector<1x256xi32>
    %48 = arith.subi %46, %47 : vector<1x256xi32>
    %c0_21 = arith.constant 0 : index
    %c3_22 = arith.constant 3 : index
    %c0_23 = arith.constant 0 : index
    %49 = vector.load %arg5[%c0_21, %c3_22, %c0_23] : memref<1x4x256xf32, #tpu.memory_space<vmem>>, vector<1x1x256xf32>
    %50 = vector.shape_cast %49 : vector<1x1x256xf32> to vector<1x256xf32>
    %51 = vector.broadcast %48 : vector<1x256xi32> to vector<512x256xi32>
    %52 = arith.cmpi eq, %4, %51 : vector<512x256xi32>
    %cst_24 = arith.constant 0.000000e+00 : f32
    %53 = vector.shape_cast %50 : vector<1x256xf32> to vector<1x256xf32>
    %54 = vector.broadcast %53 : vector<1x256xf32> to vector<512x256xf32>
    %55 = vector.broadcast %cst_24 : f32 to vector<512x256xf32>
    %56 = arith.select %52, %54, %55 : vector<512x256xi1>, vector<512x256xf32>
    %57 = arith.addf %44, %56 : vector<512x256xf32>
    %c0_25 = arith.constant 0 : index
    %c0_26 = arith.constant 0 : index
    %c0_27 = arith.constant 0 : index
    %58 = vector.load %arg6[%c0_25, %c0_26, %c0_27] : memref<1x9x256xf32, #tpu.memory_space<vmem>>, vector<1x9x256xf32>
    %59 = vector.shape_cast %58 : vector<1x9x256xf32> to vector<9x256xf32>
    %c0_28 = arith.constant 0 : index
    %c0_29 = arith.constant 0 : index
    %c0_30 = arith.constant 0 : index
    %60 = vector.load %arg3[%c0_28, %c0_29, %c0_30] : memref<1x9x512xf32, #tpu.memory_space<vmem>>, vector<1x9x512xf32>
    %61 = vector.shape_cast %60 : vector<1x9x512xf32> to vector<9x512xf32>
    %cst_31 = arith.constant dense<0.000000e+00> : vector<9x256xf32>
    %62 = tpu.matmul %61, %57, %cst_31 {dimension_numbers = #tpu.dot_dimension_numbers<[1], [0], [0], [1], [0, 0, 1, 1], [], []>} : vector<9x512xf32>, vector<512x256xf32>, vector<9x256xf32> -> vector<9x256xf32>
    %63 = arith.addf %59, %62 : vector<9x256xf32>
    %c0_32 = arith.constant 0 : index
    %c0_33 = arith.constant 0 : index
    %c0_34 = arith.constant 0 : index
    %64 = vector.load %arg6[%c0_32, %c0_33, %c0_34] : memref<1x9x256xf32, #tpu.memory_space<vmem>>, vector<1x9x256xf32>
    %65 = vector.shape_cast %64 : vector<1x9x256xf32> to vector<9x256xf32>
    %66 = vector.shape_cast %63 : vector<9x256xf32> to vector<1x9x256xf32>
    tpu.vector_store %arg6[%c0_32, %c0_33, %c0_34], %66 {strides = array<i32>} : memref<1x9x256xf32, #tpu.memory_space<vmem>>, vector<1x9x256xf32>,
    return
  }
  func.func @transform_0(%arg0: i32, %arg1: i32, %arg2: i32) -> (i32, i32, i32) {
    %c0_i32 = arith.constant 0 : i32
    %c0_i32_0 = arith.constant 0 : i32
    return %arg0, %c0_i32, %arg2 : i32, i32, i32
  }
  func.func @transform_1(%arg0: i32, %arg1: i32, %arg2: i32) -> (i32, i32, i32) {
    %c0_i32 = arith.constant 0 : i32
    %c0_i32_0 = arith.constant 0 : i32
    return %arg0, %c0_i32, %arg1 : i32, i32, i32
  }
  func.func @transform_2(%arg0: i32, %arg1: i32, %arg2: i32) -> (i32, i32, i32) {
    %c0_i32 = arith.constant 0 : i32
    %c0_i32_0 = arith.constant 0 : i32
    return %arg0, %c0_i32, %arg1 : i32, i32, i32
  }
  func.func @transform_3(%arg0: i32, %arg1: i32, %arg2: i32) -> (i32, i32, i32) {
    %c0_i32 = arith.constant 0 : i32
    %c0_i32_0 = arith.constant 0 : i32
    return %arg0, %c0_i32, %arg1 : i32, i32, i32
  }
}

module attributes {stable_mosaic.version = 11 : i64} {
  func.func @_combine_nopool_kernel(%arg0: i32, %arg1: memref<2xi32, #tpu.memory_space<smem>>, %arg2: memref<1x8x96x96xf32, #tpu.memory_space<vmem>>, %arg3: memref<1x8x96x96xf32, #tpu.memory_space<vmem>>, %arg4: memref<1x8x96x96xf32, #tpu.memory_space<vmem>>) attributes {dimension_semantics = [#tpu.dimension_semantics<parallel>], iteration_bounds = array<i64: 2>, scalar_prefetch = 1 : i64, scratch_operands = 0 : i64, tpu.core_type = #tpu.core_type<tc>, window_params = [{transform_indices = @transform_0, window_bounds = array<i64: 1, 8, 96, 96>}, {transform_indices = @transform_1, window_bounds = array<i64: 1, 8, 96, 96>}, {transform_indices = @transform_2, window_bounds = array<i64: 1, 8, 96, 96>}]} {
    %c0 = arith.constant 0 : index
    %c0_0 = arith.constant 0 : index
    %c0_1 = arith.constant 0 : index
    %c0_2 = arith.constant 0 : index
    %0 = vector.load %arg2[%c0, %c0_0, %c0_1, %c0_2] : memref<1x8x96x96xf32, #tpu.memory_space<vmem>>, vector<1x8x96x96xf32>
    %1 = vector.shape_cast %0 : vector<1x8x96x96xf32> to vector<8x96x96xf32>
    %2 = vector.extract_strided_slice %1 {offsets = [1, 0, 0], sizes = [1, 96, 96], strides = [1, 1, 1]} : vector<8x96x96xf32> to vector<1x96x96xf32>
    %3 = vector.shape_cast %2 : vector<1x96x96xf32> to vector<96x96xf32>
    %4 = vector.extract_strided_slice %1 {offsets = [0, 0, 0], sizes = [1, 96, 96], strides = [1, 1, 1]} : vector<8x96x96xf32> to vector<1x96x96xf32>
    %5 = vector.shape_cast %4 : vector<1x96x96xf32> to vector<96x96xf32>
    %6 = arith.subf %3, %5 : vector<96x96xf32>
    %cst = arith.constant 8.000000e-01 : f32
    %7 = vector.broadcast %cst : f32 to vector<96x96xf32>
    %8 = arith.cmpf ogt, %6, %7 : vector<96x96xf32>
    %c0_3 = arith.constant 0 : index
    %c0_4 = arith.constant 0 : index
    %c0_5 = arith.constant 0 : index
    %c0_6 = arith.constant 0 : index
    %9 = vector.load %arg3[%c0_3, %c0_4, %c0_5, %c0_6] : memref<1x8x96x96xf32, #tpu.memory_space<vmem>>, vector<1x8x96x96xf32>
    %10 = vector.shape_cast %9 : vector<1x8x96x96xf32> to vector<8x96x96xf32>
    %11 = arith.maximumf %10, %1 : vector<8x96x96xf32>
    %12 = arith.index_cast %arg0 : i32 to index
    %13 = memref.load %arg1[%12] : memref<2xi32, #tpu.memory_space<smem>>
    %c1_i32 = arith.constant 1 : i32
    %14 = arith.cmpi eq, %13, %c1_i32 : i32
    %15 = vector.broadcast %14 : i1 to vector<96x96xi1>
    %16 = arith.andi %15, %8 : vector<96x96xi1>
    %17 = vector.extract_strided_slice %11 {offsets = [1, 0, 0], sizes = [7, 96, 96], strides = [1, 1, 1]} : vector<8x96x96xf32> to vector<7x96x96xf32>
    %c0_7 = arith.constant 0 : index
    %c1 = arith.constant 1 : index
    %c0_8 = arith.constant 0 : index
    %c0_9 = arith.constant 0 : index
    %18 = vector.load %arg4[%c0_7, %c1, %c0_8, %c0_9] : memref<1x8x96x96xf32, #tpu.memory_space<vmem>>, vector<1x7x96x96xf32>
    %19 = vector.shape_cast %18 : vector<1x7x96x96xf32> to vector<7x96x96xf32>
    %20 = vector.shape_cast %17 : vector<7x96x96xf32> to vector<1x7x96x96xf32>
    tpu.vector_store %arg4[%c0_7, %c1, %c0_8, %c0_9], %20 {strides = array<i32>} : memref<1x8x96x96xf32, #tpu.memory_space<vmem>>, vector<1x7x96x96xf32>,
    %21 = vector.extract_strided_slice %11 {offsets = [0, 0, 0], sizes = [1, 96, 96], strides = [1, 1, 1]} : vector<8x96x96xf32> to vector<1x96x96xf32>
    %cst_10 = arith.constant 0.000000e+00 : f32
    %22 = vector.shape_cast %16 : vector<96x96xi1> to vector<1x96x96xi1>
    %23 = vector.broadcast %cst_10 : f32 to vector<1x96x96xf32>
    %24 = arith.select %22, %23, %21 : vector<1x96x96xi1>, vector<1x96x96xf32>
    %c0_11 = arith.constant 0 : index
    %c0_12 = arith.constant 0 : index
    %c0_13 = arith.constant 0 : index
    %c0_14 = arith.constant 0 : index
    %25 = vector.load %arg4[%c0_11, %c0_12, %c0_13, %c0_14] : memref<1x8x96x96xf32, #tpu.memory_space<vmem>>, vector<1x1x96x96xf32>
    %26 = vector.shape_cast %25 : vector<1x1x96x96xf32> to vector<1x96x96xf32>
    %27 = vector.shape_cast %24 : vector<1x96x96xf32> to vector<1x1x96x96xf32>
    tpu.vector_store %arg4[%c0_11, %c0_12, %c0_13, %c0_14], %27 {strides = array<i32>} : memref<1x8x96x96xf32, #tpu.memory_space<vmem>>, vector<1x1x96x96xf32>,
    return
  }
  func.func @transform_0(%arg0: i32, %arg1: memref<2xi32, #tpu.memory_space<smem>>) -> (i32, i32, i32, i32) {
    %c0_i32 = arith.constant 0 : i32
    %c0_i32_0 = arith.constant 0 : i32
    %c0_i32_1 = arith.constant 0 : i32
    %c0_i32_2 = arith.constant 0 : i32
    return %arg0, %c0_i32, %c0_i32_0, %c0_i32_1 : i32, i32, i32, i32
  }
  func.func @transform_1(%arg0: i32, %arg1: memref<2xi32, #tpu.memory_space<smem>>) -> (i32, i32, i32, i32) {
    %c0_i32 = arith.constant 0 : i32
    %c0_i32_0 = arith.constant 0 : i32
    %c0_i32_1 = arith.constant 0 : i32
    %c0_i32_2 = arith.constant 0 : i32
    return %arg0, %c0_i32, %c0_i32_0, %c0_i32_1 : i32, i32, i32, i32
  }
  func.func @transform_2(%arg0: i32, %arg1: memref<2xi32, #tpu.memory_space<smem>>) -> (i32, i32, i32, i32) {
    %c0_i32 = arith.constant 0 : i32
    %c0_i32_0 = arith.constant 0 : i32
    %c0_i32_1 = arith.constant 0 : i32
    %c0_i32_2 = arith.constant 0 : i32
    return %arg0, %c0_i32, %c0_i32_0, %c0_i32_1 : i32, i32, i32, i32
  }
}

module attributes {stable_mosaic.version = 11 : i64} {
  func.func @_combine_pool_kernel(%arg0: i32, %arg1: memref<2xi32, #tpu.memory_space<smem>>, %arg2: memref<1x8x96x96xf32, #tpu.memory_space<vmem>>, %arg3: memref<1x98x98xf32, #tpu.memory_space<vmem>>, %arg4: memref<1x8x96x96xf32, #tpu.memory_space<vmem>>, %arg5: memref<1x8x96x96xf32, #tpu.memory_space<vmem>>) attributes {dimension_semantics = [#tpu.dimension_semantics<parallel>], iteration_bounds = array<i64: 2>, scalar_prefetch = 1 : i64, scratch_operands = 0 : i64, tpu.core_type = #tpu.core_type<tc>, window_params = [{transform_indices = @transform_0, window_bounds = array<i64: 1, 8, 96, 96>}, {transform_indices = @transform_1, window_bounds = array<i64: 1, 98, 98>}, {transform_indices = @transform_2, window_bounds = array<i64: 1, 8, 96, 96>}, {transform_indices = @transform_3, window_bounds = array<i64: 1, 8, 96, 96>}]} {
    %c0 = arith.constant 0 : index
    %c0_0 = arith.constant 0 : index
    %c0_1 = arith.constant 0 : index
    %c0_2 = arith.constant 0 : index
    %0 = vector.load %arg2[%c0, %c0_0, %c0_1, %c0_2] : memref<1x8x96x96xf32, #tpu.memory_space<vmem>>, vector<1x8x96x96xf32>
    %1 = vector.shape_cast %0 : vector<1x8x96x96xf32> to vector<8x96x96xf32>
    %c0_3 = arith.constant 0 : index
    %c0_4 = arith.constant 0 : index
    %c0_5 = arith.constant 0 : index
    %2 = vector.load %arg3[%c0_3, %c0_4, %c0_5] : memref<1x98x98xf32, #tpu.memory_space<vmem>>, vector<1x98x98xf32>
    %3 = vector.shape_cast %2 : vector<1x98x98xf32> to vector<98x98xf32>
    %4 = vector.extract_strided_slice %3 {offsets = [0, 0], sizes = [96, 98], strides = [1, 1]} : vector<98x98xf32> to vector<96x98xf32>
    %5 = vector.extract_strided_slice %3 {offsets = [1, 0], sizes = [96, 98], strides = [1, 1]} : vector<98x98xf32> to vector<96x98xf32>
    %6 = arith.maximumf %4, %5 : vector<96x98xf32>
    %7 = vector.extract_strided_slice %3 {offsets = [2, 0], sizes = [96, 98], strides = [1, 1]} : vector<98x98xf32> to vector<96x98xf32>
    %8 = arith.maximumf %6, %7 : vector<96x98xf32>
    %9 = vector.extract_strided_slice %8 {offsets = [0, 0], sizes = [96, 96], strides = [1, 1]} : vector<96x98xf32> to vector<96x96xf32>
    %10 = vector.extract_strided_slice %8 {offsets = [0, 1], sizes = [96, 96], strides = [1, 1]} : vector<96x98xf32> to vector<96x96xf32>
    %11 = arith.maximumf %9, %10 : vector<96x96xf32>
    %12 = vector.extract_strided_slice %8 {offsets = [0, 2], sizes = [96, 96], strides = [1, 1]} : vector<96x98xf32> to vector<96x96xf32>
    %13 = arith.maximumf %11, %12 : vector<96x96xf32>
    %14 = vector.extract_strided_slice %1 {offsets = [1, 0, 0], sizes = [1, 96, 96], strides = [1, 1, 1]} : vector<8x96x96xf32> to vector<1x96x96xf32>
    %15 = vector.shape_cast %14 : vector<1x96x96xf32> to vector<96x96xf32>
    %16 = arith.subf %15, %13 : vector<96x96xf32>
    %cst = arith.constant 8.000000e-01 : f32
    %17 = vector.broadcast %cst : f32 to vector<96x96xf32>
    %18 = arith.cmpf ogt, %16, %17 : vector<96x96xf32>
    %c0_6 = arith.constant 0 : index
    %c0_7 = arith.constant 0 : index
    %c0_8 = arith.constant 0 : index
    %c0_9 = arith.constant 0 : index
    %19 = vector.load %arg4[%c0_6, %c0_7, %c0_8, %c0_9] : memref<1x8x96x96xf32, #tpu.memory_space<vmem>>, vector<1x8x96x96xf32>
    %20 = vector.shape_cast %19 : vector<1x8x96x96xf32> to vector<8x96x96xf32>
    %21 = arith.maximumf %20, %1 : vector<8x96x96xf32>
    %22 = arith.index_cast %arg0 : i32 to index
    %23 = memref.load %arg1[%22] : memref<2xi32, #tpu.memory_space<smem>>
    %c1_i32 = arith.constant 1 : i32
    %24 = arith.cmpi eq, %23, %c1_i32 : i32
    %25 = vector.broadcast %24 : i1 to vector<96x96xi1>
    %26 = arith.andi %25, %18 : vector<96x96xi1>
    %27 = vector.extract_strided_slice %21 {offsets = [1, 0, 0], sizes = [7, 96, 96], strides = [1, 1, 1]} : vector<8x96x96xf32> to vector<7x96x96xf32>
    %c0_10 = arith.constant 0 : index
    %c1 = arith.constant 1 : index
    %c0_11 = arith.constant 0 : index
    %c0_12 = arith.constant 0 : index
    %28 = vector.load %arg5[%c0_10, %c1, %c0_11, %c0_12] : memref<1x8x96x96xf32, #tpu.memory_space<vmem>>, vector<1x7x96x96xf32>
    %29 = vector.shape_cast %28 : vector<1x7x96x96xf32> to vector<7x96x96xf32>
    %30 = vector.shape_cast %27 : vector<7x96x96xf32> to vector<1x7x96x96xf32>
    tpu.vector_store %arg5[%c0_10, %c1, %c0_11, %c0_12], %30 {strides = array<i32>} : memref<1x8x96x96xf32, #tpu.memory_space<vmem>>, vector<1x7x96x96xf32>,
    %31 = vector.extract_strided_slice %21 {offsets = [0, 0, 0], sizes = [1, 96, 96], strides = [1, 1, 1]} : vector<8x96x96xf32> to vector<1x96x96xf32>
    %cst_13 = arith.constant 0.000000e+00 : f32
    %32 = vector.shape_cast %26 : vector<96x96xi1> to vector<1x96x96xi1>
    %33 = vector.broadcast %cst_13 : f32 to vector<1x96x96xf32>
    %34 = arith.select %32, %33, %31 : vector<1x96x96xi1>, vector<1x96x96xf32>
    %c0_14 = arith.constant 0 : index
    %c0_15 = arith.constant 0 : index
    %c0_16 = arith.constant 0 : index
    %c0_17 = arith.constant 0 : index
    %35 = vector.load %arg5[%c0_14, %c0_15, %c0_16, %c0_17] : memref<1x8x96x96xf32, #tpu.memory_space<vmem>>, vector<1x1x96x96xf32>
    %36 = vector.shape_cast %35 : vector<1x1x96x96xf32> to vector<1x96x96xf32>
    %37 = vector.shape_cast %34 : vector<1x96x96xf32> to vector<1x1x96x96xf32>
    tpu.vector_store %arg5[%c0_14, %c0_15, %c0_16, %c0_17], %37 {strides = array<i32>} : memref<1x8x96x96xf32, #tpu.memory_space<vmem>>, vector<1x1x96x96xf32>,
    return
  }
  func.func @transform_0(%arg0: i32, %arg1: memref<2xi32, #tpu.memory_space<smem>>) -> (i32, i32, i32, i32) {
    %c0_i32 = arith.constant 0 : i32
    %c0_i32_0 = arith.constant 0 : i32
    %c0_i32_1 = arith.constant 0 : i32
    %c0_i32_2 = arith.constant 0 : i32
    return %arg0, %c0_i32, %c0_i32_0, %c0_i32_1 : i32, i32, i32, i32
  }
  func.func @transform_1(%arg0: i32, %arg1: memref<2xi32, #tpu.memory_space<smem>>) -> (i32, i32, i32) {
    %c0_i32 = arith.constant 0 : i32
    %c0_i32_0 = arith.constant 0 : i32
    %c0_i32_1 = arith.constant 0 : i32
    return %arg0, %c0_i32, %c0_i32_0 : i32, i32, i32
  }
  func.func @transform_2(%arg0: i32, %arg1: memref<2xi32, #tpu.memory_space<smem>>) -> (i32, i32, i32, i32) {
    %c0_i32 = arith.constant 0 : i32
    %c0_i32_0 = arith.constant 0 : i32
    %c0_i32_1 = arith.constant 0 : i32
    %c0_i32_2 = arith.constant 0 : i32
    return %arg0, %c0_i32, %c0_i32_0, %c0_i32_1 : i32, i32, i32, i32
  }
  func.func @transform_3(%arg0: i32, %arg1: memref<2xi32, #tpu.memory_space<smem>>) -> (i32, i32, i32, i32) {
    %c0_i32 = arith.constant 0 : i32
    %c0_i32_0 = arith.constant 0 : i32
    %c0_i32_1 = arith.constant 0 : i32
    %c0_i32_2 = arith.constant 0 : i32
    return %arg0, %c0_i32, %c0_i32_0, %c0_i32_1 : i32, i32, i32, i32
  }
}

</mosaic_0001>

<llo_original>
// kernel: semantic_mapping_forward.7
$region0: #{semantic_mapping_forward.7}
  #allocation0 [shape = 'u32[]', space=smem, size = 0x4, offset = 0x4, fixed_abs, tag = 'smem constant byte address 0x4 - core index']
  #allocation1 [shape = 'u32[72,128]{1,0:T(1,128)}', space=vmem, size = 0x9000, scoped, tag = 'internal scratch']
  %s0 = inlined_call_operand.vmem [shape: f32[2,5,48,64], index: 0, kind: input, shape index: {}]
  %s1 = inlined_call_operand.vmem [shape: f32[2,7,64], index: 1, kind: output, shape index: {}]
  %s2 = sld [smem:[#allocation0]]
  $region37: #{semantic_mapping_forward.7} parent=0
    _
  %s4 = ssub.s32 1, %s2
  %s5 = scalar_select 0, %s4, %s2
  loop: start=0, step=1, limit=4
  $region2: #{semantic_mapping_forward.7} parent=0 // loop_pre_header
    _
  $region3: #{semantic_mapping_forward.7} parent=0 // loop_header
    %s7 = sphi 0, %s11
    %p8 = scmp.ge.s32.totalorder %s7, 4
    %s14 = sphi 0, %s26
    %s15 = sphi 0, %s22
    %s16 = sphi 0, %s14
    %s17 = sphi 0, %s15
    %s18 = sphi 0, %s16
    %s19 = sphi 0, %s17
    %s31 = sphi 0, %s33
    %s34 = sphi 0, %s31
    %s35 = sphi 0, %s34
    %s51 = sphi 0, %s35
    %s59 = sphi 0, %s61
    %s62 = sphi 0, %s59
    %s63 = sphi 0, %s62
    %s79 = sphi 0, %s63
  $region4: #{semantic_mapping_forward.7} parent=0 // loop_header_branch
    %10 = sbr.rel (%p8) target = $region8
  $region5: #{semantic_mapping_forward.7} parent=0 // loop_body
    %s12 = ssub.s32 %s7, 1
    %s13 = ssub.s32 %s7, 2
    %s20 = sadd.s32 1, %s15
    %p21 = scmp.ge.s32.totalorder %s20, 1
    %s22 = scalar_select %p21, 0, %s20
    %s23 = sadd.s32 1, %s14
    %s24 = scalar_select %p21, %s23, %s14
    %p25 = scmp.ge.s32.totalorder %s24, 2
    %s26 = scalar_select %p25, 0, %s24
    %s27 = ssub.s32 %s14, %s26
    %s28 = ssub.s32 %s15, %s22
    %s29 = sor.u32 %s27, %s28
    %p30 = scmp.eq.s32.totalorder %s29, 0
    %s32 = sadd.s32 %s31, 1
    %s33 = scalar_select %p30, %s31, %s32
    %p36 = pneg %p30
    %p37 = scmp.eq.s32.totalorder %s7, 1
    %p38 = por %p36, %p37
    %p39 = scmp.ne.s32.totalorder %s31, %s34
    %p40 = scmp.eq.s32.totalorder %s7, 0
    %p41 = por %p39, %p40
    %p42 = scmp.ne.s32.totalorder %s31, %s34
    %p43 = scmp.eq.s32.totalorder %s12, 1
    %p44 = por %p42, %p43
    %p45 = scmp.ne.s32.totalorder %s34, %s35
    %p46 = scmp.eq.s32.totalorder %s12, 0
    %p47 = por %p45, %p46
    %p48 = scmp.ne.s32.totalorder %s34, %s35
    %p49 = scmp.eq.s32.totalorder %s13, 1
    %p50 = por %p48, %p49
    %p52 = scmp.ne.s32.totalorder %s35, %s51
    %p53 = scmp.eq.s32.totalorder %s13, 0
    %p54 = por %p52, %p53
    %s55 = ssub.s32 %s14, %s26
    %s56 = ssub.s32 %s15, %s22
    %s57 = sor.u32 %s55, %s56
    %p58 = scmp.eq.s32.totalorder %s57, 0
    %s60 = sadd.s32 %s59, 1
    %s61 = scalar_select %p58, %s59, %s60
    %p64 = pneg %p58
    %p65 = scmp.eq.s32.totalorder %s7, 1
    %p66 = por %p64, %p65
    %p67 = scmp.ne.s32.totalorder %s59, %s62
    %p68 = scmp.eq.s32.totalorder %s7, 0
    %p69 = por %p67, %p68
    %p70 = scmp.ne.s32.totalorder %s59, %s62
    %p71 = scmp.eq.s32.totalorder %s12, 1
    %p72 = por %p70, %p71
    %p73 = scmp.ne.s32.totalorder %s62, %s63
    %p74 = scmp.eq.s32.totalorder %s12, 0
    %p75 = por %p73, %p74
    %p76 = scmp.ne.s32.totalorder %s62, %s63
    %p77 = scmp.eq.s32.totalorder %s13, 1
    %p78 = por %p76, %p77
    %p80 = scmp.ne.s32.totalorder %s63, %s79
    %p81 = scmp.eq.s32.totalorder %s13, 0
    %p82 = por %p80, %p81
    %p83 = scmp.le.s32.totalorder 1, %s7
    %p84 = scmp.lt.s32.totalorder %s7, 3
    %p85 = pnand %p83, %p84
    %p86 = pneg %p85
    // Predicated region
    $region9: #{semantic_mapping_forward.7} parent=5 // pred_check
      _
    $region10: #{semantic_mapping_forward.7} parent=5 // pred_check_branch
      %88 = sbr.rel (%p85) target = $region12
    $region11: #{semantic_mapping_forward.7} parent=5 // pred_region
      %s89 = ssub.s32 %s7, 1
    $region12: #{semantic_mapping_forward.7} parent=5 // pred_fallthru
      _
    %p90 = scmp.lt.s32.totalorder %s7, 2
    // Predicated region
    $region13: #{semantic_mapping_forward.7} parent=5 // pred_check
      %p91 = pneg %p90
    $region14: #{semantic_mapping_forward.7} parent=5 // pred_check_branch
      %93 = sbr.rel (%p91) target = $region16
    $region15: #{semantic_mapping_forward.7} parent=5 // pred_region
      // Predicated region
      $region17: #{semantic_mapping_forward.7} parent=15 // pred_check
        %p94 = pneg %p41
      $region18: #{semantic_mapping_forward.7} parent=15 // pred_check_branch
        %96 = sbr.rel (%p94) target = $region20
      $region19: #{semantic_mapping_forward.7} parent=15 // pred_region
        %p97 = scmp.lt.s32.totalorder %s14, 1
        %s98 = scalar_select %p97, %s14, 1
        %p99 = scmp.lt.s32.totalorder %s15, 0
        %s100 = scalar_select %p99, %s15, 0
        %s101 = smul.addr %s98, 30
        %s102 = sadd.s32 %s100, %s101
        %s103 = smul.addr %s102, 8
        %s104 = scalar_lea.vmem %s0, %s103
      $region20: #{semantic_mapping_forward.7} parent=15 // pred_fallthru
        _
    $region16: #{semantic_mapping_forward.7} parent=5 // pred_fallthru
      _
    %p105 = scmp.le.s32.totalorder 1, %s7
    %p106 = scmp.lt.s32.totalorder %s7, 3
    %p107 = pnand %p105, %p106
    %p108 = pneg %p107
    // Predicated region
    $region21: #{semantic_mapping_forward.7} parent=5 // pred_check
      _
    $region22: #{semantic_mapping_forward.7} parent=5 // pred_check_branch
      %110 = sbr.rel (%p107) target = $region24
    $region23: #{semantic_mapping_forward.7} parent=5 // pred_region
      %s111 = ssub.s32 %s7, 1
      %p112 = scmp.lt.s32.totalorder %s16, 1
      %s113 = scalar_select %p112, %s16, 1
      %p114 = scmp.lt.s32.totalorder %s17, 0
      %s115 = scalar_select %p114, %s17, 0
      %s116 = smul.addr %s113, 30
      %s117 = sadd.s32 %s115, %s116
      %s118 = smul.addr %s117, 8
      %s119 = scalar_lea.vmem %s0, %s118
      %p120 = pneg %p47
      %p121 = pneg %p44
      %p122 = pneg %p75
      %p123 = pneg %p72
      %p124 = scmp.lt.s32.totalorder %s16, 1
      %s125 = scalar_select %p124, %s16, 1
      %p126 = scmp.lt.s32.totalorder %s17, 0
      %s127 = scalar_select %p126, %s17, 0
      %s128 = sadd.s32 %s127, %s125
      %s129 = smul.addr %s128, 8
      %s130 = scalar_lea.vmem %s1, %s129
      %p131 = scmp.lt.s32.totalorder %s16, 1
      %s132 = scalar_select %p131, %s16, 1
      %p133 = scmp.lt.s32.totalorder %s17, 0
      %s134 = scalar_select %p133, %s17, 0
      %s135 = smul.addr %s132, 30
      %s136 = sadd.s32 %s134, %s135
      %s137 = smul.addr %s136, 8
      %s138 = scalar_lea.vmem %s0, %s137
      %p139 = scmp.lt.s32.totalorder %s16, 1
      %s140 = scalar_select %p139, %s16, 1
      %p141 = scmp.lt.s32.totalorder %s17, 0
      %s142 = scalar_select %p141, %s17, 0
      %s143 = sadd.s32 %s142, %s140
      %s144 = smul.addr %s143, 8
      %s145 = scalar_lea.vmem %s1, %s144
      %v146 = vld [vmem:[%s138] sm:$0xff]
      %v147 = vld [vmem:[%s138 + $0x8] sm:$0xff]
      %v148 = vld [vmem:[%s138 + $0x10] sm:$0xff]
      %v149 = vld [vmem:[%s138 + $0x18] sm:$0xff]
      %v150 = vld [vmem:[%s138 + $0x20] sm:$0xff]
      %v151 = vld [vmem:[%s138 + $0x28] sm:$0xff]
      %v152 = vld [vmem:[%s138 + $0x30] sm:$0xff]
      %v153 = vld [vmem:[%s138 + $0x38] sm:$0xff]
      %v154 = vld [vmem:[%s138 + $0x40] sm:$0xff]
      %v155 = vld [vmem:[%s138 + $0x48] sm:$0xff]
      %v156 = vld [vmem:[%s138 + $0x50] sm:$0xff]
      %v157 = vld [vmem:[%s138 + $0x58] sm:$0xff]
      %v158 = vld [vmem:[%s138 + $0x60] sm:$0xff]
      %v159 = vld [vmem:[%s138 + $0x68] sm:$0xff]
      %v160 = vld [vmem:[%s138 + $0x70] sm:$0xff]
      %v161 = vld [vmem:[%s138 + $0x78] sm:$0xff]
      %v162 = vld [vmem:[%s138 + $0x80] sm:$0xff]
      %v163 = vld [vmem:[%s138 + $0x88] sm:$0xff]
      %v164 = vld [vmem:[%s138 + $0x90] sm:$0xff]
      %v165 = vld [vmem:[%s138 + $0x98] sm:$0xff]
      %v166 = vld [vmem:[%s138 + $0xa0] sm:$0xff]
      %v167 = vld [vmem:[%s138 + $0xa8] sm:$0xff]
      %v168 = vld [vmem:[%s138 + $0xb0] sm:$0xff]
      %v169 = vld [vmem:[%s138 + $0xb8] sm:$0xff]
      %v170 = vld [vmem:[%s138 + $0xc0] sm:$0xff]
      %v171 = vld [vmem:[%s138 + $0xc8] sm:$0xff]
      %v172 = vld [vmem:[%s138 + $0xd0] sm:$0xff]
      %v173 = vld [vmem:[%s138 + $0xd8] sm:$0xff]
      %v174 = vld [vmem:[%s138 + $0xe0] sm:$0xff]
      %v175 = vld [vmem:[%s138 + $0xe8] sm:$0xff]
      %v176 = vlaneseq
      %v177 = vshrl.u32 %v176, 7
      %v178 = vadd.s32 %v177, 8
      %v179 = vadd.s32 %v177, 16
      %v180 = vadd.s32 %v177, 24
      %v181 = vadd.s32 %v177, 32
      %v182 = vadd.s32 %v177, 40
      %vm183 = vcmp.ge.s32.totalorder %v177, 13
      %vm184 = vcmp.ge.s32.totalorder %v178, 13
      %vm185 = vcmp.ge.s32.totalorder %v179, 13
      %vm186 = vcmp.ge.s32.totalorder %v180, 13
      %vm187 = vcmp.ge.s32.totalorder %v181, 13
      %vm188 = vcmp.ge.s32.totalorder %v182, 13
      %vm189 = vcmp.lt.s32.totalorder %v177, 35
      %vm190 = vcmp.lt.s32.totalorder %v178, 35
      %vm191 = vcmp.lt.s32.totalorder %v179, 35
      %vm192 = vcmp.lt.s32.totalorder %v180, 35
      %vm193 = vcmp.lt.s32.totalorder %v181, 35
      %vm194 = vcmp.lt.s32.totalorder %v182, 35
      %vm195 = vmand %vm183, %vm189
      %vm196 = vmand %vm184, %vm190
      %vm197 = vmand %vm185, %vm191
      %vm198 = vmand %vm186, %vm192
      %vm199 = vmand %vm187, %vm193
      %vm200 = vmand %vm188, %vm194
      %v201 = vsel %vm195, 1, 0
      %v202 = vsel %vm196, 1, 0
      %v203 = vsel %vm197, 1, 0
      %v204 = vsel %vm198, 1, 0
      %v205 = vsel %vm199, 1, 0
      %v206 = vsel %vm200, 1, 0
      %v207 = vcvt.s32.f32 %v201
      %v208 = vcvt.s32.f32 %v202
      %v209 = vcvt.s32.f32 %v203
      %v210 = vcvt.s32.f32 %v204
      %v211 = vcvt.s32.f32 %v205
      %v212 = vcvt.s32.f32 %v206
      %vm213 = vcmp.ge.s32.totalorder %v177, 20
      %vm214 = vcmp.ge.s32.totalorder %v178, 20
      %vm215 = vcmp.ge.s32.totalorder %v179, 20
      %vm216 = vcmp.ge.s32.totalorder %v180, 20
      %vm217 = vcmp.ge.s32.totalorder %v181, 20
      %vm218 = vcmp.ge.s32.totalorder %v182, 20
      %vm219 = vcmp.lt.s32.totalorder %v177, 25
      %vm220 = vcmp.lt.s32.totalorder %v178, 25
      %vm221 = vcmp.lt.s32.totalorder %v179, 25
      %vm222 = vcmp.lt.s32.totalorder %v180, 25
      %vm223 = vcmp.lt.s32.totalorder %v181, 25
      %vm224 = vcmp.lt.s32.totalorder %v182, 25
      %vm225 = vmand %vm213, %vm219
      %vm226 = vmand %vm214, %vm220
      %vm227 = vmand %vm215, %vm221
      %vm228 = vmand %vm216, %vm222
      %vm229 = vmand %vm217, %vm223
      %vm230 = vmand %vm218, %vm224
      %v231 = vsel %vm225, 1, 0
      %v232 = vsel %vm226, 1, 0
      %v233 = vsel %vm227, 1, 0
      %v234 = vsel %vm228, 1, 0
      %v235 = vsel %vm229, 1, 0
      %v236 = vsel %vm230, 1, 0
      %v237 = vcvt.s32.f32 %v231
      %v238 = vcvt.s32.f32 %v232
      %v239 = vcvt.s32.f32 %v233
      %v240 = vcvt.s32.f32 %v234
      %v241 = vcvt.s32.f32 %v235
      %v242 = vcvt.s32.f32 %v236
      %v243 = vmul.f32 %v146, %v207
      %v244 = vmul.f32 %v147, %v208
      %v245 = vmul.f32 %v148, %v209
      %v246 = vmul.f32 %v149, %v210
      %v247 = vmul.f32 %v150, %v211
      %v248 = vmul.f32 %v151, %v212
      %v249 = vmul.f32 %v152, %v207
      %v250 = vmul.f32 %v153, %v208
      %v251 = vmul.f32 %v154, %v209
      %v252 = vmul.f32 %v155, %v210
      %v253 = vmul.f32 %v156, %v211
      %v254 = vmul.f32 %v157, %v212
      %v255 = vmul.f32 %v158, %v207
      %v256 = vmul.f32 %v159, %v208
      %v257 = vmul.f32 %v160, %v209
      %v258 = vmul.f32 %v161, %v210
      %v259 = vmul.f32 %v162, %v211
      %v260 = vmul.f32 %v163, %v212
      %v261 = vmul.f32 %v164, %v207
      %v262 = vmul.f32 %v165, %v208
      %v263 = vmul.f32 %v166, %v209
      %v264 = vmul.f32 %v167, %v210
      %v265 = vmul.f32 %v168, %v211
      %v266 = vmul.f32 %v169, %v212
      %v267 = vmul.f32 %v170, %v207
      %v268 = vmul.f32 %v171, %v208
      %v269 = vmul.f32 %v172, %v209
      %v270 = vmul.f32 %v173, %v210
      %v271 = vmul.f32 %v174, %v211
      %v272 = vmul.f32 %v175, %v212
      %vm273 = vcmask 523264
      %v274 = vsel %vm273, %v243, 0.0
      %v275 = vsel %vm273, %v244, 0.0
      %v276 = vadd.f32 %v274, %v275
      %v277 = vsel %vm273, %v245, 0.0
      %v278 = vadd.f32 %v276, %v277
      %v279 = vsel %vm273, %v246, 0.0
      %v280 = vadd.f32 %v278, %v279
      %v281 = vsel %vm273, %v247, 0.0
      %v282 = vadd.f32 %v280, %v281
      %v283 = vsel %vm273, %v248, 0.0
      %v284 = vadd.f32 %v282, %v283
      %v285 = vrot.slane %v284, 4
      %v286 = vadd.f32 %v284, %v285
      %v287 = vrot.slane %v286, 2
      %v288 = vadd.f32 %v286, %v287
      %v289 = vrot.slane %v288, 1
      %v290 = vadd.f32 %v288, %v289
      %v291 = vsel %vm273, %v249, 0.0
      %v292 = vsel %vm273, %v250, 0.0
      %v293 = vadd.f32 %v291, %v292
      %v294 = vsel %vm273, %v251, 0.0
      %v295 = vadd.f32 %v293, %v294
      %v296 = vsel %vm273, %v252, 0.0
      %v297 = vadd.f32 %v295, %v296
      %v298 = vsel %vm273, %v253, 0.0
      %v299 = vadd.f32 %v297, %v298
      %v300 = vsel %vm273, %v254, 0.0
      %v301 = vadd.f32 %v299, %v300
      %v302 = vrot.slane %v301, 4
      %v303 = vadd.f32 %v301, %v302
      %v304 = vrot.slane %v303, 2
      %v305 = vadd.f32 %v303, %v304
      %v306 = vrot.slane %v305, 1
      %v307 = vadd.f32 %v305, %v306
      %v308 = vsel %vm273, %v255, 0.0
      %v309 = vsel %vm273, %v256, 0.0
      %v310 = vadd.f32 %v308, %v309
      %v311 = vsel %vm273, %v257, 0.0
      %v312 = vadd.f32 %v310, %v311
      %v313 = vsel %vm273, %v258, 0.0
      %v314 = vadd.f32 %v312, %v313
      %v315 = vsel %vm273, %v259, 0.0
      %v316 = vadd.f32 %v314, %v315
      %v317 = vsel %vm273, %v260, 0.0
      %v318 = vadd.f32 %v316, %v317
      %v319 = vrot.slane %v318, 4
      %v320 = vadd.f32 %v318, %v319
      %v321 = vrot.slane %v320, 2
      %v322 = vadd.f32 %v320, %v321
      %v323 = vrot.slane %v322, 1
      %v324 = vadd.f32 %v322, %v323
      %v325 = vsel %vm273, %v261, 0.0
      %v326 = vsel %vm273, %v262, 0.0
      %v327 = vadd.f32 %v325, %v326
      %v328 = vsel %vm273, %v263, 0.0
      %v329 = vadd.f32 %v327, %v328
      %v330 = vsel %vm273, %v264, 0.0
      %v331 = vadd.f32 %v329, %v330
      %v332 = vsel %vm273, %v265, 0.0
      %v333 = vadd.f32 %v331, %v332
      %v334 = vsel %vm273, %v266, 0.0
      %v335 = vadd.f32 %v333, %v334
      %v336 = vrot.slane %v335, 4
      %v337 = vadd.f32 %v335, %v336
      %v338 = vrot.slane %v337, 2
      %v339 = vadd.f32 %v337, %v338
      %v340 = vrot.slane %v339, 1
      %v341 = vadd.f32 %v339, %v340
      %v342 = vsel %vm273, %v267, 0.0
      %v343 = vsel %vm273, %v268, 0.0
      %v344 = vadd.f32 %v342, %v343
      %v345 = vsel %vm273, %v269, 0.0
      %v346 = vadd.f32 %v344, %v345
      %v347 = vsel %vm273, %v270, 0.0
      %v348 = vadd.f32 %v346, %v347
      %v349 = vsel %vm273, %v271, 0.0
      %v350 = vadd.f32 %v348, %v349
      %v351 = vsel %vm273, %v272, 0.0
      %v352 = vadd.f32 %v350, %v351
      %v353 = vrot.slane %v352, 4
      %v354 = vadd.f32 %v352, %v353
      %v355 = vrot.slane %v354, 2
      %v356 = vadd.f32 %v354, %v355
      %v357 = vrot.slane %v356, 1
      %v358 = vadd.f32 %v356, %v357
      %v359 = vmul.f32 %v146, %v237
      %v360 = vmul.f32 %v147, %v238
      %v361 = vmul.f32 %v148, %v239
      %v362 = vmul.f32 %v149, %v240
      %v363 = vmul.f32 %v150, %v241
      %v364 = vmul.f32 %v151, %v242
      %v365 = vsel %vm273, %v359, 0.0
      %v366 = vsel %vm273, %v360, 0.0
      %v367 = vadd.f32 %v365, %v366
      %v368 = vsel %vm273, %v361, 0.0
      %v369 = vadd.f32 %v367, %v368
      %v370 = vsel %vm273, %v362, 0.0
      %v371 = vadd.f32 %v369, %v370
      %v372 = vsel %vm273, %v363, 0.0
      %v373 = vadd.f32 %v371, %v372
      %v374 = vsel %vm273, %v364, 0.0
      %v375 = vadd.f32 %v373, %v374
      %v376 = vrot.slane %v375, 4
      %v377 = vadd.f32 %v375, %v376
      %v378 = vrot.slane %v377, 2
      %v379 = vadd.f32 %v377, %v378
      %v380 = vrot.slane %v379, 1
      %v381 = vadd.f32 %v379, %v380
      %v382 = vsel %vm273, %v146, 0.0
      %v383 = vsel %vm273, %v147, 0.0
      %v384 = vadd.f32 %v382, %v383
      %v385 = vsel %vm273, %v148, 0.0
      %v386 = vadd.f32 %v384, %v385
      %v387 = vsel %vm273, %v149, 0.0
      %v388 = vadd.f32 %v386, %v387
      %v389 = vsel %vm273, %v150, 0.0
      %v390 = vadd.f32 %v388, %v389
      %v391 = vsel %vm273, %v151, 0.0
      %v392 = vadd.f32 %v390, %v391
      %v393 = vrot.slane %v392, 4
      %v394 = vadd.f32 %v392, %v393
      %v395 = vrot.slane %v394, 2
      %v396 = vadd.f32 %v394, %v395
      %v397 = vrot.slane %v396, 1
      %v398 = vadd.f32 %v396, %v397
      %v399 = vmax.f32 %v290, 0.0
      %v400 = vmin.f32 %v399, 1.0
      %vm401 = vcmask 516096
      %402 = vst.msk [vmem:[%s145] sm:$0x1] %vm401, %v400
      %v403 = vmax.f32 %v398, 0.0
      %v404 = vmin.f32 %v403, 1.0
      %405 = vst.msk [vmem:[%s145 + $0x1] sm:$0x1] %vm401, %v404
      %v406 = vmax.f32 %v381, 0.0
      %v407 = vmin.f32 %v406, 1.0
      %408 = vst.msk [vmem:[%s145 + $0x2] sm:$0x1] %vm401, %v407
      %v409 = vrcp.pop 5.0
      %v410 = vmul.f32 5.0, %v409
      %v411 = vsub.f32 1.0, %v410
      %v412 = vmul.f32 %v409, %v411
      %v413 = vadd.f32 %v409, %v412
      %vm414 = vweird.f32 %v409
      %v415 = vsel %vm414, %v409, %v413
      %v416 = vmul.f32 %v307, %v415
      %v417 = vmul.f32 %v324, %v415
      %v418 = vmul.f32 %v341, %v415
      %v419 = vmul.f32 %v358, %v415
      %v420 = vmax.f32 %v416, 0.0
      %v421 = vmax.f32 %v417, 0.0
      %v422 = vmax.f32 %v418, 0.0
      %v423 = vmax.f32 %v419, 0.0
      %v424 = vmin.f32 %v420, 1.0
      %v425 = vmin.f32 %v421, 1.0
      %v426 = vmin.f32 %v422, 1.0
      %v427 = vmin.f32 %v423, 1.0
      %vm432 = vcmask 1041409
      %v433 = vsel %vm432, %v425, %v424
      %vm434 = vcmask 1042434
      %v435 = vsel %vm434, %v426, %v433
      %vm436 = vcmask 1043459
      %v437 = vsel %vm436, %v427, %v435
      %vm439 = vcmask 519168
      %440 = vst.msk [vmem:[%s145 + $0x3] sm:$0xf] %vm439, %v437
      %p441 = scmp.lt.s32.totalorder %s16, 1
      %s442 = scalar_select %p441, %s16, 1
      %p443 = scmp.lt.s32.totalorder %s17, 0
      %s444 = scalar_select %p443, %s17, 0
      %s445 = sadd.s32 %s444, %s442
      %s446 = smul.addr %s445, 8
      %s447 = scalar_lea.vmem %s1, %s446
      // Predicated region
      $region25: #{semantic_mapping_forward.7} parent=23 // pred_check
        %p448 = pneg %p72
      $region26: #{semantic_mapping_forward.7} parent=23 // pred_check_branch
        %450 = sbr.rel (%p448) target = $region28
      $region27: #{semantic_mapping_forward.7} parent=23 // pred_region
        _
      $region28: #{semantic_mapping_forward.7} parent=23 // pred_fallthru
        _
    $region24: #{semantic_mapping_forward.7} parent=5 // pred_fallthru
      _
    %p451 = scmp.le.s32.totalorder 2, %s7
    // Predicated region
    $region29: #{semantic_mapping_forward.7} parent=5 // pred_check
      %p452 = pneg %p451
    $region30: #{semantic_mapping_forward.7} parent=5 // pred_check_branch
      %454 = sbr.rel (%p452) target = $region32
    $region31: #{semantic_mapping_forward.7} parent=5 // pred_region
      %s455 = ssub.s32 %s7, 2
      // Predicated region
      $region33: #{semantic_mapping_forward.7} parent=31 // pred_check
        %p456 = pneg %p78
      $region34: #{semantic_mapping_forward.7} parent=31 // pred_check_branch
        %458 = sbr.rel (%p456) target = $region36
      $region35: #{semantic_mapping_forward.7} parent=31 // pred_region
        %p459 = scmp.lt.s32.totalorder %s18, 1
        %s460 = scalar_select %p459, %s18, 1
        %p461 = scmp.lt.s32.totalorder %s19, 0
        %s462 = scalar_select %p461, %s19, 0
        %s463 = sadd.s32 %s462, %s460
        %s464 = smul.addr %s463, 8
        %s465 = scalar_lea.vmem %s1, %s464
      $region36: #{semantic_mapping_forward.7} parent=31 // pred_fallthru
        _
    $region32: #{semantic_mapping_forward.7} parent=5 // pred_fallthru
      _
  $region6: #{semantic_mapping_forward.7} parent=0 // loop_footer
    %s11 = sadd.s32 1, %s7
  $region7: #{semantic_mapping_forward.7} parent=0 // loop_footer_branch
    %6 = sbr.rel target = $region3
  $region8: #{semantic_mapping_forward.7} parent=0 // loop_exit
    _

// kernel: semantic_mapping_forward.6
$region0: #{semantic_mapping_forward.6}
  #allocation0 [shape = 'u32[]', space=smem, size = 0x4, offset = 0x4, fixed_abs, tag = 'smem constant byte address 0x4 - core index']
  #allocation1 [shape = 'u32[72,128]{1,0:T(1,128)}', space=vmem, size = 0x9000, scoped, tag = 'internal scratch']
  %s0 = inlined_call_operand.vmem [shape: f32[2,5,256], index: 0, kind: input, shape index: {}]
  %s1 = inlined_call_operand.vmem [shape: s32[2,8,256], index: 1, kind: input, shape index: {}]
  %s2 = inlined_call_operand.vmem [shape: f32[2,8,256], index: 2, kind: input, shape index: {}]
  %s3 = inlined_call_operand.vmem [shape: f32[2,5,3072], index: 3, kind: output, shape index: {}]
  %s4 = sld [smem:[#allocation0]]
  $region53: #{semantic_mapping_forward.6} parent=0
    _
  %s6 = ssub.s32 1, %s4
  %s7 = scalar_select 0, %s6, %s4
  loop: start=0, step=1, limit=26
  $region2: #{semantic_mapping_forward.6} parent=0 // loop_pre_header
    _
  $region3: #{semantic_mapping_forward.6} parent=0 // loop_header
    %s9 = sphi 0, %s13
    %p10 = scmp.ge.s32.totalorder %s9, 26
    %s16 = sphi 0, %s35
    %s17 = sphi 0, %s31
    %s18 = sphi 0, %s27
    %s19 = sphi 0, %s16
    %s20 = sphi 0, %s17
    %s21 = sphi 0, %s18
    %s22 = sphi 0, %s19
    %s23 = sphi 0, %s20
    %s24 = sphi 0, %s21
    %s40 = sphi 0, %s42
    %s43 = sphi 0, %s40
    %s44 = sphi 0, %s43
    %s60 = sphi 0, %s44
    %s68 = sphi 0, %s70
    %s71 = sphi 0, %s68
    %s72 = sphi 0, %s71
    %s88 = sphi 0, %s72
    %s96 = sphi 0, %s98
    %s99 = sphi 0, %s96
    %s100 = sphi 0, %s99
    %s116 = sphi 0, %s100
    %s124 = sphi 0, %s126
    %s127 = sphi 0, %s124
    %s128 = sphi 0, %s127
    %s144 = sphi 0, %s128
  $region4: #{semantic_mapping_forward.6} parent=0 // loop_header_branch
    %12 = sbr.rel (%p10) target = $region8
  $region5: #{semantic_mapping_forward.6} parent=0 // loop_body
    %s14 = ssub.s32 %s9, 1
    %s15 = ssub.s32 %s9, 2
    %s25 = sadd.s32 1, %s18
    %p26 = scmp.ge.s32.totalorder %s25, 1
    %s27 = scalar_select %p26, 0, %s25
    %s28 = sadd.s32 1, %s17
    %s29 = scalar_select %p26, %s28, %s17
    %p30 = scmp.ge.s32.totalorder %s29, 12
    %s31 = scalar_select %p30, 0, %s29
    %s32 = sadd.s32 1, %s16
    %s33 = scalar_select %p30, %s32, %s16
    %p34 = scmp.ge.s32.totalorder %s33, 2
    %s35 = scalar_select %p34, 0, %s33
    %s36 = ssub.s32 %s16, %s35
    %s37 = ssub.s32 %s18, %s27
    %s38 = sor.u32 %s36, %s37
    %p39 = scmp.eq.s32.totalorder %s38, 0
    %s41 = sadd.s32 %s40, 1
    %s42 = scalar_select %p39, %s40, %s41
    %p45 = pneg %p39
    %p46 = scmp.eq.s32.totalorder %s9, 23
    %p47 = por %p45, %p46
    %p48 = scmp.ne.s32.totalorder %s40, %s43
    %p49 = scmp.eq.s32.totalorder %s9, 0
    %p50 = por %p48, %p49
    %p51 = scmp.ne.s32.totalorder %s40, %s43
    %p52 = scmp.eq.s32.totalorder %s14, 23
    %p53 = por %p51, %p52
    %p54 = scmp.ne.s32.totalorder %s43, %s44
    %p55 = scmp.eq.s32.totalorder %s14, 0
    %p56 = por %p54, %p55
    %p57 = scmp.ne.s32.totalorder %s43, %s44
    %p58 = scmp.eq.s32.totalorder %s15, 23
    %p59 = por %p57, %p58
    %p61 = scmp.ne.s32.totalorder %s44, %s60
    %p62 = scmp.eq.s32.totalorder %s15, 0
    %p63 = por %p61, %p62
    %s64 = ssub.s32 %s16, %s35
    %s65 = ssub.s32 %s18, %s27
    %s66 = sor.u32 %s64, %s65
    %p67 = scmp.eq.s32.totalorder %s66, 0
    %s69 = sadd.s32 %s68, 1
    %s70 = scalar_select %p67, %s68, %s69
    %p73 = pneg %p67
    %p74 = scmp.eq.s32.totalorder %s9, 23
    %p75 = por %p73, %p74
    %p76 = scmp.ne.s32.totalorder %s68, %s71
    %p77 = scmp.eq.s32.totalorder %s9, 0
    %p78 = por %p76, %p77
    %p79 = scmp.ne.s32.totalorder %s68, %s71
    %p80 = scmp.eq.s32.totalorder %s14, 23
    %p81 = por %p79, %p80
    %p82 = scmp.ne.s32.totalorder %s71, %s72
    %p83 = scmp.eq.s32.totalorder %s14, 0
    %p84 = por %p82, %p83
    %p85 = scmp.ne.s32.totalorder %s71, %s72
    %p86 = scmp.eq.s32.totalorder %s15, 23
    %p87 = por %p85, %p86
    %p89 = scmp.ne.s32.totalorder %s72, %s88
    %p90 = scmp.eq.s32.totalorder %s15, 0
    %p91 = por %p89, %p90
    %s92 = ssub.s32 %s16, %s35
    %s93 = ssub.s32 %s18, %s27
    %s94 = sor.u32 %s92, %s93
    %p95 = scmp.eq.s32.totalorder %s94, 0
    %s97 = sadd.s32 %s96, 1
    %s98 = scalar_select %p95, %s96, %s97
    %p101 = pneg %p95
    %p102 = scmp.eq.s32.totalorder %s9, 23
    %p103 = por %p101, %p102
    %p104 = scmp.ne.s32.totalorder %s96, %s99
    %p105 = scmp.eq.s32.totalorder %s9, 0
    %p106 = por %p104, %p105
    %p107 = scmp.ne.s32.totalorder %s96, %s99
    %p108 = scmp.eq.s32.totalorder %s14, 23
    %p109 = por %p107, %p108
    %p110 = scmp.ne.s32.totalorder %s99, %s100
    %p111 = scmp.eq.s32.totalorder %s14, 0
    %p112 = por %p110, %p111
    %p113 = scmp.ne.s32.totalorder %s99, %s100
    %p114 = scmp.eq.s32.totalorder %s15, 23
    %p115 = por %p113, %p114
    %p117 = scmp.ne.s32.totalorder %s100, %s116
    %p118 = scmp.eq.s32.totalorder %s15, 0
    %p119 = por %p117, %p118
    %s120 = ssub.s32 %s16, %s35
    %s121 = ssub.s32 %s17, %s31
    %s122 = sor.u32 %s120, %s121
    %p123 = scmp.eq.s32.totalorder %s122, 0
    %s125 = sadd.s32 %s124, 1
    %s126 = scalar_select %p123, %s124, %s125
    %p129 = pneg %p123
    %p130 = scmp.eq.s32.totalorder %s9, 23
    %p131 = por %p129, %p130
    %p132 = scmp.ne.s32.totalorder %s124, %s127
    %p133 = scmp.eq.s32.totalorder %s9, 0
    %p134 = por %p132, %p133
    %p135 = scmp.ne.s32.totalorder %s124, %s127
    %p136 = scmp.eq.s32.totalorder %s14, 23
    %p137 = por %p135, %p136
    %p138 = scmp.ne.s32.totalorder %s127, %s128
    %p139 = scmp.eq.s32.totalorder %s14, 0
    %p140 = por %p138, %p139
    %p141 = scmp.ne.s32.totalorder %s127, %s128
    %p142 = scmp.eq.s32.totalorder %s15, 23
    %p143 = por %p141, %p142
    %p145 = scmp.ne.s32.totalorder %s128, %s144
    %p146 = scmp.eq.s32.totalorder %s15, 0
    %p147 = por %p145, %p146
    %p148 = scmp.le.s32.totalorder 1, %s9
    %p149 = scmp.lt.s32.totalorder %s9, 25
    %p150 = pnand %p148, %p149
    %p151 = pneg %p150
    // Predicated region
    $region9: #{semantic_mapping_forward.6} parent=5 // pred_check
      _
    $region10: #{semantic_mapping_forward.6} parent=5 // pred_check_branch
      %153 = sbr.rel (%p150) target = $region12
    $region11: #{semantic_mapping_forward.6} parent=5 // pred_region
      %s154 = ssub.s32 %s9, 1
    $region12: #{semantic_mapping_forward.6} parent=5 // pred_fallthru
      _
    %p155 = scmp.lt.s32.totalorder %s9, 24
    // Predicated region
    $region13: #{semantic_mapping_forward.6} parent=5 // pred_check
      %p156 = pneg %p155
    $region14: #{semantic_mapping_forward.6} parent=5 // pred_check_branch
      %158 = sbr.rel (%p156) target = $region16
    $region15: #{semantic_mapping_forward.6} parent=5 // pred_region
      // Predicated region
      $region17: #{semantic_mapping_forward.6} parent=15 // pred_check
        %p159 = pneg %p50
      $region18: #{semantic_mapping_forward.6} parent=15 // pred_check_branch
        %161 = sbr.rel (%p159) target = $region20
      $region19: #{semantic_mapping_forward.6} parent=15 // pred_region
        %s162 = smul.u32 2, %s18
        %p163 = scmp.lt.s32.totalorder %s16, 1
        %s164 = scalar_select %p163, %s16, 1
        %p165 = scmp.lt.s32.totalorder %s162, 1
        %s166 = scalar_select %p165, %s162, 1
        %s167 = smul.addr %s164, 2
        %s168 = sadd.s32 %s166, %s167
        %s169 = smul.addr %s168, 8
        %s170 = scalar_lea.vmem %s0, %s169
        %s171 = smul.u32 2, %s18
      $region20: #{semantic_mapping_forward.6} parent=15 // pred_fallthru
        _
      // Predicated region
      $region21: #{semantic_mapping_forward.6} parent=15 // pred_check
        %p172 = pneg %p78
      $region22: #{semantic_mapping_forward.6} parent=15 // pred_check_branch
        %174 = sbr.rel (%p172) target = $region24
      $region23: #{semantic_mapping_forward.6} parent=15 // pred_region
        %s175 = smul.u32 2, %s18
        %p176 = scmp.lt.s32.totalorder %s16, 1
        %s177 = scalar_select %p176, %s16, 1
        %p178 = scmp.lt.s32.totalorder %s175, 1
        %s179 = scalar_select %p178, %s175, 1
        %s180 = smul.addr %s177, 2
        %s181 = sadd.s32 %s179, %s180
        %s182 = smul.addr %s181, 8
        %s183 = scalar_lea.vmem %s1, %s182
        %s184 = smul.u32 2, %s18
      $region24: #{semantic_mapping_forward.6} parent=15 // pred_fallthru
        _
      // Predicated region
      $region25: #{semantic_mapping_forward.6} parent=15 // pred_check
        %p185 = pneg %p106
      $region26: #{semantic_mapping_forward.6} parent=15 // pred_check_branch
        %187 = sbr.rel (%p185) target = $region28
      $region27: #{semantic_mapping_forward.6} parent=15 // pred_region
        %s188 = smul.u32 2, %s18
        %p189 = scmp.lt.s32.totalorder %s16, 1
        %s190 = scalar_select %p189, %s16, 1
        %p191 = scmp.lt.s32.totalorder %s188, 1
        %s192 = scalar_select %p191, %s188, 1
        %s193 = smul.addr %s190, 2
        %s194 = sadd.s32 %s192, %s193
        %s195 = smul.addr %s194, 8
        %s196 = scalar_lea.vmem %s2, %s195
        %s197 = smul.u32 2, %s18
      $region28: #{semantic_mapping_forward.6} parent=15 // pred_fallthru
        _
    $region16: #{semantic_mapping_forward.6} parent=5 // pred_fallthru
      _
    %p198 = scmp.le.s32.totalorder 1, %s9
    %p199 = scmp.lt.s32.totalorder %s9, 25
    %p200 = pnand %p198, %p199
    %p201 = pneg %p200
    // Predicated region
    $region29: #{semantic_mapping_forward.6} parent=5 // pred_check
      _
    $region30: #{semantic_mapping_forward.6} parent=5 // pred_check_branch
      %203 = sbr.rel (%p200) target = $region32
    $region31: #{semantic_mapping_forward.6} parent=5 // pred_region
      %s204 = ssub.s32 %s9, 1
      %s205 = smul.u32 2, %s21
      %p206 = scmp.lt.s32.totalorder %s19, 1
      %s207 = scalar_select %p206, %s19, 1
      %p208 = scmp.lt.s32.totalorder %s205, 1
      %s209 = scalar_select %p208, %s205, 1
      %s210 = smul.addr %s207, 2
      %s211 = sadd.s32 %s209, %s210
      %s212 = smul.addr %s211, 8
      %s213 = scalar_lea.vmem %s0, %s212
      %p214 = pneg %p56
      %p215 = pneg %p53
      %s216 = smul.u32 2, %s21
      %p217 = scmp.lt.s32.totalorder %s19, 1
      %s218 = scalar_select %p217, %s19, 1
      %p219 = scmp.lt.s32.totalorder %s216, 1
      %s220 = scalar_select %p219, %s216, 1
      %s221 = smul.addr %s218, 2
      %s222 = sadd.s32 %s220, %s221
      %s223 = smul.addr %s222, 8
      %s224 = scalar_lea.vmem %s1, %s223
      %p225 = pneg %p84
      %p226 = pneg %p81
      %s227 = smul.u32 2, %s21
      %p228 = scmp.lt.s32.totalorder %s19, 1
      %s229 = scalar_select %p228, %s19, 1
      %p230 = scmp.lt.s32.totalorder %s227, 1
      %s231 = scalar_select %p230, %s227, 1
      %s232 = smul.addr %s229, 2
      %s233 = sadd.s32 %s231, %s232
      %s234 = smul.addr %s233, 8
      %s235 = scalar_lea.vmem %s2, %s234
      %p236 = pneg %p112
      %p237 = pneg %p109
      %p238 = pneg %p140
      %p239 = pneg %p137
      %s240 = smul.u32 2, %s20
      %p241 = scmp.lt.s32.totalorder %s19, 1
      %s242 = scalar_select %p241, %s19, 1
      %p243 = scmp.lt.s32.totalorder %s240, 23
      %s244 = scalar_select %p243, %s240, 23
      %s245 = smul.addr %s242, 24
      %s246 = sadd.s32 %s244, %s245
      %s247 = smul.addr %s246, 8
      %s248 = scalar_lea.vmem %s3, %s247
      %s249 = smul.u32 2, %s21
      %p250 = scmp.lt.s32.totalorder %s19, 1
      %s251 = scalar_select %p250, %s19, 1
      %p252 = scmp.lt.s32.totalorder %s249, 1
      %s253 = scalar_select %p252, %s249, 1
      %s254 = smul.addr %s251, 2
      %s255 = sadd.s32 %s253, %s254
      %s256 = smul.addr %s255, 8
      %s257 = scalar_lea.vmem %s0, %s256
      %s258 = smul.u32 2, %s21
      %s259 = smul.u32 2, %s21
      %p260 = scmp.lt.s32.totalorder %s19, 1
      %s261 = scalar_select %p260, %s19, 1
      %p262 = scmp.lt.s32.totalorder %s259, 1
      %s263 = scalar_select %p262, %s259, 1
      %s264 = smul.addr %s261, 2
      %s265 = sadd.s32 %s263, %s264
      %s266 = smul.addr %s265, 8
      %s267 = scalar_lea.vmem %s1, %s266
      %s268 = smul.u32 2, %s21
      %s269 = smul.u32 2, %s21
      %p270 = scmp.lt.s32.totalorder %s19, 1
      %s271 = scalar_select %p270, %s19, 1
      %p272 = scmp.lt.s32.totalorder %s269, 1
      %s273 = scalar_select %p272, %s269, 1
      %s274 = smul.addr %s271, 2
      %s275 = sadd.s32 %s273, %s274
      %s276 = smul.addr %s275, 8
      %s277 = scalar_lea.vmem %s2, %s276
      %s278 = smul.u32 2, %s21
      %s279 = smul.u32 2, %s20
      %p280 = scmp.lt.s32.totalorder %s19, 1
      %s281 = scalar_select %p280, %s19, 1
      %p282 = scmp.lt.s32.totalorder %s279, 23
      %s283 = scalar_select %p282, %s279, 23
      %s284 = smul.addr %s281, 24
      %s285 = sadd.s32 %s283, %s284
      %s286 = smul.addr %s285, 8
      %s287 = scalar_lea.vmem %s3, %s286
      %s288 = smul.u32 2, %s20
      %s289 = smul.u32 %s20, 256
      %p290 = scmp.eq.s32.totalorder %s21, 0
      // Predicated region
      $region33: #{semantic_mapping_forward.6} parent=31 // pred_check
        %p291 = pneg %p290
      $region34: #{semantic_mapping_forward.6} parent=31 // pred_check_branch
        %293 = sbr.rel (%p291) target = $region36
      $region35: #{semantic_mapping_forward.6} parent=31 // pred_region
        %294 = vst [vmem:[%s287] sm:$0x1f] 0.0
        %295 = vst [vmem:[%s287 + $0x8] sm:$0x1f] 0.0
      $region36: #{semantic_mapping_forward.6} parent=31 // pred_fallthru
        _
      %v296 = vlaneseq
      %v297 = vshrl.u32 %v296, 7
      %v298 = vadd.s32 %v297, 8
      %v299 = vadd.s32 %v297, 16
      %v300 = vadd.s32 %v297, 24
      %v301 = vadd.s32 %v297, 32
      %v302 = vadd.s32 %v297, 40
      %v303 = vadd.s32 %v297, 48
      %v304 = vadd.s32 %v297, 56
      %v305 = vadd.s32 %v297, 64
      %v306 = vadd.s32 %v297, 72
      %v307 = vadd.s32 %v297, 80
      %v308 = vadd.s32 %v297, 88
      %v309 = vadd.s32 %v297, 96
      %v310 = vadd.s32 %v297, 104
      %v311 = vadd.s32 %v297, 112
      %v312 = vadd.s32 %v297, 120
      %v313 = vadd.s32 %v297, 128
      %v314 = vadd.s32 %v297, 136
      %v315 = vadd.s32 %v297, 144
      %v316 = vadd.s32 %v297, 152
      %v317 = vadd.s32 %v297, 160
      %v318 = vadd.s32 %v297, 168
      %v319 = vadd.s32 %v297, 176
      %v320 = vadd.s32 %v297, 184
      %v321 = vadd.s32 %v297, 192
      %v322 = vadd.s32 %v297, 200
      %v323 = vadd.s32 %v297, 208
      %v324 = vadd.s32 %v297, 216
      %v325 = vadd.s32 %v297, 224
      %v326 = vadd.s32 %v297, 232
      %v327 = vadd.s32 %v297, 240
      %v328 = vadd.s32 %v297, 248
      %v329 = vld [vmem:[%s267] ss:$8 sm:$0x3]
      %v330 = vstv %s289
      %v331 = vsub.s32 %v329, %v330
      %v332 = vld [vmem:[%s277] ss:$8 sm:$0x3]
      %v333 = vperm.slane %v331, 0
      %v334 = vperm.slane %v331, 1
      %vm335 = vcmp.eq.s32.totalorder %v297, %v333
      %vm336 = vcmp.eq.s32.totalorder %v297, %v334
      %vm337 = vcmp.eq.s32.totalorder %v298, %v333
      %vm338 = vcmp.eq.s32.totalorder %v298, %v334
      %vm339 = vcmp.eq.s32.totalorder %v299, %v333
      %vm340 = vcmp.eq.s32.totalorder %v299, %v334
      %vm341 = vcmp.eq.s32.totalorder %v300, %v333
      %vm342 = vcmp.eq.s32.totalorder %v300, %v334
      %vm343 = vcmp.eq.s32.totalorder %v301, %v333
      %vm344 = vcmp.eq.s32.totalorder %v301, %v334
      %vm345 = vcmp.eq.s32.totalorder %v302, %v333
      %vm346 = vcmp.eq.s32.totalorder %v302, %v334
      %vm347 = vcmp.eq.s32.totalorder %v303, %v333
      %vm348 = vcmp.eq.s32.totalorder %v303, %v334
      %vm349 = vcmp.eq.s32.totalorder %v304, %v333
      %vm350 = vcmp.eq.s32.totalorder %v304, %v334
      %vm351 = vcmp.eq.s32.totalorder %v305, %v333
      %vm352 = vcmp.eq.s32.totalorder %v305, %v334
      %vm353 = vcmp.eq.s32.totalorder %v306, %v333
      %vm354 = vcmp.eq.s32.totalorder %v306, %v334
      %vm355 = vcmp.eq.s32.totalorder %v307, %v333
      %vm356 = vcmp.eq.s32.totalorder %v307, %v334
      %vm357 = vcmp.eq.s32.totalorder %v308, %v333
      %vm358 = vcmp.eq.s32.totalorder %v308, %v334
      %vm359 = vcmp.eq.s32.totalorder %v309, %v333
      %vm360 = vcmp.eq.s32.totalorder %v309, %v334
      %vm361 = vcmp.eq.s32.totalorder %v310, %v333
      %vm362 = vcmp.eq.s32.totalorder %v310, %v334
      %vm363 = vcmp.eq.s32.totalorder %v311, %v333
      %vm364 = vcmp.eq.s32.totalorder %v311, %v334
      %vm365 = vcmp.eq.s32.totalorder %v312, %v333
      %vm366 = vcmp.eq.s32.totalorder %v312, %v334
      %vm367 = vcmp.eq.s32.totalorder %v313, %v333
      %vm368 = vcmp.eq.s32.totalorder %v313, %v334
      %vm369 = vcmp.eq.s32.totalorder %v314, %v333
      %vm370 = vcmp.eq.s32.totalorder %v314, %v334
      %vm371 = vcmp.eq.s32.totalorder %v315, %v333
      %vm372 = vcmp.eq.s32.totalorder %v315, %v334
      %vm373 = vcmp.eq.s32.totalorder %v316, %v333
      %vm374 = vcmp.eq.s32.totalorder %v316, %v334
      %vm375 = vcmp.eq.s32.totalorder %v317, %v333
      %vm376 = vcmp.eq.s32.totalorder %v317, %v334
      %vm377 = vcmp.eq.s32.totalorder %v318, %v333
      %vm378 = vcmp.eq.s32.totalorder %v318, %v334
      %vm379 = vcmp.eq.s32.totalorder %v319, %v333
      %vm380 = vcmp.eq.s32.totalorder %v319, %v334
      %vm381 = vcmp.eq.s32.totalorder %v320, %v333
      %vm382 = vcmp.eq.s32.totalorder %v320, %v334
      %vm383 = vcmp.eq.s32.totalorder %v321, %v333
      %vm384 = vcmp.eq.s32.totalorder %v321, %v334
      %vm385 = vcmp.eq.s32.totalorder %v322, %v333
      %vm386 = vcmp.eq.s32.totalorder %v322, %v334
      %vm387 = vcmp.eq.s32.totalorder %v323, %v333
      %vm388 = vcmp.eq.s32.totalorder %v323, %v334
      %vm389 = vcmp.eq.s32.totalorder %v324, %v333
      %vm390 = vcmp.eq.s32.totalorder %v324, %v334
      %vm391 = vcmp.eq.s32.totalorder %v325, %v333
      %vm392 = vcmp.eq.s32.totalorder %v325, %v334
      %vm393 = vcmp.eq.s32.totalorder %v326, %v333
      %vm394 = vcmp.eq.s32.totalorder %v326, %v334
      %vm395 = vcmp.eq.s32.totalorder %v327, %v333
      %vm396 = vcmp.eq.s32.totalorder %v327, %v334
      %vm397 = vcmp.eq.s32.totalorder %v328, %v333
      %vm398 = vcmp.eq.s32.totalorder %v328, %v334
      %v400 = vperm.slane %v332, 0
      %v401 = vperm.slane %v332, 1
      %v404 = vsel %vm335, %v400, 0.0
      %v405 = vsel %vm336, %v401, 0.0
      %v406 = vsel %vm337, %v400, 0.0
      %v407 = vsel %vm338, %v401, 0.0
      %v408 = vsel %vm339, %v400, 0.0
      %v409 = vsel %vm340, %v401, 0.0
      %v410 = vsel %vm341, %v400, 0.0
      %v411 = vsel %vm342, %v401, 0.0
      %v412 = vsel %vm343, %v400, 0.0
      %v413 = vsel %vm344, %v401, 0.0
      %v414 = vsel %vm345, %v400, 0.0
      %v415 = vsel %vm346, %v401, 0.0
      %v416 = vsel %vm347, %v400, 0.0
      %v417 = vsel %vm348, %v401, 0.0
      %v418 = vsel %vm349, %v400, 0.0
      %v419 = vsel %vm350, %v401, 0.0
      %v420 = vsel %vm351, %v400, 0.0
      %v421 = vsel %vm352, %v401, 0.0
      %v422 = vsel %vm353, %v400, 0.0
      %v423 = vsel %vm354, %v401, 0.0
      %v424 = vsel %vm355, %v400, 0.0
      %v425 = vsel %vm356, %v401, 0.0
      %v426 = vsel %vm357, %v400, 0.0
      %v427 = vsel %vm358, %v401, 0.0
      %v428 = vsel %vm359, %v400, 0.0
      %v429 = vsel %vm360, %v401, 0.0
      %v430 = vsel %vm361, %v400, 0.0
      %v431 = vsel %vm362, %v401, 0.0
      %v432 = vsel %vm363, %v400, 0.0
      %v433 = vsel %vm364, %v401, 0.0
      %v434 = vsel %vm365, %v400, 0.0
      %v435 = vsel %vm366, %v401, 0.0
      %v436 = vsel %vm367, %v400, 0.0
      %v437 = vsel %vm368, %v401, 0.0
      %v438 = vsel %vm369, %v400, 0.0
      %v439 = vsel %vm370, %v401, 0.0
      %v440 = vsel %vm371, %v400, 0.0
      %v441 = vsel %vm372, %v401, 0.0
      %v442 = vsel %vm373, %v400, 0.0
      %v443 = vsel %vm374, %v401, 0.0
      %v444 = vsel %vm375, %v400, 0.0
      %v445 = vsel %vm376, %v401, 0.0
      %v446 = vsel %vm377, %v400, 0.0
      %v447 = vsel %vm378, %v401, 0.0
      %v448 = vsel %vm379, %v400, 0.0
      %v449 = vsel %vm380, %v401, 0.0
      %v450 = vsel %vm381, %v400, 0.0
      %v451 = vsel %vm382, %v401, 0.0
      %v452 = vsel %vm383, %v400, 0.0
      %v453 = vsel %vm384, %v401, 0.0
      %v454 = vsel %vm385, %v400, 0.0
      %v455 = vsel %vm386, %v401, 0.0
      %v456 = vsel %vm387, %v400, 0.0
      %v457 = vsel %vm388, %v401, 0.0
      %v458 = vsel %vm389, %v400, 0.0
      %v459 = vsel %vm390, %v401, 0.0
      %v460 = vsel %vm391, %v400, 0.0
      %v461 = vsel %vm392, %v401, 0.0
      %v462 = vsel %vm393, %v400, 0.0
      %v463 = vsel %vm394, %v401, 0.0
      %v464 = vsel %vm395, %v400, 0.0
      %v465 = vsel %vm396, %v401, 0.0
      %v466 = vsel %vm397, %v400, 0.0
      %v467 = vsel %vm398, %v401, 0.0
      %v468 = vadd.f32 %v404, 0.0
      %v469 = vadd.f32 %v405, 0.0
      %v470 = vadd.f32 %v406, 0.0
      %v471 = vadd.f32 %v407, 0.0
      %v472 = vadd.f32 %v408, 0.0
      %v473 = vadd.f32 %v409, 0.0
      %v474 = vadd.f32 %v410, 0.0
      %v475 = vadd.f32 %v411, 0.0
      %v476 = vadd.f32 %v412, 0.0
      %v477 = vadd.f32 %v413, 0.0
      %v478 = vadd.f32 %v414, 0.0
      %v479 = vadd.f32 %v415, 0.0
      %v480 = vadd.f32 %v416, 0.0
      %v481 = vadd.f32 %v417, 0.0
      %v482 = vadd.f32 %v418, 0.0
      %v483 = vadd.f32 %v419, 0.0
      %v484 = vadd.f32 %v420, 0.0
      %v485 = vadd.f32 %v421, 0.0
      %v486 = vadd.f32 %v422, 0.0
      %v487 = vadd.f32 %v423, 0.0
      %v488 = vadd.f32 %v424, 0.0
      %v489 = vadd.f32 %v425, 0.0
      %v490 = vadd.f32 %v426, 0.0
      %v491 = vadd.f32 %v427, 0.0
      %v492 = vadd.f32 %v428, 0.0
      %v493 = vadd.f32 %v429, 0.0
      %v494 = vadd.f32 %v430, 0.0
      %v495 = vadd.f32 %v431, 0.0
      %v496 = vadd.f32 %v432, 0.0
      %v497 = vadd.f32 %v433, 0.0
      %v498 = vadd.f32 %v434, 0.0
      %v499 = vadd.f32 %v435, 0.0
      %v500 = vadd.f32 %v436, 0.0
      %v501 = vadd.f32 %v437, 0.0
      %v502 = vadd.f32 %v438, 0.0
      %v503 = vadd.f32 %v439, 0.0
      %v504 = vadd.f32 %v440, 0.0
      %v505 = vadd.f32 %v441, 0.0
      %v506 = vadd.f32 %v442, 0.0
      %v507 = vadd.f32 %v443, 0.0
      %v508 = vadd.f32 %v444, 0.0
      %v509 = vadd.f32 %v445, 0.0
      %v510 = vadd.f32 %v446, 0.0
      %v511 = vadd.f32 %v447, 0.0
      %v512 = vadd.f32 %v448, 0.0
      %v513 = vadd.f32 %v449, 0.0
      %v514 = vadd.f32 %v450, 0.0
      %v515 = vadd.f32 %v451, 0.0
      %v516 = vadd.f32 %v452, 0.0
      %v517 = vadd.f32 %v453, 0.0
      %v518 = vadd.f32 %v454, 0.0
      %v519 = vadd.f32 %v455, 0.0
      %v520 = vadd.f32 %v456, 0.0
      %v521 = vadd.f32 %v457, 0.0
      %v522 = vadd.f32 %v458, 0.0
      %v523 = vadd.f32 %v459, 0.0
      %v524 = vadd.f32 %v460, 0.0
      %v525 = vadd.f32 %v461, 0.0
      %v526 = vadd.f32 %v462, 0.0
      %v527 = vadd.f32 %v463, 0.0
      %v528 = vadd.f32 %v464, 0.0
      %v529 = vadd.f32 %v465, 0.0
      %v530 = vadd.f32 %v466, 0.0
      %v531 = vadd.f32 %v467, 0.0
      %s532 = scalar_lea.vmem %s267, 1
      %v533 = vld [vmem:[%s532] ss:$8 sm:$0x3]
      %v534 = vsub.s32 %v533, %v330
      %s535 = scalar_lea.vmem %s277, 1
      %v536 = vld [vmem:[%s535] ss:$8 sm:$0x3]
      %v537 = vperm.slane %v534, 0
      %v538 = vperm.slane %v534, 1
      %vm539 = vcmp.eq.s32.totalorder %v297, %v537
      %vm540 = vcmp.eq.s32.totalorder %v297, %v538
      %vm541 = vcmp.eq.s32.totalorder %v298, %v537
      %vm542 = vcmp.eq.s32.totalorder %v298, %v538
      %vm543 = vcmp.eq.s32.totalorder %v299, %v537
      %vm544 = vcmp.eq.s32.totalorder %v299, %v538
      %vm545 = vcmp.eq.s32.totalorder %v300, %v537
      %vm546 = vcmp.eq.s32.totalorder %v300, %v538
      %vm547 = vcmp.eq.s32.totalorder %v301, %v537
      %vm548 = vcmp.eq.s32.totalorder %v301, %v538
      %vm549 = vcmp.eq.s32.totalorder %v302, %v537
      %vm550 = vcmp.eq.s32.totalorder %v302, %v538
      %vm551 = vcmp.eq.s32.totalorder %v303, %v537
      %vm552 = vcmp.eq.s32.totalorder %v303, %v538
      %vm553 = vcmp.eq.s32.totalorder %v304, %v537
      %vm554 = vcmp.eq.s32.totalorder %v304, %v538
      %vm555 = vcmp.eq.s32.totalorder %v305, %v537
      %vm556 = vcmp.eq.s32.totalorder %v305, %v538
      %vm557 = vcmp.eq.s32.totalorder %v306, %v537
      %vm558 = vcmp.eq.s32.totalorder %v306, %v538
      %vm559 = vcmp.eq.s32.totalorder %v307, %v537
      %vm560 = vcmp.eq.s32.totalorder %v307, %v538
      %vm561 = vcmp.eq.s32.totalorder %v308, %v537
      %vm562 = vcmp.eq.s32.totalorder %v308, %v538
      %vm563 = vcmp.eq.s32.totalorder %v309, %v537
      %vm564 = vcmp.eq.s32.totalorder %v309, %v538
      %vm565 = vcmp.eq.s32.totalorder %v310, %v537
      %vm566 = vcmp.eq.s32.totalorder %v310, %v538
      %vm567 = vcmp.eq.s32.totalorder %v311, %v537
      %vm568 = vcmp.eq.s32.totalorder %v311, %v538
      %vm569 = vcmp.eq.s32.totalorder %v312, %v537
      %vm570 = vcmp.eq.s32.totalorder %v312, %v538
      %vm571 = vcmp.eq.s32.totalorder %v313, %v537
      %vm572 = vcmp.eq.s32.totalorder %v313, %v538
      %vm573 = vcmp.eq.s32.totalorder %v314, %v537
      %vm574 = vcmp.eq.s32.totalorder %v314, %v538
      %vm575 = vcmp.eq.s32.totalorder %v315, %v537
      %vm576 = vcmp.eq.s32.totalorder %v315, %v538
      %vm577 = vcmp.eq.s32.totalorder %v316, %v537
      %vm578 = vcmp.eq.s32.totalorder %v316, %v538
      %vm579 = vcmp.eq.s32.totalorder %v317, %v537
      %vm580 = vcmp.eq.s32.totalorder %v317, %v538
      %vm581 = vcmp.eq.s32.totalorder %v318, %v537
      %vm582 = vcmp.eq.s32.totalorder %v318, %v538
      %vm583 = vcmp.eq.s32.totalorder %v319, %v537
      %vm584 = vcmp.eq.s32.totalorder %v319, %v538
      %vm585 = vcmp.eq.s32.totalorder %v320, %v537
      %vm586 = vcmp.eq.s32.totalorder %v320, %v538
      %vm587 = vcmp.eq.s32.totalorder %v321, %v537
      %vm588 = vcmp.eq.s32.totalorder %v321, %v538
      %vm589 = vcmp.eq.s32.totalorder %v322, %v537
      %vm590 = vcmp.eq.s32.totalorder %v322, %v538
      %vm591 = vcmp.eq.s32.totalorder %v323, %v537
      %vm592 = vcmp.eq.s32.totalorder %v323, %v538
      %vm593 = vcmp.eq.s32.totalorder %v324, %v537
      %vm594 = vcmp.eq.s32.totalorder %v324, %v538
      %vm595 = vcmp.eq.s32.totalorder %v325, %v537
      %vm596 = vcmp.eq.s32.totalorder %v325, %v538
      %vm597 = vcmp.eq.s32.totalorder %v326, %v537
      %vm598 = vcmp.eq.s32.totalorder %v326, %v538
      %vm599 = vcmp.eq.s32.totalorder %v327, %v537
      %vm600 = vcmp.eq.s32.totalorder %v327, %v538
      %vm601 = vcmp.eq.s32.totalorder %v328, %v537
      %vm602 = vcmp.eq.s32.totalorder %v328, %v538
      %v604 = vperm.slane %v536, 0
      %v605 = vperm.slane %v536, 1
      %v608 = vsel %vm539, %v604, 0.0
      %v609 = vsel %vm540, %v605, 0.0
      %v610 = vsel %vm541, %v604, 0.0
      %v611 = vsel %vm542, %v605, 0.0
      %v612 = vsel %vm543, %v604, 0.0
      %v613 = vsel %vm544, %v605, 0.0
      %v614 = vsel %vm545, %v604, 0.0
      %v615 = vsel %vm546, %v605, 0.0
      %v616 = vsel %vm547, %v604, 0.0
      %v617 = vsel %vm548, %v605, 0.0
      %v618 = vsel %vm549, %v604, 0.0
      %v619 = vsel %vm550, %v605, 0.0
      %v620 = vsel %vm551, %v604, 0.0
      %v621 = vsel %vm552, %v605, 0.0
      %v622 = vsel %vm553, %v604, 0.0
      %v623 = vsel %vm554, %v605, 0.0
      %v624 = vsel %vm555, %v604, 0.0
      %v625 = vsel %vm556, %v605, 0.0
      %v626 = vsel %vm557, %v604, 0.0
      %v627 = vsel %vm558, %v605, 0.0
      %v628 = vsel %vm559, %v604, 0.0
      %v629 = vsel %vm560, %v605, 0.0
      %v630 = vsel %vm561, %v604, 0.0
      %v631 = vsel %vm562, %v605, 0.0
      %v632 = vsel %vm563, %v604, 0.0
      %v633 = vsel %vm564, %v605, 0.0
      %v634 = vsel %vm565, %v604, 0.0
      %v635 = vsel %vm566, %v605, 0.0
      %v636 = vsel %vm567, %v604, 0.0
      %v637 = vsel %vm568, %v605, 0.0
      %v638 = vsel %vm569, %v604, 0.0
      %v639 = vsel %vm570, %v605, 0.0
      %v640 = vsel %vm571, %v604, 0.0
      %v641 = vsel %vm572, %v605, 0.0
      %v642 = vsel %vm573, %v604, 0.0
      %v643 = vsel %vm574, %v605, 0.0
      %v644 = vsel %vm575, %v604, 0.0
      %v645 = vsel %vm576, %v605, 0.0
      %v646 = vsel %vm577, %v604, 0.0
      %v647 = vsel %vm578, %v605, 0.0
      %v648 = vsel %vm579, %v604, 0.0
      %v649 = vsel %vm580, %v605, 0.0
      %v650 = vsel %vm581, %v604, 0.0
      %v651 = vsel %vm582, %v605, 0.0
      %v652 = vsel %vm583, %v604, 0.0
      %v653 = vsel %vm584, %v605, 0.0
      %v654 = vsel %vm585, %v604, 0.0
      %v655 = vsel %vm586, %v605, 0.0
      %v656 = vsel %vm587, %v604, 0.0
      %v657 = vsel %vm588, %v605, 0.0
      %v658 = vsel %vm589, %v604, 0.0
      %v659 = vsel %vm590, %v605, 0.0
      %v660 = vsel %vm591, %v604, 0.0
      %v661 = vsel %vm592, %v605, 0.0
      %v662 = vsel %vm593, %v604, 0.0
      %v663 = vsel %vm594, %v605, 0.0
      %v664 = vsel %vm595, %v604, 0.0
      %v665 = vsel %vm596, %v605, 0.0
      %v666 = vsel %vm597, %v604, 0.0
      %v667 = vsel %vm598, %v605, 0.0
      %v668 = vsel %vm599, %v604, 0.0
      %v669 = vsel %vm600, %v605, 0.0
      %v670 = vsel %vm601, %v604, 0.0
      %v671 = vsel %vm602, %v605, 0.0
      %v672 = vadd.f32 %v468, %v608
      %v673 = vadd.f32 %v469, %v609
      %v674 = vadd.f32 %v470, %v610
      %v675 = vadd.f32 %v471, %v611
      %v676 = vadd.f32 %v472, %v612
      %v677 = vadd.f32 %v473, %v613
      %v678 = vadd.f32 %v474, %v614
      %v679 = vadd.f32 %v475, %v615
      %v680 = vadd.f32 %v476, %v616
      %v681 = vadd.f32 %v477, %v617
      %v682 = vadd.f32 %v478, %v618
      %v683 = vadd.f32 %v479, %v619
      %v684 = vadd.f32 %v480, %v620
      %v685 = vadd.f32 %v481, %v621
      %v686 = vadd.f32 %v482, %v622
      %v687 = vadd.f32 %v483, %v623
      %v688 = vadd.f32 %v484, %v624
      %v689 = vadd.f32 %v485, %v625
      %v690 = vadd.f32 %v486, %v626
      %v691 = vadd.f32 %v487, %v627
      %v692 = vadd.f32 %v488, %v628
      %v693 = vadd.f32 %v489, %v629
      %v694 = vadd.f32 %v490, %v630
      %v695 = vadd.f32 %v491, %v631
      %v696 = vadd.f32 %v492, %v632
      %v697 = vadd.f32 %v493, %v633
      %v698 = vadd.f32 %v494, %v634
      %v699 = vadd.f32 %v495, %v635
      %v700 = vadd.f32 %v496, %v636
      %v701 = vadd.f32 %v497, %v637
      %v702 = vadd.f32 %v498, %v638
      %v703 = vadd.f32 %v499, %v639
      %v704 = vadd.f32 %v500, %v640
      %v705 = vadd.f32 %v501, %v641
      %v706 = vadd.f32 %v502, %v642
      %v707 = vadd.f32 %v503, %v643
      %v708 = vadd.f32 %v504, %v644
      %v709 = vadd.f32 %v505, %v645
      %v710 = vadd.f32 %v506, %v646
      %v711 = vadd.f32 %v507, %v647
      %v712 = vadd.f32 %v508, %v648
      %v713 = vadd.f32 %v509, %v649
      %v714 = vadd.f32 %v510, %v650
      %v715 = vadd.f32 %v511, %v651
      %v716 = vadd.f32 %v512, %v652
      %v717 = vadd.f32 %v513, %v653
      %v718 = vadd.f32 %v514, %v654
      %v719 = vadd.f32 %v515, %v655
      %v720 = vadd.f32 %v516, %v656
      %v721 = vadd.f32 %v517, %v657
      %v722 = vadd.f32 %v518, %v658
      %v723 = vadd.f32 %v519, %v659
      %v724 = vadd.f32 %v520, %v660
      %v725 = vadd.f32 %v521, %v661
      %v726 = vadd.f32 %v522, %v662
      %v727 = vadd.f32 %v523, %v663
      %v728 = vadd.f32 %v524, %v664
      %v729 = vadd.f32 %v525, %v665
      %v730 = vadd.f32 %v526, %v666
      %v731 = vadd.f32 %v527, %v667
      %v732 = vadd.f32 %v528, %v668
      %v733 = vadd.f32 %v529, %v669
      %v734 = vadd.f32 %v530, %v670
      %v735 = vadd.f32 %v531, %v671
      %s736 = scalar_lea.vmem %s267, 2
      %v737 = vld [vmem:[%s736] ss:$8 sm:$0x3]
      %v738 = vsub.s32 %v737, %v330
      %s739 = scalar_lea.vmem %s277, 2
      %v740 = vld [vmem:[%s739] ss:$8 sm:$0x3]
      %v741 = vperm.slane %v738, 0
      %v742 = vperm.slane %v738, 1
      %vm743 = vcmp.eq.s32.totalorder %v297, %v741
      %vm744 = vcmp.eq.s32.totalorder %v297, %v742
      %vm745 = vcmp.eq.s32.totalorder %v298, %v741
      %vm746 = vcmp.eq.s32.totalorder %v298, %v742
      %vm747 = vcmp.eq.s32.totalorder %v299, %v741
      %vm748 = vcmp.eq.s32.totalorder %v299, %v742
      %vm749 = vcmp.eq.s32.totalorder %v300, %v741
      %vm750 = vcmp.eq.s32.totalorder %v300, %v742
      %vm751 = vcmp.eq.s32.totalorder %v301, %v741
      %vm752 = vcmp.eq.s32.totalorder %v301, %v742
      %vm753 = vcmp.eq.s32.totalorder %v302, %v741
      %vm754 = vcmp.eq.s32.totalorder %v302, %v742
      %vm755 = vcmp.eq.s32.totalorder %v303, %v741
      %vm756 = vcmp.eq.s32.totalorder %v303, %v742
      %vm757 = vcmp.eq.s32.totalorder %v304, %v741
      %vm758 = vcmp.eq.s32.totalorder %v304, %v742
      %vm759 = vcmp.eq.s32.totalorder %v305, %v741
      %vm760 = vcmp.eq.s32.totalorder %v305, %v742
      %vm761 = vcmp.eq.s32.totalorder %v306, %v741
      %vm762 = vcmp.eq.s32.totalorder %v306, %v742
      %vm763 = vcmp.eq.s32.totalorder %v307, %v741
      %vm764 = vcmp.eq.s32.totalorder %v307, %v742
      %vm765 = vcmp.eq.s32.totalorder %v308, %v741
      %vm766 = vcmp.eq.s32.totalorder %v308, %v742
      %vm767 = vcmp.eq.s32.totalorder %v309, %v741
      %vm768 = vcmp.eq.s32.totalorder %v309, %v742
      %vm769 = vcmp.eq.s32.totalorder %v310, %v741
      %vm770 = vcmp.eq.s32.totalorder %v310, %v742
      %vm771 = vcmp.eq.s32.totalorder %v311, %v741
      %vm772 = vcmp.eq.s32.totalorder %v311, %v742
      %vm773 = vcmp.eq.s32.totalorder %v312, %v741
      %vm774 = vcmp.eq.s32.totalorder %v312, %v742
      %vm775 = vcmp.eq.s32.totalorder %v313, %v741
      %vm776 = vcmp.eq.s32.totalorder %v313, %v742
      %vm777 = vcmp.eq.s32.totalorder %v314, %v741
      %vm778 = vcmp.eq.s32.totalorder %v314, %v742
      %vm779 = vcmp.eq.s32.totalorder %v315, %v741
      %vm780 = vcmp.eq.s32.totalorder %v315, %v742
      %vm781 = vcmp.eq.s32.totalorder %v316, %v741
      %vm782 = vcmp.eq.s32.totalorder %v316, %v742
      %vm783 = vcmp.eq.s32.totalorder %v317, %v741
      %vm784 = vcmp.eq.s32.totalorder %v317, %v742
      %vm785 = vcmp.eq.s32.totalorder %v318, %v741
      %vm786 = vcmp.eq.s32.totalorder %v318, %v742
      %vm787 = vcmp.eq.s32.totalorder %v319, %v741
      %vm788 = vcmp.eq.s32.totalorder %v319, %v742
      %vm789 = vcmp.eq.s32.totalorder %v320, %v741
      %vm790 = vcmp.eq.s32.totalorder %v320, %v742
      %vm791 = vcmp.eq.s32.totalorder %v321, %v741
      %vm792 = vcmp.eq.s32.totalorder %v321, %v742
      %vm793 = vcmp.eq.s32.totalorder %v322, %v741
      %vm794 = vcmp.eq.s32.totalorder %v322, %v742
      %vm795 = vcmp.eq.s32.totalorder %v323, %v741
      %vm796 = vcmp.eq.s32.totalorder %v323, %v742
      %vm797 = vcmp.eq.s32.totalorder %v324, %v741
      %vm798 = vcmp.eq.s32.totalorder %v324, %v742
      %vm799 = vcmp.eq.s32.totalorder %v325, %v741
      %vm800 = vcmp.eq.s32.totalorder %v325, %v742
      %vm801 = vcmp.eq.s32.totalorder %v326, %v741
      %vm802 = vcmp.eq.s32.totalorder %v326, %v742
      %vm803 = vcmp.eq.s32.totalorder %v327, %v741
      %vm804 = vcmp.eq.s32.totalorder %v327, %v742
      %vm805 = vcmp.eq.s32.totalorder %v328, %v741
      %vm806 = vcmp.eq.s32.totalorder %v328, %v742
      %v808 = vperm.slane %v740, 0
      %v809 = vperm.slane %v740, 1
      %v812 = vsel %vm743, %v808, 0.0
      %v813 = vsel %vm744, %v809, 0.0
      %v814 = vsel %vm745, %v808, 0.0
      %v815 = vsel %vm746, %v809, 0.0
      %v816 = vsel %vm747, %v808, 0.0
      %v817 = vsel %vm748, %v809, 0.0
      %v818 = vsel %vm749, %v808, 0.0
      %v819 = vsel %vm750, %v809, 0.0
      %v820 = vsel %vm751, %v808, 0.0
      %v821 = vsel %vm752, %v809, 0.0
      %v822 = vsel %vm753, %v808, 0.0
      %v823 = vsel %vm754, %v809, 0.0
      %v824 = vsel %vm755, %v808, 0.0
      %v825 = vsel %vm756, %v809, 0.0
      %v826 = vsel %vm757, %v808, 0.0
      %v827 = vsel %vm758, %v809, 0.0
      %v828 = vsel %vm759, %v808, 0.0
      %v829 = vsel %vm760, %v809, 0.0
      %v830 = vsel %vm761, %v808, 0.0
      %v831 = vsel %vm762, %v809, 0.0
      %v832 = vsel %vm763, %v808, 0.0
      %v833 = vsel %vm764, %v809, 0.0
      %v834 = vsel %vm765, %v808, 0.0
      %v835 = vsel %vm766, %v809, 0.0
      %v836 = vsel %vm767, %v808, 0.0
      %v837 = vsel %vm768, %v809, 0.0
      %v838 = vsel %vm769, %v808, 0.0
      %v839 = vsel %vm770, %v809, 0.0
      %v840 = vsel %vm771, %v808, 0.0
      %v841 = vsel %vm772, %v809, 0.0
      %v842 = vsel %vm773, %v808, 0.0
      %v843 = vsel %vm774, %v809, 0.0
      %v844 = vsel %vm775, %v808, 0.0
      %v845 = vsel %vm776, %v809, 0.0
      %v846 = vsel %vm777, %v808, 0.0
      %v847 = vsel %vm778, %v809, 0.0
      %v848 = vsel %vm779, %v808, 0.0
      %v849 = vsel %vm780, %v809, 0.0
      %v850 = vsel %vm781, %v808, 0.0
      %v851 = vsel %vm782, %v809, 0.0
      %v852 = vsel %vm783, %v808, 0.0
      %v853 = vsel %vm784, %v809, 0.0
      %v854 = vsel %vm785, %v808, 0.0
      %v855 = vsel %vm786, %v809, 0.0
      %v856 = vsel %vm787, %v808, 0.0
      %v857 = vsel %vm788, %v809, 0.0
      %v858 = vsel %vm789, %v808, 0.0
      %v859 = vsel %vm790, %v809, 0.0
      %v860 = vsel %vm791, %v808, 0.0
      %v861 = vsel %vm792, %v809, 0.0
      %v862 = vsel %vm793, %v808, 0.0
      %v863 = vsel %vm794, %v809, 0.0
      %v864 = vsel %vm795, %v808, 0.0
      %v865 = vsel %vm796, %v809, 0.0
      %v866 = vsel %vm797, %v808, 0.0
      %v867 = vsel %vm798, %v809, 0.0
      %v868 = vsel %vm799, %v808, 0.0
      %v869 = vsel %vm800, %v809, 0.0
      %v870 = vsel %vm801, %v808, 0.0
      %v871 = vsel %vm802, %v809, 0.0
      %v872 = vsel %vm803, %v808, 0.0
      %v873 = vsel %vm804, %v809, 0.0
      %v874 = vsel %vm805, %v808, 0.0
      %v875 = vsel %vm806, %v809, 0.0
      %v876 = vadd.f32 %v672, %v812
      %v877 = vadd.f32 %v673, %v813
      %v878 = vadd.f32 %v674, %v814
      %v879 = vadd.f32 %v675, %v815
      %v880 = vadd.f32 %v676, %v816
      %v881 = vadd.f32 %v677, %v817
      %v882 = vadd.f32 %v678, %v818
      %v883 = vadd.f32 %v679, %v819
      %v884 = vadd.f32 %v680, %v820
      %v885 = vadd.f32 %v681, %v821
      %v886 = vadd.f32 %v682, %v822
      %v887 = vadd.f32 %v683, %v823
      %v888 = vadd.f32 %v684, %v824
      %v889 = vadd.f32 %v685, %v825
      %v890 = vadd.f32 %v686, %v826
      %v891 = vadd.f32 %v687, %v827
      %v892 = vadd.f32 %v688, %v828
      %v893 = vadd.f32 %v689, %v829
      %v894 = vadd.f32 %v690, %v830
      %v895 = vadd.f32 %v691, %v831
      %v896 = vadd.f32 %v692, %v832
      %v897 = vadd.f32 %v693, %v833
      %v898 = vadd.f32 %v694, %v834
      %v899 = vadd.f32 %v695, %v835
      %v900 = vadd.f32 %v696, %v836
      %v901 = vadd.f32 %v697, %v837
      %v902 = vadd.f32 %v698, %v838
      %v903 = vadd.f32 %v699, %v839
      %v904 = vadd.f32 %v700, %v840
      %v905 = vadd.f32 %v701, %v841
      %v906 = vadd.f32 %v702, %v842
      %v907 = vadd.f32 %v703, %v843
      %v908 = vadd.f32 %v704, %v844
      %v909 = vadd.f32 %v705, %v845
      %v910 = vadd.f32 %v706, %v846
      %v911 = vadd.f32 %v707, %v847
      %v912 = vadd.f32 %v708, %v848
      %v913 = vadd.f32 %v709, %v849
      %v914 = vadd.f32 %v710, %v850
      %v915 = vadd.f32 %v711, %v851
      %v916 = vadd.f32 %v712, %v852
      %v917 = vadd.f32 %v713, %v853
      %v918 = vadd.f32 %v714, %v854
      %v919 = vadd.f32 %v715, %v855
      %v920 = vadd.f32 %v716, %v856
      %v921 = vadd.f32 %v717, %v857
      %v922 = vadd.f32 %v718, %v858
      %v923 = vadd.f32 %v719, %v859
      %v924 = vadd.f32 %v720, %v860
      %v925 = vadd.f32 %v721, %v861
      %v926 = vadd.f32 %v722, %v862
      %v927 = vadd.f32 %v723, %v863
      %v928 = vadd.f32 %v724, %v864
      %v929 = vadd.f32 %v725, %v865
      %v930 = vadd.f32 %v726, %v866
      %v931 = vadd.f32 %v727, %v867
      %v932 = vadd.f32 %v728, %v868
      %v933 = vadd.f32 %v729, %v869
      %v934 = vadd.f32 %v730, %v870
      %v935 = vadd.f32 %v731, %v871
      %v936 = vadd.f32 %v732, %v872
      %v937 = vadd.f32 %v733, %v873
      %v938 = vadd.f32 %v734, %v874
      %v939 = vadd.f32 %v735, %v875
      %s940 = scalar_lea.vmem %s267, 3
      %v941 = vld [vmem:[%s940] ss:$8 sm:$0x3]
      %v942 = vsub.s32 %v941, %v330
      %s943 = scalar_lea.vmem %s277, 3
      %v944 = vld [vmem:[%s943] ss:$8 sm:$0x3]
      %v945 = vperm.slane %v942, 0
      %v946 = vperm.slane %v942, 1
      %vm947 = vcmp.eq.s32.totalorder %v297, %v945
      %vm948 = vcmp.eq.s32.totalorder %v297, %v946
      %vm949 = vcmp.eq.s32.totalorder %v298, %v945
      %vm950 = vcmp.eq.s32.totalorder %v298, %v946
      %vm951 = vcmp.eq.s32.totalorder %v299, %v945
      %vm952 = vcmp.eq.s32.totalorder %v299, %v946
      %vm953 = vcmp.eq.s32.totalorder %v300, %v945
      %vm954 = vcmp.eq.s32.totalorder %v300, %v946
      %vm955 = vcmp.eq.s32.totalorder %v301, %v945
      %vm956 = vcmp.eq.s32.totalorder %v301, %v946
      %vm957 = vcmp.eq.s32.totalorder %v302, %v945
      %vm958 = vcmp.eq.s32.totalorder %v302, %v946
      %vm959 = vcmp.eq.s32.totalorder %v303, %v945
      %vm960 = vcmp.eq.s32.totalorder %v303, %v946
      %vm961 = vcmp.eq.s32.totalorder %v304, %v945
      %vm962 = vcmp.eq.s32.totalorder %v304, %v946
      %vm963 = vcmp.eq.s32.totalorder %v305, %v945
      %vm964 = vcmp.eq.s32.totalorder %v305, %v946
      %vm965 = vcmp.eq.s32.totalorder %v306, %v945
      %vm966 = vcmp.eq.s32.totalorder %v306, %v946
      %vm967 = vcmp.eq.s32.totalorder %v307, %v945
      %vm968 = vcmp.eq.s32.totalorder %v307, %v946
      %vm969 = vcmp.eq.s32.totalorder %v308, %v945
      %vm970 = vcmp.eq.s32.totalorder %v308, %v946
      %vm971 = vcmp.eq.s32.totalorder %v309, %v945
      %vm972 = vcmp.eq.s32.totalorder %v309, %v946
      %vm973 = vcmp.eq.s32.totalorder %v310, %v945
      %vm974 = vcmp.eq.s32.totalorder %v310, %v946
      %vm975 = vcmp.eq.s32.totalorder %v311, %v945
      %vm976 = vcmp.eq.s32.totalorder %v311, %v946
      %vm977 = vcmp.eq.s32.totalorder %v312, %v945
      %vm978 = vcmp.eq.s32.totalorder %v312, %v946
      %vm979 = vcmp.eq.s32.totalorder %v313, %v945
      %vm980 = vcmp.eq.s32.totalorder %v313, %v946
      %vm981 = vcmp.eq.s32.totalorder %v314, %v945
      %vm982 = vcmp.eq.s32.totalorder %v314, %v946
      %vm983 = vcmp.eq.s32.totalorder %v315, %v945
      %vm984 = vcmp.eq.s32.totalorder %v315, %v946
      %vm985 = vcmp.eq.s32.totalorder %v316, %v945
      %vm986 = vcmp.eq.s32.totalorder %v316, %v946
      %vm987 = vcmp.eq.s32.totalorder %v317, %v945
      %vm988 = vcmp.eq.s32.totalorder %v317, %v946
      %vm989 = vcmp.eq.s32.totalorder %v318, %v945
      %vm990 = vcmp.eq.s32.totalorder %v318, %v946
      %vm991 = vcmp.eq.s32.totalorder %v319, %v945
      %vm992 = vcmp.eq.s32.totalorder %v319, %v946
      %vm993 = vcmp.eq.s32.totalorder %v320, %v945
      %vm994 = vcmp.eq.s32.totalorder %v320, %v946
      %vm995 = vcmp.eq.s32.totalorder %v321, %v945
      %vm996 = vcmp.eq.s32.totalorder %v321, %v946
      %vm997 = vcmp.eq.s32.totalorder %v322, %v945
      %vm998 = vcmp.eq.s32.totalorder %v322, %v946
      %vm999 = vcmp.eq.s32.totalorder %v323, %v945
      %vm1000 = vcmp.eq.s32.totalorder %v323, %v946
      %vm1001 = vcmp.eq.s32.totalorder %v324, %v945
      %vm1002 = vcmp.eq.s32.totalorder %v324, %v946
      %vm1003 = vcmp.eq.s32.totalorder %v325, %v945
      %vm1004 = vcmp.eq.s32.totalorder %v325, %v946
      %vm1005 = vcmp.eq.s32.totalorder %v326, %v945
      %vm1006 = vcmp.eq.s32.totalorder %v326, %v946
      %vm1007 = vcmp.eq.s32.totalorder %v327, %v945
      %vm1008 = vcmp.eq.s32.totalorder %v327, %v946
      %vm1009 = vcmp.eq.s32.totalorder %v328, %v945
      %vm1010 = vcmp.eq.s32.totalorder %v328, %v946
      %v1012 = vperm.slane %v944, 0
      %v1013 = vperm.slane %v944, 1
      %v1016 = vsel %vm947, %v1012, 0.0
      %v1017 = vsel %vm948, %v1013, 0.0
      %v1018 = vsel %vm949, %v1012, 0.0
      %v1019 = vsel %vm950, %v1013, 0.0
      %v1020 = vsel %vm951, %v1012, 0.0
      %v1021 = vsel %vm952, %v1013, 0.0
      %v1022 = vsel %vm953, %v1012, 0.0
      %v1023 = vsel %vm954, %v1013, 0.0
      %v1024 = vsel %vm955, %v1012, 0.0
      %v1025 = vsel %vm956, %v1013, 0.0
      %v1026 = vsel %vm957, %v1012, 0.0
      %v1027 = vsel %vm958, %v1013, 0.0
      %v1028 = vsel %vm959, %v1012, 0.0
      %v1029 = vsel %vm960, %v1013, 0.0
      %v1030 = vsel %vm961, %v1012, 0.0
      %v1031 = vsel %vm962, %v1013, 0.0
      %v1032 = vsel %vm963, %v1012, 0.0
      %v1033 = vsel %vm964, %v1013, 0.0
      %v1034 = vsel %vm965, %v1012, 0.0
      %v1035 = vsel %vm966, %v1013, 0.0
      %v1036 = vsel %vm967, %v1012, 0.0
      %v1037 = vsel %vm968, %v1013, 0.0
      %v1038 = vsel %vm969, %v1012, 0.0
      %v1039 = vsel %vm970, %v1013, 0.0
      %v1040 = vsel %vm971, %v1012, 0.0
      %v1041 = vsel %vm972, %v1013, 0.0
      %v1042 = vsel %vm973, %v1012, 0.0
      %v1043 = vsel %vm974, %v1013, 0.0
      %v1044 = vsel %vm975, %v1012, 0.0
      %v1045 = vsel %vm976, %v1013, 0.0
      %v1046 = vsel %vm977, %v1012, 0.0
      %v1047 = vsel %vm978, %v1013, 0.0
      %v1048 = vsel %vm979, %v1012, 0.0
      %v1049 = vsel %vm980, %v1013, 0.0
      %v1050 = vsel %vm981, %v1012, 0.0
      %v1051 = vsel %vm982, %v1013, 0.0
      %v1052 = vsel %vm983, %v1012, 0.0
      %v1053 = vsel %vm984, %v1013, 0.0
      %v1054 = vsel %vm985, %v1012, 0.0
      %v1055 = vsel %vm986, %v1013, 0.0
      %v1056 = vsel %vm987, %v1012, 0.0
      %v1057 = vsel %vm988, %v1013, 0.0
      %v1058 = vsel %vm989, %v1012, 0.0
      %v1059 = vsel %vm990, %v1013, 0.0
      %v1060 = vsel %vm991, %v1012, 0.0
      %v1061 = vsel %vm992, %v1013, 0.0
      %v1062 = vsel %vm993, %v1012, 0.0
      %v1063 = vsel %vm994, %v1013, 0.0
      %v1064 = vsel %vm995, %v1012, 0.0
      %v1065 = vsel %vm996, %v1013, 0.0
      %v1066 = vsel %vm997, %v1012, 0.0
      %v1067 = vsel %vm998, %v1013, 0.0
      %v1068 = vsel %vm999, %v1012, 0.0
      %v1069 = vsel %vm1000, %v1013, 0.0
      %v1070 = vsel %vm1001, %v1012, 0.0
      %v1071 = vsel %vm1002, %v1013, 0.0
      %v1072 = vsel %vm1003, %v1012, 0.0
      %v1073 = vsel %vm1004, %v1013, 0.0
      %v1074 = vsel %vm1005, %v1012, 0.0
      %v1075 = vsel %vm1006, %v1013, 0.0
      %v1076 = vsel %vm1007, %v1012, 0.0
      %v1077 = vsel %vm1008, %v1013, 0.0
      %v1078 = vsel %vm1009, %v1012, 0.0
      %v1079 = vsel %vm1010, %v1013, 0.0
      %v1080 = vadd.f32 %v876, %v1016
      %v1081 = vadd.f32 %v877, %v1017
      %v1082 = vadd.f32 %v878, %v1018
      %v1083 = vadd.f32 %v879, %v1019
      %v1084 = vadd.f32 %v880, %v1020
      %v1085 = vadd.f32 %v881, %v1021
      %v1086 = vadd.f32 %v882, %v1022
      %v1087 = vadd.f32 %v883, %v1023
      %v1088 = vadd.f32 %v884, %v1024
      %v1089 = vadd.f32 %v885, %v1025
      %v1090 = vadd.f32 %v886, %v1026
      %v1091 = vadd.f32 %v887, %v1027
      %v1092 = vadd.f32 %v888, %v1028
      %v1093 = vadd.f32 %v889, %v1029
      %v1094 = vadd.f32 %v890, %v1030
      %v1095 = vadd.f32 %v891, %v1031
      %v1096 = vadd.f32 %v892, %v1032
      %v1097 = vadd.f32 %v893, %v1033
      %v1098 = vadd.f32 %v894, %v1034
      %v1099 = vadd.f32 %v895, %v1035
      %v1100 = vadd.f32 %v896, %v1036
      %v1101 = vadd.f32 %v897, %v1037
      %v1102 = vadd.f32 %v898, %v1038
      %v1103 = vadd.f32 %v899, %v1039
      %v1104 = vadd.f32 %v900, %v1040
      %v1105 = vadd.f32 %v901, %v1041
      %v1106 = vadd.f32 %v902, %v1042
      %v1107 = vadd.f32 %v903, %v1043
      %v1108 = vadd.f32 %v904, %v1044
      %v1109 = vadd.f32 %v905, %v1045
      %v1110 = vadd.f32 %v906, %v1046
      %v1111 = vadd.f32 %v907, %v1047
      %v1112 = vadd.f32 %v908, %v1048
      %v1113 = vadd.f32 %v909, %v1049
      %v1114 = vadd.f32 %v910, %v1050
      %v1115 = vadd.f32 %v911, %v1051
      %v1116 = vadd.f32 %v912, %v1052
      %v1117 = vadd.f32 %v913, %v1053
      %v1118 = vadd.f32 %v914, %v1054
      %v1119 = vadd.f32 %v915, %v1055
      %v1120 = vadd.f32 %v916, %v1056
      %v1121 = vadd.f32 %v917, %v1057
      %v1122 = vadd.f32 %v918, %v1058
      %v1123 = vadd.f32 %v919, %v1059
      %v1124 = vadd.f32 %v920, %v1060
      %v1125 = vadd.f32 %v921, %v1061
      %v1126 = vadd.f32 %v922, %v1062
      %v1127 = vadd.f32 %v923, %v1063
      %v1128 = vadd.f32 %v924, %v1064
      %v1129 = vadd.f32 %v925, %v1065
      %v1130 = vadd.f32 %v926, %v1066
      %v1131 = vadd.f32 %v927, %v1067
      %v1132 = vadd.f32 %v928, %v1068
      %v1133 = vadd.f32 %v929, %v1069
      %v1134 = vadd.f32 %v930, %v1070
      %v1135 = vadd.f32 %v931, %v1071
      %v1136 = vadd.f32 %v932, %v1072
      %v1137 = vadd.f32 %v933, %v1073
      %v1138 = vadd.f32 %v934, %v1074
      %v1139 = vadd.f32 %v935, %v1075
      %v1140 = vadd.f32 %v936, %v1076
      %v1141 = vadd.f32 %v937, %v1077
      %v1142 = vadd.f32 %v938, %v1078
      %v1143 = vadd.f32 %v939, %v1079
      %s1144 = scalar_lea.vmem %s267, 4
      %v1145 = vld [vmem:[%s1144] ss:$8 sm:$0x3]
      %v1146 = vsub.s32 %v1145, %v330
      %s1147 = scalar_lea.vmem %s277, 4
      %v1148 = vld [vmem:[%s1147] ss:$8 sm:$0x3]
      %v1149 = vperm.slane %v1146, 0
      %v1150 = vperm.slane %v1146, 1
      %vm1151 = vcmp.eq.s32.totalorder %v297, %v1149
      %vm1152 = vcmp.eq.s32.totalorder %v297, %v1150
      %vm1153 = vcmp.eq.s32.totalorder %v298, %v1149
      %vm1154 = vcmp.eq.s32.totalorder %v298, %v1150
      %vm1155 = vcmp.eq.s32.totalorder %v299, %v1149
      %vm1156 = vcmp.eq.s32.totalorder %v299, %v1150
      %vm1157 = vcmp.eq.s32.totalorder %v300, %v1149
      %vm1158 = vcmp.eq.s32.totalorder %v300, %v1150
      %vm1159 = vcmp.eq.s32.totalorder %v301, %v1149
      %vm1160 = vcmp.eq.s32.totalorder %v301, %v1150
      %vm1161 = vcmp.eq.s32.totalorder %v302, %v1149
      %vm1162 = vcmp.eq.s32.totalorder %v302, %v1150
      %vm1163 = vcmp.eq.s32.totalorder %v303, %v1149
      %vm1164 = vcmp.eq.s32.totalorder %v303, %v1150
      %vm1165 = vcmp.eq.s32.totalorder %v304, %v1149
      %vm1166 = vcmp.eq.s32.totalorder %v304, %v1150
      %vm1167 = vcmp.eq.s32.totalorder %v305, %v1149
      %vm1168 = vcmp.eq.s32.totalorder %v305, %v1150
      %vm1169 = vcmp.eq.s32.totalorder %v306, %v1149
      %vm1170 = vcmp.eq.s32.totalorder %v306, %v1150
      %vm1171 = vcmp.eq.s32.totalorder %v307, %v1149
      %vm1172 = vcmp.eq.s32.totalorder %v307, %v1150
      %vm1173 = vcmp.eq.s32.totalorder %v308, %v1149
      %vm1174 = vcmp.eq.s32.totalorder %v308, %v1150
      %vm1175 = vcmp.eq.s32.totalorder %v309, %v1149
      %vm1176 = vcmp.eq.s32.totalorder %v309, %v1150
      %vm1177 = vcmp.eq.s32.totalorder %v310, %v1149
      %vm1178 = vcmp.eq.s32.totalorder %v310, %v1150
      %vm1179 = vcmp.eq.s32.totalorder %v311, %v1149
      %vm1180 = vcmp.eq.s32.totalorder %v311, %v1150
      %vm1181 = vcmp.eq.s32.totalorder %v312, %v1149
      %vm1182 = vcmp.eq.s32.totalorder %v312, %v1150
      %vm1183 = vcmp.eq.s32.totalorder %v313, %v1149
      %vm1184 = vcmp.eq.s32.totalorder %v313, %v1150
      %vm1185 = vcmp.eq.s32.totalorder %v314, %v1149
      %vm1186 = vcmp.eq.s32.totalorder %v314, %v1150
      %vm1187 = vcmp.eq.s32.totalorder %v315, %v1149
      %vm1188 = vcmp.eq.s32.totalorder %v315, %v1150
      %vm1189 = vcmp.eq.s32.totalorder %v316, %v1149
      %vm1190 = vcmp.eq.s32.totalorder %v316, %v1150
      %vm1191 = vcmp.eq.s32.totalorder %v317, %v1149
      %vm1192 = vcmp.eq.s32.totalorder %v317, %v1150
      %vm1193 = vcmp.eq.s32.totalorder %v318, %v1149
      %vm1194 = vcmp.eq.s32.totalorder %v318, %v1150
      %vm1195 = vcmp.eq.s32.totalorder %v319, %v1149
      %vm1196 = vcmp.eq.s32.totalorder %v319, %v1150
      %vm1197 = vcmp.eq.s32.totalorder %v320, %v1149
      %vm1198 = vcmp.eq.s32.totalorder %v320, %v1150
      %vm1199 = vcmp.eq.s32.totalorder %v321, %v1149
      %vm1200 = vcmp.eq.s32.totalorder %v321, %v1150
      %vm1201 = vcmp.eq.s32.totalorder %v322, %v1149
      %vm1202 = vcmp.eq.s32.totalorder %v322, %v1150
      %vm1203 = vcmp.eq.s32.totalorder %v323, %v1149
      %vm1204 = vcmp.eq.s32.totalorder %v323, %v1150
      %vm1205 = vcmp.eq.s32.totalorder %v324, %v1149
      %vm1206 = vcmp.eq.s32.totalorder %v324, %v1150
      %vm1207 = vcmp.eq.s32.totalorder %v325, %v1149
      %vm1208 = vcmp.eq.s32.totalorder %v325, %v1150
      %vm1209 = vcmp.eq.s32.totalorder %v326, %v1149
      %vm1210 = vcmp.eq.s32.totalorder %v326, %v1150
      %vm1211 = vcmp.eq.s32.totalorder %v327, %v1149
      %vm1212 = vcmp.eq.s32.totalorder %v327, %v1150
      %vm1213 = vcmp.eq.s32.totalorder %v328, %v1149
      %vm1214 = vcmp.eq.s32.totalorder %v328, %v1150
      %v1216 = vperm.slane %v1148, 0
      %v1217 = vperm.slane %v1148, 1
      %v1220 = vsel %vm1151, %v1216, 0.0
      %v1221 = vsel %vm1152, %v1217, 0.0
      %v1222 = vsel %vm1153, %v1216, 0.0
      %v1223 = vsel %vm1154, %v1217, 0.0
      %v1224 = vsel %vm1155, %v1216, 0.0
      %v1225 = vsel %vm1156, %v1217, 0.0
      %v1226 = vsel %vm1157, %v1216, 0.0
      %v1227 = vsel %vm1158, %v1217, 0.0
      %v1228 = vsel %vm1159, %v1216, 0.0
      %v1229 = vsel %vm1160, %v1217, 0.0
      %v1230 = vsel %vm1161, %v1216, 0.0
      %v1231 = vsel %vm1162, %v1217, 0.0
      %v1232 = vsel %vm1163, %v1216, 0.0
      %v1233 = vsel %vm1164, %v1217, 0.0
      %v1234 = vsel %vm1165, %v1216, 0.0
      %v1235 = vsel %vm1166, %v1217, 0.0
      %v1236 = vsel %vm1167, %v1216, 0.0
      %v1237 = vsel %vm1168, %v1217, 0.0
      %v1238 = vsel %vm1169, %v1216, 0.0
      %v1239 = vsel %vm1170, %v1217, 0.0
      %v1240 = vsel %vm1171, %v1216, 0.0
      %v1241 = vsel %vm1172, %v1217, 0.0
      %v1242 = vsel %vm1173, %v1216, 0.0
      %v1243 = vsel %vm1174, %v1217, 0.0
      %v1244 = vsel %vm1175, %v1216, 0.0
      %v1245 = vsel %vm1176, %v1217, 0.0
      %v1246 = vsel %vm1177, %v1216, 0.0
      %v1247 = vsel %vm1178, %v1217, 0.0
      %v1248 = vsel %vm1179, %v1216, 0.0
      %v1249 = vsel %vm1180, %v1217, 0.0
      %v1250 = vsel %vm1181, %v1216, 0.0
      %v1251 = vsel %vm1182, %v1217, 0.0
      %v1252 = vsel %vm1183, %v1216, 0.0
      %v1253 = vsel %vm1184, %v1217, 0.0
      %v1254 = vsel %vm1185, %v1216, 0.0
      %v1255 = vsel %vm1186, %v1217, 0.0
      %v1256 = vsel %vm1187, %v1216, 0.0
      %v1257 = vsel %vm1188, %v1217, 0.0
      %v1258 = vsel %vm1189, %v1216, 0.0
      %v1259 = vsel %vm1190, %v1217, 0.0
      %v1260 = vsel %vm1191, %v1216, 0.0
      %v1261 = vsel %vm1192, %v1217, 0.0
      %v1262 = vsel %vm1193, %v1216, 0.0
      %v1263 = vsel %vm1194, %v1217, 0.0
      %v1264 = vsel %vm1195, %v1216, 0.0
      %v1265 = vsel %vm1196, %v1217, 0.0
      %v1266 = vsel %vm1197, %v1216, 0.0
      %v1267 = vsel %vm1198, %v1217, 0.0
      %v1268 = vsel %vm1199, %v1216, 0.0
      %v1269 = vsel %vm1200, %v1217, 0.0
      %v1270 = vsel %vm1201, %v1216, 0.0
      %v1271 = vsel %vm1202, %v1217, 0.0
      %v1272 = vsel %vm1203, %v1216, 0.0
      %v1273 = vsel %vm1204, %v1217, 0.0
      %v1274 = vsel %vm1205, %v1216, 0.0
      %v1275 = vsel %vm1206, %v1217, 0.0
      %v1276 = vsel %vm1207, %v1216, 0.0
      %v1277 = vsel %vm1208, %v1217, 0.0
      %v1278 = vsel %vm1209, %v1216, 0.0
      %v1279 = vsel %vm1210, %v1217, 0.0
      %v1280 = vsel %vm1211, %v1216, 0.0
      %v1281 = vsel %vm1212, %v1217, 0.0
      %v1282 = vsel %vm1213, %v1216, 0.0
      %v1283 = vsel %vm1214, %v1217, 0.0
      %v1284 = vadd.f32 %v1080, %v1220
      %v1285 = vadd.f32 %v1081, %v1221
      %v1286 = vadd.f32 %v1082, %v1222
      %v1287 = vadd.f32 %v1083, %v1223
      %v1288 = vadd.f32 %v1084, %v1224
      %v1289 = vadd.f32 %v1085, %v1225
      %v1290 = vadd.f32 %v1086, %v1226
      %v1291 = vadd.f32 %v1087, %v1227
      %v1292 = vadd.f32 %v1088, %v1228
      %v1293 = vadd.f32 %v1089, %v1229
      %v1294 = vadd.f32 %v1090, %v1230
      %v1295 = vadd.f32 %v1091, %v1231
      %v1296 = vadd.f32 %v1092, %v1232
      %v1297 = vadd.f32 %v1093, %v1233
      %v1298 = vadd.f32 %v1094, %v1234
      %v1299 = vadd.f32 %v1095, %v1235
      %v1300 = vadd.f32 %v1096, %v1236
      %v1301 = vadd.f32 %v1097, %v1237
      %v1302 = vadd.f32 %v1098, %v1238
      %v1303 = vadd.f32 %v1099, %v1239
      %v1304 = vadd.f32 %v1100, %v1240
      %v1305 = vadd.f32 %v1101, %v1241
      %v1306 = vadd.f32 %v1102, %v1242
      %v1307 = vadd.f32 %v1103, %v1243
      %v1308 = vadd.f32 %v1104, %v1244
      %v1309 = vadd.f32 %v1105, %v1245
      %v1310 = vadd.f32 %v1106, %v1246
      %v1311 = vadd.f32 %v1107, %v1247
      %v1312 = vadd.f32 %v1108, %v1248
      %v1313 = vadd.f32 %v1109, %v1249
      %v1314 = vadd.f32 %v1110, %v1250
      %v1315 = vadd.f32 %v1111, %v1251
      %v1316 = vadd.f32 %v1112, %v1252
      %v1317 = vadd.f32 %v1113, %v1253
      %v1318 = vadd.f32 %v1114, %v1254
      %v1319 = vadd.f32 %v1115, %v1255
      %v1320 = vadd.f32 %v1116, %v1256
      %v1321 = vadd.f32 %v1117, %v1257
      %v1322 = vadd.f32 %v1118, %v1258
      %v1323 = vadd.f32 %v1119, %v1259
      %v1324 = vadd.f32 %v1120, %v1260
      %v1325 = vadd.f32 %v1121, %v1261
      %v1326 = vadd.f32 %v1122, %v1262
      %v1327 = vadd.f32 %v1123, %v1263
      %v1328 = vadd.f32 %v1124, %v1264
      %v1329 = vadd.f32 %v1125, %v1265
      %v1330 = vadd.f32 %v1126, %v1266
      %v1331 = vadd.f32 %v1127, %v1267
      %v1332 = vadd.f32 %v1128, %v1268
      %v1333 = vadd.f32 %v1129, %v1269
      %v1334 = vadd.f32 %v1130, %v1270
      %v1335 = vadd.f32 %v1131, %v1271
      %v1336 = vadd.f32 %v1132, %v1272
      %v1337 = vadd.f32 %v1133, %v1273
      %v1338 = vadd.f32 %v1134, %v1274
      %v1339 = vadd.f32 %v1135, %v1275
      %v1340 = vadd.f32 %v1136, %v1276
      %v1341 = vadd.f32 %v1137, %v1277
      %v1342 = vadd.f32 %v1138, %v1278
      %v1343 = vadd.f32 %v1139, %v1279
      %v1344 = vadd.f32 %v1140, %v1280
      %v1345 = vadd.f32 %v1141, %v1281
      %v1346 = vadd.f32 %v1142, %v1282
      %v1347 = vadd.f32 %v1143, %v1283
      %s1348 = scalar_lea.vmem %s267, 5
      %v1349 = vld [vmem:[%s1348] ss:$8 sm:$0x3]
      %v1350 = vsub.s32 %v1349, %v330
      %s1351 = scalar_lea.vmem %s277, 5
      %v1352 = vld [vmem:[%s1351] ss:$8 sm:$0x3]
      %v1353 = vperm.slane %v1350, 0
      %v1354 = vperm.slane %v1350, 1
      %vm1355 = vcmp.eq.s32.totalorder %v297, %v1353
      %vm1356 = vcmp.eq.s32.totalorder %v297, %v1354
      %vm1357 = vcmp.eq.s32.totalorder %v298, %v1353
      %vm1358 = vcmp.eq.s32.totalorder %v298, %v1354
      %vm1359 = vcmp.eq.s32.totalorder %v299, %v1353
      %vm1360 = vcmp.eq.s32.totalorder %v299, %v1354
      %vm1361 = vcmp.eq.s32.totalorder %v300, %v1353
      %vm1362 = vcmp.eq.s32.totalorder %v300, %v1354
      %vm1363 = vcmp.eq.s32.totalorder %v301, %v1353
      %vm1364 = vcmp.eq.s32.totalorder %v301, %v1354
      %vm1365 = vcmp.eq.s32.totalorder %v302, %v1353
      %vm1366 = vcmp.eq.s32.totalorder %v302, %v1354
      %vm1367 = vcmp.eq.s32.totalorder %v303, %v1353
      %vm1368 = vcmp.eq.s32.totalorder %v303, %v1354
      %vm1369 = vcmp.eq.s32.totalorder %v304, %v1353
      %vm1370 = vcmp.eq.s32.totalorder %v304, %v1354
      %vm1371 = vcmp.eq.s32.totalorder %v305, %v1353
      %vm1372 = vcmp.eq.s32.totalorder %v305, %v1354
      %vm1373 = vcmp.eq.s32.totalorder %v306, %v1353
      %vm1374 = vcmp.eq.s32.totalorder %v306, %v1354
      %vm1375 = vcmp.eq.s32.totalorder %v307, %v1353
      %vm1376 = vcmp.eq.s32.totalorder %v307, %v1354
      %vm1377 = vcmp.eq.s32.totalorder %v308, %v1353
      %vm1378 = vcmp.eq.s32.totalorder %v308, %v1354
      %vm1379 = vcmp.eq.s32.totalorder %v309, %v1353
      %vm1380 = vcmp.eq.s32.totalorder %v309, %v1354
      %vm1381 = vcmp.eq.s32.totalorder %v310, %v1353
      %vm1382 = vcmp.eq.s32.totalorder %v310, %v1354
      %vm1383 = vcmp.eq.s32.totalorder %v311, %v1353
      %vm1384 = vcmp.eq.s32.totalorder %v311, %v1354
      %vm1385 = vcmp.eq.s32.totalorder %v312, %v1353
      %vm1386 = vcmp.eq.s32.totalorder %v312, %v1354
      %vm1387 = vcmp.eq.s32.totalorder %v313, %v1353
      %vm1388 = vcmp.eq.s32.totalorder %v313, %v1354
      %vm1389 = vcmp.eq.s32.totalorder %v314, %v1353
      %vm1390 = vcmp.eq.s32.totalorder %v314, %v1354
      %vm1391 = vcmp.eq.s32.totalorder %v315, %v1353
      %vm1392 = vcmp.eq.s32.totalorder %v315, %v1354
      %vm1393 = vcmp.eq.s32.totalorder %v316, %v1353
      %vm1394 = vcmp.eq.s32.totalorder %v316, %v1354
      %vm1395 = vcmp.eq.s32.totalorder %v317, %v1353
      %vm1396 = vcmp.eq.s32.totalorder %v317, %v1354
      %vm1397 = vcmp.eq.s32.totalorder %v318, %v1353
      %vm1398 = vcmp.eq.s32.totalorder %v318, %v1354
      %vm1399 = vcmp.eq.s32.totalorder %v319, %v1353
      %vm1400 = vcmp.eq.s32.totalorder %v319, %v1354
      %vm1401 = vcmp.eq.s32.totalorder %v320, %v1353
      %vm1402 = vcmp.eq.s32.totalorder %v320, %v1354
      %vm1403 = vcmp.eq.s32.totalorder %v321, %v1353
      %vm1404 = vcmp.eq.s32.totalorder %v321, %v1354
      %vm1405 = vcmp.eq.s32.totalorder %v322, %v1353
      %vm1406 = vcmp.eq.s32.totalorder %v322, %v1354
      %vm1407 = vcmp.eq.s32.totalorder %v323, %v1353
      %vm1408 = vcmp.eq.s32.totalorder %v323, %v1354
      %vm1409 = vcmp.eq.s32.totalorder %v324, %v1353
      %vm1410 = vcmp.eq.s32.totalorder %v324, %v1354
      %vm1411 = vcmp.eq.s32.totalorder %v325, %v1353
      %vm1412 = vcmp.eq.s32.totalorder %v325, %v1354
      %vm1413 = vcmp.eq.s32.totalorder %v326, %v1353
      %vm1414 = vcmp.eq.s32.totalorder %v326, %v1354
      %vm1415 = vcmp.eq.s32.totalorder %v327, %v1353
      %vm1416 = vcmp.eq.s32.totalorder %v327, %v1354
      %vm1417 = vcmp.eq.s32.totalorder %v328, %v1353
      %vm1418 = vcmp.eq.s32.totalorder %v328, %v1354
      %v1420 = vperm.slane %v1352, 0
      %v1421 = vperm.slane %v1352, 1
      %v1424 = vsel %vm1355, %v1420, 0.0
      %v1425 = vsel %vm1356, %v1421, 0.0
      %v1426 = vsel %vm1357, %v1420, 0.0
      %v1427 = vsel %vm1358, %v1421, 0.0
      %v1428 = vsel %vm1359, %v1420, 0.0
      %v1429 = vsel %vm1360, %v1421, 0.0
      %v1430 = vsel %vm1361, %v1420, 0.0
      %v1431 = vsel %vm1362, %v1421, 0.0
      %v1432 = vsel %vm1363, %v1420, 0.0
      %v1433 = vsel %vm1364, %v1421, 0.0
      %v1434 = vsel %vm1365, %v1420, 0.0
      %v1435 = vsel %vm1366, %v1421, 0.0
      %v1436 = vsel %vm1367, %v1420, 0.0
      %v1437 = vsel %vm1368, %v1421, 0.0
      %v1438 = vsel %vm1369, %v1420, 0.0
      %v1439 = vsel %vm1370, %v1421, 0.0
      %v1440 = vsel %vm1371, %v1420, 0.0
      %v1441 = vsel %vm1372, %v1421, 0.0
      %v1442 = vsel %vm1373, %v1420, 0.0
      %v1443 = vsel %vm1374, %v1421, 0.0
      %v1444 = vsel %vm1375, %v1420, 0.0
      %v1445 = vsel %vm1376, %v1421, 0.0
      %v1446 = vsel %vm1377, %v1420, 0.0
      %v1447 = vsel %vm1378, %v1421, 0.0
      %v1448 = vsel %vm1379, %v1420, 0.0
      %v1449 = vsel %vm1380, %v1421, 0.0
      %v1450 = vsel %vm1381, %v1420, 0.0
      %v1451 = vsel %vm1382, %v1421, 0.0
      %v1452 = vsel %vm1383, %v1420, 0.0
      %v1453 = vsel %vm1384, %v1421, 0.0
      %v1454 = vsel %vm1385, %v1420, 0.0
      %v1455 = vsel %vm1386, %v1421, 0.0
      %v1456 = vsel %vm1387, %v1420, 0.0
      %v1457 = vsel %vm1388, %v1421, 0.0
      %v1458 = vsel %vm1389, %v1420, 0.0
      %v1459 = vsel %vm1390, %v1421, 0.0
      %v1460 = vsel %vm1391, %v1420, 0.0
      %v1461 = vsel %vm1392, %v1421, 0.0
      %v1462 = vsel %vm1393, %v1420, 0.0
      %v1463 = vsel %vm1394, %v1421, 0.0
      %v1464 = vsel %vm1395, %v1420, 0.0
      %v1465 = vsel %vm1396, %v1421, 0.0
      %v1466 = vsel %vm1397, %v1420, 0.0
      %v1467 = vsel %vm1398, %v1421, 0.0
      %v1468 = vsel %vm1399, %v1420, 0.0
      %v1469 = vsel %vm1400, %v1421, 0.0
      %v1470 = vsel %vm1401, %v1420, 0.0
      %v1471 = vsel %vm1402, %v1421, 0.0
      %v1472 = vsel %vm1403, %v1420, 0.0
      %v1473 = vsel %vm1404, %v1421, 0.0
      %v1474 = vsel %vm1405, %v1420, 0.0
      %v1475 = vsel %vm1406, %v1421, 0.0
      %v1476 = vsel %vm1407, %v1420, 0.0
      %v1477 = vsel %vm1408, %v1421, 0.0
      %v1478 = vsel %vm1409, %v1420, 0.0
      %v1479 = vsel %vm1410, %v1421, 0.0
      %v1480 = vsel %vm1411, %v1420, 0.0
      %v1481 = vsel %vm1412, %v1421, 0.0
      %v1482 = vsel %vm1413, %v1420, 0.0
      %v1483 = vsel %vm1414, %v1421, 0.0
      %v1484 = vsel %vm1415, %v1420, 0.0
      %v1485 = vsel %vm1416, %v1421, 0.0
      %v1486 = vsel %vm1417, %v1420, 0.0
      %v1487 = vsel %vm1418, %v1421, 0.0
      %v1488 = vadd.f32 %v1284, %v1424
      %v1489 = vadd.f32 %v1285, %v1425
      %v1490 = vadd.f32 %v1286, %v1426
      %v1491 = vadd.f32 %v1287, %v1427
      %v1492 = vadd.f32 %v1288, %v1428
      %v1493 = vadd.f32 %v1289, %v1429
      %v1494 = vadd.f32 %v1290, %v1430
      %v1495 = vadd.f32 %v1291, %v1431
      %v1496 = vadd.f32 %v1292, %v1432
      %v1497 = vadd.f32 %v1293, %v1433
      %v1498 = vadd.f32 %v1294, %v1434
      %v1499 = vadd.f32 %v1295, %v1435
      %v1500 = vadd.f32 %v1296, %v1436
      %v1501 = vadd.f32 %v1297, %v1437
      %v1502 = vadd.f32 %v1298, %v1438
      %v1503 = vadd.f32 %v1299, %v1439
      %v1504 = vadd.f32 %v1300, %v1440
      %v1505 = vadd.f32 %v1301, %v1441
      %v1506 = vadd.f32 %v1302, %v1442
      %v1507 = vadd.f32 %v1303, %v1443
      %v1508 = vadd.f32 %v1304, %v1444
      %v1509 = vadd.f32 %v1305, %v1445
      %v1510 = vadd.f32 %v1306, %v1446
      %v1511 = vadd.f32 %v1307, %v1447
      %v1512 = vadd.f32 %v1308, %v1448
      %v1513 = vadd.f32 %v1309, %v1449
      %v1514 = vadd.f32 %v1310, %v1450
      %v1515 = vadd.f32 %v1311, %v1451
      %v1516 = vadd.f32 %v1312, %v1452
      %v1517 = vadd.f32 %v1313, %v1453
      %v1518 = vadd.f32 %v1314, %v1454
      %v1519 = vadd.f32 %v1315, %v1455
      %v1520 = vadd.f32 %v1316, %v1456
      %v1521 = vadd.f32 %v1317, %v1457
      %v1522 = vadd.f32 %v1318, %v1458
      %v1523 = vadd.f32 %v1319, %v1459
      %v1524 = vadd.f32 %v1320, %v1460
      %v1525 = vadd.f32 %v1321, %v1461
      %v1526 = vadd.f32 %v1322, %v1462
      %v1527 = vadd.f32 %v1323, %v1463
      %v1528 = vadd.f32 %v1324, %v1464
      %v1529 = vadd.f32 %v1325, %v1465
      %v1530 = vadd.f32 %v1326, %v1466
      %v1531 = vadd.f32 %v1327, %v1467
      %v1532 = vadd.f32 %v1328, %v1468
      %v1533 = vadd.f32 %v1329, %v1469
      %v1534 = vadd.f32 %v1330, %v1470
      %v1535 = vadd.f32 %v1331, %v1471
      %v1536 = vadd.f32 %v1332, %v1472
      %v1537 = vadd.f32 %v1333, %v1473
      %v1538 = vadd.f32 %v1334, %v1474
      %v1539 = vadd.f32 %v1335, %v1475
      %v1540 = vadd.f32 %v1336, %v1476
      %v1541 = vadd.f32 %v1337, %v1477
      %v1542 = vadd.f32 %v1338, %v1478
      %v1543 = vadd.f32 %v1339, %v1479
      %v1544 = vadd.f32 %v1340, %v1480
      %v1545 = vadd.f32 %v1341, %v1481
      %v1546 = vadd.f32 %v1342, %v1482
      %v1547 = vadd.f32 %v1343, %v1483
      %v1548 = vadd.f32 %v1344, %v1484
      %v1549 = vadd.f32 %v1345, %v1485
      %v1550 = vadd.f32 %v1346, %v1486
      %v1551 = vadd.f32 %v1347, %v1487
      %s1552 = scalar_lea.vmem %s267, 6
      %v1553 = vld [vmem:[%s1552] ss:$8 sm:$0x3]
      %v1554 = vsub.s32 %v1553, %v330
      %s1555 = scalar_lea.vmem %s277, 6
      %v1556 = vld [vmem:[%s1555] ss:$8 sm:$0x3]
      %v1557 = vperm.slane %v1554, 0
      %v1558 = vperm.slane %v1554, 1
      %vm1559 = vcmp.eq.s32.totalorder %v297, %v1557
      %vm1560 = vcmp.eq.s32.totalorder %v297, %v1558
      %vm1561 = vcmp.eq.s32.totalorder %v298, %v1557
      %vm1562 = vcmp.eq.s32.totalorder %v298, %v1558
      %vm1563 = vcmp.eq.s32.totalorder %v299, %v1557
      %vm1564 = vcmp.eq.s32.totalorder %v299, %v1558
      %vm1565 = vcmp.eq.s32.totalorder %v300, %v1557
      %vm1566 = vcmp.eq.s32.totalorder %v300, %v1558
      %vm1567 = vcmp.eq.s32.totalorder %v301, %v1557
      %vm1568 = vcmp.eq.s32.totalorder %v301, %v1558
      %vm1569 = vcmp.eq.s32.totalorder %v302, %v1557
      %vm1570 = vcmp.eq.s32.totalorder %v302, %v1558
      %vm1571 = vcmp.eq.s32.totalorder %v303, %v1557
      %vm1572 = vcmp.eq.s32.totalorder %v303, %v1558
      %vm1573 = vcmp.eq.s32.totalorder %v304, %v1557
      %vm1574 = vcmp.eq.s32.totalorder %v304, %v1558
      %vm1575 = vcmp.eq.s32.totalorder %v305, %v1557
      %vm1576 = vcmp.eq.s32.totalorder %v305, %v1558
      %vm1577 = vcmp.eq.s32.totalorder %v306, %v1557
      %vm1578 = vcmp.eq.s32.totalorder %v306, %v1558
      %vm1579 = vcmp.eq.s32.totalorder %v307, %v1557
      %vm1580 = vcmp.eq.s32.totalorder %v307, %v1558
      %vm1581 = vcmp.eq.s32.totalorder %v308, %v1557
      %vm1582 = vcmp.eq.s32.totalorder %v308, %v1558
      %vm1583 = vcmp.eq.s32.totalorder %v309, %v1557
      %vm1584 = vcmp.eq.s32.totalorder %v309, %v1558
      %vm1585 = vcmp.eq.s32.totalorder %v310, %v1557
      %vm1586 = vcmp.eq.s32.totalorder %v310, %v1558
      %vm1587 = vcmp.eq.s32.totalorder %v311, %v1557
      %vm1588 = vcmp.eq.s32.totalorder %v311, %v1558
      %vm1589 = vcmp.eq.s32.totalorder %v312, %v1557
      %vm1590 = vcmp.eq.s32.totalorder %v312, %v1558
      %vm1591 = vcmp.eq.s32.totalorder %v313, %v1557
      %vm1592 = vcmp.eq.s32.totalorder %v313, %v1558
      %vm1593 = vcmp.eq.s32.totalorder %v314, %v1557
      %vm1594 = vcmp.eq.s32.totalorder %v314, %v1558
      %vm1595 = vcmp.eq.s32.totalorder %v315, %v1557
      %vm1596 = vcmp.eq.s32.totalorder %v315, %v1558
      %vm1597 = vcmp.eq.s32.totalorder %v316, %v1557
      %vm1598 = vcmp.eq.s32.totalorder %v316, %v1558
      %vm1599 = vcmp.eq.s32.totalorder %v317, %v1557
      %vm1600 = vcmp.eq.s32.totalorder %v317, %v1558
      %vm1601 = vcmp.eq.s32.totalorder %v318, %v1557
      %vm1602 = vcmp.eq.s32.totalorder %v318, %v1558
      %vm1603 = vcmp.eq.s32.totalorder %v319, %v1557
      %vm1604 = vcmp.eq.s32.totalorder %v319, %v1558
      %vm1605 = vcmp.eq.s32.totalorder %v320, %v1557
      %vm1606 = vcmp.eq.s32.totalorder %v320, %v1558
      %vm1607 = vcmp.eq.s32.totalorder %v321, %v1557
      %vm1608 = vcmp.eq.s32.totalorder %v321, %v1558
      %vm1609 = vcmp.eq.s32.totalorder %v322, %v1557
      %vm1610 = vcmp.eq.s32.totalorder %v322, %v1558
      %vm1611 = vcmp.eq.s32.totalorder %v323, %v1557
      %vm1612 = vcmp.eq.s32.totalorder %v323, %v1558
      %vm1613 = vcmp.eq.s32.totalorder %v324, %v1557
      %vm1614 = vcmp.eq.s32.totalorder %v324, %v1558
      %vm1615 = vcmp.eq.s32.totalorder %v325, %v1557
      %vm1616 = vcmp.eq.s32.totalorder %v325, %v1558
      %vm1617 = vcmp.eq.s32.totalorder %v326, %v1557
      %vm1618 = vcmp.eq.s32.totalorder %v326, %v1558
      %vm1619 = vcmp.eq.s32.totalorder %v327, %v1557
      %vm1620 = vcmp.eq.s32.totalorder %v327, %v1558
      %vm1621 = vcmp.eq.s32.totalorder %v328, %v1557
      %vm1622 = vcmp.eq.s32.totalorder %v328, %v1558
      %v1624 = vperm.slane %v1556, 0
      %v1625 = vperm.slane %v1556, 1
      %v1628 = vsel %vm1559, %v1624, 0.0
      %v1629 = vsel %vm1560, %v1625, 0.0
      %v1630 = vsel %vm1561, %v1624, 0.0
      %v1631 = vsel %vm1562, %v1625, 0.0
      %v1632 = vsel %vm1563, %v1624, 0.0
      %v1633 = vsel %vm1564, %v1625, 0.0
      %v1634 = vsel %vm1565, %v1624, 0.0
      %v1635 = vsel %vm1566, %v1625, 0.0
      %v1636 = vsel %vm1567, %v1624, 0.0
      %v1637 = vsel %vm1568, %v1625, 0.0
      %v1638 = vsel %vm1569, %v1624, 0.0
      %v1639 = vsel %vm1570, %v1625, 0.0
      %v1640 = vsel %vm1571, %v1624, 0.0
      %v1641 = vsel %vm1572, %v1625, 0.0
      %v1642 = vsel %vm1573, %v1624, 0.0
      %v1643 = vsel %vm1574, %v1625, 0.0
      %v1644 = vsel %vm1575, %v1624, 0.0
      %v1645 = vsel %vm1576, %v1625, 0.0
      %v1646 = vsel %vm1577, %v1624, 0.0
      %v1647 = vsel %vm1578, %v1625, 0.0
      %v1648 = vsel %vm1579, %v1624, 0.0
      %v1649 = vsel %vm1580, %v1625, 0.0
      %v1650 = vsel %vm1581, %v1624, 0.0
      %v1651 = vsel %vm1582, %v1625, 0.0
      %v1652 = vsel %vm1583, %v1624, 0.0
      %v1653 = vsel %vm1584, %v1625, 0.0
      %v1654 = vsel %vm1585, %v1624, 0.0
      %v1655 = vsel %vm1586, %v1625, 0.0
      %v1656 = vsel %vm1587, %v1624, 0.0
      %v1657 = vsel %vm1588, %v1625, 0.0
      %v1658 = vsel %vm1589, %v1624, 0.0
      %v1659 = vsel %vm1590, %v1625, 0.0
      %v1660 = vsel %vm1591, %v1624, 0.0
      %v1661 = vsel %vm1592, %v1625, 0.0
      %v1662 = vsel %vm1593, %v1624, 0.0
      %v1663 = vsel %vm1594, %v1625, 0.0
      %v1664 = vsel %vm1595, %v1624, 0.0
      %v1665 = vsel %vm1596, %v1625, 0.0
      %v1666 = vsel %vm1597, %v1624, 0.0
      %v1667 = vsel %vm1598, %v1625, 0.0
      %v1668 = vsel %vm1599, %v1624, 0.0
      %v1669 = vsel %vm1600, %v1625, 0.0
      %v1670 = vsel %vm1601, %v1624, 0.0
      %v1671 = vsel %vm1602, %v1625, 0.0
      %v1672 = vsel %vm1603, %v1624, 0.0
      %v1673 = vsel %vm1604, %v1625, 0.0
      %v1674 = vsel %vm1605, %v1624, 0.0
      %v1675 = vsel %vm1606, %v1625, 0.0
      %v1676 = vsel %vm1607, %v1624, 0.0
      %v1677 = vsel %vm1608, %v1625, 0.0
      %v1678 = vsel %vm1609, %v1624, 0.0
      %v1679 = vsel %vm1610, %v1625, 0.0
      %v1680 = vsel %vm1611, %v1624, 0.0
      %v1681 = vsel %vm1612, %v1625, 0.0
      %v1682 = vsel %vm1613, %v1624, 0.0
      %v1683 = vsel %vm1614, %v1625, 0.0
      %v1684 = vsel %vm1615, %v1624, 0.0
      %v1685 = vsel %vm1616, %v1625, 0.0
      %v1686 = vsel %vm1617, %v1624, 0.0
      %v1687 = vsel %vm1618, %v1625, 0.0
      %v1688 = vsel %vm1619, %v1624, 0.0
      %v1689 = vsel %vm1620, %v1625, 0.0
      %v1690 = vsel %vm1621, %v1624, 0.0
      %v1691 = vsel %vm1622, %v1625, 0.0
      %v1692 = vadd.f32 %v1488, %v1628
      %v1693 = vadd.f32 %v1489, %v1629
      %v1694 = vadd.f32 %v1490, %v1630
      %v1695 = vadd.f32 %v1491, %v1631
      %v1696 = vadd.f32 %v1492, %v1632
      %v1697 = vadd.f32 %v1493, %v1633
      %v1698 = vadd.f32 %v1494, %v1634
      %v1699 = vadd.f32 %v1495, %v1635
      %v1700 = vadd.f32 %v1496, %v1636
      %v1701 = vadd.f32 %v1497, %v1637
      %v1702 = vadd.f32 %v1498, %v1638
      %v1703 = vadd.f32 %v1499, %v1639
      %v1704 = vadd.f32 %v1500, %v1640
      %v1705 = vadd.f32 %v1501, %v1641
      %v1706 = vadd.f32 %v1502, %v1642
      %v1707 = vadd.f32 %v1503, %v1643
      %v1708 = vadd.f32 %v1504, %v1644
      %v1709 = vadd.f32 %v1505, %v1645
      %v1710 = vadd.f32 %v1506, %v1646
      %v1711 = vadd.f32 %v1507, %v1647
      %v1712 = vadd.f32 %v1508, %v1648
      %v1713 = vadd.f32 %v1509, %v1649
      %v1714 = vadd.f32 %v1510, %v1650
      %v1715 = vadd.f32 %v1511, %v1651
      %v1716 = vadd.f32 %v1512, %v1652
      %v1717 = vadd.f32 %v1513, %v1653
      %v1718 = vadd.f32 %v1514, %v1654
      %v1719 = vadd.f32 %v1515, %v1655
      %v1720 = vadd.f32 %v1516, %v1656
      %v1721 = vadd.f32 %v1517, %v1657
      %v1722 = vadd.f32 %v1518, %v1658
      %v1723 = vadd.f32 %v1519, %v1659
      %v1724 = vadd.f32 %v1520, %v1660
      %v1725 = vadd.f32 %v1521, %v1661
      %v1726 = vadd.f32 %v1522, %v1662
      %v1727 = vadd.f32 %v1523, %v1663
      %v1728 = vadd.f32 %v1524, %v1664
      %v1729 = vadd.f32 %v1525, %v1665
      %v1730 = vadd.f32 %v1526, %v1666
      %v1731 = vadd.f32 %v1527, %v1667
      %v1732 = vadd.f32 %v1528, %v1668
      %v1733 = vadd.f32 %v1529, %v1669
      %v1734 = vadd.f32 %v1530, %v1670
      %v1735 = vadd.f32 %v1531, %v1671
      %v1736 = vadd.f32 %v1532, %v1672
      %v1737 = vadd.f32 %v1533, %v1673
      %v1738 = vadd.f32 %v1534, %v1674
      %v1739 = vadd.f32 %v1535, %v1675
      %v1740 = vadd.f32 %v1536, %v1676
      %v1741 = vadd.f32 %v1537, %v1677
      %v1742 = vadd.f32 %v1538, %v1678
      %v1743 = vadd.f32 %v1539, %v1679
      %v1744 = vadd.f32 %v1540, %v1680
      %v1745 = vadd.f32 %v1541, %v1681
      %v1746 = vadd.f32 %v1542, %v1682
      %v1747 = vadd.f32 %v1543, %v1683
      %v1748 = vadd.f32 %v1544, %v1684
      %v1749 = vadd.f32 %v1545, %v1685
      %v1750 = vadd.f32 %v1546, %v1686
      %v1751 = vadd.f32 %v1547, %v1687
      %v1752 = vadd.f32 %v1548, %v1688
      %v1753 = vadd.f32 %v1549, %v1689
      %v1754 = vadd.f32 %v1550, %v1690
      %v1755 = vadd.f32 %v1551, %v1691
      %s1756 = scalar_lea.vmem %s267, 7
      %v1757 = vld [vmem:[%s1756] ss:$8 sm:$0x3]
      %v1758 = vsub.s32 %v1757, %v330
      %s1759 = scalar_lea.vmem %s277, 7
      %v1760 = vld [vmem:[%s1759] ss:$8 sm:$0x3]
      %v1761 = vperm.slane %v1758, 0
      %v1762 = vperm.slane %v1758, 1
      %vm1763 = vcmp.eq.s32.totalorder %v297, %v1761
      %vm1764 = vcmp.eq.s32.totalorder %v297, %v1762
      %vm1765 = vcmp.eq.s32.totalorder %v298, %v1761
      %vm1766 = vcmp.eq.s32.totalorder %v298, %v1762
      %vm1767 = vcmp.eq.s32.totalorder %v299, %v1761
      %vm1768 = vcmp.eq.s32.totalorder %v299, %v1762
      %vm1769 = vcmp.eq.s32.totalorder %v300, %v1761
      %vm1770 = vcmp.eq.s32.totalorder %v300, %v1762
      %vm1771 = vcmp.eq.s32.totalorder %v301, %v1761
      %vm1772 = vcmp.eq.s32.totalorder %v301, %v1762
      %vm1773 = vcmp.eq.s32.totalorder %v302, %v1761
      %vm1774 = vcmp.eq.s32.totalorder %v302, %v1762
      %vm1775 = vcmp.eq.s32.totalorder %v303, %v1761
      %vm1776 = vcmp.eq.s32.totalorder %v303, %v1762
      %vm1777 = vcmp.eq.s32.totalorder %v304, %v1761
      %vm1778 = vcmp.eq.s32.totalorder %v304, %v1762
      %vm1779 = vcmp.eq.s32.totalorder %v305, %v1761
      %vm1780 = vcmp.eq.s32.totalorder %v305, %v1762
      %vm1781 = vcmp.eq.s32.totalorder %v306, %v1761
      %vm1782 = vcmp.eq.s32.totalorder %v306, %v1762
      %vm1783 = vcmp.eq.s32.totalorder %v307, %v1761
      %vm1784 = vcmp.eq.s32.totalorder %v307, %v1762
      %vm1785 = vcmp.eq.s32.totalorder %v308, %v1761
      %vm1786 = vcmp.eq.s32.totalorder %v308, %v1762
      %vm1787 = vcmp.eq.s32.totalorder %v309, %v1761
      %vm1788 = vcmp.eq.s32.totalorder %v309, %v1762
      %vm1789 = vcmp.eq.s32.totalorder %v310, %v1761
      %vm1790 = vcmp.eq.s32.totalorder %v310, %v1762
      %vm1791 = vcmp.eq.s32.totalorder %v311, %v1761
      %vm1792 = vcmp.eq.s32.totalorder %v311, %v1762
      %vm1793 = vcmp.eq.s32.totalorder %v312, %v1761
      %vm1794 = vcmp.eq.s32.totalorder %v312, %v1762
      %vm1795 = vcmp.eq.s32.totalorder %v313, %v1761
      %vm1796 = vcmp.eq.s32.totalorder %v313, %v1762
      %vm1797 = vcmp.eq.s32.totalorder %v314, %v1761
      %vm1798 = vcmp.eq.s32.totalorder %v314, %v1762
      %vm1799 = vcmp.eq.s32.totalorder %v315, %v1761
      %vm1800 = vcmp.eq.s32.totalorder %v315, %v1762
      %vm1801 = vcmp.eq.s32.totalorder %v316, %v1761
      %vm1802 = vcmp.eq.s32.totalorder %v316, %v1762
      %vm1803 = vcmp.eq.s32.totalorder %v317, %v1761
      %vm1804 = vcmp.eq.s32.totalorder %v317, %v1762
      %vm1805 = vcmp.eq.s32.totalorder %v318, %v1761
      %vm1806 = vcmp.eq.s32.totalorder %v318, %v1762
      %vm1807 = vcmp.eq.s32.totalorder %v319, %v1761
      %vm1808 = vcmp.eq.s32.totalorder %v319, %v1762
      %vm1809 = vcmp.eq.s32.totalorder %v320, %v1761
      %vm1810 = vcmp.eq.s32.totalorder %v320, %v1762
      %vm1811 = vcmp.eq.s32.totalorder %v321, %v1761
      %vm1812 = vcmp.eq.s32.totalorder %v321, %v1762
      %vm1813 = vcmp.eq.s32.totalorder %v322, %v1761
      %vm1814 = vcmp.eq.s32.totalorder %v322, %v1762
      %vm1815 = vcmp.eq.s32.totalorder %v323, %v1761
      %vm1816 = vcmp.eq.s32.totalorder %v323, %v1762
      %vm1817 = vcmp.eq.s32.totalorder %v324, %v1761
      %vm1818 = vcmp.eq.s32.totalorder %v324, %v1762
      %vm1819 = vcmp.eq.s32.totalorder %v325, %v1761
      %vm1820 = vcmp.eq.s32.totalorder %v325, %v1762
      %vm1821 = vcmp.eq.s32.totalorder %v326, %v1761
      %vm1822 = vcmp.eq.s32.totalorder %v326, %v1762
      %vm1823 = vcmp.eq.s32.totalorder %v327, %v1761
      %vm1824 = vcmp.eq.s32.totalorder %v327, %v1762
      %vm1825 = vcmp.eq.s32.totalorder %v328, %v1761
      %vm1826 = vcmp.eq.s32.totalorder %v328, %v1762
      %v1828 = vperm.slane %v1760, 0
      %v1829 = vperm.slane %v1760, 1
      %v1832 = vsel %vm1763, %v1828, 0.0
      %v1833 = vsel %vm1764, %v1829, 0.0
      %v1834 = vsel %vm1765, %v1828, 0.0
      %v1835 = vsel %vm1766, %v1829, 0.0
      %v1836 = vsel %vm1767, %v1828, 0.0
      %v1837 = vsel %vm1768, %v1829, 0.0
      %v1838 = vsel %vm1769, %v1828, 0.0
      %v1839 = vsel %vm1770, %v1829, 0.0
      %v1840 = vsel %vm1771, %v1828, 0.0
      %v1841 = vsel %vm1772, %v1829, 0.0
      %v1842 = vsel %vm1773, %v1828, 0.0
      %v1843 = vsel %vm1774, %v1829, 0.0
      %v1844 = vsel %vm1775, %v1828, 0.0
      %v1845 = vsel %vm1776, %v1829, 0.0
      %v1846 = vsel %vm1777, %v1828, 0.0
      %v1847 = vsel %vm1778, %v1829, 0.0
      %v1848 = vsel %vm1779, %v1828, 0.0
      %v1849 = vsel %vm1780, %v1829, 0.0
      %v1850 = vsel %vm1781, %v1828, 0.0
      %v1851 = vsel %vm1782, %v1829, 0.0
      %v1852 = vsel %vm1783, %v1828, 0.0
      %v1853 = vsel %vm1784, %v1829, 0.0
      %v1854 = vsel %vm1785, %v1828, 0.0
      %v1855 = vsel %vm1786, %v1829, 0.0
      %v1856 = vsel %vm1787, %v1828, 0.0
      %v1857 = vsel %vm1788, %v1829, 0.0
      %v1858 = vsel %vm1789, %v1828, 0.0
      %v1859 = vsel %vm1790, %v1829, 0.0
      %v1860 = vsel %vm1791, %v1828, 0.0
      %v1861 = vsel %vm1792, %v1829, 0.0
      %v1862 = vsel %vm1793, %v1828, 0.0
      %v1863 = vsel %vm1794, %v1829, 0.0
      %v1864 = vsel %vm1795, %v1828, 0.0
      %v1865 = vsel %vm1796, %v1829, 0.0
      %v1866 = vsel %vm1797, %v1828, 0.0
      %v1867 = vsel %vm1798, %v1829, 0.0
      %v1868 = vsel %vm1799, %v1828, 0.0
      %v1869 = vsel %vm1800, %v1829, 0.0
      %v1870 = vsel %vm1801, %v1828, 0.0
      %v1871 = vsel %vm1802, %v1829, 0.0
      %v1872 = vsel %vm1803, %v1828, 0.0
      %v1873 = vsel %vm1804, %v1829, 0.0
      %v1874 = vsel %vm1805, %v1828, 0.0
      %v1875 = vsel %vm1806, %v1829, 0.0
      %v1876 = vsel %vm1807, %v1828, 0.0
      %v1877 = vsel %vm1808, %v1829, 0.0
      %v1878 = vsel %vm1809, %v1828, 0.0
      %v1879 = vsel %vm1810, %v1829, 0.0
      %v1880 = vsel %vm1811, %v1828, 0.0
      %v1881 = vsel %vm1812, %v1829, 0.0
      %v1882 = vsel %vm1813, %v1828, 0.0
      %v1883 = vsel %vm1814, %v1829, 0.0
      %v1884 = vsel %vm1815, %v1828, 0.0
      %v1885 = vsel %vm1816, %v1829, 0.0
      %v1886 = vsel %vm1817, %v1828, 0.0
      %v1887 = vsel %vm1818, %v1829, 0.0
      %v1888 = vsel %vm1819, %v1828, 0.0
      %v1889 = vsel %vm1820, %v1829, 0.0
      %v1890 = vsel %vm1821, %v1828, 0.0
      %v1891 = vsel %vm1822, %v1829, 0.0
      %v1892 = vsel %vm1823, %v1828, 0.0
      %v1893 = vsel %vm1824, %v1829, 0.0
      %v1894 = vsel %vm1825, %v1828, 0.0
      %v1895 = vsel %vm1826, %v1829, 0.0
      %v1896 = vadd.f32 %v1692, %v1832
      %v1897 = vadd.f32 %v1693, %v1833
      %v1898 = vadd.f32 %v1694, %v1834
      %v1899 = vadd.f32 %v1695, %v1835
      %v1900 = vadd.f32 %v1696, %v1836
      %v1901 = vadd.f32 %v1697, %v1837
      %v1902 = vadd.f32 %v1698, %v1838
      %v1903 = vadd.f32 %v1699, %v1839
      %v1904 = vadd.f32 %v1700, %v1840
      %v1905 = vadd.f32 %v1701, %v1841
      %v1906 = vadd.f32 %v1702, %v1842
      %v1907 = vadd.f32 %v1703, %v1843
      %v1908 = vadd.f32 %v1704, %v1844
      %v1909 = vadd.f32 %v1705, %v1845
      %v1910 = vadd.f32 %v1706, %v1846
      %v1911 = vadd.f32 %v1707, %v1847
      %v1912 = vadd.f32 %v1708, %v1848
      %v1913 = vadd.f32 %v1709, %v1849
      %v1914 = vadd.f32 %v1710, %v1850
      %v1915 = vadd.f32 %v1711, %v1851
      %v1916 = vadd.f32 %v1712, %v1852
      %v1917 = vadd.f32 %v1713, %v1853
      %v1918 = vadd.f32 %v1714, %v1854
      %v1919 = vadd.f32 %v1715, %v1855
      %v1920 = vadd.f32 %v1716, %v1856
      %v1921 = vadd.f32 %v1717, %v1857
      %v1922 = vadd.f32 %v1718, %v1858
      %v1923 = vadd.f32 %v1719, %v1859
      %v1924 = vadd.f32 %v1720, %v1860
      %v1925 = vadd.f32 %v1721, %v1861
      %v1926 = vadd.f32 %v1722, %v1862
      %v1927 = vadd.f32 %v1723, %v1863
      %v1928 = vadd.f32 %v1724, %v1864
      %v1929 = vadd.f32 %v1725, %v1865
      %v1930 = vadd.f32 %v1726, %v1866
      %v1931 = vadd.f32 %v1727, %v1867
      %v1932 = vadd.f32 %v1728, %v1868
      %v1933 = vadd.f32 %v1729, %v1869
      %v1934 = vadd.f32 %v1730, %v1870
      %v1935 = vadd.f32 %v1731, %v1871
      %v1936 = vadd.f32 %v1732, %v1872
      %v1937 = vadd.f32 %v1733, %v1873
      %v1938 = vadd.f32 %v1734, %v1874
      %v1939 = vadd.f32 %v1735, %v1875
      %v1940 = vadd.f32 %v1736, %v1876
      %v1941 = vadd.f32 %v1737, %v1877
      %v1942 = vadd.f32 %v1738, %v1878
      %v1943 = vadd.f32 %v1739, %v1879
      %v1944 = vadd.f32 %v1740, %v1880
      %v1945 = vadd.f32 %v1741, %v1881
      %v1946 = vadd.f32 %v1742, %v1882
      %v1947 = vadd.f32 %v1743, %v1883
      %v1948 = vadd.f32 %v1744, %v1884
      %v1949 = vadd.f32 %v1745, %v1885
      %v1950 = vadd.f32 %v1746, %v1886
      %v1951 = vadd.f32 %v1747, %v1887
      %v1952 = vadd.f32 %v1748, %v1888
      %v1953 = vadd.f32 %v1749, %v1889
      %v1954 = vadd.f32 %v1750, %v1890
      %v1955 = vadd.f32 %v1751, %v1891
      %v1956 = vadd.f32 %v1752, %v1892
      %v1957 = vadd.f32 %v1753, %v1893
      %v1958 = vadd.f32 %v1754, %v1894
      %v1959 = vadd.f32 %v1755, %v1895
      %v1960 = vld [vmem:[%s257] sm:$0x1f]
      %v1961 = vld [vmem:[%s257 + $0x8] sm:$0x1f]
      %1962 = vmatpush.xpose.msra.mxu0 %v1926
      %1963 = vmatpush.xpose.msra.mxu0 %v1924
      %1964 = vmatpush.xpose.msra.mxu0 %v1922
      %1965 = vmatpush.xpose.msra.mxu0 %v1920
      %1966 = vmatpush.xpose.msra.mxu0 %v1918
      %1967 = vmatpush.xpose.msra.mxu0 %v1916
      %1968 = vmatpush.xpose.msra.mxu0 %v1914
      %1969 = vmatpush.xpose.msra.mxu0 %v1912
      %1970 = vmatpush.xpose.msra.mxu0 %v1910
      %1971 = vmatpush.xpose.msra.mxu0 %v1908
      %1972 = vmatpush.xpose.msra.mxu0 %v1906
      %1973 = vmatpush.xpose.msra.mxu0 %v1904
      %1974 = vmatpush.xpose.msra.mxu0 %v1902
      %1975 = vmatpush.xpose.msra.mxu0 %v1900
      %1976 = vmatpush.xpose.msra.mxu0 %v1898
      %1977 = vmatpush.xpose.msra.mxu0 %v1896
      %1978 = vmatmul.f32.gmra.mxu0 %v1960
      %v1979 = vpop.f32.mrf.mxu0
      %v1980 = vadd.f32 0.0, %v1979
      %1981 = vdwg.mxu0
      %1982 = vmatpush.xpose.msra.mxu0 %v1927
      %1983 = vmatpush.xpose.msra.mxu0 %v1925
      %1984 = vmatpush.xpose.msra.mxu0 %v1923
      %1985 = vmatpush.xpose.msra.mxu0 %v1921
      %1986 = vmatpush.xpose.msra.mxu0 %v1919
      %1987 = vmatpush.xpose.msra.mxu0 %v1917
      %1988 = vmatpush.xpose.msra.mxu0 %v1915
      %1989 = vmatpush.xpose.msra.mxu0 %v1913
      %1990 = vmatpush.xpose.msra.mxu0 %v1911
      %1991 = vmatpush.xpose.msra.mxu0 %v1909
      %1992 = vmatpush.xpose.msra.mxu0 %v1907
      %1993 = vmatpush.xpose.msra.mxu0 %v1905
      %1994 = vmatpush.xpose.msra.mxu0 %v1903
      %1995 = vmatpush.xpose.msra.mxu0 %v1901
      %1996 = vmatpush.xpose.msra.mxu0 %v1899
      %1997 = vmatpush.xpose.msra.mxu0 %v1897
      %1998 = vmatmul.f32.gmra.mxu0 %v1961
      %v1999 = vpop.f32.mrf.mxu0
      %v2000 = vadd.f32 %v1980, %v1999
      %2001 = vdwg.mxu0
      %2002 = vmatpush.xpose.msra.mxu0 %v1958
      %2003 = vmatpush.xpose.msra.mxu0 %v1956
      %2004 = vmatpush.xpose.msra.mxu0 %v1954
      %2005 = vmatpush.xpose.msra.mxu0 %v1952
      %2006 = vmatpush.xpose.msra.mxu0 %v1950
      %2007 = vmatpush.xpose.msra.mxu0 %v1948
      %2008 = vmatpush.xpose.msra.mxu0 %v1946
      %2009 = vmatpush.xpose.msra.mxu0 %v1944
      %2010 = vmatpush.xpose.msra.mxu0 %v1942
      %2011 = vmatpush.xpose.msra.mxu0 %v1940
      %2012 = vmatpush.xpose.msra.mxu0 %v1938
      %2013 = vmatpush.xpose.msra.mxu0 %v1936
      %2014 = vmatpush.xpose.msra.mxu0 %v1934
      %2015 = vmatpush.xpose.msra.mxu0 %v1932
      %2016 = vmatpush.xpose.msra.mxu0 %v1930
      %2017 = vmatpush.xpose.msra.mxu0 %v1928
      %2018 = vmatmul.f32.gmra.mxu0 %v1960
      %v2019 = vpop.f32.mrf.mxu0
      %v2020 = vadd.f32 0.0, %v2019
      %2021 = vdwg.mxu0
      %2022 = vmatpush.xpose.msra.mxu0 %v1959
      %2023 = vmatpush.xpose.msra.mxu0 %v1957
      %2024 = vmatpush.xpose.msra.mxu0 %v1955
      %2025 = vmatpush.xpose.msra.mxu0 %v1953
      %2026 = vmatpush.xpose.msra.mxu0 %v1951
      %2027 = vmatpush.xpose.msra.mxu0 %v1949
      %2028 = vmatpush.xpose.msra.mxu0 %v1947
      %2029 = vmatpush.xpose.msra.mxu0 %v1945
      %2030 = vmatpush.xpose.msra.mxu0 %v1943
      %2031 = vmatpush.xpose.msra.mxu0 %v1941
      %2032 = vmatpush.xpose.msra.mxu0 %v1939
      %2033 = vmatpush.xpose.msra.mxu0 %v1937
      %2034 = vmatpush.xpose.msra.mxu0 %v1935
      %2035 = vmatpush.xpose.msra.mxu0 %v1933
      %2036 = vmatpush.xpose.msra.mxu0 %v1931
      %2037 = vmatpush.xpose.msra.mxu0 %v1929
      %2038 = vmatmul.f32.gmra.mxu0 %v1961
      %v2039 = vpop.f32.mrf.mxu0
      %v2040 = vadd.f32 %v2020, %v2039
      %2041 = vdwg.mxu0
      %v2042 = vld [vmem:[%s287] sm:$0x1f]
      %v2043 = vld [vmem:[%s287 + $0x8] sm:$0x1f]
      %v2044 = vadd.f32 %v2042, %v2000
      %v2045 = vadd.f32 %v2043, %v2040
      %2046 = vst [vmem:[%s287] sm:$0x1f] %v2044
      %2047 = vst [vmem:[%s287 + $0x8] sm:$0x1f] %v2045
      // Predicated region
      $region37: #{semantic_mapping_forward.6} parent=31 // pred_check
        %p2048 = pneg %p290
      $region38: #{semantic_mapping_forward.6} parent=31 // pred_check_branch
        %2050 = sbr.rel (%p2048) target = $region40
      $region39: #{semantic_mapping_forward.6} parent=31 // pred_region
        %v2051 = vld [vmem:[%s287] sm:$0x1f]
        %v2052 = vld [vmem:[%s287 + $0x8] sm:$0x1f]
        %v2053 = vround.ne.pseudo %v2051
        %v2054 = vround.ne.pseudo %v2052
        %2055 = vst [vmem:[%s287] sm:$0x1f] %v2053
        %2056 = vst [vmem:[%s287 + $0x8] sm:$0x1f] %v2054
      $region40: #{semantic_mapping_forward.6} parent=31 // pred_fallthru
        _
      %s2057 = smul.u32 2, %s20
      %p2058 = scmp.lt.s32.totalorder %s19, 1
      %s2059 = scalar_select %p2058, %s19, 1
      %p2060 = scmp.lt.s32.totalorder %s2057, 23
      %s2061 = scalar_select %p2060, %s2057, 23
      %s2062 = smul.addr %s2059, 24
      %s2063 = sadd.s32 %s2061, %s2062
      %s2064 = smul.addr %s2063, 8
      %s2065 = scalar_lea.vmem %s3, %s2064
      // Predicated region
      $region41: #{semantic_mapping_forward.6} parent=31 // pred_check
        %p2066 = pneg %p137
      $region42: #{semantic_mapping_forward.6} parent=31 // pred_check_branch
        %2068 = sbr.rel (%p2066) target = $region44
      $region43: #{semantic_mapping_forward.6} parent=31 // pred_region
        %s2069 = smul.u32 2, %s20
      $region44: #{semantic_mapping_forward.6} parent=31 // pred_fallthru
        _
    $region32: #{semantic_mapping_forward.6} parent=5 // pred_fallthru
      _
    %p2070 = scmp.le.s32.totalorder 2, %s9
    // Predicated region
    $region45: #{semantic_mapping_forward.6} parent=5 // pred_check
      %p2071 = pneg %p2070
    $region46: #{semantic_mapping_forward.6} parent=5 // pred_check_branch
      %2073 = sbr.rel (%p2071) target = $region48
    $region47: #{semantic_mapping_forward.6} parent=5 // pred_region
      %s2074 = ssub.s32 %s9, 2
      // Predicated region
      $region49: #{semantic_mapping_forward.6} parent=47 // pred_check
        %p2075 = pneg %p143
      $region50: #{semantic_mapping_forward.6} parent=47 // pred_check_branch
        %2077 = sbr.rel (%p2075) target = $region52
      $region51: #{semantic_mapping_forward.6} parent=47 // pred_region
        %s2078 = smul.u32 2, %s23
        %p2079 = scmp.lt.s32.totalorder %s22, 1
        %s2080 = scalar_select %p2079, %s22, 1
        %p2081 = scmp.lt.s32.totalorder %s2078, 23
        %s2082 = scalar_select %p2081, %s2078, 23
        %s2083 = smul.addr %s2080, 24
        %s2084 = sadd.s32 %s2082, %s2083
        %s2085 = smul.addr %s2084, 8
        %s2086 = scalar_lea.vmem %s3, %s2085
      $region52: #{semantic_mapping_forward.6} parent=47 // pred_fallthru
        _
    $region48: #{semantic_mapping_forward.6} parent=5 // pred_fallthru
      _
  $region6: #{semantic_mapping_forward.6} parent=0 // loop_footer
    %s13 = sadd.s32 1, %s9
  $region7: #{semantic_mapping_forward.6} parent=0 // loop_footer_branch
    %8 = sbr.rel target = $region3
  $region8: #{semantic_mapping_forward.6} parent=0 // loop_exit
    _

// kernel: semantic_mapping_forward.8
$region0: #{semantic_mapping_forward.8}
  #allocation0 [shape = 'u32[]', space=smem, size = 0x4, offset = 0x4, fixed_abs, tag = 'smem constant byte address 0x4 - core index']
  #allocation1 [shape = 'u32[72,128]{1,0:T(1,128)}', space=vmem, size = 0x9000, scoped, tag = 'internal scratch']
  %s0 = inlined_call_operand.vmem [shape: f32[2,9,9216], index: 0, kind: input, shape index: {}]
  %s1 = inlined_call_operand.vmem [shape: s32[2,4,9216], index: 1, kind: input, shape index: {}]
  %s2 = inlined_call_operand.vmem [shape: f32[2,4,9216], index: 2, kind: input, shape index: {}]
  %s3 = inlined_call_operand.vmem [shape: f32[2,9,9216], index: 3, kind: output, shape index: {}]
  %s4 = sld [smem:[#allocation0]]
  $region91: #{semantic_mapping_forward.8} parent=0
    _
  %s6 = ssub.s32 1, %s4
  %s7 = scalar_select 0, %s6, %s4
  $region1: #{semantic_mapping_forward.8} parent=0
    #allocation2 [shape = 'u8[65536]{0}', space=vmem, size = 0x10000, scoped, tag = 'input window, operand 0']
    #allocation3 [shape = 'u8[32768]{0}', space=vmem, size = 0x8000, scoped, tag = 'output window, operand 0']
    loop: start=0, step=1, limit=1298
    $region2: #{semantic_mapping_forward.8} parent=1 // loop_pre_header
      _
    $region3: #{semantic_mapping_forward.8} parent=1 // loop_header
      %s9 = sphi 0, %s13
      %p10 = scmp.ge.s32.totalorder %s9, 1298
      %s16 = sphi 0, %s35
      %s17 = sphi 0, %s31
      %s18 = sphi 0, %s27
      %s19 = sphi 0, %s16
      %s20 = sphi 0, %s17
      %s21 = sphi 0, %s18
      %s22 = sphi 0, %s19
      %s23 = sphi 0, %s20
      %s24 = sphi 0, %s21
      %s40 = sphi 0, %s42
      %s43 = sphi 0, %s40
      %s44 = sphi 0, %s43
      %s60 = sphi 0, %s44
      %s68 = sphi 0, %s70
      %s71 = sphi 0, %s68
      %s72 = sphi 0, %s71
      %s88 = sphi 0, %s72
      %s96 = sphi 0, %s98
      %s99 = sphi 0, %s96
      %s100 = sphi 0, %s99
      %s116 = sphi 0, %s100
      %s124 = sphi 0, %s126
      %s127 = sphi 0, %s124
      %s128 = sphi 0, %s127
      %s144 = sphi 0, %s128
    $region4: #{semantic_mapping_forward.8} parent=1 // loop_header_branch
      %12 = sbr.rel (%p10) target = $region8
    $region5: #{semantic_mapping_forward.8} parent=1 // loop_body
      %s14 = ssub.s32 %s9, 1
      %s15 = ssub.s32 %s9, 2
      %s25 = sadd.s32 1, %s18
      %p26 = scmp.ge.s32.totalorder %s25, 18
      %s27 = scalar_select %p26, 0, %s25
      %s28 = sadd.s32 1, %s17
      %s29 = scalar_select %p26, %s28, %s17
      %p30 = scmp.ge.s32.totalorder %s29, 36
      %s31 = scalar_select %p30, 0, %s29
      %s32 = sadd.s32 1, %s16
      %s33 = scalar_select %p30, %s32, %s16
      %p34 = scmp.ge.s32.totalorder %s33, 2
      %s35 = scalar_select %p34, 0, %s33
      %s36 = ssub.s32 %s16, %s35
      %s37 = ssub.s32 %s18, %s27
      %s38 = sor.u32 %s36, %s37
      %p39 = scmp.eq.s32.totalorder %s38, 0
      %s41 = sadd.s32 %s40, 1
      %s42 = scalar_select %p39, %s40, %s41
      %p45 = pneg %p39
      %p46 = scmp.eq.s32.totalorder %s9, 1295
      %p47 = por %p45, %p46
      %p48 = scmp.ne.s32.totalorder %s40, %s43
      %p49 = scmp.eq.s32.totalorder %s9, 0
      %p50 = por %p48, %p49
      %p51 = scmp.ne.s32.totalorder %s40, %s43
      %p52 = scmp.eq.s32.totalorder %s14, 1295
      %p53 = por %p51, %p52
      %p54 = scmp.ne.s32.totalorder %s43, %s44
      %p55 = scmp.eq.s32.totalorder %s14, 0
      %p56 = por %p54, %p55
      %p57 = scmp.ne.s32.totalorder %s43, %s44
      %p58 = scmp.eq.s32.totalorder %s15, 1295
      %p59 = por %p57, %p58
      %p61 = scmp.ne.s32.totalorder %s44, %s60
      %p62 = scmp.eq.s32.totalorder %s15, 0
      %p63 = por %p61, %p62
      %s64 = ssub.s32 %s16, %s35
      %s65 = ssub.s32 %s17, %s31
      %s66 = sor.u32 %s64, %s65
      %p67 = scmp.eq.s32.totalorder %s66, 0
      %s69 = sadd.s32 %s68, 1
      %s70 = scalar_select %p67, %s68, %s69
      %p73 = pneg %p67
      %p74 = scmp.eq.s32.totalorder %s9, 1295
      %p75 = por %p73, %p74
      %p76 = scmp.ne.s32.totalorder %s68, %s71
      %p77 = scmp.eq.s32.totalorder %s9, 0
      %p78 = por %p76, %p77
      %p79 = scmp.ne.s32.totalorder %s68, %s71
      %p80 = scmp.eq.s32.totalorder %s14, 1295
      %p81 = por %p79, %p80
      %p82 = scmp.ne.s32.totalorder %s71, %s72
      %p83 = scmp.eq.s32.totalorder %s14, 0
      %p84 = por %p82, %p83
      %p85 = scmp.ne.s32.totalorder %s71, %s72
      %p86 = scmp.eq.s32.totalorder %s15, 1295
      %p87 = por %p85, %p86
      %p89 = scmp.ne.s32.totalorder %s72, %s88
      %p90 = scmp.eq.s32.totalorder %s15, 0
      %p91 = por %p89, %p90
      %s92 = ssub.s32 %s16, %s35
      %s93 = ssub.s32 %s17, %s31
      %s94 = sor.u32 %s92, %s93
      %p95 = scmp.eq.s32.totalorder %s94, 0
      %s97 = sadd.s32 %s96, 1
      %s98 = scalar_select %p95, %s96, %s97
      %p101 = pneg %p95
      %p102 = scmp.eq.s32.totalorder %s9, 1295
      %p103 = por %p101, %p102
      %p104 = scmp.ne.s32.totalorder %s96, %s99
      %p105 = scmp.eq.s32.totalorder %s9, 0
      %p106 = por %p104, %p105
      %p107 = scmp.ne.s32.totalorder %s96, %s99
      %p108 = scmp.eq.s32.totalorder %s14, 1295
      %p109 = por %p107, %p108
      %p110 = scmp.ne.s32.totalorder %s99, %s100
      %p111 = scmp.eq.s32.totalorder %s14, 0
      %p112 = por %p110, %p111
      %p113 = scmp.ne.s32.totalorder %s99, %s100
      %p114 = scmp.eq.s32.totalorder %s15, 1295
      %p115 = por %p113, %p114
      %p117 = scmp.ne.s32.totalorder %s100, %s116
      %p118 = scmp.eq.s32.totalorder %s15, 0
      %p119 = por %p117, %p118
      %s120 = ssub.s32 %s16, %s35
      %s121 = ssub.s32 %s17, %s31
      %s122 = sor.u32 %s120, %s121
      %p123 = scmp.eq.s32.totalorder %s122, 0
      %s125 = sadd.s32 %s124, 1
      %s126 = scalar_select %p123, %s124, %s125
      %p129 = pneg %p123
      %p130 = scmp.eq.s32.totalorder %s9, 1295
      %p131 = por %p129, %p130
      %p132 = scmp.ne.s32.totalorder %s124, %s127
      %p133 = scmp.eq.s32.totalorder %s9, 0
      %p134 = por %p132, %p133
      %p135 = scmp.ne.s32.totalorder %s124, %s127
      %p136 = scmp.eq.s32.totalorder %s14, 1295
      %p137 = por %p135, %p136
      %p138 = scmp.ne.s32.totalorder %s127, %s128
      %p139 = scmp.eq.s32.totalorder %s14, 0
      %p140 = por %p138, %p139
      %p141 = scmp.ne.s32.totalorder %s127, %s128
      %p142 = scmp.eq.s32.totalorder %s15, 1295
      %p143 = por %p141, %p142
      %p145 = scmp.ne.s32.totalorder %s128, %s144
      %p146 = scmp.eq.s32.totalorder %s15, 0
      %p147 = por %p145, %p146
      %p148 = scmp.le.s32.totalorder 1, %s9
      %p149 = scmp.lt.s32.totalorder %s9, 1297
      %p150 = pnand %p148, %p149
      %p151 = pneg %p150
      // Predicated region
      $region9: #{semantic_mapping_forward.8} parent=5 // pred_check
        _
      $region10: #{semantic_mapping_forward.8} parent=5 // pred_check_branch
        %153 = sbr.rel (%p150) target = $region12
      $region11: #{semantic_mapping_forward.8} parent=5 // pred_region
        %s154 = ssub.s32 %s9, 1
      $region12: #{semantic_mapping_forward.8} parent=5 // pred_fallthru
        _
      %p155 = scmp.lt.s32.totalorder %s9, 1296
      // Predicated region
      $region13: #{semantic_mapping_forward.8} parent=5 // pred_check
        %p156 = pneg %p155
      $region14: #{semantic_mapping_forward.8} parent=5 // pred_check_branch
        %158 = sbr.rel (%p156) target = $region16
      $region15: #{semantic_mapping_forward.8} parent=5 // pred_region
        // Predicated region
        $region17: #{semantic_mapping_forward.8} parent=15 // pred_check
          %p159 = pneg %p50
        $region18: #{semantic_mapping_forward.8} parent=15 // pred_check_branch
          %161 = sbr.rel (%p159) target = $region20
        $region19: #{semantic_mapping_forward.8} parent=15 // pred_region
          %s162 = sand.u32 %s40, 1
          %s163 = sand.u32 %s40, 1
          %s164 = smul.addr %s163, 64
          %s165 = scalar_lea.vmem [#allocation2], %s164
          %s166 = smul.u32 4, %s18
          %s167 = smul.addr %s16, 144
          %s168 = sadd.s32 %s166, %s167
          %s169 = smul.addr %s168, 8
          %s170 = scalar_lea.vmem %s0, %s169
          // Predicated region
          $region21: #{semantic_mapping_forward.8} parent=19 // pred_check
            _
          $region22: #{semantic_mapping_forward.8} parent=19 // pred_check_branch
            %172 = sbr.rel (0) target = $region24
          $region23: #{semantic_mapping_forward.8} parent=19 // pred_region
            // Predicated region
            $region25: #{semantic_mapping_forward.8} parent=23 // pred_check
              _
            $region26: #{semantic_mapping_forward.8} parent=23 // pred_check_branch
              %174 = sbr.rel (0) target = $region28
            $region27: #{semantic_mapping_forward.8} parent=23 // pred_region
              loop: start=0, step=1, limit=1
              $region29: #{semantic_mapping_forward.8} parent=27 // loop_pre_header
                _
              $region30: #{semantic_mapping_forward.8} parent=27 // loop_header
                %s176 = sphi 0, %s180
                %p177 = scmp.ge.s32.totalorder %s176, 1
                %s181 = sphi %s170, %s170
                %s182 = sphi %s165, %s165
              $region31: #{semantic_mapping_forward.8} parent=27 // loop_header_branch
                %179 = sbr.rel (%p177) target = $region35
              $region32: #{semantic_mapping_forward.8} parent=27 // loop_body
                %v183 = vld [vmem:[%s181] sm:$0xff]
                %184 = vst [vmem:[%s182] sm:$0xff] %v183
                %v185 = vld [vmem:[%s181 + $0x8] sm:$0xff]
                %186 = vst [vmem:[%s182 + $0x8] sm:$0xff] %v185
                %v187 = vld [vmem:[%s181 + $0x10] sm:$0xff]
                %188 = vst [vmem:[%s182 + $0x10] sm:$0xff] %v187
                %v189 = vld [vmem:[%s181 + $0x18] sm:$0xff]
                %190 = vst [vmem:[%s182 + $0x18] sm:$0xff] %v189
                %v191 = vld [vmem:[%s181 + $0x240] sm:$0xff]
                %192 = vst [vmem:[%s182 + $0x20] sm:$0xff] %v191
                %v193 = vld [vmem:[%s181 + $0x248] sm:$0xff]
                %194 = vst [vmem:[%s182 + $0x28] sm:$0xff] %v193
                %v195 = vld [vmem:[%s181 + $0x250] sm:$0xff]
                %196 = vst [vmem:[%s182 + $0x30] sm:$0xff] %v195
                %v197 = vld [vmem:[%s181 + $0x258] sm:$0xff]
                %198 = vst [vmem:[%s182 + $0x38] sm:$0xff] %v197
              $region33: #{semantic_mapping_forward.8} parent=27 // loop_footer
                %s180 = sadd.s32 1, %s176
              $region34: #{semantic_mapping_forward.8} parent=27 // loop_footer_branch
                %175 = sbr.rel target = $region30
              $region35: #{semantic_mapping_forward.8} parent=27 // loop_exit
                _
            $region28: #{semantic_mapping_forward.8} parent=23 // pred_fallthru
              _
            // Predicated region
            $region36: #{semantic_mapping_forward.8} parent=23 // pred_check
              _
            $region37: #{semantic_mapping_forward.8} parent=23 // pred_check_branch
              %200 = sbr.rel target = $region39
            $region38: #{semantic_mapping_forward.8} parent=23 // pred_region
              _
            $region39: #{semantic_mapping_forward.8} parent=23 // pred_fallthru
              _
          $region24: #{semantic_mapping_forward.8} parent=19 // pred_fallthru
            _
          %201 = vnop
        $region20: #{semantic_mapping_forward.8} parent=15 // pred_fallthru
          _
        // Predicated region
        $region40: #{semantic_mapping_forward.8} parent=15 // pred_check
          %p202 = pneg %p78
        $region41: #{semantic_mapping_forward.8} parent=15 // pred_check_branch
          %204 = sbr.rel (%p202) target = $region43
        $region42: #{semantic_mapping_forward.8} parent=15 // pred_region
          %s205 = smul.u32 2, %s17
          %p206 = scmp.lt.s32.totalorder %s16, 1
          %s207 = scalar_select %p206, %s16, 1
          %p208 = scmp.lt.s32.totalorder %s205, 71
          %s209 = scalar_select %p208, %s205, 71
          %s210 = smul.addr %s207, 72
          %s211 = sadd.s32 %s209, %s210
          %s212 = smul.addr %s211, 4
          %s213 = scalar_lea.vmem %s1, %s212
          %s214 = smul.u32 2, %s17
        $region43: #{semantic_mapping_forward.8} parent=15 // pred_fallthru
          _
        // Predicated region
        $region44: #{semantic_mapping_forward.8} parent=15 // pred_check
          %p215 = pneg %p106
        $region45: #{semantic_mapping_forward.8} parent=15 // pred_check_branch
          %217 = sbr.rel (%p215) target = $region47
        $region46: #{semantic_mapping_forward.8} parent=15 // pred_region
          %s218 = smul.u32 2, %s17
          %p219 = scmp.lt.s32.totalorder %s16, 1
          %s220 = scalar_select %p219, %s16, 1
          %p221 = scmp.lt.s32.totalorder %s218, 71
          %s222 = scalar_select %p221, %s218, 71
          %s223 = smul.addr %s220, 72
          %s224 = sadd.s32 %s222, %s223
          %s225 = smul.addr %s224, 4
          %s226 = scalar_lea.vmem %s2, %s225
          %s227 = smul.u32 2, %s17
        $region47: #{semantic_mapping_forward.8} parent=15 // pred_fallthru
          _
      $region16: #{semantic_mapping_forward.8} parent=5 // pred_fallthru
        _
      %p228 = scmp.le.s32.totalorder 1, %s9
      %p229 = scmp.lt.s32.totalorder %s9, 1297
      %p230 = pnand %p228, %p229
      %p231 = pneg %p230
      // Predicated region
      $region48: #{semantic_mapping_forward.8} parent=5 // pred_check
        _
      $region49: #{semantic_mapping_forward.8} parent=5 // pred_check_branch
        %233 = sbr.rel (%p230) target = $region51
      $region50: #{semantic_mapping_forward.8} parent=5 // pred_region
        %s234 = ssub.s32 %s9, 1
        %s235 = sand.u32 %s43, 1
        %s236 = sand.u32 %s43, 1
        %s237 = smul.addr %s236, 64
        %s238 = scalar_lea.vmem [#allocation2], %s237
        // Predicated region
        $region52: #{semantic_mapping_forward.8} parent=50 // pred_check
          %p239 = pneg %p56
        $region53: #{semantic_mapping_forward.8} parent=50 // pred_check_branch
          %241 = sbr.rel (%p239) target = $region55
        $region54: #{semantic_mapping_forward.8} parent=50 // pred_region
          _
        $region55: #{semantic_mapping_forward.8} parent=50 // pred_fallthru
          _
        %s242 = sand.u32 %s43, 1
        %s243 = sand.u32 %s43, 1
        %s244 = smul.addr %s243, 64
        %s245 = scalar_lea.vmem [#allocation2], %s244
        %p246 = pneg %p56
        %p247 = pneg %p53
        %s248 = smul.u32 2, %s20
        %p249 = scmp.lt.s32.totalorder %s19, 1
        %s250 = scalar_select %p249, %s19, 1
        %p251 = scmp.lt.s32.totalorder %s248, 71
        %s252 = scalar_select %p251, %s248, 71
        %s253 = smul.addr %s250, 72
        %s254 = sadd.s32 %s252, %s253
        %s255 = smul.addr %s254, 4
        %s256 = scalar_lea.vmem %s1, %s255
        %p257 = pneg %p84
        %p258 = pneg %p81
        %s259 = smul.u32 2, %s20
        %p260 = scmp.lt.s32.totalorder %s19, 1
        %s261 = scalar_select %p260, %s19, 1
        %p262 = scmp.lt.s32.totalorder %s259, 71
        %s263 = scalar_select %p262, %s259, 71
        %s264 = smul.addr %s261, 72
        %s265 = sadd.s32 %s263, %s264
        %s266 = smul.addr %s265, 4
        %s267 = scalar_lea.vmem %s2, %s266
        %p268 = pneg %p112
        %p269 = pneg %p109
        %p270 = pneg %p140
        %p271 = pneg %p137
        %s272 = sand.u32 %s127, 1
        %s273 = sand.u32 %s127, 1
        %s274 = smul.addr %s273, 32
        %s275 = scalar_lea.vmem [#allocation3], %s274
        %s276 = smul.u32 4, %s21
        %s277 = smul.u32 2, %s20
        %p278 = scmp.lt.s32.totalorder %s19, 1
        %s279 = scalar_select %p278, %s19, 1
        %p280 = scmp.lt.s32.totalorder %s277, 71
        %s281 = scalar_select %p280, %s277, 71
        %s282 = smul.addr %s279, 72
        %s283 = sadd.s32 %s281, %s282
        %s284 = smul.addr %s283, 4
        %s285 = scalar_lea.vmem %s1, %s284
        %s286 = smul.u32 2, %s20
        %s287 = smul.u32 2, %s20
        %p288 = scmp.lt.s32.totalorder %s19, 1
        %s289 = scalar_select %p288, %s19, 1
        %p290 = scmp.lt.s32.totalorder %s287, 71
        %s291 = scalar_select %p290, %s287, 71
        %s292 = smul.addr %s289, 72
        %s293 = sadd.s32 %s291, %s292
        %s294 = smul.addr %s293, 4
        %s295 = scalar_lea.vmem %s2, %s294
        %s296 = smul.u32 2, %s20
        %s297 = smul.u32 2, %s20
        %s298 = smul.u32 %s21, 512
        %p299 = scmp.eq.s32.totalorder %s21, 0
        // Predicated region
        $region56: #{semantic_mapping_forward.8} parent=50 // pred_check
          %p300 = pneg %p299
        $region57: #{semantic_mapping_forward.8} parent=50 // pred_check_branch
          %302 = sbr.rel (%p300) target = $region59
        $region58: #{semantic_mapping_forward.8} parent=50 // pred_region
          %303 = vst [vmem:[%s275] sm:$0xff] 0.0
          %304 = vst [vmem:[%s275 + $0x8] sm:$0xff] 0.0
          %305 = vst [vmem:[%s275 + $0x10] sm:$0x1] 0.0
          %306 = vst [vmem:[%s275 + $0x18] sm:$0x1] 0.0
        $region59: #{semantic_mapping_forward.8} parent=50 // pred_fallthru
          _
        %v307 = vlaneseq
        %v308 = vshrl.u32 %v307, 7
        %v309 = vadd.s32 %v308, 8
        %v310 = vadd.s32 %v308, 16
        %v311 = vadd.s32 %v308, 24
        %v312 = vadd.s32 %v308, 32
        %v313 = vadd.s32 %v308, 40
        %v314 = vadd.s32 %v308, 48
        %v315 = vadd.s32 %v308, 56
        %v316 = vadd.s32 %v308, 64
        %v317 = vadd.s32 %v308, 72
        %v318 = vadd.s32 %v308, 80
        %v319 = vadd.s32 %v308, 88
        %v320 = vadd.s32 %v308, 96
        %v321 = vadd.s32 %v308, 104
        %v322 = vadd.s32 %v308, 112
        %v323 = vadd.s32 %v308, 120
        %v324 = vadd.s32 %v308, 128
        %v325 = vadd.s32 %v308, 136
        %v326 = vadd.s32 %v308, 144
        %v327 = vadd.s32 %v308, 152
        %v328 = vadd.s32 %v308, 160
        %v329 = vadd.s32 %v308, 168
        %v330 = vadd.s32 %v308, 176
        %v331 = vadd.s32 %v308, 184
        %v332 = vadd.s32 %v308, 192
        %v333 = vadd.s32 %v308, 200
        %v334 = vadd.s32 %v308, 208
        %v335 = vadd.s32 %v308, 216
        %v336 = vadd.s32 %v308, 224
        %v337 = vadd.s32 %v308, 232
        %v338 = vadd.s32 %v308, 240
        %v339 = vadd.s32 %v308, 248
        %v340 = vadd.s32 %v308, 256
        %v341 = vadd.s32 %v308, 264
        %v342 = vadd.s32 %v308, 272
        %v343 = vadd.s32 %v308, 280
        %v344 = vadd.s32 %v308, 288
        %v345 = vadd.s32 %v308, 296
        %v346 = vadd.s32 %v308, 304
        %v347 = vadd.s32 %v308, 312
        %v348 = vadd.s32 %v308, 320
        %v349 = vadd.s32 %v308, 328
        %v350 = vadd.s32 %v308, 336
        %v351 = vadd.s32 %v308, 344
        %v352 = vadd.s32 %v308, 352
        %v353 = vadd.s32 %v308, 360
        %v354 = vadd.s32 %v308, 368
        %v355 = vadd.s32 %v308, 376
        %v356 = vadd.s32 %v308, 384
        %v357 = vadd.s32 %v308, 392
        %v358 = vadd.s32 %v308, 400
        %v359 = vadd.s32 %v308, 408
        %v360 = vadd.s32 %v308, 416
        %v361 = vadd.s32 %v308, 424
        %v362 = vadd.s32 %v308, 432
        %v363 = vadd.s32 %v308, 440
        %v364 = vadd.s32 %v308, 448
        %v365 = vadd.s32 %v308, 456
        %v366 = vadd.s32 %v308, 464
        %v367 = vadd.s32 %v308, 472
        %v368 = vadd.s32 %v308, 480
        %v369 = vadd.s32 %v308, 488
        %v370 = vadd.s32 %v308, 496
        %v371 = vadd.s32 %v308, 504
        %v372 = vld [vmem:[%s285] ss:$4 sm:$0x3]
        %v373 = vstv %s298
        %v374 = vsub.s32 %v372, %v373
        %v375 = vld [vmem:[%s295] ss:$4 sm:$0x3]
        %v376 = vperm.slane %v374, 0
        %v377 = vperm.slane %v374, 1
        %vm378 = vcmp.eq.s32.totalorder %v308, %v376
        %vm379 = vcmp.eq.s32.totalorder %v308, %v377
        %vm380 = vcmp.eq.s32.totalorder %v309, %v376
        %vm381 = vcmp.eq.s32.totalorder %v309, %v377
        %vm382 = vcmp.eq.s32.totalorder %v310, %v376
        %vm383 = vcmp.eq.s32.totalorder %v310, %v377
        %vm384 = vcmp.eq.s32.totalorder %v311, %v376
        %vm385 = vcmp.eq.s32.totalorder %v311, %v377
        %vm386 = vcmp.eq.s32.totalorder %v312, %v376
        %vm387 = vcmp.eq.s32.totalorder %v312, %v377
        %vm388 = vcmp.eq.s32.totalorder %v313, %v376
        %vm389 = vcmp.eq.s32.totalorder %v313, %v377
        %vm390 = vcmp.eq.s32.totalorder %v314, %v376
        %vm391 = vcmp.eq.s32.totalorder %v314, %v377
        %vm392 = vcmp.eq.s32.totalorder %v315, %v376
        %vm393 = vcmp.eq.s32.totalorder %v315, %v377
        %vm394 = vcmp.eq.s32.totalorder %v316, %v376
        %vm395 = vcmp.eq.s32.totalorder %v316, %v377
        %vm396 = vcmp.eq.s32.totalorder %v317, %v376
        %vm397 = vcmp.eq.s32.totalorder %v317, %v377
        %vm398 = vcmp.eq.s32.totalorder %v318, %v376
        %vm399 = vcmp.eq.s32.totalorder %v318, %v377
        %vm400 = vcmp.eq.s32.totalorder %v319, %v376
        %vm401 = vcmp.eq.s32.totalorder %v319, %v377
        %vm402 = vcmp.eq.s32.totalorder %v320, %v376
        %vm403 = vcmp.eq.s32.totalorder %v320, %v377
        %vm404 = vcmp.eq.s32.totalorder %v321, %v376
        %vm405 = vcmp.eq.s32.totalorder %v321, %v377
        %vm406 = vcmp.eq.s32.totalorder %v322, %v376
        %vm407 = vcmp.eq.s32.totalorder %v322, %v377
        %vm408 = vcmp.eq.s32.totalorder %v323, %v376
        %vm409 = vcmp.eq.s32.totalorder %v323, %v377
        %vm410 = vcmp.eq.s32.totalorder %v324, %v376
        %vm411 = vcmp.eq.s32.totalorder %v324, %v377
        %vm412 = vcmp.eq.s32.totalorder %v325, %v376
        %vm413 = vcmp.eq.s32.totalorder %v325, %v377
        %vm414 = vcmp.eq.s32.totalorder %v326, %v376
        %vm415 = vcmp.eq.s32.totalorder %v326, %v377
        %vm416 = vcmp.eq.s32.totalorder %v327, %v376
        %vm417 = vcmp.eq.s32.totalorder %v327, %v377
        %vm418 = vcmp.eq.s32.totalorder %v328, %v376
        %vm419 = vcmp.eq.s32.totalorder %v328, %v377
        %vm420 = vcmp.eq.s32.totalorder %v329, %v376
        %vm421 = vcmp.eq.s32.totalorder %v329, %v377
        %vm422 = vcmp.eq.s32.totalorder %v330, %v376
        %vm423 = vcmp.eq.s32.totalorder %v330, %v377
        %vm424 = vcmp.eq.s32.totalorder %v331, %v376
        %vm425 = vcmp.eq.s32.totalorder %v331, %v377
        %vm426 = vcmp.eq.s32.totalorder %v332, %v376
        %vm427 = vcmp.eq.s32.totalorder %v332, %v377
        %vm428 = vcmp.eq.s32.totalorder %v333, %v376
        %vm429 = vcmp.eq.s32.totalorder %v333, %v377
        %vm430 = vcmp.eq.s32.totalorder %v334, %v376
        %vm431 = vcmp.eq.s32.totalorder %v334, %v377
        %vm432 = vcmp.eq.s32.totalorder %v335, %v376
        %vm433 = vcmp.eq.s32.totalorder %v335, %v377
        %vm434 = vcmp.eq.s32.totalorder %v336, %v376
        %vm435 = vcmp.eq.s32.totalorder %v336, %v377
        %vm436 = vcmp.eq.s32.totalorder %v337, %v376
        %vm437 = vcmp.eq.s32.totalorder %v337, %v377
        %vm438 = vcmp.eq.s32.totalorder %v338, %v376
        %vm439 = vcmp.eq.s32.totalorder %v338, %v377
        %vm440 = vcmp.eq.s32.totalorder %v339, %v376
        %vm441 = vcmp.eq.s32.totalorder %v339, %v377
        %vm442 = vcmp.eq.s32.totalorder %v340, %v376
        %vm443 = vcmp.eq.s32.totalorder %v340, %v377
        %vm444 = vcmp.eq.s32.totalorder %v341, %v376
        %vm445 = vcmp.eq.s32.totalorder %v341, %v377
        %vm446 = vcmp.eq.s32.totalorder %v342, %v376
        %vm447 = vcmp.eq.s32.totalorder %v342, %v377
        %vm448 = vcmp.eq.s32.totalorder %v343, %v376
        %vm449 = vcmp.eq.s32.totalorder %v343, %v377
        %vm450 = vcmp.eq.s32.totalorder %v344, %v376
        %vm451 = vcmp.eq.s32.totalorder %v344, %v377
        %vm452 = vcmp.eq.s32.totalorder %v345, %v376
        %vm453 = vcmp.eq.s32.totalorder %v345, %v377
        %vm454 = vcmp.eq.s32.totalorder %v346, %v376
        %vm455 = vcmp.eq.s32.totalorder %v346, %v377
        %vm456 = vcmp.eq.s32.totalorder %v347, %v376
        %vm457 = vcmp.eq.s32.totalorder %v347, %v377
        %vm458 = vcmp.eq.s32.totalorder %v348, %v376
        %vm459 = vcmp.eq.s32.totalorder %v348, %v377
        %vm460 = vcmp.eq.s32.totalorder %v349, %v376
        %vm461 = vcmp.eq.s32.totalorder %v349, %v377
        %vm462 = vcmp.eq.s32.totalorder %v350, %v376
        %vm463 = vcmp.eq.s32.totalorder %v350, %v377
        %vm464 = vcmp.eq.s32.totalorder %v351, %v376
        %vm465 = vcmp.eq.s32.totalorder %v351, %v377
        %vm466 = vcmp.eq.s32.totalorder %v352, %v376
        %vm467 = vcmp.eq.s32.totalorder %v352, %v377
        %vm468 = vcmp.eq.s32.totalorder %v353, %v376
        %vm469 = vcmp.eq.s32.totalorder %v353, %v377
        %vm470 = vcmp.eq.s32.totalorder %v354, %v376
        %vm471 = vcmp.eq.s32.totalorder %v354, %v377
        %vm472 = vcmp.eq.s32.totalorder %v355, %v376
        %vm473 = vcmp.eq.s32.totalorder %v355, %v377
        %vm474 = vcmp.eq.s32.totalorder %v356, %v376
        %vm475 = vcmp.eq.s32.totalorder %v356, %v377
        %vm476 = vcmp.eq.s32.totalorder %v357, %v376
        %vm477 = vcmp.eq.s32.totalorder %v357, %v377
        %vm478 = vcmp.eq.s32.totalorder %v358, %v376
        %vm479 = vcmp.eq.s32.totalorder %v358, %v377
        %vm480 = vcmp.eq.s32.totalorder %v359, %v376
        %vm481 = vcmp.eq.s32.totalorder %v359, %v377
        %vm482 = vcmp.eq.s32.totalorder %v360, %v376
        %vm483 = vcmp.eq.s32.totalorder %v360, %v377
        %vm484 = vcmp.eq.s32.totalorder %v361, %v376
        %vm485 = vcmp.eq.s32.totalorder %v361, %v377
        %vm486 = vcmp.eq.s32.totalorder %v362, %v376
        %vm487 = vcmp.eq.s32.totalorder %v362, %v377
        %vm488 = vcmp.eq.s32.totalorder %v363, %v376
        %vm489 = vcmp.eq.s32.totalorder %v363, %v377
        %vm490 = vcmp.eq.s32.totalorder %v364, %v376
        %vm491 = vcmp.eq.s32.totalorder %v364, %v377
        %vm492 = vcmp.eq.s32.totalorder %v365, %v376
        %vm493 = vcmp.eq.s32.totalorder %v365, %v377
        %vm494 = vcmp.eq.s32.totalorder %v366, %v376
        %vm495 = vcmp.eq.s32.totalorder %v366, %v377
        %vm496 = vcmp.eq.s32.totalorder %v367, %v376
        %vm497 = vcmp.eq.s32.totalorder %v367, %v377
        %vm498 = vcmp.eq.s32.totalorder %v368, %v376
        %vm499 = vcmp.eq.s32.totalorder %v368, %v377
        %vm500 = vcmp.eq.s32.totalorder %v369, %v376
        %vm501 = vcmp.eq.s32.totalorder %v369, %v377
        %vm502 = vcmp.eq.s32.totalorder %v370, %v376
        %vm503 = vcmp.eq.s32.totalorder %v370, %v377
        %vm504 = vcmp.eq.s32.totalorder %v371, %v376
        %vm505 = vcmp.eq.s32.totalorder %v371, %v377
        %v507 = vperm.slane %v375, 0
        %v508 = vperm.slane %v375, 1
        %v511 = vsel %vm378, %v507, 0.0
        %v512 = vsel %vm379, %v508, 0.0
        %v513 = vsel %vm380, %v507, 0.0
        %v514 = vsel %vm381, %v508, 0.0
        %v515 = vsel %vm382, %v507, 0.0
        %v516 = vsel %vm383, %v508, 0.0
        %v517 = vsel %vm384, %v507, 0.0
        %v518 = vsel %vm385, %v508, 0.0
        %v519 = vsel %vm386, %v507, 0.0
        %v520 = vsel %vm387, %v508, 0.0
        %v521 = vsel %vm388, %v507, 0.0
        %v522 = vsel %vm389, %v508, 0.0
        %v523 = vsel %vm390, %v507, 0.0
        %v524 = vsel %vm391, %v508, 0.0
        %v525 = vsel %vm392, %v507, 0.0
        %v526 = vsel %vm393, %v508, 0.0
        %v527 = vsel %vm394, %v507, 0.0
        %v528 = vsel %vm395, %v508, 0.0
        %v529 = vsel %vm396, %v507, 0.0
        %v530 = vsel %vm397, %v508, 0.0
        %v531 = vsel %vm398, %v507, 0.0
        %v532 = vsel %vm399, %v508, 0.0
        %v533 = vsel %vm400, %v507, 0.0
        %v534 = vsel %vm401, %v508, 0.0
        %v535 = vsel %vm402, %v507, 0.0
        %v536 = vsel %vm403, %v508, 0.0
        %v537 = vsel %vm404, %v507, 0.0
        %v538 = vsel %vm405, %v508, 0.0
        %v539 = vsel %vm406, %v507, 0.0
        %v540 = vsel %vm407, %v508, 0.0
        %v541 = vsel %vm408, %v507, 0.0
        %v542 = vsel %vm409, %v508, 0.0
        %v543 = vsel %vm410, %v507, 0.0
        %v544 = vsel %vm411, %v508, 0.0
        %v545 = vsel %vm412, %v507, 0.0
        %v546 = vsel %vm413, %v508, 0.0
        %v547 = vsel %vm414, %v507, 0.0
        %v548 = vsel %vm415, %v508, 0.0
        %v549 = vsel %vm416, %v507, 0.0
        %v550 = vsel %vm417, %v508, 0.0
        %v551 = vsel %vm418, %v507, 0.0
        %v552 = vsel %vm419, %v508, 0.0
        %v553 = vsel %vm420, %v507, 0.0
        %v554 = vsel %vm421, %v508, 0.0
        %v555 = vsel %vm422, %v507, 0.0
        %v556 = vsel %vm423, %v508, 0.0
        %v557 = vsel %vm424, %v507, 0.0
        %v558 = vsel %vm425, %v508, 0.0
        %v559 = vsel %vm426, %v507, 0.0
        %v560 = vsel %vm427, %v508, 0.0
        %v561 = vsel %vm428, %v507, 0.0
        %v562 = vsel %vm429, %v508, 0.0
        %v563 = vsel %vm430, %v507, 0.0
        %v564 = vsel %vm431, %v508, 0.0
        %v565 = vsel %vm432, %v507, 0.0
        %v566 = vsel %vm433, %v508, 0.0
        %v567 = vsel %vm434, %v507, 0.0
        %v568 = vsel %vm435, %v508, 0.0
        %v569 = vsel %vm436, %v507, 0.0
        %v570 = vsel %vm437, %v508, 0.0
        %v571 = vsel %vm438, %v507, 0.0
        %v572 = vsel %vm439, %v508, 0.0
        %v573 = vsel %vm440, %v507, 0.0
        %v574 = vsel %vm441, %v508, 0.0
        %v575 = vsel %vm442, %v507, 0.0
        %v576 = vsel %vm443, %v508, 0.0
        %v577 = vsel %vm444, %v507, 0.0
        %v578 = vsel %vm445, %v508, 0.0
        %v579 = vsel %vm446, %v507, 0.0
        %v580 = vsel %vm447, %v508, 0.0
        %v581 = vsel %vm448, %v507, 0.0
        %v582 = vsel %vm449, %v508, 0.0
        %v583 = vsel %vm450, %v507, 0.0
        %v584 = vsel %vm451, %v508, 0.0
        %v585 = vsel %vm452, %v507, 0.0
        %v586 = vsel %vm453, %v508, 0.0
        %v587 = vsel %vm454, %v507, 0.0
        %v588 = vsel %vm455, %v508, 0.0
        %v589 = vsel %vm456, %v507, 0.0
        %v590 = vsel %vm457, %v508, 0.0
        %v591 = vsel %vm458, %v507, 0.0
        %v592 = vsel %vm459, %v508, 0.0
        %v593 = vsel %vm460, %v507, 0.0
        %v594 = vsel %vm461, %v508, 0.0
        %v595 = vsel %vm462, %v507, 0.0
        %v596 = vsel %vm463, %v508, 0.0
        %v597 = vsel %vm464, %v507, 0.0
        %v598 = vsel %vm465, %v508, 0.0
        %v599 = vsel %vm466, %v507, 0.0
        %v600 = vsel %vm467, %v508, 0.0
        %v601 = vsel %vm468, %v507, 0.0
        %v602 = vsel %vm469, %v508, 0.0
        %v603 = vsel %vm470, %v507, 0.0
        %v604 = vsel %vm471, %v508, 0.0
        %v605 = vsel %vm472, %v507, 0.0
        %v606 = vsel %vm473, %v508, 0.0
        %v607 = vsel %vm474, %v507, 0.0
        %v608 = vsel %vm475, %v508, 0.0
        %v609 = vsel %vm476, %v507, 0.0
        %v610 = vsel %vm477, %v508, 0.0
        %v611 = vsel %vm478, %v507, 0.0
        %v612 = vsel %vm479, %v508, 0.0
        %v613 = vsel %vm480, %v507, 0.0
        %v614 = vsel %vm481, %v508, 0.0
        %v615 = vsel %vm482, %v507, 0.0
        %v616 = vsel %vm483, %v508, 0.0
        %v617 = vsel %vm484, %v507, 0.0
        %v618 = vsel %vm485, %v508, 0.0
        %v619 = vsel %vm486, %v507, 0.0
        %v620 = vsel %vm487, %v508, 0.0
        %v621 = vsel %vm488, %v507, 0.0
        %v622 = vsel %vm489, %v508, 0.0
        %v623 = vsel %vm490, %v507, 0.0
        %v624 = vsel %vm491, %v508, 0.0
        %v625 = vsel %vm492, %v507, 0.0
        %v626 = vsel %vm493, %v508, 0.0
        %v627 = vsel %vm494, %v507, 0.0
        %v628 = vsel %vm495, %v508, 0.0
        %v629 = vsel %vm496, %v507, 0.0
        %v630 = vsel %vm497, %v508, 0.0
        %v631 = vsel %vm498, %v507, 0.0
        %v632 = vsel %vm499, %v508, 0.0
        %v633 = vsel %vm500, %v507, 0.0
        %v634 = vsel %vm501, %v508, 0.0
        %v635 = vsel %vm502, %v507, 0.0
        %v636 = vsel %vm503, %v508, 0.0
        %v637 = vsel %vm504, %v507, 0.0
        %v638 = vsel %vm505, %v508, 0.0
        %v639 = vadd.f32 %v511, 0.0
        %v640 = vadd.f32 %v512, 0.0
        %v641 = vadd.f32 %v513, 0.0
        %v642 = vadd.f32 %v514, 0.0
        %v643 = vadd.f32 %v515, 0.0
        %v644 = vadd.f32 %v516, 0.0
        %v645 = vadd.f32 %v517, 0.0
        %v646 = vadd.f32 %v518, 0.0
        %v647 = vadd.f32 %v519, 0.0
        %v648 = vadd.f32 %v520, 0.0
        %v649 = vadd.f32 %v521, 0.0
        %v650 = vadd.f32 %v522, 0.0
        %v651 = vadd.f32 %v523, 0.0
        %v652 = vadd.f32 %v524, 0.0
        %v653 = vadd.f32 %v525, 0.0
        %v654 = vadd.f32 %v526, 0.0
        %v655 = vadd.f32 %v527, 0.0
        %v656 = vadd.f32 %v528, 0.0
        %v657 = vadd.f32 %v529, 0.0
        %v658 = vadd.f32 %v530, 0.0
        %v659 = vadd.f32 %v531, 0.0
        %v660 = vadd.f32 %v532, 0.0
        %v661 = vadd.f32 %v533, 0.0
        %v662 = vadd.f32 %v534, 0.0
        %v663 = vadd.f32 %v535, 0.0
        %v664 = vadd.f32 %v536, 0.0
        %v665 = vadd.f32 %v537, 0.0
        %v666 = vadd.f32 %v538, 0.0
        %v667 = vadd.f32 %v539, 0.0
        %v668 = vadd.f32 %v540, 0.0
        %v669 = vadd.f32 %v541, 0.0
        %v670 = vadd.f32 %v542, 0.0
        %v671 = vadd.f32 %v543, 0.0
        %v672 = vadd.f32 %v544, 0.0
        %v673 = vadd.f32 %v545, 0.0
        %v674 = vadd.f32 %v546, 0.0
        %v675 = vadd.f32 %v547, 0.0
        %v676 = vadd.f32 %v548, 0.0
        %v677 = vadd.f32 %v549, 0.0
        %v678 = vadd.f32 %v550, 0.0
        %v679 = vadd.f32 %v551, 0.0
        %v680 = vadd.f32 %v552, 0.0
        %v681 = vadd.f32 %v553, 0.0
        %v682 = vadd.f32 %v554, 0.0
        %v683 = vadd.f32 %v555, 0.0
        %v684 = vadd.f32 %v556, 0.0
        %v685 = vadd.f32 %v557, 0.0
        %v686 = vadd.f32 %v558, 0.0
        %v687 = vadd.f32 %v559, 0.0
        %v688 = vadd.f32 %v560, 0.0
        %v689 = vadd.f32 %v561, 0.0
        %v690 = vadd.f32 %v562, 0.0
        %v691 = vadd.f32 %v563, 0.0
        %v692 = vadd.f32 %v564, 0.0
        %v693 = vadd.f32 %v565, 0.0
        %v694 = vadd.f32 %v566, 0.0
        %v695 = vadd.f32 %v567, 0.0
        %v696 = vadd.f32 %v568, 0.0
        %v697 = vadd.f32 %v569, 0.0
        %v698 = vadd.f32 %v570, 0.0
        %v699 = vadd.f32 %v571, 0.0
        %v700 = vadd.f32 %v572, 0.0
        %v701 = vadd.f32 %v573, 0.0
        %v702 = vadd.f32 %v574, 0.0
        %v703 = vadd.f32 %v575, 0.0
        %v704 = vadd.f32 %v576, 0.0
        %v705 = vadd.f32 %v577, 0.0
        %v706 = vadd.f32 %v578, 0.0
        %v707 = vadd.f32 %v579, 0.0
        %v708 = vadd.f32 %v580, 0.0
        %v709 = vadd.f32 %v581, 0.0
        %v710 = vadd.f32 %v582, 0.0
        %v711 = vadd.f32 %v583, 0.0
        %v712 = vadd.f32 %v584, 0.0
        %v713 = vadd.f32 %v585, 0.0
        %v714 = vadd.f32 %v586, 0.0
        %v715 = vadd.f32 %v587, 0.0
        %v716 = vadd.f32 %v588, 0.0
        %v717 = vadd.f32 %v589, 0.0
        %v718 = vadd.f32 %v590, 0.0
        %v719 = vadd.f32 %v591, 0.0
        %v720 = vadd.f32 %v592, 0.0
        %v721 = vadd.f32 %v593, 0.0
        %v722 = vadd.f32 %v594, 0.0
        %v723 = vadd.f32 %v595, 0.0
        %v724 = vadd.f32 %v596, 0.0
        %v725 = vadd.f32 %v597, 0.0
        %v726 = vadd.f32 %v598, 0.0
        %v727 = vadd.f32 %v599, 0.0
        %v728 = vadd.f32 %v600, 0.0
        %v729 = vadd.f32 %v601, 0.0
        %v730 = vadd.f32 %v602, 0.0
        %v731 = vadd.f32 %v603, 0.0
        %v732 = vadd.f32 %v604, 0.0
        %v733 = vadd.f32 %v605, 0.0
        %v734 = vadd.f32 %v606, 0.0
        %v735 = vadd.f32 %v607, 0.0
        %v736 = vadd.f32 %v608, 0.0
        %v737 = vadd.f32 %v609, 0.0
        %v738 = vadd.f32 %v610, 0.0
        %v739 = vadd.f32 %v611, 0.0
        %v740 = vadd.f32 %v612, 0.0
        %v741 = vadd.f32 %v613, 0.0
        %v742 = vadd.f32 %v614, 0.0
        %v743 = vadd.f32 %v615, 0.0
        %v744 = vadd.f32 %v616, 0.0
        %v745 = vadd.f32 %v617, 0.0
        %v746 = vadd.f32 %v618, 0.0
        %v747 = vadd.f32 %v619, 0.0
        %v748 = vadd.f32 %v620, 0.0
        %v749 = vadd.f32 %v621, 0.0
        %v750 = vadd.f32 %v622, 0.0
        %v751 = vadd.f32 %v623, 0.0
        %v752 = vadd.f32 %v624, 0.0
        %v753 = vadd.f32 %v625, 0.0
        %v754 = vadd.f32 %v626, 0.0
        %v755 = vadd.f32 %v627, 0.0
        %v756 = vadd.f32 %v628, 0.0
        %v757 = vadd.f32 %v629, 0.0
        %v758 = vadd.f32 %v630, 0.0
        %v759 = vadd.f32 %v631, 0.0
        %v760 = vadd.f32 %v632, 0.0
        %v761 = vadd.f32 %v633, 0.0
        %v762 = vadd.f32 %v634, 0.0
        %v763 = vadd.f32 %v635, 0.0
        %v764 = vadd.f32 %v636, 0.0
        %v765 = vadd.f32 %v637, 0.0
        %v766 = vadd.f32 %v638, 0.0
        %s767 = scalar_lea.vmem %s285, 1
        %v768 = vld [vmem:[%s767] ss:$4 sm:$0x3]
        %v769 = vsub.s32 %v768, %v373
        %s770 = scalar_lea.vmem %s295, 1
        %v771 = vld [vmem:[%s770] ss:$4 sm:$0x3]
        %v772 = vperm.slane %v769, 0
        %v773 = vperm.slane %v769, 1
        %vm774 = vcmp.eq.s32.totalorder %v308, %v772
        %vm775 = vcmp.eq.s32.totalorder %v308, %v773
        %vm776 = vcmp.eq.s32.totalorder %v309, %v772
        %vm777 = vcmp.eq.s32.totalorder %v309, %v773
        %vm778 = vcmp.eq.s32.totalorder %v310, %v772
        %vm779 = vcmp.eq.s32.totalorder %v310, %v773
        %vm780 = vcmp.eq.s32.totalorder %v311, %v772
        %vm781 = vcmp.eq.s32.totalorder %v311, %v773
        %vm782 = vcmp.eq.s32.totalorder %v312, %v772
        %vm783 = vcmp.eq.s32.totalorder %v312, %v773
        %vm784 = vcmp.eq.s32.totalorder %v313, %v772
        %vm785 = vcmp.eq.s32.totalorder %v313, %v773
        %vm786 = vcmp.eq.s32.totalorder %v314, %v772
        %vm787 = vcmp.eq.s32.totalorder %v314, %v773
        %vm788 = vcmp.eq.s32.totalorder %v315, %v772
        %vm789 = vcmp.eq.s32.totalorder %v315, %v773
        %vm790 = vcmp.eq.s32.totalorder %v316, %v772
        %vm791 = vcmp.eq.s32.totalorder %v316, %v773
        %vm792 = vcmp.eq.s32.totalorder %v317, %v772
        %vm793 = vcmp.eq.s32.totalorder %v317, %v773
        %vm794 = vcmp.eq.s32.totalorder %v318, %v772
        %vm795 = vcmp.eq.s32.totalorder %v318, %v773
        %vm796 = vcmp.eq.s32.totalorder %v319, %v772
        %vm797 = vcmp.eq.s32.totalorder %v319, %v773
        %vm798 = vcmp.eq.s32.totalorder %v320, %v772
        %vm799 = vcmp.eq.s32.totalorder %v320, %v773
        %vm800 = vcmp.eq.s32.totalorder %v321, %v772
        %vm801 = vcmp.eq.s32.totalorder %v321, %v773
        %vm802 = vcmp.eq.s32.totalorder %v322, %v772
        %vm803 = vcmp.eq.s32.totalorder %v322, %v773
        %vm804 = vcmp.eq.s32.totalorder %v323, %v772
        %vm805 = vcmp.eq.s32.totalorder %v323, %v773
        %vm806 = vcmp.eq.s32.totalorder %v324, %v772
        %vm807 = vcmp.eq.s32.totalorder %v324, %v773
        %vm808 = vcmp.eq.s32.totalorder %v325, %v772
        %vm809 = vcmp.eq.s32.totalorder %v325, %v773
        %vm810 = vcmp.eq.s32.totalorder %v326, %v772
        %vm811 = vcmp.eq.s32.totalorder %v326, %v773
        %vm812 = vcmp.eq.s32.totalorder %v327, %v772
        %vm813 = vcmp.eq.s32.totalorder %v327, %v773
        %vm814 = vcmp.eq.s32.totalorder %v328, %v772
        %vm815 = vcmp.eq.s32.totalorder %v328, %v773
        %vm816 = vcmp.eq.s32.totalorder %v329, %v772
        %vm817 = vcmp.eq.s32.totalorder %v329, %v773
        %vm818 = vcmp.eq.s32.totalorder %v330, %v772
        %vm819 = vcmp.eq.s32.totalorder %v330, %v773
        %vm820 = vcmp.eq.s32.totalorder %v331, %v772
        %vm821 = vcmp.eq.s32.totalorder %v331, %v773
        %vm822 = vcmp.eq.s32.totalorder %v332, %v772
        %vm823 = vcmp.eq.s32.totalorder %v332, %v773
        %vm824 = vcmp.eq.s32.totalorder %v333, %v772
        %vm825 = vcmp.eq.s32.totalorder %v333, %v773
        %vm826 = vcmp.eq.s32.totalorder %v334, %v772
        %vm827 = vcmp.eq.s32.totalorder %v334, %v773
        %vm828 = vcmp.eq.s32.totalorder %v335, %v772
        %vm829 = vcmp.eq.s32.totalorder %v335, %v773
        %vm830 = vcmp.eq.s32.totalorder %v336, %v772
        %vm831 = vcmp.eq.s32.totalorder %v336, %v773
        %vm832 = vcmp.eq.s32.totalorder %v337, %v772
        %vm833 = vcmp.eq.s32.totalorder %v337, %v773
        %vm834 = vcmp.eq.s32.totalorder %v338, %v772
        %vm835 = vcmp.eq.s32.totalorder %v338, %v773
        %vm836 = vcmp.eq.s32.totalorder %v339, %v772
        %vm837 = vcmp.eq.s32.totalorder %v339, %v773
        %vm838 = vcmp.eq.s32.totalorder %v340, %v772
        %vm839 = vcmp.eq.s32.totalorder %v340, %v773
        %vm840 = vcmp.eq.s32.totalorder %v341, %v772
        %vm841 = vcmp.eq.s32.totalorder %v341, %v773
        %vm842 = vcmp.eq.s32.totalorder %v342, %v772
        %vm843 = vcmp.eq.s32.totalorder %v342, %v773
        %vm844 = vcmp.eq.s32.totalorder %v343, %v772
        %vm845 = vcmp.eq.s32.totalorder %v343, %v773
        %vm846 = vcmp.eq.s32.totalorder %v344, %v772
        %vm847 = vcmp.eq.s32.totalorder %v344, %v773
        %vm848 = vcmp.eq.s32.totalorder %v345, %v772
        %vm849 = vcmp.eq.s32.totalorder %v345, %v773
        %vm850 = vcmp.eq.s32.totalorder %v346, %v772
        %vm851 = vcmp.eq.s32.totalorder %v346, %v773
        %vm852 = vcmp.eq.s32.totalorder %v347, %v772
        %vm853 = vcmp.eq.s32.totalorder %v347, %v773
        %vm854 = vcmp.eq.s32.totalorder %v348, %v772
        %vm855 = vcmp.eq.s32.totalorder %v348, %v773
        %vm856 = vcmp.eq.s32.totalorder %v349, %v772
        %vm857 = vcmp.eq.s32.totalorder %v349, %v773
        %vm858 = vcmp.eq.s32.totalorder %v350, %v772
        %vm859 = vcmp.eq.s32.totalorder %v350, %v773
        %vm860 = vcmp.eq.s32.totalorder %v351, %v772
        %vm861 = vcmp.eq.s32.totalorder %v351, %v773
        %vm862 = vcmp.eq.s32.totalorder %v352, %v772
        %vm863 = vcmp.eq.s32.totalorder %v352, %v773
        %vm864 = vcmp.eq.s32.totalorder %v353, %v772
        %vm865 = vcmp.eq.s32.totalorder %v353, %v773
        %vm866 = vcmp.eq.s32.totalorder %v354, %v772
        %vm867 = vcmp.eq.s32.totalorder %v354, %v773
        %vm868 = vcmp.eq.s32.totalorder %v355, %v772
        %vm869 = vcmp.eq.s32.totalorder %v355, %v773
        %vm870 = vcmp.eq.s32.totalorder %v356, %v772
        %vm871 = vcmp.eq.s32.totalorder %v356, %v773
        %vm872 = vcmp.eq.s32.totalorder %v357, %v772
        %vm873 = vcmp.eq.s32.totalorder %v357, %v773
        %vm874 = vcmp.eq.s32.totalorder %v358, %v772
        %vm875 = vcmp.eq.s32.totalorder %v358, %v773
        %vm876 = vcmp.eq.s32.totalorder %v359, %v772
        %vm877 = vcmp.eq.s32.totalorder %v359, %v773
        %vm878 = vcmp.eq.s32.totalorder %v360, %v772
        %vm879 = vcmp.eq.s32.totalorder %v360, %v773
        %vm880 = vcmp.eq.s32.totalorder %v361, %v772
        %vm881 = vcmp.eq.s32.totalorder %v361, %v773
        %vm882 = vcmp.eq.s32.totalorder %v362, %v772
        %vm883 = vcmp.eq.s32.totalorder %v362, %v773
        %vm884 = vcmp.eq.s32.totalorder %v363, %v772
        %vm885 = vcmp.eq.s32.totalorder %v363, %v773
        %vm886 = vcmp.eq.s32.totalorder %v364, %v772
        %vm887 = vcmp.eq.s32.totalorder %v364, %v773
        %vm888 = vcmp.eq.s32.totalorder %v365, %v772
        %vm889 = vcmp.eq.s32.totalorder %v365, %v773
        %vm890 = vcmp.eq.s32.totalorder %v366, %v772
        %vm891 = vcmp.eq.s32.totalorder %v366, %v773
        %vm892 = vcmp.eq.s32.totalorder %v367, %v772
        %vm893 = vcmp.eq.s32.totalorder %v367, %v773
        %vm894 = vcmp.eq.s32.totalorder %v368, %v772
        %vm895 = vcmp.eq.s32.totalorder %v368, %v773
        %vm896 = vcmp.eq.s32.totalorder %v369, %v772
        %vm897 = vcmp.eq.s32.totalorder %v369, %v773
        %vm898 = vcmp.eq.s32.totalorder %v370, %v772
        %vm899 = vcmp.eq.s32.totalorder %v370, %v773
        %vm900 = vcmp.eq.s32.totalorder %v371, %v772
        %vm901 = vcmp.eq.s32.totalorder %v371, %v773
        %v903 = vperm.slane %v771, 0
        %v904 = vperm.slane %v771, 1
        %v907 = vsel %vm774, %v903, 0.0
        %v908 = vsel %vm775, %v904, 0.0
        %v909 = vsel %vm776, %v903, 0.0
        %v910 = vsel %vm777, %v904, 0.0
        %v911 = vsel %vm778, %v903, 0.0
        %v912 = vsel %vm779, %v904, 0.0
        %v913 = vsel %vm780, %v903, 0.0
        %v914 = vsel %vm781, %v904, 0.0
        %v915 = vsel %vm782, %v903, 0.0
        %v916 = vsel %vm783, %v904, 0.0
        %v917 = vsel %vm784, %v903, 0.0
        %v918 = vsel %vm785, %v904, 0.0
        %v919 = vsel %vm786, %v903, 0.0
        %v920 = vsel %vm787, %v904, 0.0
        %v921 = vsel %vm788, %v903, 0.0
        %v922 = vsel %vm789, %v904, 0.0
        %v923 = vsel %vm790, %v903, 0.0
        %v924 = vsel %vm791, %v904, 0.0
        %v925 = vsel %vm792, %v903, 0.0
        %v926 = vsel %vm793, %v904, 0.0
        %v927 = vsel %vm794, %v903, 0.0
        %v928 = vsel %vm795, %v904, 0.0
        %v929 = vsel %vm796, %v903, 0.0
        %v930 = vsel %vm797, %v904, 0.0
        %v931 = vsel %vm798, %v903, 0.0
        %v932 = vsel %vm799, %v904, 0.0
        %v933 = vsel %vm800, %v903, 0.0
        %v934 = vsel %vm801, %v904, 0.0
        %v935 = vsel %vm802, %v903, 0.0
        %v936 = vsel %vm803, %v904, 0.0
        %v937 = vsel %vm804, %v903, 0.0
        %v938 = vsel %vm805, %v904, 0.0
        %v939 = vsel %vm806, %v903, 0.0
        %v940 = vsel %vm807, %v904, 0.0
        %v941 = vsel %vm808, %v903, 0.0
        %v942 = vsel %vm809, %v904, 0.0
        %v943 = vsel %vm810, %v903, 0.0
        %v944 = vsel %vm811, %v904, 0.0
        %v945 = vsel %vm812, %v903, 0.0
        %v946 = vsel %vm813, %v904, 0.0
        %v947 = vsel %vm814, %v903, 0.0
        %v948 = vsel %vm815, %v904, 0.0
        %v949 = vsel %vm816, %v903, 0.0
        %v950 = vsel %vm817, %v904, 0.0
        %v951 = vsel %vm818, %v903, 0.0
        %v952 = vsel %vm819, %v904, 0.0
        %v953 = vsel %vm820, %v903, 0.0
        %v954 = vsel %vm821, %v904, 0.0
        %v955 = vsel %vm822, %v903, 0.0
        %v956 = vsel %vm823, %v904, 0.0
        %v957 = vsel %vm824, %v903, 0.0
        %v958 = vsel %vm825, %v904, 0.0
        %v959 = vsel %vm826, %v903, 0.0
        %v960 = vsel %vm827, %v904, 0.0
        %v961 = vsel %vm828, %v903, 0.0
        %v962 = vsel %vm829, %v904, 0.0
        %v963 = vsel %vm830, %v903, 0.0
        %v964 = vsel %vm831, %v904, 0.0
        %v965 = vsel %vm832, %v903, 0.0
        %v966 = vsel %vm833, %v904, 0.0
        %v967 = vsel %vm834, %v903, 0.0
        %v968 = vsel %vm835, %v904, 0.0
        %v969 = vsel %vm836, %v903, 0.0
        %v970 = vsel %vm837, %v904, 0.0
        %v971 = vsel %vm838, %v903, 0.0
        %v972 = vsel %vm839, %v904, 0.0
        %v973 = vsel %vm840, %v903, 0.0
        %v974 = vsel %vm841, %v904, 0.0
        %v975 = vsel %vm842, %v903, 0.0
        %v976 = vsel %vm843, %v904, 0.0
        %v977 = vsel %vm844, %v903, 0.0
        %v978 = vsel %vm845, %v904, 0.0
        %v979 = vsel %vm846, %v903, 0.0
        %v980 = vsel %vm847, %v904, 0.0
        %v981 = vsel %vm848, %v903, 0.0
        %v982 = vsel %vm849, %v904, 0.0
        %v983 = vsel %vm850, %v903, 0.0
        %v984 = vsel %vm851, %v904, 0.0
        %v985 = vsel %vm852, %v903, 0.0
        %v986 = vsel %vm853, %v904, 0.0
        %v987 = vsel %vm854, %v903, 0.0
        %v988 = vsel %vm855, %v904, 0.0
        %v989 = vsel %vm856, %v903, 0.0
        %v990 = vsel %vm857, %v904, 0.0
        %v991 = vsel %vm858, %v903, 0.0
        %v992 = vsel %vm859, %v904, 0.0
        %v993 = vsel %vm860, %v903, 0.0
        %v994 = vsel %vm861, %v904, 0.0
        %v995 = vsel %vm862, %v903, 0.0
        %v996 = vsel %vm863, %v904, 0.0
        %v997 = vsel %vm864, %v903, 0.0
        %v998 = vsel %vm865, %v904, 0.0
        %v999 = vsel %vm866, %v903, 0.0
        %v1000 = vsel %vm867, %v904, 0.0
        %v1001 = vsel %vm868, %v903, 0.0
        %v1002 = vsel %vm869, %v904, 0.0
        %v1003 = vsel %vm870, %v903, 0.0
        %v1004 = vsel %vm871, %v904, 0.0
        %v1005 = vsel %vm872, %v903, 0.0
        %v1006 = vsel %vm873, %v904, 0.0
        %v1007 = vsel %vm874, %v903, 0.0
        %v1008 = vsel %vm875, %v904, 0.0
        %v1009 = vsel %vm876, %v903, 0.0
        %v1010 = vsel %vm877, %v904, 0.0
        %v1011 = vsel %vm878, %v903, 0.0
        %v1012 = vsel %vm879, %v904, 0.0
        %v1013 = vsel %vm880, %v903, 0.0
        %v1014 = vsel %vm881, %v904, 0.0
        %v1015 = vsel %vm882, %v903, 0.0
        %v1016 = vsel %vm883, %v904, 0.0
        %v1017 = vsel %vm884, %v903, 0.0
        %v1018 = vsel %vm885, %v904, 0.0
        %v1019 = vsel %vm886, %v903, 0.0
        %v1020 = vsel %vm887, %v904, 0.0
        %v1021 = vsel %vm888, %v903, 0.0
        %v1022 = vsel %vm889, %v904, 0.0
        %v1023 = vsel %vm890, %v903, 0.0
        %v1024 = vsel %vm891, %v904, 0.0
        %v1025 = vsel %vm892, %v903, 0.0
        %v1026 = vsel %vm893, %v904, 0.0
        %v1027 = vsel %vm894, %v903, 0.0
        %v1028 = vsel %vm895, %v904, 0.0
        %v1029 = vsel %vm896, %v903, 0.0
        %v1030 = vsel %vm897, %v904, 0.0
        %v1031 = vsel %vm898, %v903, 0.0
        %v1032 = vsel %vm899, %v904, 0.0
        %v1033 = vsel %vm900, %v903, 0.0
        %v1034 = vsel %vm901, %v904, 0.0
        %v1035 = vadd.f32 %v639, %v907
        %v1036 = vadd.f32 %v640, %v908
        %v1037 = vadd.f32 %v641, %v909
        %v1038 = vadd.f32 %v642, %v910
        %v1039 = vadd.f32 %v643, %v911
        %v1040 = vadd.f32 %v644, %v912
        %v1041 = vadd.f32 %v645, %v913
        %v1042 = vadd.f32 %v646, %v914
        %v1043 = vadd.f32 %v647, %v915
        %v1044 = vadd.f32 %v648, %v916
        %v1045 = vadd.f32 %v649, %v917
        %v1046 = vadd.f32 %v650, %v918
        %v1047 = vadd.f32 %v651, %v919
        %v1048 = vadd.f32 %v652, %v920
        %v1049 = vadd.f32 %v653, %v921
        %v1050 = vadd.f32 %v654, %v922
        %v1051 = vadd.f32 %v655, %v923
        %v1052 = vadd.f32 %v656, %v924
        %v1053 = vadd.f32 %v657, %v925
        %v1054 = vadd.f32 %v658, %v926
        %v1055 = vadd.f32 %v659, %v927
        %v1056 = vadd.f32 %v660, %v928
        %v1057 = vadd.f32 %v661, %v929
        %v1058 = vadd.f32 %v662, %v930
        %v1059 = vadd.f32 %v663, %v931
        %v1060 = vadd.f32 %v664, %v932
        %v1061 = vadd.f32 %v665, %v933
        %v1062 = vadd.f32 %v666, %v934
        %v1063 = vadd.f32 %v667, %v935
        %v1064 = vadd.f32 %v668, %v936
        %v1065 = vadd.f32 %v669, %v937
        %v1066 = vadd.f32 %v670, %v938
        %v1067 = vadd.f32 %v671, %v939
        %v1068 = vadd.f32 %v672, %v940
        %v1069 = vadd.f32 %v673, %v941
        %v1070 = vadd.f32 %v674, %v942
        %v1071 = vadd.f32 %v675, %v943
        %v1072 = vadd.f32 %v676, %v944
        %v1073 = vadd.f32 %v677, %v945
        %v1074 = vadd.f32 %v678, %v946
        %v1075 = vadd.f32 %v679, %v947
        %v1076 = vadd.f32 %v680, %v948
        %v1077 = vadd.f32 %v681, %v949
        %v1078 = vadd.f32 %v682, %v950
        %v1079 = vadd.f32 %v683, %v951
        %v1080 = vadd.f32 %v684, %v952
        %v1081 = vadd.f32 %v685, %v953
        %v1082 = vadd.f32 %v686, %v954
        %v1083 = vadd.f32 %v687, %v955
        %v1084 = vadd.f32 %v688, %v956
        %v1085 = vadd.f32 %v689, %v957
        %v1086 = vadd.f32 %v690, %v958
        %v1087 = vadd.f32 %v691, %v959
        %v1088 = vadd.f32 %v692, %v960
        %v1089 = vadd.f32 %v693, %v961
        %v1090 = vadd.f32 %v694, %v962
        %v1091 = vadd.f32 %v695, %v963
        %v1092 = vadd.f32 %v696, %v964
        %v1093 = vadd.f32 %v697, %v965
        %v1094 = vadd.f32 %v698, %v966
        %v1095 = vadd.f32 %v699, %v967
        %v1096 = vadd.f32 %v700, %v968
        %v1097 = vadd.f32 %v701, %v969
        %v1098 = vadd.f32 %v702, %v970
        %v1099 = vadd.f32 %v703, %v971
        %v1100 = vadd.f32 %v704, %v972
        %v1101 = vadd.f32 %v705, %v973
        %v1102 = vadd.f32 %v706, %v974
        %v1103 = vadd.f32 %v707, %v975
        %v1104 = vadd.f32 %v708, %v976
        %v1105 = vadd.f32 %v709, %v977
        %v1106 = vadd.f32 %v710, %v978
        %v1107 = vadd.f32 %v711, %v979
        %v1108 = vadd.f32 %v712, %v980
        %v1109 = vadd.f32 %v713, %v981
        %v1110 = vadd.f32 %v714, %v982
        %v1111 = vadd.f32 %v715, %v983
        %v1112 = vadd.f32 %v716, %v984
        %v1113 = vadd.f32 %v717, %v985
        %v1114 = vadd.f32 %v718, %v986
        %v1115 = vadd.f32 %v719, %v987
        %v1116 = vadd.f32 %v720, %v988
        %v1117 = vadd.f32 %v721, %v989
        %v1118 = vadd.f32 %v722, %v990
        %v1119 = vadd.f32 %v723, %v991
        %v1120 = vadd.f32 %v724, %v992
        %v1121 = vadd.f32 %v725, %v993
        %v1122 = vadd.f32 %v726, %v994
        %v1123 = vadd.f32 %v727, %v995
        %v1124 = vadd.f32 %v728, %v996
        %v1125 = vadd.f32 %v729, %v997
        %v1126 = vadd.f32 %v730, %v998
        %v1127 = vadd.f32 %v731, %v999
        %v1128 = vadd.f32 %v732, %v1000
        %v1129 = vadd.f32 %v733, %v1001
        %v1130 = vadd.f32 %v734, %v1002
        %v1131 = vadd.f32 %v735, %v1003
        %v1132 = vadd.f32 %v736, %v1004
        %v1133 = vadd.f32 %v737, %v1005
        %v1134 = vadd.f32 %v738, %v1006
        %v1135 = vadd.f32 %v739, %v1007
        %v1136 = vadd.f32 %v740, %v1008
        %v1137 = vadd.f32 %v741, %v1009
        %v1138 = vadd.f32 %v742, %v1010
        %v1139 = vadd.f32 %v743, %v1011
        %v1140 = vadd.f32 %v744, %v1012
        %v1141 = vadd.f32 %v745, %v1013
        %v1142 = vadd.f32 %v746, %v1014
        %v1143 = vadd.f32 %v747, %v1015
        %v1144 = vadd.f32 %v748, %v1016
        %v1145 = vadd.f32 %v749, %v1017
        %v1146 = vadd.f32 %v750, %v1018
        %v1147 = vadd.f32 %v751, %v1019
        %v1148 = vadd.f32 %v752, %v1020
        %v1149 = vadd.f32 %v753, %v1021
        %v1150 = vadd.f32 %v754, %v1022
        %v1151 = vadd.f32 %v755, %v1023
        %v1152 = vadd.f32 %v756, %v1024
        %v1153 = vadd.f32 %v757, %v1025
        %v1154 = vadd.f32 %v758, %v1026
        %v1155 = vadd.f32 %v759, %v1027
        %v1156 = vadd.f32 %v760, %v1028
        %v1157 = vadd.f32 %v761, %v1029
        %v1158 = vadd.f32 %v762, %v1030
        %v1159 = vadd.f32 %v763, %v1031
        %v1160 = vadd.f32 %v764, %v1032
        %v1161 = vadd.f32 %v765, %v1033
        %v1162 = vadd.f32 %v766, %v1034
        %s1163 = scalar_lea.vmem %s285, 2
        %v1164 = vld [vmem:[%s1163] ss:$4 sm:$0x3]
        %v1165 = vsub.s32 %v1164, %v373
        %s1166 = scalar_lea.vmem %s295, 2
        %v1167 = vld [vmem:[%s1166] ss:$4 sm:$0x3]
        %v1168 = vperm.slane %v1165, 0
        %v1169 = vperm.slane %v1165, 1
        %vm1170 = vcmp.eq.s32.totalorder %v308, %v1168
        %vm1171 = vcmp.eq.s32.totalorder %v308, %v1169
        %vm1172 = vcmp.eq.s32.totalorder %v309, %v1168
        %vm1173 = vcmp.eq.s32.totalorder %v309, %v1169
        %vm1174 = vcmp.eq.s32.totalorder %v310, %v1168
        %vm1175 = vcmp.eq.s32.totalorder %v310, %v1169
        %vm1176 = vcmp.eq.s32.totalorder %v311, %v1168
        %vm1177 = vcmp.eq.s32.totalorder %v311, %v1169
        %vm1178 = vcmp.eq.s32.totalorder %v312, %v1168
        %vm1179 = vcmp.eq.s32.totalorder %v312, %v1169
        %vm1180 = vcmp.eq.s32.totalorder %v313, %v1168
        %vm1181 = vcmp.eq.s32.totalorder %v313, %v1169
        %vm1182 = vcmp.eq.s32.totalorder %v314, %v1168
        %vm1183 = vcmp.eq.s32.totalorder %v314, %v1169
        %vm1184 = vcmp.eq.s32.totalorder %v315, %v1168
        %vm1185 = vcmp.eq.s32.totalorder %v315, %v1169
        %vm1186 = vcmp.eq.s32.totalorder %v316, %v1168
        %vm1187 = vcmp.eq.s32.totalorder %v316, %v1169
        %vm1188 = vcmp.eq.s32.totalorder %v317, %v1168
        %vm1189 = vcmp.eq.s32.totalorder %v317, %v1169
        %vm1190 = vcmp.eq.s32.totalorder %v318, %v1168
        %vm1191 = vcmp.eq.s32.totalorder %v318, %v1169
        %vm1192 = vcmp.eq.s32.totalorder %v319, %v1168
        %vm1193 = vcmp.eq.s32.totalorder %v319, %v1169
        %vm1194 = vcmp.eq.s32.totalorder %v320, %v1168
        %vm1195 = vcmp.eq.s32.totalorder %v320, %v1169
        %vm1196 = vcmp.eq.s32.totalorder %v321, %v1168
        %vm1197 = vcmp.eq.s32.totalorder %v321, %v1169
        %vm1198 = vcmp.eq.s32.totalorder %v322, %v1168
        %vm1199 = vcmp.eq.s32.totalorder %v322, %v1169
        %vm1200 = vcmp.eq.s32.totalorder %v323, %v1168
        %vm1201 = vcmp.eq.s32.totalorder %v323, %v1169
        %vm1202 = vcmp.eq.s32.totalorder %v324, %v1168
        %vm1203 = vcmp.eq.s32.totalorder %v324, %v1169
        %vm1204 = vcmp.eq.s32.totalorder %v325, %v1168
        %vm1205 = vcmp.eq.s32.totalorder %v325, %v1169
        %vm1206 = vcmp.eq.s32.totalorder %v326, %v1168
        %vm1207 = vcmp.eq.s32.totalorder %v326, %v1169
        %vm1208 = vcmp.eq.s32.totalorder %v327, %v1168
        %vm1209 = vcmp.eq.s32.totalorder %v327, %v1169
        %vm1210 = vcmp.eq.s32.totalorder %v328, %v1168
        %vm1211 = vcmp.eq.s32.totalorder %v328, %v1169
        %vm1212 = vcmp.eq.s32.totalorder %v329, %v1168
        %vm1213 = vcmp.eq.s32.totalorder %v329, %v1169
        %vm1214 = vcmp.eq.s32.totalorder %v330, %v1168
        %vm1215 = vcmp.eq.s32.totalorder %v330, %v1169
        %vm1216 = vcmp.eq.s32.totalorder %v331, %v1168
        %vm1217 = vcmp.eq.s32.totalorder %v331, %v1169
        %vm1218 = vcmp.eq.s32.totalorder %v332, %v1168
        %vm1219 = vcmp.eq.s32.totalorder %v332, %v1169
        %vm1220 = vcmp.eq.s32.totalorder %v333, %v1168
        %vm1221 = vcmp.eq.s32.totalorder %v333, %v1169
        %vm1222 = vcmp.eq.s32.totalorder %v334, %v1168
        %vm1223 = vcmp.eq.s32.totalorder %v334, %v1169
        %vm1224 = vcmp.eq.s32.totalorder %v335, %v1168
        %vm1225 = vcmp.eq.s32.totalorder %v335, %v1169
        %vm1226 = vcmp.eq.s32.totalorder %v336, %v1168
        %vm1227 = vcmp.eq.s32.totalorder %v336, %v1169
        %vm1228 = vcmp.eq.s32.totalorder %v337, %v1168
        %vm1229 = vcmp.eq.s32.totalorder %v337, %v1169
        %vm1230 = vcmp.eq.s32.totalorder %v338, %v1168
        %vm1231 = vcmp.eq.s32.totalorder %v338, %v1169
        %vm1232 = vcmp.eq.s32.totalorder %v339, %v1168
        %vm1233 = vcmp.eq.s32.totalorder %v339, %v1169
        %vm1234 = vcmp.eq.s32.totalorder %v340, %v1168
        %vm1235 = vcmp.eq.s32.totalorder %v340, %v1169
        %vm1236 = vcmp.eq.s32.totalorder %v341, %v1168
        %vm1237 = vcmp.eq.s32.totalorder %v341, %v1169
        %vm1238 = vcmp.eq.s32.totalorder %v342, %v1168
        %vm1239 = vcmp.eq.s32.totalorder %v342, %v1169
        %vm1240 = vcmp.eq.s32.totalorder %v343, %v1168
        %vm1241 = vcmp.eq.s32.totalorder %v343, %v1169
        %vm1242 = vcmp.eq.s32.totalorder %v344, %v1168
        %vm1243 = vcmp.eq.s32.totalorder %v344, %v1169
        %vm1244 = vcmp.eq.s32.totalorder %v345, %v1168
        %vm1245 = vcmp.eq.s32.totalorder %v345, %v1169
        %vm1246 = vcmp.eq.s32.totalorder %v346, %v1168
        %vm1247 = vcmp.eq.s32.totalorder %v346, %v1169
        %vm1248 = vcmp.eq.s32.totalorder %v347, %v1168
        %vm1249 = vcmp.eq.s32.totalorder %v347, %v1169
        %vm1250 = vcmp.eq.s32.totalorder %v348, %v1168
        %vm1251 = vcmp.eq.s32.totalorder %v348, %v1169
        %vm1252 = vcmp.eq.s32.totalorder %v349, %v1168
        %vm1253 = vcmp.eq.s32.totalorder %v349, %v1169
        %vm1254 = vcmp.eq.s32.totalorder %v350, %v1168
        %vm1255 = vcmp.eq.s32.totalorder %v350, %v1169
        %vm1256 = vcmp.eq.s32.totalorder %v351, %v1168
        %vm1257 = vcmp.eq.s32.totalorder %v351, %v1169
        %vm1258 = vcmp.eq.s32.totalorder %v352, %v1168
        %vm1259 = vcmp.eq.s32.totalorder %v352, %v1169
        %vm1260 = vcmp.eq.s32.totalorder %v353, %v1168
        %vm1261 = vcmp.eq.s32.totalorder %v353, %v1169
        %vm1262 = vcmp.eq.s32.totalorder %v354, %v1168
        %vm1263 = vcmp.eq.s32.totalorder %v354, %v1169
        %vm1264 = vcmp.eq.s32.totalorder %v355, %v1168
        %vm1265 = vcmp.eq.s32.totalorder %v355, %v1169
        %vm1266 = vcmp.eq.s32.totalorder %v356, %v1168
        %vm1267 = vcmp.eq.s32.totalorder %v356, %v1169
        %vm1268 = vcmp.eq.s32.totalorder %v357, %v1168
        %vm1269 = vcmp.eq.s32.totalorder %v357, %v1169
        %vm1270 = vcmp.eq.s32.totalorder %v358, %v1168
        %vm1271 = vcmp.eq.s32.totalorder %v358, %v1169
        %vm1272 = vcmp.eq.s32.totalorder %v359, %v1168
        %vm1273 = vcmp.eq.s32.totalorder %v359, %v1169
        %vm1274 = vcmp.eq.s32.totalorder %v360, %v1168
        %vm1275 = vcmp.eq.s32.totalorder %v360, %v1169
        %vm1276 = vcmp.eq.s32.totalorder %v361, %v1168
        %vm1277 = vcmp.eq.s32.totalorder %v361, %v1169
        %vm1278 = vcmp.eq.s32.totalorder %v362, %v1168
        %vm1279 = vcmp.eq.s32.totalorder %v362, %v1169
        %vm1280 = vcmp.eq.s32.totalorder %v363, %v1168
        %vm1281 = vcmp.eq.s32.totalorder %v363, %v1169
        %vm1282 = vcmp.eq.s32.totalorder %v364, %v1168
        %vm1283 = vcmp.eq.s32.totalorder %v364, %v1169
        %vm1284 = vcmp.eq.s32.totalorder %v365, %v1168
        %vm1285 = vcmp.eq.s32.totalorder %v365, %v1169
        %vm1286 = vcmp.eq.s32.totalorder %v366, %v1168
        %vm1287 = vcmp.eq.s32.totalorder %v366, %v1169
        %vm1288 = vcmp.eq.s32.totalorder %v367, %v1168
        %vm1289 = vcmp.eq.s32.totalorder %v367, %v1169
        %vm1290 = vcmp.eq.s32.totalorder %v368, %v1168
        %vm1291 = vcmp.eq.s32.totalorder %v368, %v1169
        %vm1292 = vcmp.eq.s32.totalorder %v369, %v1168
        %vm1293 = vcmp.eq.s32.totalorder %v369, %v1169
        %vm1294 = vcmp.eq.s32.totalorder %v370, %v1168
        %vm1295 = vcmp.eq.s32.totalorder %v370, %v1169
        %vm1296 = vcmp.eq.s32.totalorder %v371, %v1168
        %vm1297 = vcmp.eq.s32.totalorder %v371, %v1169
        %v1299 = vperm.slane %v1167, 0
        %v1300 = vperm.slane %v1167, 1
        %v1303 = vsel %vm1170, %v1299, 0.0
        %v1304 = vsel %vm1171, %v1300, 0.0
        %v1305 = vsel %vm1172, %v1299, 0.0
        %v1306 = vsel %vm1173, %v1300, 0.0
        %v1307 = vsel %vm1174, %v1299, 0.0
        %v1308 = vsel %vm1175, %v1300, 0.0
        %v1309 = vsel %vm1176, %v1299, 0.0
        %v1310 = vsel %vm1177, %v1300, 0.0
        %v1311 = vsel %vm1178, %v1299, 0.0
        %v1312 = vsel %vm1179, %v1300, 0.0
        %v1313 = vsel %vm1180, %v1299, 0.0
        %v1314 = vsel %vm1181, %v1300, 0.0
        %v1315 = vsel %vm1182, %v1299, 0.0
        %v1316 = vsel %vm1183, %v1300, 0.0
        %v1317 = vsel %vm1184, %v1299, 0.0
        %v1318 = vsel %vm1185, %v1300, 0.0
        %v1319 = vsel %vm1186, %v1299, 0.0
        %v1320 = vsel %vm1187, %v1300, 0.0
        %v1321 = vsel %vm1188, %v1299, 0.0
        %v1322 = vsel %vm1189, %v1300, 0.0
        %v1323 = vsel %vm1190, %v1299, 0.0
        %v1324 = vsel %vm1191, %v1300, 0.0
        %v1325 = vsel %vm1192, %v1299, 0.0
        %v1326 = vsel %vm1193, %v1300, 0.0
        %v1327 = vsel %vm1194, %v1299, 0.0
        %v1328 = vsel %vm1195, %v1300, 0.0
        %v1329 = vsel %vm1196, %v1299, 0.0
        %v1330 = vsel %vm1197, %v1300, 0.0
        %v1331 = vsel %vm1198, %v1299, 0.0
        %v1332 = vsel %vm1199, %v1300, 0.0
        %v1333 = vsel %vm1200, %v1299, 0.0
        %v1334 = vsel %vm1201, %v1300, 0.0
        %v1335 = vsel %vm1202, %v1299, 0.0
        %v1336 = vsel %vm1203, %v1300, 0.0
        %v1337 = vsel %vm1204, %v1299, 0.0
        %v1338 = vsel %vm1205, %v1300, 0.0
        %v1339 = vsel %vm1206, %v1299, 0.0
        %v1340 = vsel %vm1207, %v1300, 0.0
        %v1341 = vsel %vm1208, %v1299, 0.0
        %v1342 = vsel %vm1209, %v1300, 0.0
        %v1343 = vsel %vm1210, %v1299, 0.0
        %v1344 = vsel %vm1211, %v1300, 0.0
        %v1345 = vsel %vm1212, %v1299, 0.0
        %v1346 = vsel %vm1213, %v1300, 0.0
        %v1347 = vsel %vm1214, %v1299, 0.0
        %v1348 = vsel %vm1215, %v1300, 0.0
        %v1349 = vsel %vm1216, %v1299, 0.0
        %v1350 = vsel %vm1217, %v1300, 0.0
        %v1351 = vsel %vm1218, %v1299, 0.0
        %v1352 = vsel %vm1219, %v1300, 0.0
        %v1353 = vsel %vm1220, %v1299, 0.0
        %v1354 = vsel %vm1221, %v1300, 0.0
        %v1355 = vsel %vm1222, %v1299, 0.0
        %v1356 = vsel %vm1223, %v1300, 0.0
        %v1357 = vsel %vm1224, %v1299, 0.0
        %v1358 = vsel %vm1225, %v1300, 0.0
        %v1359 = vsel %vm1226, %v1299, 0.0
        %v1360 = vsel %vm1227, %v1300, 0.0
        %v1361 = vsel %vm1228, %v1299, 0.0
        %v1362 = vsel %vm1229, %v1300, 0.0
        %v1363 = vsel %vm1230, %v1299, 0.0
        %v1364 = vsel %vm1231, %v1300, 0.0
        %v1365 = vsel %vm1232, %v1299, 0.0
        %v1366 = vsel %vm1233, %v1300, 0.0
        %v1367 = vsel %vm1234, %v1299, 0.0
        %v1368 = vsel %vm1235, %v1300, 0.0
        %v1369 = vsel %vm1236, %v1299, 0.0
        %v1370 = vsel %vm1237, %v1300, 0.0
        %v1371 = vsel %vm1238, %v1299, 0.0
        %v1372 = vsel %vm1239, %v1300, 0.0
        %v1373 = vsel %vm1240, %v1299, 0.0
        %v1374 = vsel %vm1241, %v1300, 0.0
        %v1375 = vsel %vm1242, %v1299, 0.0
        %v1376 = vsel %vm1243, %v1300, 0.0
        %v1377 = vsel %vm1244, %v1299, 0.0
        %v1378 = vsel %vm1245, %v1300, 0.0
        %v1379 = vsel %vm1246, %v1299, 0.0
        %v1380 = vsel %vm1247, %v1300, 0.0
        %v1381 = vsel %vm1248, %v1299, 0.0
        %v1382 = vsel %vm1249, %v1300, 0.0
        %v1383 = vsel %vm1250, %v1299, 0.0
        %v1384 = vsel %vm1251, %v1300, 0.0
        %v1385 = vsel %vm1252, %v1299, 0.0
        %v1386 = vsel %vm1253, %v1300, 0.0
        %v1387 = vsel %vm1254, %v1299, 0.0
        %v1388 = vsel %vm1255, %v1300, 0.0
        %v1389 = vsel %vm1256, %v1299, 0.0
        %v1390 = vsel %vm1257, %v1300, 0.0
        %v1391 = vsel %vm1258, %v1299, 0.0
        %v1392 = vsel %vm1259, %v1300, 0.0
        %v1393 = vsel %vm1260, %v1299, 0.0
        %v1394 = vsel %vm1261, %v1300, 0.0
        %v1395 = vsel %vm1262, %v1299, 0.0
        %v1396 = vsel %vm1263, %v1300, 0.0
        %v1397 = vsel %vm1264, %v1299, 0.0
        %v1398 = vsel %vm1265, %v1300, 0.0
        %v1399 = vsel %vm1266, %v1299, 0.0
        %v1400 = vsel %vm1267, %v1300, 0.0
        %v1401 = vsel %vm1268, %v1299, 0.0
        %v1402 = vsel %vm1269, %v1300, 0.0
        %v1403 = vsel %vm1270, %v1299, 0.0
        %v1404 = vsel %vm1271, %v1300, 0.0
        %v1405 = vsel %vm1272, %v1299, 0.0
        %v1406 = vsel %vm1273, %v1300, 0.0
        %v1407 = vsel %vm1274, %v1299, 0.0
        %v1408 = vsel %vm1275, %v1300, 0.0
        %v1409 = vsel %vm1276, %v1299, 0.0
        %v1410 = vsel %vm1277, %v1300, 0.0
        %v1411 = vsel %vm1278, %v1299, 0.0
        %v1412 = vsel %vm1279, %v1300, 0.0
        %v1413 = vsel %vm1280, %v1299, 0.0
        %v1414 = vsel %vm1281, %v1300, 0.0
        %v1415 = vsel %vm1282, %v1299, 0.0
        %v1416 = vsel %vm1283, %v1300, 0.0
        %v1417 = vsel %vm1284, %v1299, 0.0
        %v1418 = vsel %vm1285, %v1300, 0.0
        %v1419 = vsel %vm1286, %v1299, 0.0
        %v1420 = vsel %vm1287, %v1300, 0.0
        %v1421 = vsel %vm1288, %v1299, 0.0
        %v1422 = vsel %vm1289, %v1300, 0.0
        %v1423 = vsel %vm1290, %v1299, 0.0
        %v1424 = vsel %vm1291, %v1300, 0.0
        %v1425 = vsel %vm1292, %v1299, 0.0
        %v1426 = vsel %vm1293, %v1300, 0.0
        %v1427 = vsel %vm1294, %v1299, 0.0
        %v1428 = vsel %vm1295, %v1300, 0.0
        %v1429 = vsel %vm1296, %v1299, 0.0
        %v1430 = vsel %vm1297, %v1300, 0.0
        %v1431 = vadd.f32 %v1035, %v1303
        %v1432 = vadd.f32 %v1036, %v1304
        %v1433 = vadd.f32 %v1037, %v1305
        %v1434 = vadd.f32 %v1038, %v1306
        %v1435 = vadd.f32 %v1039, %v1307
        %v1436 = vadd.f32 %v1040, %v1308
        %v1437 = vadd.f32 %v1041, %v1309
        %v1438 = vadd.f32 %v1042, %v1310
        %v1439 = vadd.f32 %v1043, %v1311
        %v1440 = vadd.f32 %v1044, %v1312
        %v1441 = vadd.f32 %v1045, %v1313
        %v1442 = vadd.f32 %v1046, %v1314
        %v1443 = vadd.f32 %v1047, %v1315
        %v1444 = vadd.f32 %v1048, %v1316
        %v1445 = vadd.f32 %v1049, %v1317
        %v1446 = vadd.f32 %v1050, %v1318
        %v1447 = vadd.f32 %v1051, %v1319
        %v1448 = vadd.f32 %v1052, %v1320
        %v1449 = vadd.f32 %v1053, %v1321
        %v1450 = vadd.f32 %v1054, %v1322
        %v1451 = vadd.f32 %v1055, %v1323
        %v1452 = vadd.f32 %v1056, %v1324
        %v1453 = vadd.f32 %v1057, %v1325
        %v1454 = vadd.f32 %v1058, %v1326
        %v1455 = vadd.f32 %v1059, %v1327
        %v1456 = vadd.f32 %v1060, %v1328
        %v1457 = vadd.f32 %v1061, %v1329
        %v1458 = vadd.f32 %v1062, %v1330
        %v1459 = vadd.f32 %v1063, %v1331
        %v1460 = vadd.f32 %v1064, %v1332
        %v1461 = vadd.f32 %v1065, %v1333
        %v1462 = vadd.f32 %v1066, %v1334
        %v1463 = vadd.f32 %v1067, %v1335
        %v1464 = vadd.f32 %v1068, %v1336
        %v1465 = vadd.f32 %v1069, %v1337
        %v1466 = vadd.f32 %v1070, %v1338
        %v1467 = vadd.f32 %v1071, %v1339
        %v1468 = vadd.f32 %v1072, %v1340
        %v1469 = vadd.f32 %v1073, %v1341
        %v1470 = vadd.f32 %v1074, %v1342
        %v1471 = vadd.f32 %v1075, %v1343
        %v1472 = vadd.f32 %v1076, %v1344
        %v1473 = vadd.f32 %v1077, %v1345
        %v1474 = vadd.f32 %v1078, %v1346
        %v1475 = vadd.f32 %v1079, %v1347
        %v1476 = vadd.f32 %v1080, %v1348
        %v1477 = vadd.f32 %v1081, %v1349
        %v1478 = vadd.f32 %v1082, %v1350
        %v1479 = vadd.f32 %v1083, %v1351
        %v1480 = vadd.f32 %v1084, %v1352
        %v1481 = vadd.f32 %v1085, %v1353
        %v1482 = vadd.f32 %v1086, %v1354
        %v1483 = vadd.f32 %v1087, %v1355
        %v1484 = vadd.f32 %v1088, %v1356
        %v1485 = vadd.f32 %v1089, %v1357
        %v1486 = vadd.f32 %v1090, %v1358
        %v1487 = vadd.f32 %v1091, %v1359
        %v1488 = vadd.f32 %v1092, %v1360
        %v1489 = vadd.f32 %v1093, %v1361
        %v1490 = vadd.f32 %v1094, %v1362
        %v1491 = vadd.f32 %v1095, %v1363
        %v1492 = vadd.f32 %v1096, %v1364
        %v1493 = vadd.f32 %v1097, %v1365
        %v1494 = vadd.f32 %v1098, %v1366
        %v1495 = vadd.f32 %v1099, %v1367
        %v1496 = vadd.f32 %v1100, %v1368
        %v1497 = vadd.f32 %v1101, %v1369
        %v1498 = vadd.f32 %v1102, %v1370
        %v1499 = vadd.f32 %v1103, %v1371
        %v1500 = vadd.f32 %v1104, %v1372
        %v1501 = vadd.f32 %v1105, %v1373
        %v1502 = vadd.f32 %v1106, %v1374
        %v1503 = vadd.f32 %v1107, %v1375
        %v1504 = vadd.f32 %v1108, %v1376
        %v1505 = vadd.f32 %v1109, %v1377
        %v1506 = vadd.f32 %v1110, %v1378
        %v1507 = vadd.f32 %v1111, %v1379
        %v1508 = vadd.f32 %v1112, %v1380
        %v1509 = vadd.f32 %v1113, %v1381
        %v1510 = vadd.f32 %v1114, %v1382
        %v1511 = vadd.f32 %v1115, %v1383
        %v1512 = vadd.f32 %v1116, %v1384
        %v1513 = vadd.f32 %v1117, %v1385
        %v1514 = vadd.f32 %v1118, %v1386
        %v1515 = vadd.f32 %v1119, %v1387
        %v1516 = vadd.f32 %v1120, %v1388
        %v1517 = vadd.f32 %v1121, %v1389
        %v1518 = vadd.f32 %v1122, %v1390
        %v1519 = vadd.f32 %v1123, %v1391
        %v1520 = vadd.f32 %v1124, %v1392
        %v1521 = vadd.f32 %v1125, %v1393
        %v1522 = vadd.f32 %v1126, %v1394
        %v1523 = vadd.f32 %v1127, %v1395
        %v1524 = vadd.f32 %v1128, %v1396
        %v1525 = vadd.f32 %v1129, %v1397
        %v1526 = vadd.f32 %v1130, %v1398
        %v1527 = vadd.f32 %v1131, %v1399
        %v1528 = vadd.f32 %v1132, %v1400
        %v1529 = vadd.f32 %v1133, %v1401
        %v1530 = vadd.f32 %v1134, %v1402
        %v1531 = vadd.f32 %v1135, %v1403
        %v1532 = vadd.f32 %v1136, %v1404
        %v1533 = vadd.f32 %v1137, %v1405
        %v1534 = vadd.f32 %v1138, %v1406
        %v1535 = vadd.f32 %v1139, %v1407
        %v1536 = vadd.f32 %v1140, %v1408
        %v1537 = vadd.f32 %v1141, %v1409
        %v1538 = vadd.f32 %v1142, %v1410
        %v1539 = vadd.f32 %v1143, %v1411
        %v1540 = vadd.f32 %v1144, %v1412
        %v1541 = vadd.f32 %v1145, %v1413
        %v1542 = vadd.f32 %v1146, %v1414
        %v1543 = vadd.f32 %v1147, %v1415
        %v1544 = vadd.f32 %v1148, %v1416
        %v1545 = vadd.f32 %v1149, %v1417
        %v1546 = vadd.f32 %v1150, %v1418
        %v1547 = vadd.f32 %v1151, %v1419
        %v1548 = vadd.f32 %v1152, %v1420
        %v1549 = vadd.f32 %v1153, %v1421
        %v1550 = vadd.f32 %v1154, %v1422
        %v1551 = vadd.f32 %v1155, %v1423
        %v1552 = vadd.f32 %v1156, %v1424
        %v1553 = vadd.f32 %v1157, %v1425
        %v1554 = vadd.f32 %v1158, %v1426
        %v1555 = vadd.f32 %v1159, %v1427
        %v1556 = vadd.f32 %v1160, %v1428
        %v1557 = vadd.f32 %v1161, %v1429
        %v1558 = vadd.f32 %v1162, %v1430
        %s1559 = scalar_lea.vmem %s285, 3
        %v1560 = vld [vmem:[%s1559] ss:$4 sm:$0x3]
        %v1561 = vsub.s32 %v1560, %v373
        %s1562 = scalar_lea.vmem %s295, 3
        %v1563 = vld [vmem:[%s1562] ss:$4 sm:$0x3]
        %v1564 = vperm.slane %v1561, 0
        %v1565 = vperm.slane %v1561, 1
        %vm1566 = vcmp.eq.s32.totalorder %v308, %v1564
        %vm1567 = vcmp.eq.s32.totalorder %v308, %v1565
        %vm1568 = vcmp.eq.s32.totalorder %v309, %v1564
        %vm1569 = vcmp.eq.s32.totalorder %v309, %v1565
        %vm1570 = vcmp.eq.s32.totalorder %v310, %v1564
        %vm1571 = vcmp.eq.s32.totalorder %v310, %v1565
        %vm1572 = vcmp.eq.s32.totalorder %v311, %v1564
        %vm1573 = vcmp.eq.s32.totalorder %v311, %v1565
        %vm1574 = vcmp.eq.s32.totalorder %v312, %v1564
        %vm1575 = vcmp.eq.s32.totalorder %v312, %v1565
        %vm1576 = vcmp.eq.s32.totalorder %v313, %v1564
        %vm1577 = vcmp.eq.s32.totalorder %v313, %v1565
        %vm1578 = vcmp.eq.s32.totalorder %v314, %v1564
        %vm1579 = vcmp.eq.s32.totalorder %v314, %v1565
        %vm1580 = vcmp.eq.s32.totalorder %v315, %v1564
        %vm1581 = vcmp.eq.s32.totalorder %v315, %v1565
        %vm1582 = vcmp.eq.s32.totalorder %v316, %v1564
        %vm1583 = vcmp.eq.s32.totalorder %v316, %v1565
        %vm1584 = vcmp.eq.s32.totalorder %v317, %v1564
        %vm1585 = vcmp.eq.s32.totalorder %v317, %v1565
        %vm1586 = vcmp.eq.s32.totalorder %v318, %v1564
        %vm1587 = vcmp.eq.s32.totalorder %v318, %v1565
        %vm1588 = vcmp.eq.s32.totalorder %v319, %v1564
        %vm1589 = vcmp.eq.s32.totalorder %v319, %v1565
        %vm1590 = vcmp.eq.s32.totalorder %v320, %v1564
        %vm1591 = vcmp.eq.s32.totalorder %v320, %v1565
        %vm1592 = vcmp.eq.s32.totalorder %v321, %v1564
        %vm1593 = vcmp.eq.s32.totalorder %v321, %v1565
        %vm1594 = vcmp.eq.s32.totalorder %v322, %v1564
        %vm1595 = vcmp.eq.s32.totalorder %v322, %v1565
        %vm1596 = vcmp.eq.s32.totalorder %v323, %v1564
        %vm1597 = vcmp.eq.s32.totalorder %v323, %v1565
        %vm1598 = vcmp.eq.s32.totalorder %v324, %v1564
        %vm1599 = vcmp.eq.s32.totalorder %v324, %v1565
        %vm1600 = vcmp.eq.s32.totalorder %v325, %v1564
        %vm1601 = vcmp.eq.s32.totalorder %v325, %v1565
        %vm1602 = vcmp.eq.s32.totalorder %v326, %v1564
        %vm1603 = vcmp.eq.s32.totalorder %v326, %v1565
        %vm1604 = vcmp.eq.s32.totalorder %v327, %v1564
        %vm1605 = vcmp.eq.s32.totalorder %v327, %v1565
        %vm1606 = vcmp.eq.s32.totalorder %v328, %v1564
        %vm1607 = vcmp.eq.s32.totalorder %v328, %v1565
        %vm1608 = vcmp.eq.s32.totalorder %v329, %v1564
        %vm1609 = vcmp.eq.s32.totalorder %v329, %v1565
        %vm1610 = vcmp.eq.s32.totalorder %v330, %v1564
        %vm1611 = vcmp.eq.s32.totalorder %v330, %v1565
        %vm1612 = vcmp.eq.s32.totalorder %v331, %v1564
        %vm1613 = vcmp.eq.s32.totalorder %v331, %v1565
        %vm1614 = vcmp.eq.s32.totalorder %v332, %v1564
        %vm1615 = vcmp.eq.s32.totalorder %v332, %v1565
        %vm1616 = vcmp.eq.s32.totalorder %v333, %v1564
        %vm1617 = vcmp.eq.s32.totalorder %v333, %v1565
        %vm1618 = vcmp.eq.s32.totalorder %v334, %v1564
        %vm1619 = vcmp.eq.s32.totalorder %v334, %v1565
        %vm1620 = vcmp.eq.s32.totalorder %v335, %v1564
        %vm1621 = vcmp.eq.s32.totalorder %v335, %v1565
        %vm1622 = vcmp.eq.s32.totalorder %v336, %v1564
        %vm1623 = vcmp.eq.s32.totalorder %v336, %v1565
        %vm1624 = vcmp.eq.s32.totalorder %v337, %v1564
        %vm1625 = vcmp.eq.s32.totalorder %v337, %v1565
        %vm1626 = vcmp.eq.s32.totalorder %v338, %v1564
        %vm1627 = vcmp.eq.s32.totalorder %v338, %v1565
        %vm1628 = vcmp.eq.s32.totalorder %v339, %v1564
        %vm1629 = vcmp.eq.s32.totalorder %v339, %v1565
        %vm1630 = vcmp.eq.s32.totalorder %v340, %v1564
        %vm1631 = vcmp.eq.s32.totalorder %v340, %v1565
        %vm1632 = vcmp.eq.s32.totalorder %v341, %v1564
        %vm1633 = vcmp.eq.s32.totalorder %v341, %v1565
        %vm1634 = vcmp.eq.s32.totalorder %v342, %v1564
        %vm1635 = vcmp.eq.s32.totalorder %v342, %v1565
        %vm1636 = vcmp.eq.s32.totalorder %v343, %v1564
        %vm1637 = vcmp.eq.s32.totalorder %v343, %v1565
        %vm1638 = vcmp.eq.s32.totalorder %v344, %v1564
        %vm1639 = vcmp.eq.s32.totalorder %v344, %v1565
        %vm1640 = vcmp.eq.s32.totalorder %v345, %v1564
        %vm1641 = vcmp.eq.s32.totalorder %v345, %v1565
        %vm1642 = vcmp.eq.s32.totalorder %v346, %v1564
        %vm1643 = vcmp.eq.s32.totalorder %v346, %v1565
        %vm1644 = vcmp.eq.s32.totalorder %v347, %v1564
        %vm1645 = vcmp.eq.s32.totalorder %v347, %v1565
        %vm1646 = vcmp.eq.s32.totalorder %v348, %v1564
        %vm1647 = vcmp.eq.s32.totalorder %v348, %v1565
        %vm1648 = vcmp.eq.s32.totalorder %v349, %v1564
        %vm1649 = vcmp.eq.s32.totalorder %v349, %v1565
        %vm1650 = vcmp.eq.s32.totalorder %v350, %v1564
        %vm1651 = vcmp.eq.s32.totalorder %v350, %v1565
        %vm1652 = vcmp.eq.s32.totalorder %v351, %v1564
        %vm1653 = vcmp.eq.s32.totalorder %v351, %v1565
        %vm1654 = vcmp.eq.s32.totalorder %v352, %v1564
        %vm1655 = vcmp.eq.s32.totalorder %v352, %v1565
        %vm1656 = vcmp.eq.s32.totalorder %v353, %v1564
        %vm1657 = vcmp.eq.s32.totalorder %v353, %v1565
        %vm1658 = vcmp.eq.s32.totalorder %v354, %v1564
        %vm1659 = vcmp.eq.s32.totalorder %v354, %v1565
        %vm1660 = vcmp.eq.s32.totalorder %v355, %v1564
        %vm1661 = vcmp.eq.s32.totalorder %v355, %v1565
        %vm1662 = vcmp.eq.s32.totalorder %v356, %v1564
        %vm1663 = vcmp.eq.s32.totalorder %v356, %v1565
        %vm1664 = vcmp.eq.s32.totalorder %v357, %v1564
        %vm1665 = vcmp.eq.s32.totalorder %v357, %v1565
        %vm1666 = vcmp.eq.s32.totalorder %v358, %v1564
        %vm1667 = vcmp.eq.s32.totalorder %v358, %v1565
        %vm1668 = vcmp.eq.s32.totalorder %v359, %v1564
        %vm1669 = vcmp.eq.s32.totalorder %v359, %v1565
        %vm1670 = vcmp.eq.s32.totalorder %v360, %v1564
        %vm1671 = vcmp.eq.s32.totalorder %v360, %v1565
        %vm1672 = vcmp.eq.s32.totalorder %v361, %v1564
        %vm1673 = vcmp.eq.s32.totalorder %v361, %v1565
        %vm1674 = vcmp.eq.s32.totalorder %v362, %v1564
        %vm1675 = vcmp.eq.s32.totalorder %v362, %v1565
        %vm1676 = vcmp.eq.s32.totalorder %v363, %v1564
        %vm1677 = vcmp.eq.s32.totalorder %v363, %v1565
        %vm1678 = vcmp.eq.s32.totalorder %v364, %v1564
        %vm1679 = vcmp.eq.s32.totalorder %v364, %v1565
        %vm1680 = vcmp.eq.s32.totalorder %v365, %v1564
        %vm1681 = vcmp.eq.s32.totalorder %v365, %v1565
        %vm1682 = vcmp.eq.s32.totalorder %v366, %v1564
        %vm1683 = vcmp.eq.s32.totalorder %v366, %v1565
        %vm1684 = vcmp.eq.s32.totalorder %v367, %v1564
        %vm1685 = vcmp.eq.s32.totalorder %v367, %v1565
        %vm1686 = vcmp.eq.s32.totalorder %v368, %v1564
        %vm1687 = vcmp.eq.s32.totalorder %v368, %v1565
        %vm1688 = vcmp.eq.s32.totalorder %v369, %v1564
        %vm1689 = vcmp.eq.s32.totalorder %v369, %v1565
        %vm1690 = vcmp.eq.s32.totalorder %v370, %v1564
        %vm1691 = vcmp.eq.s32.totalorder %v370, %v1565
        %vm1692 = vcmp.eq.s32.totalorder %v371, %v1564
        %vm1693 = vcmp.eq.s32.totalorder %v371, %v1565
        %v1695 = vperm.slane %v1563, 0
        %v1696 = vperm.slane %v1563, 1
        %v1699 = vsel %vm1566, %v1695, 0.0
        %v1700 = vsel %vm1567, %v1696, 0.0
        %v1701 = vsel %vm1568, %v1695, 0.0
        %v1702 = vsel %vm1569, %v1696, 0.0
        %v1703 = vsel %vm1570, %v1695, 0.0
        %v1704 = vsel %vm1571, %v1696, 0.0
        %v1705 = vsel %vm1572, %v1695, 0.0
        %v1706 = vsel %vm1573, %v1696, 0.0
        %v1707 = vsel %vm1574, %v1695, 0.0
        %v1708 = vsel %vm1575, %v1696, 0.0
        %v1709 = vsel %vm1576, %v1695, 0.0
        %v1710 = vsel %vm1577, %v1696, 0.0
        %v1711 = vsel %vm1578, %v1695, 0.0
        %v1712 = vsel %vm1579, %v1696, 0.0
        %v1713 = vsel %vm1580, %v1695, 0.0
        %v1714 = vsel %vm1581, %v1696, 0.0
        %v1715 = vsel %vm1582, %v1695, 0.0
        %v1716 = vsel %vm1583, %v1696, 0.0
        %v1717 = vsel %vm1584, %v1695, 0.0
        %v1718 = vsel %vm1585, %v1696, 0.0
        %v1719 = vsel %vm1586, %v1695, 0.0
        %v1720 = vsel %vm1587, %v1696, 0.0
        %v1721 = vsel %vm1588, %v1695, 0.0
        %v1722 = vsel %vm1589, %v1696, 0.0
        %v1723 = vsel %vm1590, %v1695, 0.0
        %v1724 = vsel %vm1591, %v1696, 0.0
        %v1725 = vsel %vm1592, %v1695, 0.0
        %v1726 = vsel %vm1593, %v1696, 0.0
        %v1727 = vsel %vm1594, %v1695, 0.0
        %v1728 = vsel %vm1595, %v1696, 0.0
        %v1729 = vsel %vm1596, %v1695, 0.0
        %v1730 = vsel %vm1597, %v1696, 0.0
        %v1731 = vsel %vm1598, %v1695, 0.0
        %v1732 = vsel %vm1599, %v1696, 0.0
        %v1733 = vsel %vm1600, %v1695, 0.0
        %v1734 = vsel %vm1601, %v1696, 0.0
        %v1735 = vsel %vm1602, %v1695, 0.0
        %v1736 = vsel %vm1603, %v1696, 0.0
        %v1737 = vsel %vm1604, %v1695, 0.0
        %v1738 = vsel %vm1605, %v1696, 0.0
        %v1739 = vsel %vm1606, %v1695, 0.0
        %v1740 = vsel %vm1607, %v1696, 0.0
        %v1741 = vsel %vm1608, %v1695, 0.0
        %v1742 = vsel %vm1609, %v1696, 0.0
        %v1743 = vsel %vm1610, %v1695, 0.0
        %v1744 = vsel %vm1611, %v1696, 0.0
        %v1745 = vsel %vm1612, %v1695, 0.0
        %v1746 = vsel %vm1613, %v1696, 0.0
        %v1747 = vsel %vm1614, %v1695, 0.0
        %v1748 = vsel %vm1615, %v1696, 0.0
        %v1749 = vsel %vm1616, %v1695, 0.0
        %v1750 = vsel %vm1617, %v1696, 0.0
        %v1751 = vsel %vm1618, %v1695, 0.0
        %v1752 = vsel %vm1619, %v1696, 0.0
        %v1753 = vsel %vm1620, %v1695, 0.0
        %v1754 = vsel %vm1621, %v1696, 0.0
        %v1755 = vsel %vm1622, %v1695, 0.0
        %v1756 = vsel %vm1623, %v1696, 0.0
        %v1757 = vsel %vm1624, %v1695, 0.0
        %v1758 = vsel %vm1625, %v1696, 0.0
        %v1759 = vsel %vm1626, %v1695, 0.0
        %v1760 = vsel %vm1627, %v1696, 0.0
        %v1761 = vsel %vm1628, %v1695, 0.0
        %v1762 = vsel %vm1629, %v1696, 0.0
        %v1763 = vsel %vm1630, %v1695, 0.0
        %v1764 = vsel %vm1631, %v1696, 0.0
        %v1765 = vsel %vm1632, %v1695, 0.0
        %v1766 = vsel %vm1633, %v1696, 0.0
        %v1767 = vsel %vm1634, %v1695, 0.0
        %v1768 = vsel %vm1635, %v1696, 0.0
        %v1769 = vsel %vm1636, %v1695, 0.0
        %v1770 = vsel %vm1637, %v1696, 0.0
        %v1771 = vsel %vm1638, %v1695, 0.0
        %v1772 = vsel %vm1639, %v1696, 0.0
        %v1773 = vsel %vm1640, %v1695, 0.0
        %v1774 = vsel %vm1641, %v1696, 0.0
        %v1775 = vsel %vm1642, %v1695, 0.0
        %v1776 = vsel %vm1643, %v1696, 0.0
        %v1777 = vsel %vm1644, %v1695, 0.0
        %v1778 = vsel %vm1645, %v1696, 0.0
        %v1779 = vsel %vm1646, %v1695, 0.0
        %v1780 = vsel %vm1647, %v1696, 0.0
        %v1781 = vsel %vm1648, %v1695, 0.0
        %v1782 = vsel %vm1649, %v1696, 0.0
        %v1783 = vsel %vm1650, %v1695, 0.0
        %v1784 = vsel %vm1651, %v1696, 0.0
        %v1785 = vsel %vm1652, %v1695, 0.0
        %v1786 = vsel %vm1653, %v1696, 0.0
        %v1787 = vsel %vm1654, %v1695, 0.0
        %v1788 = vsel %vm1655, %v1696, 0.0
        %v1789 = vsel %vm1656, %v1695, 0.0
        %v1790 = vsel %vm1657, %v1696, 0.0
        %v1791 = vsel %vm1658, %v1695, 0.0
        %v1792 = vsel %vm1659, %v1696, 0.0
        %v1793 = vsel %vm1660, %v1695, 0.0
        %v1794 = vsel %vm1661, %v1696, 0.0
        %v1795 = vsel %vm1662, %v1695, 0.0
        %v1796 = vsel %vm1663, %v1696, 0.0
        %v1797 = vsel %vm1664, %v1695, 0.0
        %v1798 = vsel %vm1665, %v1696, 0.0
        %v1799 = vsel %vm1666, %v1695, 0.0
        %v1800 = vsel %vm1667, %v1696, 0.0
        %v1801 = vsel %vm1668, %v1695, 0.0
        %v1802 = vsel %vm1669, %v1696, 0.0
        %v1803 = vsel %vm1670, %v1695, 0.0
        %v1804 = vsel %vm1671, %v1696, 0.0
        %v1805 = vsel %vm1672, %v1695, 0.0
        %v1806 = vsel %vm1673, %v1696, 0.0
        %v1807 = vsel %vm1674, %v1695, 0.0
        %v1808 = vsel %vm1675, %v1696, 0.0
        %v1809 = vsel %vm1676, %v1695, 0.0
        %v1810 = vsel %vm1677, %v1696, 0.0
        %v1811 = vsel %vm1678, %v1695, 0.0
        %v1812 = vsel %vm1679, %v1696, 0.0
        %v1813 = vsel %vm1680, %v1695, 0.0
        %v1814 = vsel %vm1681, %v1696, 0.0
        %v1815 = vsel %vm1682, %v1695, 0.0
        %v1816 = vsel %vm1683, %v1696, 0.0
        %v1817 = vsel %vm1684, %v1695, 0.0
        %v1818 = vsel %vm1685, %v1696, 0.0
        %v1819 = vsel %vm1686, %v1695, 0.0
        %v1820 = vsel %vm1687, %v1696, 0.0
        %v1821 = vsel %vm1688, %v1695, 0.0
        %v1822 = vsel %vm1689, %v1696, 0.0
        %v1823 = vsel %vm1690, %v1695, 0.0
        %v1824 = vsel %vm1691, %v1696, 0.0
        %v1825 = vsel %vm1692, %v1695, 0.0
        %v1826 = vsel %vm1693, %v1696, 0.0
        %v1827 = vadd.f32 %v1431, %v1699
        %v1828 = vadd.f32 %v1432, %v1700
        %v1829 = vadd.f32 %v1433, %v1701
        %v1830 = vadd.f32 %v1434, %v1702
        %v1831 = vadd.f32 %v1435, %v1703
        %v1832 = vadd.f32 %v1436, %v1704
        %v1833 = vadd.f32 %v1437, %v1705
        %v1834 = vadd.f32 %v1438, %v1706
        %v1835 = vadd.f32 %v1439, %v1707
        %v1836 = vadd.f32 %v1440, %v1708
        %v1837 = vadd.f32 %v1441, %v1709
        %v1838 = vadd.f32 %v1442, %v1710
        %v1839 = vadd.f32 %v1443, %v1711
        %v1840 = vadd.f32 %v1444, %v1712
        %v1841 = vadd.f32 %v1445, %v1713
        %v1842 = vadd.f32 %v1446, %v1714
        %v1843 = vadd.f32 %v1447, %v1715
        %v1844 = vadd.f32 %v1448, %v1716
        %v1845 = vadd.f32 %v1449, %v1717
        %v1846 = vadd.f32 %v1450, %v1718
        %v1847 = vadd.f32 %v1451, %v1719
        %v1848 = vadd.f32 %v1452, %v1720
        %v1849 = vadd.f32 %v1453, %v1721
        %v1850 = vadd.f32 %v1454, %v1722
        %v1851 = vadd.f32 %v1455, %v1723
        %v1852 = vadd.f32 %v1456, %v1724
        %v1853 = vadd.f32 %v1457, %v1725
        %v1854 = vadd.f32 %v1458, %v1726
        %v1855 = vadd.f32 %v1459, %v1727
        %v1856 = vadd.f32 %v1460, %v1728
        %v1857 = vadd.f32 %v1461, %v1729
        %v1858 = vadd.f32 %v1462, %v1730
        %v1859 = vadd.f32 %v1463, %v1731
        %v1860 = vadd.f32 %v1464, %v1732
        %v1861 = vadd.f32 %v1465, %v1733
        %v1862 = vadd.f32 %v1466, %v1734
        %v1863 = vadd.f32 %v1467, %v1735
        %v1864 = vadd.f32 %v1468, %v1736
        %v1865 = vadd.f32 %v1469, %v1737
        %v1866 = vadd.f32 %v1470, %v1738
        %v1867 = vadd.f32 %v1471, %v1739
        %v1868 = vadd.f32 %v1472, %v1740
        %v1869 = vadd.f32 %v1473, %v1741
        %v1870 = vadd.f32 %v1474, %v1742
        %v1871 = vadd.f32 %v1475, %v1743
        %v1872 = vadd.f32 %v1476, %v1744
        %v1873 = vadd.f32 %v1477, %v1745
        %v1874 = vadd.f32 %v1478, %v1746
        %v1875 = vadd.f32 %v1479, %v1747
        %v1876 = vadd.f32 %v1480, %v1748
        %v1877 = vadd.f32 %v1481, %v1749
        %v1878 = vadd.f32 %v1482, %v1750
        %v1879 = vadd.f32 %v1483, %v1751
        %v1880 = vadd.f32 %v1484, %v1752
        %v1881 = vadd.f32 %v1485, %v1753
        %v1882 = vadd.f32 %v1486, %v1754
        %v1883 = vadd.f32 %v1487, %v1755
        %v1884 = vadd.f32 %v1488, %v1756
        %v1885 = vadd.f32 %v1489, %v1757
        %v1886 = vadd.f32 %v1490, %v1758
        %v1887 = vadd.f32 %v1491, %v1759
        %v1888 = vadd.f32 %v1492, %v1760
        %v1889 = vadd.f32 %v1493, %v1761
        %v1890 = vadd.f32 %v1494, %v1762
        %v1891 = vadd.f32 %v1495, %v1763
        %v1892 = vadd.f32 %v1496, %v1764
        %v1893 = vadd.f32 %v1497, %v1765
        %v1894 = vadd.f32 %v1498, %v1766
        %v1895 = vadd.f32 %v1499, %v1767
        %v1896 = vadd.f32 %v1500, %v1768
        %v1897 = vadd.f32 %v1501, %v1769
        %v1898 = vadd.f32 %v1502, %v1770
        %v1899 = vadd.f32 %v1503, %v1771
        %v1900 = vadd.f32 %v1504, %v1772
        %v1901 = vadd.f32 %v1505, %v1773
        %v1902 = vadd.f32 %v1506, %v1774
        %v1903 = vadd.f32 %v1507, %v1775
        %v1904 = vadd.f32 %v1508, %v1776
        %v1905 = vadd.f32 %v1509, %v1777
        %v1906 = vadd.f32 %v1510, %v1778
        %v1907 = vadd.f32 %v1511, %v1779
        %v1908 = vadd.f32 %v1512, %v1780
        %v1909 = vadd.f32 %v1513, %v1781
        %v1910 = vadd.f32 %v1514, %v1782
        %v1911 = vadd.f32 %v1515, %v1783
        %v1912 = vadd.f32 %v1516, %v1784
        %v1913 = vadd.f32 %v1517, %v1785
        %v1914 = vadd.f32 %v1518, %v1786
        %v1915 = vadd.f32 %v1519, %v1787
        %v1916 = vadd.f32 %v1520, %v1788
        %v1917 = vadd.f32 %v1521, %v1789
        %v1918 = vadd.f32 %v1522, %v1790
        %v1919 = vadd.f32 %v1523, %v1791
        %v1920 = vadd.f32 %v1524, %v1792
        %v1921 = vadd.f32 %v1525, %v1793
        %v1922 = vadd.f32 %v1526, %v1794
        %v1923 = vadd.f32 %v1527, %v1795
        %v1924 = vadd.f32 %v1528, %v1796
        %v1925 = vadd.f32 %v1529, %v1797
        %v1926 = vadd.f32 %v1530, %v1798
        %v1927 = vadd.f32 %v1531, %v1799
        %v1928 = vadd.f32 %v1532, %v1800
        %v1929 = vadd.f32 %v1533, %v1801
        %v1930 = vadd.f32 %v1534, %v1802
        %v1931 = vadd.f32 %v1535, %v1803
        %v1932 = vadd.f32 %v1536, %v1804
        %v1933 = vadd.f32 %v1537, %v1805
        %v1934 = vadd.f32 %v1538, %v1806
        %v1935 = vadd.f32 %v1539, %v1807
        %v1936 = vadd.f32 %v1540, %v1808
        %v1937 = vadd.f32 %v1541, %v1809
        %v1938 = vadd.f32 %v1542, %v1810
        %v1939 = vadd.f32 %v1543, %v1811
        %v1940 = vadd.f32 %v1544, %v1812
        %v1941 = vadd.f32 %v1545, %v1813
        %v1942 = vadd.f32 %v1546, %v1814
        %v1943 = vadd.f32 %v1547, %v1815
        %v1944 = vadd.f32 %v1548, %v1816
        %v1945 = vadd.f32 %v1549, %v1817
        %v1946 = vadd.f32 %v1550, %v1818
        %v1947 = vadd.f32 %v1551, %v1819
        %v1948 = vadd.f32 %v1552, %v1820
        %v1949 = vadd.f32 %v1553, %v1821
        %v1950 = vadd.f32 %v1554, %v1822
        %v1951 = vadd.f32 %v1555, %v1823
        %v1952 = vadd.f32 %v1556, %v1824
        %v1953 = vadd.f32 %v1557, %v1825
        %v1954 = vadd.f32 %v1558, %v1826
        %v1955 = vld [vmem:[%s275] sm:$0xff]
        %v1956 = vld [vmem:[%s275 + $0x8] sm:$0xff]
        %v1957 = vld [vmem:[%s275 + $0x10] sm:$0x1]
        %v1958 = vld [vmem:[%s275 + $0x18] sm:$0x1]
        %v1959 = vld [vmem:[%s238] sm:$0xff]
        %v1960 = vld [vmem:[%s238 + $0x8] sm:$0xff]
        %v1961 = vld [vmem:[%s238 + $0x10] sm:$0xff]
        %v1962 = vld [vmem:[%s238 + $0x18] sm:$0xff]
        %v1963 = vld [vmem:[%s238 + $0x20] sm:$0x1]
        %v1964 = vld [vmem:[%s238 + $0x28] sm:$0x1]
        %v1965 = vld [vmem:[%s238 + $0x30] sm:$0x1]
        %v1966 = vld [vmem:[%s238 + $0x38] sm:$0x1]
        %1967 = vmatpush.msra.mxu0 %v1857
        %1968 = vmatpush.msra.mxu0 %v1855
        %1969 = vmatpush.msra.mxu0 %v1853
        %1970 = vmatpush.msra.mxu0 %v1851
        %1971 = vmatpush.msra.mxu0 %v1849
        %1972 = vmatpush.msra.mxu0 %v1847
        %1973 = vmatpush.msra.mxu0 %v1845
        %1974 = vmatpush.msra.mxu0 %v1843
        %1975 = vmatpush.msra.mxu0 %v1841
        %1976 = vmatpush.msra.mxu0 %v1839
        %1977 = vmatpush.msra.mxu0 %v1837
        %1978 = vmatpush.msra.mxu0 %v1835
        %1979 = vmatpush.msra.mxu0 %v1833
        %1980 = vmatpush.msra.mxu0 %v1831
        %1981 = vmatpush.msra.mxu0 %v1829
        %1982 = vmatpush.msra.mxu0 %v1827
        %1983 = vmatmul.f32.gmra.mxu0 %v1959
        %v1984 = vpop.f32.mrf.mxu0
        %v1985 = vadd.f32 0.0, %v1984
        %1986 = vmatmul.f32.gmra.mxu0 %v1963
        %v1987 = vpop.f32.mrf.mxu0
        %v1988 = vadd.f32 0.0, %v1987
        %1989 = vdwg.mxu0
        %1990 = vmatpush.msra.mxu0 %v1889
        %1991 = vmatpush.msra.mxu0 %v1887
        %1992 = vmatpush.msra.mxu0 %v1885
        %1993 = vmatpush.msra.mxu0 %v1883
        %1994 = vmatpush.msra.mxu0 %v1881
        %1995 = vmatpush.msra.mxu0 %v1879
        %1996 = vmatpush.msra.mxu0 %v1877
        %1997 = vmatpush.msra.mxu0 %v1875
        %1998 = vmatpush.msra.mxu0 %v1873
        %1999 = vmatpush.msra.mxu0 %v1871
        %2000 = vmatpush.msra.mxu0 %v1869
        %2001 = vmatpush.msra.mxu0 %v1867
        %2002 = vmatpush.msra.mxu0 %v1865
        %2003 = vmatpush.msra.mxu0 %v1863
        %2004 = vmatpush.msra.mxu0 %v1861
        %2005 = vmatpush.msra.mxu0 %v1859
        %2006 = vmatmul.f32.gmra.mxu0 %v1960
        %v2007 = vpop.f32.mrf.mxu0
        %v2008 = vadd.f32 %v1985, %v2007
        %2009 = vmatmul.f32.gmra.mxu0 %v1964
        %v2010 = vpop.f32.mrf.mxu0
        %v2011 = vadd.f32 %v1988, %v2010
        %2012 = vdwg.mxu0
        %2013 = vmatpush.msra.mxu0 %v1921
        %2014 = vmatpush.msra.mxu0 %v1919
        %2015 = vmatpush.msra.mxu0 %v1917
        %2016 = vmatpush.msra.mxu0 %v1915
        %2017 = vmatpush.msra.mxu0 %v1913
        %2018 = vmatpush.msra.mxu0 %v1911
        %2019 = vmatpush.msra.mxu0 %v1909
        %2020 = vmatpush.msra.mxu0 %v1907
        %2021 = vmatpush.msra.mxu0 %v1905
        %2022 = vmatpush.msra.mxu0 %v1903
        %2023 = vmatpush.msra.mxu0 %v1901
        %2024 = vmatpush.msra.mxu0 %v1899
        %2025 = vmatpush.msra.mxu0 %v1897
        %2026 = vmatpush.msra.mxu0 %v1895
        %2027 = vmatpush.msra.mxu0 %v1893
        %2028 = vmatpush.msra.mxu0 %v1891
        %2029 = vmatmul.f32.gmra.mxu0 %v1961
        %v2030 = vpop.f32.mrf.mxu0
        %v2031 = vadd.f32 %v2008, %v2030
        %2032 = vmatmul.f32.gmra.mxu0 %v1965
        %v2033 = vpop.f32.mrf.mxu0
        %v2034 = vadd.f32 %v2011, %v2033
        %2035 = vdwg.mxu0
        %2036 = vmatpush.msra.mxu0 %v1953
        %2037 = vmatpush.msra.mxu0 %v1951
        %2038 = vmatpush.msra.mxu0 %v1949
        %2039 = vmatpush.msra.mxu0 %v1947
        %2040 = vmatpush.msra.mxu0 %v1945
        %2041 = vmatpush.msra.mxu0 %v1943
        %2042 = vmatpush.msra.mxu0 %v1941
        %2043 = vmatpush.msra.mxu0 %v1939
        %2044 = vmatpush.msra.mxu0 %v1937
        %2045 = vmatpush.msra.mxu0 %v1935
        %2046 = vmatpush.msra.mxu0 %v1933
        %2047 = vmatpush.msra.mxu0 %v1931
        %2048 = vmatpush.msra.mxu0 %v1929
        %2049 = vmatpush.msra.mxu0 %v1927
        %2050 = vmatpush.msra.mxu0 %v1925
        %2051 = vmatpush.msra.mxu0 %v1923
        %2052 = vmatmul.f32.gmra.mxu0 %v1962
        %v2053 = vpop.f32.mrf.mxu0
        %v2054 = vadd.f32 %v2031, %v2053
        %2055 = vmatmul.f32.gmra.mxu0 %v1966
        %v2056 = vpop.f32.mrf.mxu0
        %v2057 = vadd.f32 %v2034, %v2056
        %2058 = vdwg.mxu0
        %2059 = vmatpush.msra.mxu0 %v1858
        %2060 = vmatpush.msra.mxu0 %v1856
        %2061 = vmatpush.msra.mxu0 %v1854
        %2062 = vmatpush.msra.mxu0 %v1852
        %2063 = vmatpush.msra.mxu0 %v1850
        %2064 = vmatpush.msra.mxu0 %v1848
        %2065 = vmatpush.msra.mxu0 %v1846
        %2066 = vmatpush.msra.mxu0 %v1844
        %2067 = vmatpush.msra.mxu0 %v1842
        %2068 = vmatpush.msra.mxu0 %v1840
        %2069 = vmatpush.msra.mxu0 %v1838
        %2070 = vmatpush.msra.mxu0 %v1836
        %2071 = vmatpush.msra.mxu0 %v1834
        %2072 = vmatpush.msra.mxu0 %v1832
        %2073 = vmatpush.msra.mxu0 %v1830
        %2074 = vmatpush.msra.mxu0 %v1828
        %2075 = vmatmul.f32.gmra.mxu0 %v1959
        %v2076 = vpop.f32.mrf.mxu0
        %v2077 = vadd.f32 0.0, %v2076
        %2078 = vmatmul.f32.gmra.mxu0 %v1963
        %v2079 = vpop.f32.mrf.mxu0
        %v2080 = vadd.f32 0.0, %v2079
        %2081 = vdwg.mxu0
        %2082 = vmatpush.msra.mxu0 %v1890
        %2083 = vmatpush.msra.mxu0 %v1888
        %2084 = vmatpush.msra.mxu0 %v1886
        %2085 = vmatpush.msra.mxu0 %v1884
        %2086 = vmatpush.msra.mxu0 %v1882
        %2087 = vmatpush.msra.mxu0 %v1880
        %2088 = vmatpush.msra.mxu0 %v1878
        %2089 = vmatpush.msra.mxu0 %v1876
        %2090 = vmatpush.msra.mxu0 %v1874
        %2091 = vmatpush.msra.mxu0 %v1872
        %2092 = vmatpush.msra.mxu0 %v1870
        %2093 = vmatpush.msra.mxu0 %v1868
        %2094 = vmatpush.msra.mxu0 %v1866
        %2095 = vmatpush.msra.mxu0 %v1864
        %2096 = vmatpush.msra.mxu0 %v1862
        %2097 = vmatpush.msra.mxu0 %v1860
        %2098 = vmatmul.f32.gmra.mxu0 %v1960
        %v2099 = vpop.f32.mrf.mxu0
        %v2100 = vadd.f32 %v2077, %v2099
        %2101 = vmatmul.f32.gmra.mxu0 %v1964
        %v2102 = vpop.f32.mrf.mxu0
        %v2103 = vadd.f32 %v2080, %v2102
        %2104 = vdwg.mxu0
        %2105 = vmatpush.msra.mxu0 %v1922
        %2106 = vmatpush.msra.mxu0 %v1920
        %2107 = vmatpush.msra.mxu0 %v1918
        %2108 = vmatpush.msra.mxu0 %v1916
        %2109 = vmatpush.msra.mxu0 %v1914
        %2110 = vmatpush.msra.mxu0 %v1912
        %2111 = vmatpush.msra.mxu0 %v1910
        %2112 = vmatpush.msra.mxu0 %v1908
        %2113 = vmatpush.msra.mxu0 %v1906
        %2114 = vmatpush.msra.mxu0 %v1904
        %2115 = vmatpush.msra.mxu0 %v1902
        %2116 = vmatpush.msra.mxu0 %v1900
        %2117 = vmatpush.msra.mxu0 %v1898
        %2118 = vmatpush.msra.mxu0 %v1896
        %2119 = vmatpush.msra.mxu0 %v1894
        %2120 = vmatpush.msra.mxu0 %v1892
        %2121 = vmatmul.f32.gmra.mxu0 %v1961
        %v2122 = vpop.f32.mrf.mxu0
        %v2123 = vadd.f32 %v2100, %v2122
        %2124 = vmatmul.f32.gmra.mxu0 %v1965
        %v2125 = vpop.f32.mrf.mxu0
        %v2126 = vadd.f32 %v2103, %v2125
        %2127 = vdwg.mxu0
        %2128 = vmatpush.msra.mxu0 %v1954
        %2129 = vmatpush.msra.mxu0 %v1952
        %2130 = vmatpush.msra.mxu0 %v1950
        %2131 = vmatpush.msra.mxu0 %v1948
        %2132 = vmatpush.msra.mxu0 %v1946
        %2133 = vmatpush.msra.mxu0 %v1944
        %2134 = vmatpush.msra.mxu0 %v1942
        %2135 = vmatpush.msra.mxu0 %v1940
        %2136 = vmatpush.msra.mxu0 %v1938
        %2137 = vmatpush.msra.mxu0 %v1936
        %2138 = vmatpush.msra.mxu0 %v1934
        %2139 = vmatpush.msra.mxu0 %v1932
        %2140 = vmatpush.msra.mxu0 %v1930
        %2141 = vmatpush.msra.mxu0 %v1928
        %2142 = vmatpush.msra.mxu0 %v1926
        %2143 = vmatpush.msra.mxu0 %v1924
        %2144 = vmatmul.f32.gmra.mxu0 %v1962
        %v2145 = vpop.f32.mrf.mxu0
        %v2146 = vadd.f32 %v2123, %v2145
        %2147 = vmatmul.f32.gmra.mxu0 %v1966
        %v2148 = vpop.f32.mrf.mxu0
        %v2149 = vadd.f32 %v2126, %v2148
        %2150 = vdwg.mxu0
        %v2151 = vadd.f32 %v1955, %v2054
        %v2152 = vadd.f32 %v1956, %v2146
        %v2153 = vadd.f32 %v1957, %v2057
        %v2154 = vadd.f32 %v1958, %v2149
        %2155 = vst [vmem:[%s275] sm:$0xff] %v2151
        %2156 = vst [vmem:[%s275 + $0x8] sm:$0xff] %v2152
        %2157 = vst [vmem:[%s275 + $0x10] sm:$0x1] %v2153
        %2158 = vst [vmem:[%s275 + $0x18] sm:$0x1] %v2154
        %s2159 = sand.u32 %s127, 1
        %s2160 = sand.u32 %s127, 1
        %s2161 = smul.addr %s2160, 32
        %s2162 = scalar_lea.vmem [#allocation3], %s2161
        // Predicated region
        $region60: #{semantic_mapping_forward.8} parent=50 // pred_check
          %p2163 = pneg %p137
        $region61: #{semantic_mapping_forward.8} parent=50 // pred_check_branch
          %2165 = sbr.rel (%p2163) target = $region63
        $region62: #{semantic_mapping_forward.8} parent=50 // pred_region
          %s2166 = smul.u32 2, %s20
          %s2167 = smul.addr %s19, 144
          %s2168 = sadd.s32 %s2166, %s2167
          %s2169 = smul.addr %s2168, 8
          %s2170 = scalar_lea.vmem %s3, %s2169
          // Predicated region
          $region64: #{semantic_mapping_forward.8} parent=62 // pred_check
            _
          $region65: #{semantic_mapping_forward.8} parent=62 // pred_check_branch
            %2172 = sbr.rel (0) target = $region67
          $region66: #{semantic_mapping_forward.8} parent=62 // pred_region
            // Predicated region
            $region68: #{semantic_mapping_forward.8} parent=66 // pred_check
              _
            $region69: #{semantic_mapping_forward.8} parent=66 // pred_check_branch
              %2174 = sbr.rel (0) target = $region71
            $region70: #{semantic_mapping_forward.8} parent=66 // pred_region
              loop: start=0, step=1, limit=1
              $region72: #{semantic_mapping_forward.8} parent=70 // loop_pre_header
                _
              $region73: #{semantic_mapping_forward.8} parent=70 // loop_header
                %s2176 = sphi 0, %s2180
                %p2177 = scmp.ge.s32.totalorder %s2176, 1
                %s2181 = sphi %s2162, %s2162
                %s2182 = sphi %s2170, %s2170
              $region74: #{semantic_mapping_forward.8} parent=70 // loop_header_branch
                %2179 = sbr.rel (%p2177) target = $region78
              $region75: #{semantic_mapping_forward.8} parent=70 // loop_body
                %v2183 = vld [vmem:[%s2181] sm:$0xff]
                %2184 = vst [vmem:[%s2182] sm:$0xff] %v2183
                %v2185 = vld [vmem:[%s2181 + $0x8] sm:$0xff]
                %2186 = vst [vmem:[%s2182 + $0x8] sm:$0xff] %v2185
                %v2187 = vld [vmem:[%s2181 + $0x10] sm:$0xff]
                %2188 = vst [vmem:[%s2182 + $0x240] sm:$0xff] %v2187
                %v2189 = vld [vmem:[%s2181 + $0x18] sm:$0xff]
                %2190 = vst [vmem:[%s2182 + $0x248] sm:$0xff] %v2189
              $region76: #{semantic_mapping_forward.8} parent=70 // loop_footer
                %s2180 = sadd.s32 1, %s2176
              $region77: #{semantic_mapping_forward.8} parent=70 // loop_footer_branch
                %2175 = sbr.rel target = $region73
              $region78: #{semantic_mapping_forward.8} parent=70 // loop_exit
                _
            $region71: #{semantic_mapping_forward.8} parent=66 // pred_fallthru
              _
            // Predicated region
            $region79: #{semantic_mapping_forward.8} parent=66 // pred_check
              _
            $region80: #{semantic_mapping_forward.8} parent=66 // pred_check_branch
              %2192 = sbr.rel target = $region82
            $region81: #{semantic_mapping_forward.8} parent=66 // pred_region
              _
            $region82: #{semantic_mapping_forward.8} parent=66 // pred_fallthru
              _
          $region67: #{semantic_mapping_forward.8} parent=62 // pred_fallthru
            _
          %2193 = vnop
        $region63: #{semantic_mapping_forward.8} parent=50 // pred_fallthru
          _
      $region51: #{semantic_mapping_forward.8} parent=5 // pred_fallthru
        _
      %p2194 = scmp.le.s32.totalorder 2, %s9
      // Predicated region
      $region83: #{semantic_mapping_forward.8} parent=5 // pred_check
        %p2195 = pneg %p2194
      $region84: #{semantic_mapping_forward.8} parent=5 // pred_check_branch
        %2197 = sbr.rel (%p2195) target = $region86
      $region85: #{semantic_mapping_forward.8} parent=5 // pred_region
        %s2198 = ssub.s32 %s9, 2
        // Predicated region
        $region87: #{semantic_mapping_forward.8} parent=85 // pred_check
          %p2199 = pneg %p143
        $region88: #{semantic_mapping_forward.8} parent=85 // pred_check_branch
          %2201 = sbr.rel (%p2199) target = $region90
        $region89: #{semantic_mapping_forward.8} parent=85 // pred_region
          %s2202 = sand.u32 %s128, 1
          %s2203 = sand.u32 %s128, 1
          %s2204 = smul.addr %s2203, 32
          %s2205 = scalar_lea.vmem [#allocation3], %s2204
        $region90: #{semantic_mapping_forward.8} parent=85 // pred_fallthru
          _
      $region86: #{semantic_mapping_forward.8} parent=5 // pred_fallthru
        _
    $region6: #{semantic_mapping_forward.8} parent=1 // loop_footer
      %s13 = sadd.s32 1, %s9
    $region7: #{semantic_mapping_forward.8} parent=1 // loop_footer_branch
      %8 = sbr.rel target = $region3
    $region8: #{semantic_mapping_forward.8} parent=1 // loop_exit
      _

// kernel: semantic_mapping_forward.11
$region0: #{semantic_mapping_forward.11}
  #allocation0 [shape = 'u32[]', space=smem, size = 0x4, offset = 0x4, fixed_abs, tag = 'smem constant byte address 0x4 - core index']
  #allocation1 [shape = 'u32[72,128]{1,0:T(1,128)}', space=vmem, size = 0x9000, scoped, tag = 'internal scratch']
  #allocation2 [shape = 's32[1]{0}', space=sflag, size = 0x4, scoped, tag = 'scoped memory for semantic_mapping_forward.11']
  #allocation3 [shape = 'u8[512]{0}', space=smem, size = 0x200, scoped, tag = 'prefetched SMEM operand 0']
  %s0 = inlined_call_operand.vmem [shape: s32[2], index: 0, kind: input, shape index: {}]
  %s1 = inlined_call_operand.vmem [shape: f32[2,8,96,96], index: 1, kind: input, shape index: {}]
  %s2 = inlined_call_operand.vmem [shape: f32[2,8,96,96], index: 2, kind: input, shape index: {}]
  %s3 = inlined_call_operand.hbm [shape: f32[2,8,96,96], index: 3, kind: output, shape index: {}]
  %s4 = sld [smem:[#allocation0]]
  $region41: #{semantic_mapping_forward.11} parent=0
    _
  %s6 = ssub.s32 1, %s4
  %s7 = scalar_select 0, %s6, %s4
  %s9 = sshll.u32 %s0, 4
  %s10 = int_to_ptr.vmem [resolvable:$true] %s9
  %12 = dma.vmem_to_smem %s10, 16, [#allocation3], [#allocation2]
  %14 = dma.done [#allocation2], 16
  %15 = sfence
  $region1: #{semantic_mapping_forward.11} parent=0
    #allocation4 [shape = 'u8[786432]{0}', space=vmem, size = 0xc0000, scoped, tag = 'output window, operand 0']
    #allocation5 [shape = 's32[2]{0}', space=sflag, size = 0x8, scoped, tag = 'scoped memory for semantic_mapping_forward.11']
    %16 = vsyncpa [#allocation5], 0
    %s17 = scalar_lea.sflag [#allocation5], 1
    %18 = vsyncpa %s17, 0
    loop: start=0, step=1, limit=4
    $region2: #{semantic_mapping_forward.11} parent=1 // loop_pre_header
      _
    $region3: #{semantic_mapping_forward.11} parent=1 // loop_header
      %s20 = sphi 0, %s24
      %p21 = scmp.ge.s32.totalorder %s20, 4
      %s30 = sphi 0, %s32
      %s33 = sphi 0, %s30
      %s34 = sphi 0, %s33
      %s50 = sphi 0, %s34
      %s56 = sphi 0, %s58
      %s59 = sphi 0, %s56
      %s60 = sphi 0, %s59
      %s76 = sphi 0, %s60
      %s82 = sphi 0, %s84
      %s85 = sphi 0, %s82
      %s86 = sphi 0, %s85
      %s102 = sphi 0, %s86
    $region4: #{semantic_mapping_forward.11} parent=1 // loop_header_branch
      %23 = sbr.rel (%p21) target = $region8
    $region5: #{semantic_mapping_forward.11} parent=1 // loop_body
      %s25 = ssub.s32 %s20, 1
      %s26 = ssub.s32 %s20, 2
      %s27 = sadd.s32 %s20, 1
      %s28 = ssub.s32 %s20, %s27
      %p29 = scmp.eq.s32.totalorder %s28, 0
      %s31 = sadd.s32 %s30, 1
      %s32 = scalar_select %p29, %s30, %s31
      %p35 = pneg %p29
      %p36 = scmp.eq.s32.totalorder %s20, 1
      %p37 = por %p35, %p36
      %p38 = scmp.ne.s32.totalorder %s30, %s33
      %p39 = scmp.eq.s32.totalorder %s20, 0
      %p40 = por %p38, %p39
      %p41 = scmp.ne.s32.totalorder %s30, %s33
      %p42 = scmp.eq.s32.totalorder %s25, 1
      %p43 = por %p41, %p42
      %p44 = scmp.ne.s32.totalorder %s33, %s34
      %p45 = scmp.eq.s32.totalorder %s25, 0
      %p46 = por %p44, %p45
      %p47 = scmp.ne.s32.totalorder %s33, %s34
      %p48 = scmp.eq.s32.totalorder %s26, 1
      %p49 = por %p47, %p48
      %p51 = scmp.ne.s32.totalorder %s34, %s50
      %p52 = scmp.eq.s32.totalorder %s26, 0
      %p53 = por %p51, %p52
      %s54 = ssub.s32 %s20, %s27
      %p55 = scmp.eq.s32.totalorder %s54, 0
      %s57 = sadd.s32 %s56, 1
      %s58 = scalar_select %p55, %s56, %s57
      %p61 = pneg %p55
      %p62 = scmp.eq.s32.totalorder %s20, 1
      %p63 = por %p61, %p62
      %p64 = scmp.ne.s32.totalorder %s56, %s59
      %p65 = scmp.eq.s32.totalorder %s20, 0
      %p66 = por %p64, %p65
      %p67 = scmp.ne.s32.totalorder %s56, %s59
      %p68 = scmp.eq.s32.totalorder %s25, 1
      %p69 = por %p67, %p68
      %p70 = scmp.ne.s32.totalorder %s59, %s60
      %p71 = scmp.eq.s32.totalorder %s25, 0
      %p72 = por %p70, %p71
      %p73 = scmp.ne.s32.totalorder %s59, %s60
      %p74 = scmp.eq.s32.totalorder %s26, 1
      %p75 = por %p73, %p74
      %p77 = scmp.ne.s32.totalorder %s60, %s76
      %p78 = scmp.eq.s32.totalorder %s26, 0
      %p79 = por %p77, %p78
      %s80 = ssub.s32 %s20, %s27
      %p81 = scmp.eq.s32.totalorder %s80, 0
      %s83 = sadd.s32 %s82, 1
      %s84 = scalar_select %p81, %s82, %s83
      %p87 = pneg %p81
      %p88 = scmp.eq.s32.totalorder %s20, 1
      %p89 = por %p87, %p88
      %p90 = scmp.ne.s32.totalorder %s82, %s85
      %p91 = scmp.eq.s32.totalorder %s20, 0
      %p92 = por %p90, %p91
      %p93 = scmp.ne.s32.totalorder %s82, %s85
      %p94 = scmp.eq.s32.totalorder %s25, 1
      %p95 = por %p93, %p94
      %p96 = scmp.ne.s32.totalorder %s85, %s86
      %p97 = scmp.eq.s32.totalorder %s25, 0
      %p98 = por %p96, %p97
      %p99 = scmp.ne.s32.totalorder %s85, %s86
      %p100 = scmp.eq.s32.totalorder %s26, 1
      %p101 = por %p99, %p100
      %p103 = scmp.ne.s32.totalorder %s86, %s102
      %p104 = scmp.eq.s32.totalorder %s26, 0
      %p105 = por %p103, %p104
      %p106 = scmp.le.s32.totalorder 1, %s20
      %p107 = scmp.lt.s32.totalorder %s20, 3
      %p108 = pnand %p106, %p107
      %p109 = pneg %p108
      // Predicated region
      $region9: #{semantic_mapping_forward.11} parent=5 // pred_check
        _
      $region10: #{semantic_mapping_forward.11} parent=5 // pred_check_branch
        %111 = sbr.rel (%p108) target = $region12
      $region11: #{semantic_mapping_forward.11} parent=5 // pred_region
        %s112 = ssub.s32 %s20, 1
      $region12: #{semantic_mapping_forward.11} parent=5 // pred_fallthru
        _
      %p113 = scmp.lt.s32.totalorder %s20, 2
      // Predicated region
      $region13: #{semantic_mapping_forward.11} parent=5 // pred_check
        %p114 = pneg %p113
      $region14: #{semantic_mapping_forward.11} parent=5 // pred_check_branch
        %116 = sbr.rel (%p114) target = $region16
      $region15: #{semantic_mapping_forward.11} parent=5 // pred_region
        // Predicated region
        $region17: #{semantic_mapping_forward.11} parent=15 // pred_check
          %p117 = pneg %p40
        $region18: #{semantic_mapping_forward.11} parent=15 // pred_check_branch
          %119 = sbr.rel (%p117) target = $region20
        $region19: #{semantic_mapping_forward.11} parent=15 // pred_region
          %p120 = scmp.lt.s32.totalorder %s20, 1
          %s121 = scalar_select %p120, %s20, 1
          %s122 = smul.addr %s121, 96
          %s123 = smul.addr %s122, 8
          %s124 = scalar_lea.vmem %s1, %s123
        $region20: #{semantic_mapping_forward.11} parent=15 // pred_fallthru
          _
        // Predicated region
        $region21: #{semantic_mapping_forward.11} parent=15 // pred_check
          %p125 = pneg %p66
        $region22: #{semantic_mapping_forward.11} parent=15 // pred_check_branch
          %127 = sbr.rel (%p125) target = $region24
        $region23: #{semantic_mapping_forward.11} parent=15 // pred_region
          %p128 = scmp.lt.s32.totalorder %s20, 1
          %s129 = scalar_select %p128, %s20, 1
          %s130 = smul.addr %s129, 96
          %s131 = smul.addr %s130, 8
          %s132 = scalar_lea.vmem %s2, %s131
        $region24: #{semantic_mapping_forward.11} parent=15 // pred_fallthru
          _
      $region16: #{semantic_mapping_forward.11} parent=5 // pred_fallthru
        _
      %p133 = scmp.le.s32.totalorder 1, %s20
      %p134 = scmp.lt.s32.totalorder %s20, 3
      %p135 = pnand %p133, %p134
      %p136 = pneg %p135
      // Predicated region
      $region25: #{semantic_mapping_forward.11} parent=5 // pred_check
        _
      $region26: #{semantic_mapping_forward.11} parent=5 // pred_check_branch
        %138 = sbr.rel (%p135) target = $region28
      $region27: #{semantic_mapping_forward.11} parent=5 // pred_region
        %s139 = ssub.s32 %s20, 1
        %p140 = scmp.lt.s32.totalorder %s25, 1
        %s141 = scalar_select %p140, %s25, 1
        %s142 = smul.addr %s141, 96
        %s143 = smul.addr %s142, 8
        %s144 = scalar_lea.vmem %s1, %s143
        %p145 = pneg %p46
        %p146 = pneg %p43
        %p147 = scmp.lt.s32.totalorder %s25, 1
        %s148 = scalar_select %p147, %s25, 1
        %s149 = smul.addr %s148, 96
        %s150 = smul.addr %s149, 8
        %s151 = scalar_lea.vmem %s2, %s150
        %p152 = pneg %p72
        %p153 = pneg %p69
        %p154 = pneg %p98
        %p155 = pneg %p95
        %s156 = sand.u32 %s85, 1
        %s157 = scalar_lea.sflag [#allocation5], %s156
        %s158 = sand.u32 %s85, 1
        %s159 = smul.addr %s158, 768
        %s160 = scalar_lea.vmem [#allocation4], %s159
        %p161 = scmp.lt.s32.totalorder %s25, 1
        %s162 = scalar_select %p161, %s25, 1
        %s163 = smul.addr %s162, 96
        %s164 = smul.addr %s163, 8
        %s165 = scalar_lea.vmem %s1, %s164
        %p166 = scmp.lt.s32.totalorder %s25, 1
        %s167 = scalar_select %p166, %s25, 1
        %s168 = smul.addr %s167, 96
        %s169 = smul.addr %s168, 8
        %s170 = scalar_lea.vmem %s2, %s169
        %v171 = vld [vmem:[%s165] sm:$0xff]
        %v172 = vld [vmem:[%s165 + $0x8] sm:$0xff]
        %v173 = vld [vmem:[%s165 + $0x10] sm:$0xff]
        %v174 = vld [vmem:[%s165 + $0x18] sm:$0xff]
        %v175 = vld [vmem:[%s165 + $0x20] sm:$0xff]
        %v176 = vld [vmem:[%s165 + $0x28] sm:$0xff]
        %v177 = vld [vmem:[%s165 + $0x30] sm:$0xff]
        %v178 = vld [vmem:[%s165 + $0x38] sm:$0xff]
        %v179 = vld [vmem:[%s165 + $0x40] sm:$0xff]
        %v180 = vld [vmem:[%s165 + $0x48] sm:$0xff]
        %v181 = vld [vmem:[%s165 + $0x50] sm:$0xff]
        %v182 = vld [vmem:[%s165 + $0x58] sm:$0xff]
        %v183 = vld [vmem:[%s165 + $0x60] sm:$0xff]
        %v184 = vld [vmem:[%s165 + $0x68] sm:$0xff]
        %v185 = vld [vmem:[%s165 + $0x70] sm:$0xff]
        %v186 = vld [vmem:[%s165 + $0x78] sm:$0xff]
        %v187 = vld [vmem:[%s165 + $0x80] sm:$0xff]
        %v188 = vld [vmem:[%s165 + $0x88] sm:$0xff]
        %v189 = vld [vmem:[%s165 + $0x90] sm:$0xff]
        %v190 = vld [vmem:[%s165 + $0x98] sm:$0xff]
        %v191 = vld [vmem:[%s165 + $0xa0] sm:$0xff]
        %v192 = vld [vmem:[%s165 + $0xa8] sm:$0xff]
        %v193 = vld [vmem:[%s165 + $0xb0] sm:$0xff]
        %v194 = vld [vmem:[%s165 + $0xb8] sm:$0xff]
        %v195 = vld [vmem:[%s165 + $0xc0] sm:$0xff]
        %v196 = vld [vmem:[%s165 + $0xc8] sm:$0xff]
        %v197 = vld [vmem:[%s165 + $0xd0] sm:$0xff]
        %v198 = vld [vmem:[%s165 + $0xd8] sm:$0xff]
        %v199 = vld [vmem:[%s165 + $0xe0] sm:$0xff]
        %v200 = vld [vmem:[%s165 + $0xe8] sm:$0xff]
        %v201 = vld [vmem:[%s165 + $0xf0] sm:$0xff]
        %v202 = vld [vmem:[%s165 + $0xf8] sm:$0xff]
        %v203 = vld [vmem:[%s165 + $0x100] sm:$0xff]
        %v204 = vld [vmem:[%s165 + $0x108] sm:$0xff]
        %v205 = vld [vmem:[%s165 + $0x110] sm:$0xff]
        %v206 = vld [vmem:[%s165 + $0x118] sm:$0xff]
        %v207 = vld [vmem:[%s165 + $0x120] sm:$0xff]
        %v208 = vld [vmem:[%s165 + $0x128] sm:$0xff]
        %v209 = vld [vmem:[%s165 + $0x130] sm:$0xff]
        %v210 = vld [vmem:[%s165 + $0x138] sm:$0xff]
        %v211 = vld [vmem:[%s165 + $0x140] sm:$0xff]
        %v212 = vld [vmem:[%s165 + $0x148] sm:$0xff]
        %v213 = vld [vmem:[%s165 + $0x150] sm:$0xff]
        %v214 = vld [vmem:[%s165 + $0x158] sm:$0xff]
        %v215 = vld [vmem:[%s165 + $0x160] sm:$0xff]
        %v216 = vld [vmem:[%s165 + $0x168] sm:$0xff]
        %v217 = vld [vmem:[%s165 + $0x170] sm:$0xff]
        %v218 = vld [vmem:[%s165 + $0x178] sm:$0xff]
        %v219 = vld [vmem:[%s165 + $0x180] sm:$0xff]
        %v220 = vld [vmem:[%s165 + $0x188] sm:$0xff]
        %v221 = vld [vmem:[%s165 + $0x190] sm:$0xff]
        %v222 = vld [vmem:[%s165 + $0x198] sm:$0xff]
        %v223 = vld [vmem:[%s165 + $0x1a0] sm:$0xff]
        %v224 = vld [vmem:[%s165 + $0x1a8] sm:$0xff]
        %v225 = vld [vmem:[%s165 + $0x1b0] sm:$0xff]
        %v226 = vld [vmem:[%s165 + $0x1b8] sm:$0xff]
        %v227 = vld [vmem:[%s165 + $0x1c0] sm:$0xff]
        %v228 = vld [vmem:[%s165 + $0x1c8] sm:$0xff]
        %v229 = vld [vmem:[%s165 + $0x1d0] sm:$0xff]
        %v230 = vld [vmem:[%s165 + $0x1d8] sm:$0xff]
        %v231 = vld [vmem:[%s165 + $0x1e0] sm:$0xff]
        %v232 = vld [vmem:[%s165 + $0x1e8] sm:$0xff]
        %v233 = vld [vmem:[%s165 + $0x1f0] sm:$0xff]
        %v234 = vld [vmem:[%s165 + $0x1f8] sm:$0xff]
        %v235 = vld [vmem:[%s165 + $0x200] sm:$0xff]
        %v236 = vld [vmem:[%s165 + $0x208] sm:$0xff]
        %v237 = vld [vmem:[%s165 + $0x210] sm:$0xff]
        %v238 = vld [vmem:[%s165 + $0x218] sm:$0xff]
        %v239 = vld [vmem:[%s165 + $0x220] sm:$0xff]
        %v240 = vld [vmem:[%s165 + $0x228] sm:$0xff]
        %v241 = vld [vmem:[%s165 + $0x230] sm:$0xff]
        %v242 = vld [vmem:[%s165 + $0x238] sm:$0xff]
        %v243 = vld [vmem:[%s165 + $0x240] sm:$0xff]
        %v244 = vld [vmem:[%s165 + $0x248] sm:$0xff]
        %v245 = vld [vmem:[%s165 + $0x250] sm:$0xff]
        %v246 = vld [vmem:[%s165 + $0x258] sm:$0xff]
        %v247 = vld [vmem:[%s165 + $0x260] sm:$0xff]
        %v248 = vld [vmem:[%s165 + $0x268] sm:$0xff]
        %v249 = vld [vmem:[%s165 + $0x270] sm:$0xff]
        %v250 = vld [vmem:[%s165 + $0x278] sm:$0xff]
        %v251 = vld [vmem:[%s165 + $0x280] sm:$0xff]
        %v252 = vld [vmem:[%s165 + $0x288] sm:$0xff]
        %v253 = vld [vmem:[%s165 + $0x290] sm:$0xff]
        %v254 = vld [vmem:[%s165 + $0x298] sm:$0xff]
        %v255 = vld [vmem:[%s165 + $0x2a0] sm:$0xff]
        %v256 = vld [vmem:[%s165 + $0x2a8] sm:$0xff]
        %v257 = vld [vmem:[%s165 + $0x2b0] sm:$0xff]
        %v258 = vld [vmem:[%s165 + $0x2b8] sm:$0xff]
        %v259 = vld [vmem:[%s165 + $0x2c0] sm:$0xff]
        %v260 = vld [vmem:[%s165 + $0x2c8] sm:$0xff]
        %v261 = vld [vmem:[%s165 + $0x2d0] sm:$0xff]
        %v262 = vld [vmem:[%s165 + $0x2d8] sm:$0xff]
        %v263 = vld [vmem:[%s165 + $0x2e0] sm:$0xff]
        %v264 = vld [vmem:[%s165 + $0x2e8] sm:$0xff]
        %v265 = vld [vmem:[%s165 + $0x2f0] sm:$0xff]
        %v266 = vld [vmem:[%s165 + $0x2f8] sm:$0xff]
        %v267 = vsub.f32 %v183, %v171
        %v268 = vsub.f32 %v184, %v172
        %v269 = vsub.f32 %v185, %v173
        %v270 = vsub.f32 %v186, %v174
        %v271 = vsub.f32 %v187, %v175
        %v272 = vsub.f32 %v188, %v176
        %v273 = vsub.f32 %v189, %v177
        %v274 = vsub.f32 %v190, %v178
        %v275 = vsub.f32 %v191, %v179
        %v276 = vsub.f32 %v192, %v180
        %v277 = vsub.f32 %v193, %v181
        %v278 = vsub.f32 %v194, %v182
        %vm279 = vcmp.gt.f32.partialorder %v267, 0.8
        %vm280 = vcmp.gt.f32.partialorder %v268, 0.8
        %vm281 = vcmp.gt.f32.partialorder %v269, 0.8
        %vm282 = vcmp.gt.f32.partialorder %v270, 0.8
        %vm283 = vcmp.gt.f32.partialorder %v271, 0.8
        %vm284 = vcmp.gt.f32.partialorder %v272, 0.8
        %vm285 = vcmp.gt.f32.partialorder %v273, 0.8
        %vm286 = vcmp.gt.f32.partialorder %v274, 0.8
        %vm287 = vcmp.gt.f32.partialorder %v275, 0.8
        %vm288 = vcmp.gt.f32.partialorder %v276, 0.8
        %vm289 = vcmp.gt.f32.partialorder %v277, 0.8
        %vm290 = vcmp.gt.f32.partialorder %v278, 0.8
        %v291 = vld [vmem:[%s170] sm:$0xff]
        %v292 = vld [vmem:[%s170 + $0x8] sm:$0xff]
        %v293 = vld [vmem:[%s170 + $0x10] sm:$0xff]
        %v294 = vld [vmem:[%s170 + $0x18] sm:$0xff]
        %v295 = vld [vmem:[%s170 + $0x20] sm:$0xff]
        %v296 = vld [vmem:[%s170 + $0x28] sm:$0xff]
        %v297 = vld [vmem:[%s170 + $0x30] sm:$0xff]
        %v298 = vld [vmem:[%s170 + $0x38] sm:$0xff]
        %v299 = vld [vmem:[%s170 + $0x40] sm:$0xff]
        %v300 = vld [vmem:[%s170 + $0x48] sm:$0xff]
        %v301 = vld [vmem:[%s170 + $0x50] sm:$0xff]
        %v302 = vld [vmem:[%s170 + $0x58] sm:$0xff]
        %v303 = vld [vmem:[%s170 + $0x60] sm:$0xff]
        %v304 = vld [vmem:[%s170 + $0x68] sm:$0xff]
        %v305 = vld [vmem:[%s170 + $0x70] sm:$0xff]
        %v306 = vld [vmem:[%s170 + $0x78] sm:$0xff]
        %v307 = vld [vmem:[%s170 + $0x80] sm:$0xff]
        %v308 = vld [vmem:[%s170 + $0x88] sm:$0xff]
        %v309 = vld [vmem:[%s170 + $0x90] sm:$0xff]
        %v310 = vld [vmem:[%s170 + $0x98] sm:$0xff]
        %v311 = vld [vmem:[%s170 + $0xa0] sm:$0xff]
        %v312 = vld [vmem:[%s170 + $0xa8] sm:$0xff]
        %v313 = vld [vmem:[%s170 + $0xb0] sm:$0xff]
        %v314 = vld [vmem:[%s170 + $0xb8] sm:$0xff]
        %v315 = vld [vmem:[%s170 + $0xc0] sm:$0xff]
        %v316 = vld [vmem:[%s170 + $0xc8] sm:$0xff]
        %v317 = vld [vmem:[%s170 + $0xd0] sm:$0xff]
        %v318 = vld [vmem:[%s170 + $0xd8] sm:$0xff]
        %v319 = vld [vmem:[%s170 + $0xe0] sm:$0xff]
        %v320 = vld [vmem:[%s170 + $0xe8] sm:$0xff]
        %v321 = vld [vmem:[%s170 + $0xf0] sm:$0xff]
        %v322 = vld [vmem:[%s170 + $0xf8] sm:$0xff]
        %v323 = vld [vmem:[%s170 + $0x100] sm:$0xff]
        %v324 = vld [vmem:[%s170 + $0x108] sm:$0xff]
        %v325 = vld [vmem:[%s170 + $0x110] sm:$0xff]
        %v326 = vld [vmem:[%s170 + $0x118] sm:$0xff]
        %v327 = vld [vmem:[%s170 + $0x120] sm:$0xff]
        %v328 = vld [vmem:[%s170 + $0x128] sm:$0xff]
        %v329 = vld [vmem:[%s170 + $0x130] sm:$0xff]
        %v330 = vld [vmem:[%s170 + $0x138] sm:$0xff]
        %v331 = vld [vmem:[%s170 + $0x140] sm:$0xff]
        %v332 = vld [vmem:[%s170 + $0x148] sm:$0xff]
        %v333 = vld [vmem:[%s170 + $0x150] sm:$0xff]
        %v334 = vld [vmem:[%s170 + $0x158] sm:$0xff]
        %v335 = vld [vmem:[%s170 + $0x160] sm:$0xff]
        %v336 = vld [vmem:[%s170 + $0x168] sm:$0xff]
        %v337 = vld [vmem:[%s170 + $0x170] sm:$0xff]
        %v338 = vld [vmem:[%s170 + $0x178] sm:$0xff]
        %v339 = vld [vmem:[%s170 + $0x180] sm:$0xff]
        %v340 = vld [vmem:[%s170 + $0x188] sm:$0xff]
        %v341 = vld [vmem:[%s170 + $0x190] sm:$0xff]
        %v342 = vld [vmem:[%s170 + $0x198] sm:$0xff]
        %v343 = vld [vmem:[%s170 + $0x1a0] sm:$0xff]
        %v344 = vld [vmem:[%s170 + $0x1a8] sm:$0xff]
        %v345 = vld [vmem:[%s170 + $0x1b0] sm:$0xff]
        %v346 = vld [vmem:[%s170 + $0x1b8] sm:$0xff]
        %v347 = vld [vmem:[%s170 + $0x1c0] sm:$0xff]
        %v348 = vld [vmem:[%s170 + $0x1c8] sm:$0xff]
        %v349 = vld [vmem:[%s170 + $0x1d0] sm:$0xff]
        %v350 = vld [vmem:[%s170 + $0x1d8] sm:$0xff]
        %v351 = vld [vmem:[%s170 + $0x1e0] sm:$0xff]
        %v352 = vld [vmem:[%s170 + $0x1e8] sm:$0xff]
        %v353 = vld [vmem:[%s170 + $0x1f0] sm:$0xff]
        %v354 = vld [vmem:[%s170 + $0x1f8] sm:$0xff]
        %v355 = vld [vmem:[%s170 + $0x200] sm:$0xff]
        %v356 = vld [vmem:[%s170 + $0x208] sm:$0xff]
        %v357 = vld [vmem:[%s170 + $0x210] sm:$0xff]
        %v358 = vld [vmem:[%s170 + $0x218] sm:$0xff]
        %v359 = vld [vmem:[%s170 + $0x220] sm:$0xff]
        %v360 = vld [vmem:[%s170 + $0x228] sm:$0xff]
        %v361 = vld [vmem:[%s170 + $0x230] sm:$0xff]
        %v362 = vld [vmem:[%s170 + $0x238] sm:$0xff]
        %v363 = vld [vmem:[%s170 + $0x240] sm:$0xff]
        %v364 = vld [vmem:[%s170 + $0x248] sm:$0xff]
        %v365 = vld [vmem:[%s170 + $0x250] sm:$0xff]
        %v366 = vld [vmem:[%s170 + $0x258] sm:$0xff]
        %v367 = vld [vmem:[%s170 + $0x260] sm:$0xff]
        %v368 = vld [vmem:[%s170 + $0x268] sm:$0xff]
        %v369 = vld [vmem:[%s170 + $0x270] sm:$0xff]
        %v370 = vld [vmem:[%s170 + $0x278] sm:$0xff]
        %v371 = vld [vmem:[%s170 + $0x280] sm:$0xff]
        %v372 = vld [vmem:[%s170 + $0x288] sm:$0xff]
        %v373 = vld [vmem:[%s170 + $0x290] sm:$0xff]
        %v374 = vld [vmem:[%s170 + $0x298] sm:$0xff]
        %v375 = vld [vmem:[%s170 + $0x2a0] sm:$0xff]
        %v376 = vld [vmem:[%s170 + $0x2a8] sm:$0xff]
        %v377 = vld [vmem:[%s170 + $0x2b0] sm:$0xff]
        %v378 = vld [vmem:[%s170 + $0x2b8] sm:$0xff]
        %v379 = vld [vmem:[%s170 + $0x2c0] sm:$0xff]
        %v380 = vld [vmem:[%s170 + $0x2c8] sm:$0xff]
        %v381 = vld [vmem:[%s170 + $0x2d0] sm:$0xff]
        %v382 = vld [vmem:[%s170 + $0x2d8] sm:$0xff]
        %v383 = vld [vmem:[%s170 + $0x2e0] sm:$0xff]
        %v384 = vld [vmem:[%s170 + $0x2e8] sm:$0xff]
        %v385 = vld [vmem:[%s170 + $0x2f0] sm:$0xff]
        %v386 = vld [vmem:[%s170 + $0x2f8] sm:$0xff]
        %v387 = vmax.f32 %v291, %v171
        %v388 = vmax.f32 %v292, %v172
        %v389 = vmax.f32 %v293, %v173
        %v390 = vmax.f32 %v294, %v174
        %v391 = vmax.f32 %v295, %v175
        %v392 = vmax.f32 %v296, %v176
        %v393 = vmax.f32 %v297, %v177
        %v394 = vmax.f32 %v298, %v178
        %v395 = vmax.f32 %v299, %v179
        %v396 = vmax.f32 %v300, %v180
        %v397 = vmax.f32 %v301, %v181
        %v398 = vmax.f32 %v302, %v182
        %v399 = vmax.f32 %v303, %v183
        %v400 = vmax.f32 %v304, %v184
        %v401 = vmax.f32 %v305, %v185
        %v402 = vmax.f32 %v306, %v186
        %v403 = vmax.f32 %v307, %v187
        %v404 = vmax.f32 %v308, %v188
        %v405 = vmax.f32 %v309, %v189
        %v406 = vmax.f32 %v310, %v190
        %v407 = vmax.f32 %v311, %v191
        %v408 = vmax.f32 %v312, %v192
        %v409 = vmax.f32 %v313, %v193
        %v410 = vmax.f32 %v314, %v194
        %v411 = vmax.f32 %v315, %v195
        %v412 = vmax.f32 %v316, %v196
        %v413 = vmax.f32 %v317, %v197
        %v414 = vmax.f32 %v318, %v198
        %v415 = vmax.f32 %v319, %v199
        %v416 = vmax.f32 %v320, %v200
        %v417 = vmax.f32 %v321, %v201
        %v418 = vmax.f32 %v322, %v202
        %v419 = vmax.f32 %v323, %v203
        %v420 = vmax.f32 %v324, %v204
        %v421 = vmax.f32 %v325, %v205
        %v422 = vmax.f32 %v326, %v206
        %v423 = vmax.f32 %v327, %v207
        %v424 = vmax.f32 %v328, %v208
        %v425 = vmax.f32 %v329, %v209
        %v426 = vmax.f32 %v330, %v210
        %v427 = vmax.f32 %v331, %v211
        %v428 = vmax.f32 %v332, %v212
        %v429 = vmax.f32 %v333, %v213
        %v430 = vmax.f32 %v334, %v214
        %v431 = vmax.f32 %v335, %v215
        %v432 = vmax.f32 %v336, %v216
        %v433 = vmax.f32 %v337, %v217
        %v434 = vmax.f32 %v338, %v218
        %v435 = vmax.f32 %v339, %v219
        %v436 = vmax.f32 %v340, %v220
        %v437 = vmax.f32 %v341, %v221
        %v438 = vmax.f32 %v342, %v222
        %v439 = vmax.f32 %v343, %v223
        %v440 = vmax.f32 %v344, %v224
        %v441 = vmax.f32 %v345, %v225
        %v442 = vmax.f32 %v346, %v226
        %v443 = vmax.f32 %v347, %v227
        %v444 = vmax.f32 %v348, %v228
        %v445 = vmax.f32 %v349, %v229
        %v446 = vmax.f32 %v350, %v230
        %v447 = vmax.f32 %v351, %v231
        %v448 = vmax.f32 %v352, %v232
        %v449 = vmax.f32 %v353, %v233
        %v450 = vmax.f32 %v354, %v234
        %v451 = vmax.f32 %v355, %v235
        %v452 = vmax.f32 %v356, %v236
        %v453 = vmax.f32 %v357, %v237
        %v454 = vmax.f32 %v358, %v238
        %v455 = vmax.f32 %v359, %v239
        %v456 = vmax.f32 %v360, %v240
        %v457 = vmax.f32 %v361, %v241
        %v458 = vmax.f32 %v362, %v242
        %v459 = vmax.f32 %v363, %v243
        %v460 = vmax.f32 %v364, %v244
        %v461 = vmax.f32 %v365, %v245
        %v462 = vmax.f32 %v366, %v246
        %v463 = vmax.f32 %v367, %v247
        %v464 = vmax.f32 %v368, %v248
        %v465 = vmax.f32 %v369, %v249
        %v466 = vmax.f32 %v370, %v250
        %v467 = vmax.f32 %v371, %v251
        %v468 = vmax.f32 %v372, %v252
        %v469 = vmax.f32 %v373, %v253
        %v470 = vmax.f32 %v374, %v254
        %v471 = vmax.f32 %v375, %v255
        %v472 = vmax.f32 %v376, %v256
        %v473 = vmax.f32 %v377, %v257
        %v474 = vmax.f32 %v378, %v258
        %v475 = vmax.f32 %v379, %v259
        %v476 = vmax.f32 %v380, %v260
        %v477 = vmax.f32 %v381, %v261
        %v478 = vmax.f32 %v382, %v262
        %v479 = vmax.f32 %v383, %v263
        %v480 = vmax.f32 %v384, %v264
        %v481 = vmax.f32 %v385, %v265
        %v482 = vmax.f32 %v386, %v266
        %s483 = sld [smem:[#allocation3 + %s25]]
        %p484 = scmp.eq.s32.totalorder %s483, 1
        %s485 = scalar_select %p484, 1, 0
        %v486 = vstv %s485
        %vm487 = vcmp.eq.s32.totalorder %v486, 1
        %vm488 = vmand %vm487, %vm279
        %vm489 = vmand %vm487, %vm280
        %vm490 = vmand %vm487, %vm281
        %vm491 = vmand %vm487, %vm282
        %vm492 = vmand %vm487, %vm283
        %vm493 = vmand %vm487, %vm284
        %vm494 = vmand %vm487, %vm285
        %vm495 = vmand %vm487, %vm286
        %vm496 = vmand %vm487, %vm287
        %vm497 = vmand %vm487, %vm288
        %vm498 = vmand %vm487, %vm289
        %vm499 = vmand %vm487, %vm290
        %s500 = scalar_lea.vmem %s160, 96 [#allocation4]
        %vm501 = vcmask 785408
        %502 = vst.msk [vmem:[%s500] sm:$0xff] %vm501, %v399
        %503 = vst.msk [vmem:[%s500 + $0x8] sm:$0xff] %vm501, %v400
        %504 = vst.msk [vmem:[%s500 + $0x10] sm:$0xff] %vm501, %v401
        %505 = vst.msk [vmem:[%s500 + $0x18] sm:$0xff] %vm501, %v402
        %506 = vst.msk [vmem:[%s500 + $0x20] sm:$0xff] %vm501, %v403
        %507 = vst.msk [vmem:[%s500 + $0x28] sm:$0xff] %vm501, %v404
        %508 = vst.msk [vmem:[%s500 + $0x30] sm:$0xff] %vm501, %v405
        %509 = vst.msk [vmem:[%s500 + $0x38] sm:$0xff] %vm501, %v406
        %510 = vst.msk [vmem:[%s500 + $0x40] sm:$0xff] %vm501, %v407
        %511 = vst.msk [vmem:[%s500 + $0x48] sm:$0xff] %vm501, %v408
        %512 = vst.msk [vmem:[%s500 + $0x50] sm:$0xff] %vm501, %v409
        %513 = vst.msk [vmem:[%s500 + $0x58] sm:$0xff] %vm501, %v410
        %514 = vst.msk [vmem:[%s500 + $0x60] sm:$0xff] %vm501, %v411
        %515 = vst.msk [vmem:[%s500 + $0x68] sm:$0xff] %vm501, %v412
        %516 = vst.msk [vmem:[%s500 + $0x70] sm:$0xff] %vm501, %v413
        %517 = vst.msk [vmem:[%s500 + $0x78] sm:$0xff] %vm501, %v414
        %518 = vst.msk [vmem:[%s500 + $0x80] sm:$0xff] %vm501, %v415
        %519 = vst.msk [vmem:[%s500 + $0x88] sm:$0xff] %vm501, %v416
        %520 = vst.msk [vmem:[%s500 + $0x90] sm:$0xff] %vm501, %v417
        %521 = vst.msk [vmem:[%s500 + $0x98] sm:$0xff] %vm501, %v418
        %522 = vst.msk [vmem:[%s500 + $0xa0] sm:$0xff] %vm501, %v419
        %523 = vst.msk [vmem:[%s500 + $0xa8] sm:$0xff] %vm501, %v420
        %524 = vst.msk [vmem:[%s500 + $0xb0] sm:$0xff] %vm501, %v421
        %525 = vst.msk [vmem:[%s500 + $0xb8] sm:$0xff] %vm501, %v422
        %526 = vst.msk [vmem:[%s500 + $0xc0] sm:$0xff] %vm501, %v423
        %527 = vst.msk [vmem:[%s500 + $0xc8] sm:$0xff] %vm501, %v424
        %528 = vst.msk [vmem:[%s500 + $0xd0] sm:$0xff] %vm501, %v425
        %529 = vst.msk [vmem:[%s500 + $0xd8] sm:$0xff] %vm501, %v426
        %530 = vst.msk [vmem:[%s500 + $0xe0] sm:$0xff] %vm501, %v427
        %531 = vst.msk [vmem:[%s500 + $0xe8] sm:$0xff] %vm501, %v428
        %532 = vst.msk [vmem:[%s500 + $0xf0] sm:$0xff] %vm501, %v429
        %533 = vst.msk [vmem:[%s500 + $0xf8] sm:$0xff] %vm501, %v430
        %534 = vst.msk [vmem:[%s500 + $0x100] sm:$0xff] %vm501, %v431
        %535 = vst.msk [vmem:[%s500 + $0x108] sm:$0xff] %vm501, %v432
        %536 = vst.msk [vmem:[%s500 + $0x110] sm:$0xff] %vm501, %v433
        %537 = vst.msk [vmem:[%s500 + $0x118] sm:$0xff] %vm501, %v434
        %538 = vst.msk [vmem:[%s500 + $0x120] sm:$0xff] %vm501, %v435
        %539 = vst.msk [vmem:[%s500 + $0x128] sm:$0xff] %vm501, %v436
        %540 = vst.msk [vmem:[%s500 + $0x130] sm:$0xff] %vm501, %v437
        %541 = vst.msk [vmem:[%s500 + $0x138] sm:$0xff] %vm501, %v438
        %542 = vst.msk [vmem:[%s500 + $0x140] sm:$0xff] %vm501, %v439
        %543 = vst.msk [vmem:[%s500 + $0x148] sm:$0xff] %vm501, %v440
        %544 = vst.msk [vmem:[%s500 + $0x150] sm:$0xff] %vm501, %v441
        %545 = vst.msk [vmem:[%s500 + $0x158] sm:$0xff] %vm501, %v442
        %546 = vst.msk [vmem:[%s500 + $0x160] sm:$0xff] %vm501, %v443
        %547 = vst.msk [vmem:[%s500 + $0x168] sm:$0xff] %vm501, %v444
        %548 = vst.msk [vmem:[%s500 + $0x170] sm:$0xff] %vm501, %v445
        %549 = vst.msk [vmem:[%s500 + $0x178] sm:$0xff] %vm501, %v446
        %550 = vst.msk [vmem:[%s500 + $0x180] sm:$0xff] %vm501, %v447
        %551 = vst.msk [vmem:[%s500 + $0x188] sm:$0xff] %vm501, %v448
        %552 = vst.msk [vmem:[%s500 + $0x190] sm:$0xff] %vm501, %v449
        %553 = vst.msk [vmem:[%s500 + $0x198] sm:$0xff] %vm501, %v450
        %554 = vst.msk [vmem:[%s500 + $0x1a0] sm:$0xff] %vm501, %v451
        %555 = vst.msk [vmem:[%s500 + $0x1a8] sm:$0xff] %vm501, %v452
        %556 = vst.msk [vmem:[%s500 + $0x1b0] sm:$0xff] %vm501, %v453
        %557 = vst.msk [vmem:[%s500 + $0x1b8] sm:$0xff] %vm501, %v454
        %558 = vst.msk [vmem:[%s500 + $0x1c0] sm:$0xff] %vm501, %v455
        %559 = vst.msk [vmem:[%s500 + $0x1c8] sm:$0xff] %vm501, %v456
        %560 = vst.msk [vmem:[%s500 + $0x1d0] sm:$0xff] %vm501, %v457
        %561 = vst.msk [vmem:[%s500 + $0x1d8] sm:$0xff] %vm501, %v458
        %562 = vst.msk [vmem:[%s500 + $0x1e0] sm:$0xff] %vm501, %v459
        %563 = vst.msk [vmem:[%s500 + $0x1e8] sm:$0xff] %vm501, %v460
        %564 = vst.msk [vmem:[%s500 + $0x1f0] sm:$0xff] %vm501, %v461
        %565 = vst.msk [vmem:[%s500 + $0x1f8] sm:$0xff] %vm501, %v462
        %566 = vst.msk [vmem:[%s500 + $0x200] sm:$0xff] %vm501, %v463
        %567 = vst.msk [vmem:[%s500 + $0x208] sm:$0xff] %vm501, %v464
        %568 = vst.msk [vmem:[%s500 + $0x210] sm:$0xff] %vm501, %v465
        %569 = vst.msk [vmem:[%s500 + $0x218] sm:$0xff] %vm501, %v466
        %570 = vst.msk [vmem:[%s500 + $0x220] sm:$0xff] %vm501, %v467
        %571 = vst.msk [vmem:[%s500 + $0x228] sm:$0xff] %vm501, %v468
        %572 = vst.msk [vmem:[%s500 + $0x230] sm:$0xff] %vm501, %v469
        %573 = vst.msk [vmem:[%s500 + $0x238] sm:$0xff] %vm501, %v470
        %574 = vst.msk [vmem:[%s500 + $0x240] sm:$0xff] %vm501, %v471
        %575 = vst.msk [vmem:[%s500 + $0x248] sm:$0xff] %vm501, %v472
        %576 = vst.msk [vmem:[%s500 + $0x250] sm:$0xff] %vm501, %v473
        %577 = vst.msk [vmem:[%s500 + $0x258] sm:$0xff] %vm501, %v474
        %578 = vst.msk [vmem:[%s500 + $0x260] sm:$0xff] %vm501, %v475
        %579 = vst.msk [vmem:[%s500 + $0x268] sm:$0xff] %vm501, %v476
        %580 = vst.msk [vmem:[%s500 + $0x270] sm:$0xff] %vm501, %v477
        %581 = vst.msk [vmem:[%s500 + $0x278] sm:$0xff] %vm501, %v478
        %582 = vst.msk [vmem:[%s500 + $0x280] sm:$0xff] %vm501, %v479
        %583 = vst.msk [vmem:[%s500 + $0x288] sm:$0xff] %vm501, %v480
        %584 = vst.msk [vmem:[%s500 + $0x290] sm:$0xff] %vm501, %v481
        %585 = vst.msk [vmem:[%s500 + $0x298] sm:$0xff] %vm501, %v482
        %v586 = vsel %vm488, 0.0, %v387
        %v587 = vsel %vm489, 0.0, %v388
        %v588 = vsel %vm490, 0.0, %v389
        %v589 = vsel %vm491, 0.0, %v390
        %v590 = vsel %vm492, 0.0, %v391
        %v591 = vsel %vm493, 0.0, %v392
        %v592 = vsel %vm494, 0.0, %v393
        %v593 = vsel %vm495, 0.0, %v394
        %v594 = vsel %vm496, 0.0, %v395
        %v595 = vsel %vm497, 0.0, %v396
        %v596 = vsel %vm498, 0.0, %v397
        %v597 = vsel %vm499, 0.0, %v398
        %598 = vst.msk [vmem:[%s160] sm:$0xff] %vm501, %v586
        %599 = vst.msk [vmem:[%s160 + $0x8] sm:$0xff] %vm501, %v587
        %600 = vst.msk [vmem:[%s160 + $0x10] sm:$0xff] %vm501, %v588
        %601 = vst.msk [vmem:[%s160 + $0x18] sm:$0xff] %vm501, %v589
        %602 = vst.msk [vmem:[%s160 + $0x20] sm:$0xff] %vm501, %v590
        %603 = vst.msk [vmem:[%s160 + $0x28] sm:$0xff] %vm501, %v591
        %604 = vst.msk [vmem:[%s160 + $0x30] sm:$0xff] %vm501, %v592
        %605 = vst.msk [vmem:[%s160 + $0x38] sm:$0xff] %vm501, %v593
        %606 = vst.msk [vmem:[%s160 + $0x40] sm:$0xff] %vm501, %v594
        %607 = vst.msk [vmem:[%s160 + $0x48] sm:$0xff] %vm501, %v595
        %608 = vst.msk [vmem:[%s160 + $0x50] sm:$0xff] %vm501, %v596
        %609 = vst.msk [vmem:[%s160 + $0x58] sm:$0xff] %vm501, %v597
        %s610 = sand.u32 %s85, 1
        %s611 = scalar_lea.sflag [#allocation5], %s610
        %s612 = sand.u32 %s85, 1
        %s613 = smul.addr %s612, 768
        %s614 = scalar_lea.vmem [#allocation4], %s613
        // Predicated region
        $region29: #{semantic_mapping_forward.11} parent=27 // pred_check
          %p615 = pneg %p95
        $region30: #{semantic_mapping_forward.11} parent=27 // pred_check_branch
          %617 = sbr.rel (%p615) target = $region32
        $region31: #{semantic_mapping_forward.11} parent=27 // pred_region
          %619 = vsyncadd %s611, 0
          %s620 = smul.addr %s25, 96
          %s621 = smul.addr %s620, 8
          %s622 = scalar_lea.hbm %s3, %s621
          %s623 = sshll.u32 %s614, 4
          %s624 = int_to_ptr.vmem [resolvable:$true] %s623
          %s625 = sshll.u32 %s622, 4
          %s626 = int_to_ptr.hbm [resolvable:$true] %s625
          %631 = dma.vmem_to_hbm [thread:$0]  %s624, 12288, %s626, %s611, 128, 128, 8
        $region32: #{semantic_mapping_forward.11} parent=27 // pred_fallthru
          _
      $region28: #{semantic_mapping_forward.11} parent=5 // pred_fallthru
        _
      %p632 = scmp.le.s32.totalorder 2, %s20
      // Predicated region
      $region33: #{semantic_mapping_forward.11} parent=5 // pred_check
        %p633 = pneg %p632
      $region34: #{semantic_mapping_forward.11} parent=5 // pred_check_branch
        %635 = sbr.rel (%p633) target = $region36
      $region35: #{semantic_mapping_forward.11} parent=5 // pred_region
        %s636 = ssub.s32 %s20, 2
        // Predicated region
        $region37: #{semantic_mapping_forward.11} parent=35 // pred_check
          %p637 = pneg %p101
        $region38: #{semantic_mapping_forward.11} parent=35 // pred_check_branch
          %639 = sbr.rel (%p637) target = $region40
        $region39: #{semantic_mapping_forward.11} parent=35 // pred_region
          %s640 = sand.u32 %s86, 1
          %s641 = scalar_lea.sflag [#allocation5], %s640
          %s642 = sand.u32 %s86, 1
          %s643 = smul.addr %s642, 768
          %s644 = scalar_lea.vmem [#allocation4], %s643
          %646 = dma.done %s641, 12288
        $region40: #{semantic_mapping_forward.11} parent=35 // pred_fallthru
          _
      $region36: #{semantic_mapping_forward.11} parent=5 // pred_fallthru
        _
    $region6: #{semantic_mapping_forward.11} parent=1 // loop_footer
      %s24 = sadd.s32 1, %s20
    $region7: #{semantic_mapping_forward.11} parent=1 // loop_footer_branch
      %19 = sbr.rel target = $region3
    $region8: #{semantic_mapping_forward.11} parent=1 // loop_exit
      _
    %647 = vsyncpa [#allocation5], 1
    %s648 = scalar_lea.sflag [#allocation5], 1
    %649 = vsyncpa %s648, 1

// kernel: semantic_mapping_forward.10
$region0: #{semantic_mapping_forward.10}
  #allocation0 [shape = 'u32[]', space=smem, size = 0x4, offset = 0x4, fixed_abs, tag = 'smem constant byte address 0x4 - core index']
  #allocation1 [shape = 'u32[72,128]{1,0:T(1,128)}', space=vmem, size = 0x9000, scoped, tag = 'internal scratch']
  #allocation2 [shape = 's32[1]{0}', space=sflag, size = 0x4, scoped, tag = 'scoped memory for semantic_mapping_forward.10']
  #allocation3 [shape = 'u8[512]{0}', space=smem, size = 0x200, scoped, tag = 'prefetched SMEM operand 0']
  %s0 = inlined_call_operand.vmem [shape: s32[2], index: 0, kind: input, shape index: {}]
  %s1 = inlined_call_operand.vmem [shape: f32[2,8,96,96], index: 1, kind: input, shape index: {}]
  %s2 = inlined_call_operand.vmem [shape: f32[2,98,98], index: 2, kind: input, shape index: {}]
  %s3 = inlined_call_operand.vmem [shape: f32[2,8,96,96], index: 3, kind: input, shape index: {}]
  %s4 = inlined_call_operand.hbm [shape: f32[2,8,96,96], index: 4, kind: output, shape index: {}]
  %s5 = sld [smem:[#allocation0]]
  $region45: #{semantic_mapping_forward.10} parent=0
    _
  %s7 = ssub.s32 1, %s5
  %s8 = scalar_select 0, %s7, %s5
  %s10 = sshll.u32 %s0, 4
  %s11 = int_to_ptr.vmem [resolvable:$true] %s10
  %13 = dma.vmem_to_smem %s11, 16, [#allocation3], [#allocation2]
  %15 = dma.done [#allocation2], 16
  %16 = sfence
  $region1: #{semantic_mapping_forward.10} parent=0
    #allocation4 [shape = 'u8[786432]{0}', space=vmem, size = 0xc0000, scoped, tag = 'output window, operand 0']
    #allocation5 [shape = 's32[2]{0}', space=sflag, size = 0x8, scoped, tag = 'scoped memory for semantic_mapping_forward.10']
    %17 = vsyncpa [#allocation5], 0
    %s18 = scalar_lea.sflag [#allocation5], 1
    %19 = vsyncpa %s18, 0
    loop: start=0, step=1, limit=4
    $region2: #{semantic_mapping_forward.10} parent=1 // loop_pre_header
      _
    $region3: #{semantic_mapping_forward.10} parent=1 // loop_header
      %s21 = sphi 0, %s25
      %p22 = scmp.ge.s32.totalorder %s21, 4
      %s31 = sphi 0, %s33
      %s34 = sphi 0, %s31
      %s35 = sphi 0, %s34
      %s51 = sphi 0, %s35
      %s57 = sphi 0, %s59
      %s60 = sphi 0, %s57
      %s61 = sphi 0, %s60
      %s77 = sphi 0, %s61
      %s83 = sphi 0, %s85
      %s86 = sphi 0, %s83
      %s87 = sphi 0, %s86
      %s103 = sphi 0, %s87
      %s109 = sphi 0, %s111
      %s112 = sphi 0, %s109
      %s113 = sphi 0, %s112
      %s129 = sphi 0, %s113
    $region4: #{semantic_mapping_forward.10} parent=1 // loop_header_branch
      %24 = sbr.rel (%p22) target = $region8
    $region5: #{semantic_mapping_forward.10} parent=1 // loop_body
      %s26 = ssub.s32 %s21, 1
      %s27 = ssub.s32 %s21, 2
      %s28 = sadd.s32 %s21, 1
      %s29 = ssub.s32 %s21, %s28
      %p30 = scmp.eq.s32.totalorder %s29, 0
      %s32 = sadd.s32 %s31, 1
      %s33 = scalar_select %p30, %s31, %s32
      %p36 = pneg %p30
      %p37 = scmp.eq.s32.totalorder %s21, 1
      %p38 = por %p36, %p37
      %p39 = scmp.ne.s32.totalorder %s31, %s34
      %p40 = scmp.eq.s32.totalorder %s21, 0
      %p41 = por %p39, %p40
      %p42 = scmp.ne.s32.totalorder %s31, %s34
      %p43 = scmp.eq.s32.totalorder %s26, 1
      %p44 = por %p42, %p43
      %p45 = scmp.ne.s32.totalorder %s34, %s35
      %p46 = scmp.eq.s32.totalorder %s26, 0
      %p47 = por %p45, %p46
      %p48 = scmp.ne.s32.totalorder %s34, %s35
      %p49 = scmp.eq.s32.totalorder %s27, 1
      %p50 = por %p48, %p49
      %p52 = scmp.ne.s32.totalorder %s35, %s51
      %p53 = scmp.eq.s32.totalorder %s27, 0
      %p54 = por %p52, %p53
      %s55 = ssub.s32 %s21, %s28
      %p56 = scmp.eq.s32.totalorder %s55, 0
      %s58 = sadd.s32 %s57, 1
      %s59 = scalar_select %p56, %s57, %s58
      %p62 = pneg %p56
      %p63 = scmp.eq.s32.totalorder %s21, 1
      %p64 = por %p62, %p63
      %p65 = scmp.ne.s32.totalorder %s57, %s60
      %p66 = scmp.eq.s32.totalorder %s21, 0
      %p67 = por %p65, %p66
      %p68 = scmp.ne.s32.totalorder %s57, %s60
      %p69 = scmp.eq.s32.totalorder %s26, 1
      %p70 = por %p68, %p69
      %p71 = scmp.ne.s32.totalorder %s60, %s61
      %p72 = scmp.eq.s32.totalorder %s26, 0
      %p73 = por %p71, %p72
      %p74 = scmp.ne.s32.totalorder %s60, %s61
      %p75 = scmp.eq.s32.totalorder %s27, 1
      %p76 = por %p74, %p75
      %p78 = scmp.ne.s32.totalorder %s61, %s77
      %p79 = scmp.eq.s32.totalorder %s27, 0
      %p80 = por %p78, %p79
      %s81 = ssub.s32 %s21, %s28
      %p82 = scmp.eq.s32.totalorder %s81, 0
      %s84 = sadd.s32 %s83, 1
      %s85 = scalar_select %p82, %s83, %s84
      %p88 = pneg %p82
      %p89 = scmp.eq.s32.totalorder %s21, 1
      %p90 = por %p88, %p89
      %p91 = scmp.ne.s32.totalorder %s83, %s86
      %p92 = scmp.eq.s32.totalorder %s21, 0
      %p93 = por %p91, %p92
      %p94 = scmp.ne.s32.totalorder %s83, %s86
      %p95 = scmp.eq.s32.totalorder %s26, 1
      %p96 = por %p94, %p95
      %p97 = scmp.ne.s32.totalorder %s86, %s87
      %p98 = scmp.eq.s32.totalorder %s26, 0
      %p99 = por %p97, %p98
      %p100 = scmp.ne.s32.totalorder %s86, %s87
      %p101 = scmp.eq.s32.totalorder %s27, 1
      %p102 = por %p100, %p101
      %p104 = scmp.ne.s32.totalorder %s87, %s103
      %p105 = scmp.eq.s32.totalorder %s27, 0
      %p106 = por %p104, %p105
      %s107 = ssub.s32 %s21, %s28
      %p108 = scmp.eq.s32.totalorder %s107, 0
      %s110 = sadd.s32 %s109, 1
      %s111 = scalar_select %p108, %s109, %s110
      %p114 = pneg %p108
      %p115 = scmp.eq.s32.totalorder %s21, 1
      %p116 = por %p114, %p115
      %p117 = scmp.ne.s32.totalorder %s109, %s112
      %p118 = scmp.eq.s32.totalorder %s21, 0
      %p119 = por %p117, %p118
      %p120 = scmp.ne.s32.totalorder %s109, %s112
      %p121 = scmp.eq.s32.totalorder %s26, 1
      %p122 = por %p120, %p121
      %p123 = scmp.ne.s32.totalorder %s112, %s113
      %p124 = scmp.eq.s32.totalorder %s26, 0
      %p125 = por %p123, %p124
      %p126 = scmp.ne.s32.totalorder %s112, %s113
      %p127 = scmp.eq.s32.totalorder %s27, 1
      %p128 = por %p126, %p127
      %p130 = scmp.ne.s32.totalorder %s113, %s129
      %p131 = scmp.eq.s32.totalorder %s27, 0
      %p132 = por %p130, %p131
      %p133 = scmp.le.s32.totalorder 1, %s21
      %p134 = scmp.lt.s32.totalorder %s21, 3
      %p135 = pnand %p133, %p134
      %p136 = pneg %p135
      // Predicated region
      $region9: #{semantic_mapping_forward.10} parent=5 // pred_check
        _
      $region10: #{semantic_mapping_forward.10} parent=5 // pred_check_branch
        %138 = sbr.rel (%p135) target = $region12
      $region11: #{semantic_mapping_forward.10} parent=5 // pred_region
        %s139 = ssub.s32 %s21, 1
      $region12: #{semantic_mapping_forward.10} parent=5 // pred_fallthru
        _
      %p140 = scmp.lt.s32.totalorder %s21, 2
      // Predicated region
      $region13: #{semantic_mapping_forward.10} parent=5 // pred_check
        %p141 = pneg %p140
      $region14: #{semantic_mapping_forward.10} parent=5 // pred_check_branch
        %143 = sbr.rel (%p141) target = $region16
      $region15: #{semantic_mapping_forward.10} parent=5 // pred_region
        // Predicated region
        $region17: #{semantic_mapping_forward.10} parent=15 // pred_check
          %p144 = pneg %p41
        $region18: #{semantic_mapping_forward.10} parent=15 // pred_check_branch
          %146 = sbr.rel (%p144) target = $region20
        $region19: #{semantic_mapping_forward.10} parent=15 // pred_region
          %p147 = scmp.lt.s32.totalorder %s21, 1
          %s148 = scalar_select %p147, %s21, 1
          %s149 = smul.addr %s148, 96
          %s150 = smul.addr %s149, 8
          %s151 = scalar_lea.vmem %s1, %s150
        $region20: #{semantic_mapping_forward.10} parent=15 // pred_fallthru
          _
        // Predicated region
        $region21: #{semantic_mapping_forward.10} parent=15 // pred_check
          %p152 = pneg %p67
        $region22: #{semantic_mapping_forward.10} parent=15 // pred_check_branch
          %154 = sbr.rel (%p152) target = $region24
        $region23: #{semantic_mapping_forward.10} parent=15 // pred_region
          %p155 = scmp.lt.s32.totalorder %s21, 1
          %s156 = scalar_select %p155, %s21, 1
          %s157 = smul.addr %s156, 13
          %s158 = smul.addr %s157, 8
          %s159 = scalar_lea.vmem %s2, %s158
        $region24: #{semantic_mapping_forward.10} parent=15 // pred_fallthru
          _
        // Predicated region
        $region25: #{semantic_mapping_forward.10} parent=15 // pred_check
          %p160 = pneg %p93
        $region26: #{semantic_mapping_forward.10} parent=15 // pred_check_branch
          %162 = sbr.rel (%p160) target = $region28
        $region27: #{semantic_mapping_forward.10} parent=15 // pred_region
          %p163 = scmp.lt.s32.totalorder %s21, 1
          %s164 = scalar_select %p163, %s21, 1
          %s165 = smul.addr %s164, 96
          %s166 = smul.addr %s165, 8
          %s167 = scalar_lea.vmem %s3, %s166
        $region28: #{semantic_mapping_forward.10} parent=15 // pred_fallthru
          _
      $region16: #{semantic_mapping_forward.10} parent=5 // pred_fallthru
        _
      %p168 = scmp.le.s32.totalorder 1, %s21
      %p169 = scmp.lt.s32.totalorder %s21, 3
      %p170 = pnand %p168, %p169
      %p171 = pneg %p170
      // Predicated region
      $region29: #{semantic_mapping_forward.10} parent=5 // pred_check
        _
      $region30: #{semantic_mapping_forward.10} parent=5 // pred_check_branch
        %173 = sbr.rel (%p170) target = $region32
      $region31: #{semantic_mapping_forward.10} parent=5 // pred_region
        %s174 = ssub.s32 %s21, 1
        %p175 = scmp.lt.s32.totalorder %s26, 1
        %s176 = scalar_select %p175, %s26, 1
        %s177 = smul.addr %s176, 96
        %s178 = smul.addr %s177, 8
        %s179 = scalar_lea.vmem %s1, %s178
        %p180 = pneg %p47
        %p181 = pneg %p44
        %p182 = scmp.lt.s32.totalorder %s26, 1
        %s183 = scalar_select %p182, %s26, 1
        %s184 = smul.addr %s183, 13
        %s185 = smul.addr %s184, 8
        %s186 = scalar_lea.vmem %s2, %s185
        %p187 = pneg %p73
        %p188 = pneg %p70
        %p189 = scmp.lt.s32.totalorder %s26, 1
        %s190 = scalar_select %p189, %s26, 1
        %s191 = smul.addr %s190, 96
        %s192 = smul.addr %s191, 8
        %s193 = scalar_lea.vmem %s3, %s192
        %p194 = pneg %p99
        %p195 = pneg %p96
        %p196 = pneg %p125
        %p197 = pneg %p122
        %s198 = sand.u32 %s112, 1
        %s199 = scalar_lea.sflag [#allocation5], %s198
        %s200 = sand.u32 %s112, 1
        %s201 = smul.addr %s200, 768
        %s202 = scalar_lea.vmem [#allocation4], %s201
        %p203 = scmp.lt.s32.totalorder %s26, 1
        %s204 = scalar_select %p203, %s26, 1
        %s205 = smul.addr %s204, 96
        %s206 = smul.addr %s205, 8
        %s207 = scalar_lea.vmem %s1, %s206
        %p208 = scmp.lt.s32.totalorder %s26, 1
        %s209 = scalar_select %p208, %s26, 1
        %s210 = smul.addr %s209, 13
        %s211 = smul.addr %s210, 8
        %s212 = scalar_lea.vmem %s2, %s211
        %p213 = scmp.lt.s32.totalorder %s26, 1
        %s214 = scalar_select %p213, %s26, 1
        %s215 = smul.addr %s214, 96
        %s216 = smul.addr %s215, 8
        %s217 = scalar_lea.vmem %s3, %s216
        %v218 = vld [vmem:[%s207] sm:$0xff]
        %v219 = vld [vmem:[%s207 + $0x8] sm:$0xff]
        %v220 = vld [vmem:[%s207 + $0x10] sm:$0xff]
        %v221 = vld [vmem:[%s207 + $0x18] sm:$0xff]
        %v222 = vld [vmem:[%s207 + $0x20] sm:$0xff]
        %v223 = vld [vmem:[%s207 + $0x28] sm:$0xff]
        %v224 = vld [vmem:[%s207 + $0x30] sm:$0xff]
        %v225 = vld [vmem:[%s207 + $0x38] sm:$0xff]
        %v226 = vld [vmem:[%s207 + $0x40] sm:$0xff]
        %v227 = vld [vmem:[%s207 + $0x48] sm:$0xff]
        %v228 = vld [vmem:[%s207 + $0x50] sm:$0xff]
        %v229 = vld [vmem:[%s207 + $0x58] sm:$0xff]
        %v230 = vld [vmem:[%s207 + $0x60] sm:$0xff]
        %v231 = vld [vmem:[%s207 + $0x68] sm:$0xff]
        %v232 = vld [vmem:[%s207 + $0x70] sm:$0xff]
        %v233 = vld [vmem:[%s207 + $0x78] sm:$0xff]
        %v234 = vld [vmem:[%s207 + $0x80] sm:$0xff]
        %v235 = vld [vmem:[%s207 + $0x88] sm:$0xff]
        %v236 = vld [vmem:[%s207 + $0x90] sm:$0xff]
        %v237 = vld [vmem:[%s207 + $0x98] sm:$0xff]
        %v238 = vld [vmem:[%s207 + $0xa0] sm:$0xff]
        %v239 = vld [vmem:[%s207 + $0xa8] sm:$0xff]
        %v240 = vld [vmem:[%s207 + $0xb0] sm:$0xff]
        %v241 = vld [vmem:[%s207 + $0xb8] sm:$0xff]
        %v242 = vld [vmem:[%s207 + $0xc0] sm:$0xff]
        %v243 = vld [vmem:[%s207 + $0xc8] sm:$0xff]
        %v244 = vld [vmem:[%s207 + $0xd0] sm:$0xff]
        %v245 = vld [vmem:[%s207 + $0xd8] sm:$0xff]
        %v246 = vld [vmem:[%s207 + $0xe0] sm:$0xff]
        %v247 = vld [vmem:[%s207 + $0xe8] sm:$0xff]
        %v248 = vld [vmem:[%s207 + $0xf0] sm:$0xff]
        %v249 = vld [vmem:[%s207 + $0xf8] sm:$0xff]
        %v250 = vld [vmem:[%s207 + $0x100] sm:$0xff]
        %v251 = vld [vmem:[%s207 + $0x108] sm:$0xff]
        %v252 = vld [vmem:[%s207 + $0x110] sm:$0xff]
        %v253 = vld [vmem:[%s207 + $0x118] sm:$0xff]
        %v254 = vld [vmem:[%s207 + $0x120] sm:$0xff]
        %v255 = vld [vmem:[%s207 + $0x128] sm:$0xff]
        %v256 = vld [vmem:[%s207 + $0x130] sm:$0xff]
        %v257 = vld [vmem:[%s207 + $0x138] sm:$0xff]
        %v258 = vld [vmem:[%s207 + $0x140] sm:$0xff]
        %v259 = vld [vmem:[%s207 + $0x148] sm:$0xff]
        %v260 = vld [vmem:[%s207 + $0x150] sm:$0xff]
        %v261 = vld [vmem:[%s207 + $0x158] sm:$0xff]
        %v262 = vld [vmem:[%s207 + $0x160] sm:$0xff]
        %v263 = vld [vmem:[%s207 + $0x168] sm:$0xff]
        %v264 = vld [vmem:[%s207 + $0x170] sm:$0xff]
        %v265 = vld [vmem:[%s207 + $0x178] sm:$0xff]
        %v266 = vld [vmem:[%s207 + $0x180] sm:$0xff]
        %v267 = vld [vmem:[%s207 + $0x188] sm:$0xff]
        %v268 = vld [vmem:[%s207 + $0x190] sm:$0xff]
        %v269 = vld [vmem:[%s207 + $0x198] sm:$0xff]
        %v270 = vld [vmem:[%s207 + $0x1a0] sm:$0xff]
        %v271 = vld [vmem:[%s207 + $0x1a8] sm:$0xff]
        %v272 = vld [vmem:[%s207 + $0x1b0] sm:$0xff]
        %v273 = vld [vmem:[%s207 + $0x1b8] sm:$0xff]
        %v274 = vld [vmem:[%s207 + $0x1c0] sm:$0xff]
        %v275 = vld [vmem:[%s207 + $0x1c8] sm:$0xff]
        %v276 = vld [vmem:[%s207 + $0x1d0] sm:$0xff]
        %v277 = vld [vmem:[%s207 + $0x1d8] sm:$0xff]
        %v278 = vld [vmem:[%s207 + $0x1e0] sm:$0xff]
        %v279 = vld [vmem:[%s207 + $0x1e8] sm:$0xff]
        %v280 = vld [vmem:[%s207 + $0x1f0] sm:$0xff]
        %v281 = vld [vmem:[%s207 + $0x1f8] sm:$0xff]
        %v282 = vld [vmem:[%s207 + $0x200] sm:$0xff]
        %v283 = vld [vmem:[%s207 + $0x208] sm:$0xff]
        %v284 = vld [vmem:[%s207 + $0x210] sm:$0xff]
        %v285 = vld [vmem:[%s207 + $0x218] sm:$0xff]
        %v286 = vld [vmem:[%s207 + $0x220] sm:$0xff]
        %v287 = vld [vmem:[%s207 + $0x228] sm:$0xff]
        %v288 = vld [vmem:[%s207 + $0x230] sm:$0xff]
        %v289 = vld [vmem:[%s207 + $0x238] sm:$0xff]
        %v290 = vld [vmem:[%s207 + $0x240] sm:$0xff]
        %v291 = vld [vmem:[%s207 + $0x248] sm:$0xff]
        %v292 = vld [vmem:[%s207 + $0x250] sm:$0xff]
        %v293 = vld [vmem:[%s207 + $0x258] sm:$0xff]
        %v294 = vld [vmem:[%s207 + $0x260] sm:$0xff]
        %v295 = vld [vmem:[%s207 + $0x268] sm:$0xff]
        %v296 = vld [vmem:[%s207 + $0x270] sm:$0xff]
        %v297 = vld [vmem:[%s207 + $0x278] sm:$0xff]
        %v298 = vld [vmem:[%s207 + $0x280] sm:$0xff]
        %v299 = vld [vmem:[%s207 + $0x288] sm:$0xff]
        %v300 = vld [vmem:[%s207 + $0x290] sm:$0xff]
        %v301 = vld [vmem:[%s207 + $0x298] sm:$0xff]
        %v302 = vld [vmem:[%s207 + $0x2a0] sm:$0xff]
        %v303 = vld [vmem:[%s207 + $0x2a8] sm:$0xff]
        %v304 = vld [vmem:[%s207 + $0x2b0] sm:$0xff]
        %v305 = vld [vmem:[%s207 + $0x2b8] sm:$0xff]
        %v306 = vld [vmem:[%s207 + $0x2c0] sm:$0xff]
        %v307 = vld [vmem:[%s207 + $0x2c8] sm:$0xff]
        %v308 = vld [vmem:[%s207 + $0x2d0] sm:$0xff]
        %v309 = vld [vmem:[%s207 + $0x2d8] sm:$0xff]
        %v310 = vld [vmem:[%s207 + $0x2e0] sm:$0xff]
        %v311 = vld [vmem:[%s207 + $0x2e8] sm:$0xff]
        %v312 = vld [vmem:[%s207 + $0x2f0] sm:$0xff]
        %v313 = vld [vmem:[%s207 + $0x2f8] sm:$0xff]
        %v314 = vld [vmem:[%s212] sm:$0xff]
        %v315 = vld [vmem:[%s212 + $0x8] sm:$0xff]
        %v316 = vld [vmem:[%s212 + $0x10] sm:$0xff]
        %v317 = vld [vmem:[%s212 + $0x18] sm:$0xff]
        %v318 = vld [vmem:[%s212 + $0x20] sm:$0xff]
        %v319 = vld [vmem:[%s212 + $0x28] sm:$0xff]
        %v320 = vld [vmem:[%s212 + $0x30] sm:$0xff]
        %v321 = vld [vmem:[%s212 + $0x38] sm:$0xff]
        %v322 = vld [vmem:[%s212 + $0x40] sm:$0xff]
        %v323 = vld [vmem:[%s212 + $0x48] sm:$0xff]
        %v324 = vld [vmem:[%s212 + $0x50] sm:$0xff]
        %v325 = vld [vmem:[%s212 + $0x58] sm:$0xff]
        %v326 = vld [vmem:[%s212 + $0x60] sm:$0x3]
        %vm340 = vcmask 1046528
        %v341 = vrot.slane %v314, 1
        %v342 = vrot.slane %v315, 1
        %v343 = vsel %vm340, %v341, %v342
        %v344 = vrot.slane %v316, 1
        %v345 = vsel %vm340, %v342, %v344
        %v346 = vrot.slane %v317, 1
        %v347 = vsel %vm340, %v344, %v346
        %v348 = vrot.slane %v318, 1
        %v349 = vsel %vm340, %v346, %v348
        %v350 = vrot.slane %v319, 1
        %v351 = vsel %vm340, %v348, %v350
        %v352 = vrot.slane %v320, 1
        %v353 = vsel %vm340, %v350, %v352
        %v354 = vrot.slane %v321, 1
        %v355 = vsel %vm340, %v352, %v354
        %v356 = vrot.slane %v322, 1
        %v357 = vsel %vm340, %v354, %v356
        %v358 = vrot.slane %v323, 1
        %v359 = vsel %vm340, %v356, %v358
        %v360 = vrot.slane %v324, 1
        %v361 = vsel %vm340, %v358, %v360
        %v362 = vrot.slane %v325, 1
        %v363 = vsel %vm340, %v360, %v362
        %v364 = vrot.slane %v326, 1
        %v365 = vsel %vm340, %v362, %v364
        %v378 = vmax.f32 %v314, %v343
        %v379 = vmax.f32 %v315, %v345
        %v380 = vmax.f32 %v316, %v347
        %v381 = vmax.f32 %v317, %v349
        %v382 = vmax.f32 %v318, %v351
        %v383 = vmax.f32 %v319, %v353
        %v384 = vmax.f32 %v320, %v355
        %v385 = vmax.f32 %v321, %v357
        %v386 = vmax.f32 %v322, %v359
        %v387 = vmax.f32 %v323, %v361
        %v388 = vmax.f32 %v324, %v363
        %v389 = vmax.f32 %v325, %v365
        %vm390 = vcmask 1045504
        %v391 = vrot.slane %v314, 2
        %v392 = vrot.slane %v315, 2
        %v393 = vsel %vm390, %v391, %v392
        %v394 = vrot.slane %v316, 2
        %v395 = vsel %vm390, %v392, %v394
        %v396 = vrot.slane %v317, 2
        %v397 = vsel %vm390, %v394, %v396
        %v398 = vrot.slane %v318, 2
        %v399 = vsel %vm390, %v396, %v398
        %v400 = vrot.slane %v319, 2
        %v401 = vsel %vm390, %v398, %v400
        %v402 = vrot.slane %v320, 2
        %v403 = vsel %vm390, %v400, %v402
        %v404 = vrot.slane %v321, 2
        %v405 = vsel %vm390, %v402, %v404
        %v406 = vrot.slane %v322, 2
        %v407 = vsel %vm390, %v404, %v406
        %v408 = vrot.slane %v323, 2
        %v409 = vsel %vm390, %v406, %v408
        %v410 = vrot.slane %v324, 2
        %v411 = vsel %vm390, %v408, %v410
        %v412 = vrot.slane %v325, 2
        %v413 = vsel %vm390, %v410, %v412
        %v414 = vrot.slane %v326, 2
        %v415 = vsel %vm390, %v412, %v414
        %v428 = vmax.f32 %v378, %v393
        %v429 = vmax.f32 %v379, %v395
        %v430 = vmax.f32 %v380, %v397
        %v431 = vmax.f32 %v381, %v399
        %v432 = vmax.f32 %v382, %v401
        %v433 = vmax.f32 %v383, %v403
        %v434 = vmax.f32 %v384, %v405
        %v435 = vmax.f32 %v385, %v407
        %v436 = vmax.f32 %v386, %v409
        %v437 = vmax.f32 %v387, %v411
        %v438 = vmax.f32 %v388, %v413
        %v439 = vmax.f32 %v389, %v415
        %452 = vrot.lane.b32.xlu0 %v428, 127
        %v453 = vpop.permute.xlu0 %452
        %454 = vrot.lane.b32.xlu0 %v429, 127
        %v455 = vpop.permute.xlu0 %454
        %456 = vrot.lane.b32.xlu0 %v430, 127
        %v457 = vpop.permute.xlu0 %456
        %458 = vrot.lane.b32.xlu0 %v431, 127
        %v459 = vpop.permute.xlu0 %458
        %460 = vrot.lane.b32.xlu0 %v432, 127
        %v461 = vpop.permute.xlu0 %460
        %462 = vrot.lane.b32.xlu0 %v433, 127
        %v463 = vpop.permute.xlu0 %462
        %464 = vrot.lane.b32.xlu0 %v434, 127
        %v465 = vpop.permute.xlu0 %464
        %466 = vrot.lane.b32.xlu0 %v435, 127
        %v467 = vpop.permute.xlu0 %466
        %468 = vrot.lane.b32.xlu0 %v436, 127
        %v469 = vpop.permute.xlu0 %468
        %470 = vrot.lane.b32.xlu0 %v437, 127
        %v471 = vpop.permute.xlu0 %470
        %472 = vrot.lane.b32.xlu0 %v438, 127
        %v473 = vpop.permute.xlu0 %472
        %474 = vrot.lane.b32.xlu0 %v439, 127
        %v475 = vpop.permute.xlu0 %474
        %v488 = vmax.f32 %v428, %v453
        %v489 = vmax.f32 %v429, %v455
        %v490 = vmax.f32 %v430, %v457
        %v491 = vmax.f32 %v431, %v459
        %v492 = vmax.f32 %v432, %v461
        %v493 = vmax.f32 %v433, %v463
        %v494 = vmax.f32 %v434, %v465
        %v495 = vmax.f32 %v435, %v467
        %v496 = vmax.f32 %v436, %v469
        %v497 = vmax.f32 %v437, %v471
        %v498 = vmax.f32 %v438, %v473
        %v499 = vmax.f32 %v439, %v475
        %500 = vrot.lane.b32.xlu0 %v428, 126
        %v501 = vpop.permute.xlu0 %500
        %502 = vrot.lane.b32.xlu0 %v429, 126
        %v503 = vpop.permute.xlu0 %502
        %504 = vrot.lane.b32.xlu0 %v430, 126
        %v505 = vpop.permute.xlu0 %504
        %506 = vrot.lane.b32.xlu0 %v431, 126
        %v507 = vpop.permute.xlu0 %506
        %508 = vrot.lane.b32.xlu0 %v432, 126
        %v509 = vpop.permute.xlu0 %508
        %510 = vrot.lane.b32.xlu0 %v433, 126
        %v511 = vpop.permute.xlu0 %510
        %512 = vrot.lane.b32.xlu0 %v434, 126
        %v513 = vpop.permute.xlu0 %512
        %514 = vrot.lane.b32.xlu0 %v435, 126
        %v515 = vpop.permute.xlu0 %514
        %516 = vrot.lane.b32.xlu0 %v436, 126
        %v517 = vpop.permute.xlu0 %516
        %518 = vrot.lane.b32.xlu0 %v437, 126
        %v519 = vpop.permute.xlu0 %518
        %520 = vrot.lane.b32.xlu0 %v438, 126
        %v521 = vpop.permute.xlu0 %520
        %522 = vrot.lane.b32.xlu0 %v439, 126
        %v523 = vpop.permute.xlu0 %522
        %v536 = vmax.f32 %v488, %v501
        %v537 = vmax.f32 %v489, %v503
        %v538 = vmax.f32 %v490, %v505
        %v539 = vmax.f32 %v491, %v507
        %v540 = vmax.f32 %v492, %v509
        %v541 = vmax.f32 %v493, %v511
        %v542 = vmax.f32 %v494, %v513
        %v543 = vmax.f32 %v495, %v515
        %v544 = vmax.f32 %v496, %v517
        %v545 = vmax.f32 %v497, %v519
        %v546 = vmax.f32 %v498, %v521
        %v547 = vmax.f32 %v499, %v523
        %v548 = vsub.f32 %v230, %v536
        %v549 = vsub.f32 %v231, %v537
        %v550 = vsub.f32 %v232, %v538
        %v551 = vsub.f32 %v233, %v539
        %v552 = vsub.f32 %v234, %v540
        %v553 = vsub.f32 %v235, %v541
        %v554 = vsub.f32 %v236, %v542
        %v555 = vsub.f32 %v237, %v543
        %v556 = vsub.f32 %v238, %v544
        %v557 = vsub.f32 %v239, %v545
        %v558 = vsub.f32 %v240, %v546
        %v559 = vsub.f32 %v241, %v547
        %vm560 = vcmp.gt.f32.partialorder %v548, 0.8
        %vm561 = vcmp.gt.f32.partialorder %v549, 0.8
        %vm562 = vcmp.gt.f32.partialorder %v550, 0.8
        %vm563 = vcmp.gt.f32.partialorder %v551, 0.8
        %vm564 = vcmp.gt.f32.partialorder %v552, 0.8
        %vm565 = vcmp.gt.f32.partialorder %v553, 0.8
        %vm566 = vcmp.gt.f32.partialorder %v554, 0.8
        %vm567 = vcmp.gt.f32.partialorder %v555, 0.8
        %vm568 = vcmp.gt.f32.partialorder %v556, 0.8
        %vm569 = vcmp.gt.f32.partialorder %v557, 0.8
        %vm570 = vcmp.gt.f32.partialorder %v558, 0.8
        %vm571 = vcmp.gt.f32.partialorder %v559, 0.8
        %v572 = vld [vmem:[%s217] sm:$0xff]
        %v573 = vld [vmem:[%s217 + $0x8] sm:$0xff]
        %v574 = vld [vmem:[%s217 + $0x10] sm:$0xff]
        %v575 = vld [vmem:[%s217 + $0x18] sm:$0xff]
        %v576 = vld [vmem:[%s217 + $0x20] sm:$0xff]
        %v577 = vld [vmem:[%s217 + $0x28] sm:$0xff]
        %v578 = vld [vmem:[%s217 + $0x30] sm:$0xff]
        %v579 = vld [vmem:[%s217 + $0x38] sm:$0xff]
        %v580 = vld [vmem:[%s217 + $0x40] sm:$0xff]
        %v581 = vld [vmem:[%s217 + $0x48] sm:$0xff]
        %v582 = vld [vmem:[%s217 + $0x50] sm:$0xff]
        %v583 = vld [vmem:[%s217 + $0x58] sm:$0xff]
        %v584 = vld [vmem:[%s217 + $0x60] sm:$0xff]
        %v585 = vld [vmem:[%s217 + $0x68] sm:$0xff]
        %v586 = vld [vmem:[%s217 + $0x70] sm:$0xff]
        %v587 = vld [vmem:[%s217 + $0x78] sm:$0xff]
        %v588 = vld [vmem:[%s217 + $0x80] sm:$0xff]
        %v589 = vld [vmem:[%s217 + $0x88] sm:$0xff]
        %v590 = vld [vmem:[%s217 + $0x90] sm:$0xff]
        %v591 = vld [vmem:[%s217 + $0x98] sm:$0xff]
        %v592 = vld [vmem:[%s217 + $0xa0] sm:$0xff]
        %v593 = vld [vmem:[%s217 + $0xa8] sm:$0xff]
        %v594 = vld [vmem:[%s217 + $0xb0] sm:$0xff]
        %v595 = vld [vmem:[%s217 + $0xb8] sm:$0xff]
        %v596 = vld [vmem:[%s217 + $0xc0] sm:$0xff]
        %v597 = vld [vmem:[%s217 + $0xc8] sm:$0xff]
        %v598 = vld [vmem:[%s217 + $0xd0] sm:$0xff]
        %v599 = vld [vmem:[%s217 + $0xd8] sm:$0xff]
        %v600 = vld [vmem:[%s217 + $0xe0] sm:$0xff]
        %v601 = vld [vmem:[%s217 + $0xe8] sm:$0xff]
        %v602 = vld [vmem:[%s217 + $0xf0] sm:$0xff]
        %v603 = vld [vmem:[%s217 + $0xf8] sm:$0xff]
        %v604 = vld [vmem:[%s217 + $0x100] sm:$0xff]
        %v605 = vld [vmem:[%s217 + $0x108] sm:$0xff]
        %v606 = vld [vmem:[%s217 + $0x110] sm:$0xff]
        %v607 = vld [vmem:[%s217 + $0x118] sm:$0xff]
        %v608 = vld [vmem:[%s217 + $0x120] sm:$0xff]
        %v609 = vld [vmem:[%s217 + $0x128] sm:$0xff]
        %v610 = vld [vmem:[%s217 + $0x130] sm:$0xff]
        %v611 = vld [vmem:[%s217 + $0x138] sm:$0xff]
        %v612 = vld [vmem:[%s217 + $0x140] sm:$0xff]
        %v613 = vld [vmem:[%s217 + $0x148] sm:$0xff]
        %v614 = vld [vmem:[%s217 + $0x150] sm:$0xff]
        %v615 = vld [vmem:[%s217 + $0x158] sm:$0xff]
        %v616 = vld [vmem:[%s217 + $0x160] sm:$0xff]
        %v617 = vld [vmem:[%s217 + $0x168] sm:$0xff]
        %v618 = vld [vmem:[%s217 + $0x170] sm:$0xff]
        %v619 = vld [vmem:[%s217 + $0x178] sm:$0xff]
        %v620 = vld [vmem:[%s217 + $0x180] sm:$0xff]
        %v621 = vld [vmem:[%s217 + $0x188] sm:$0xff]
        %v622 = vld [vmem:[%s217 + $0x190] sm:$0xff]
        %v623 = vld [vmem:[%s217 + $0x198] sm:$0xff]
        %v624 = vld [vmem:[%s217 + $0x1a0] sm:$0xff]
        %v625 = vld [vmem:[%s217 + $0x1a8] sm:$0xff]
        %v626 = vld [vmem:[%s217 + $0x1b0] sm:$0xff]
        %v627 = vld [vmem:[%s217 + $0x1b8] sm:$0xff]
        %v628 = vld [vmem:[%s217 + $0x1c0] sm:$0xff]
        %v629 = vld [vmem:[%s217 + $0x1c8] sm:$0xff]
        %v630 = vld [vmem:[%s217 + $0x1d0] sm:$0xff]
        %v631 = vld [vmem:[%s217 + $0x1d8] sm:$0xff]
        %v632 = vld [vmem:[%s217 + $0x1e0] sm:$0xff]
        %v633 = vld [vmem:[%s217 + $0x1e8] sm:$0xff]
        %v634 = vld [vmem:[%s217 + $0x1f0] sm:$0xff]
        %v635 = vld [vmem:[%s217 + $0x1f8] sm:$0xff]
        %v636 = vld [vmem:[%s217 + $0x200] sm:$0xff]
        %v637 = vld [vmem:[%s217 + $0x208] sm:$0xff]
        %v638 = vld [vmem:[%s217 + $0x210] sm:$0xff]
        %v639 = vld [vmem:[%s217 + $0x218] sm:$0xff]
        %v640 = vld [vmem:[%s217 + $0x220] sm:$0xff]
        %v641 = vld [vmem:[%s217 + $0x228] sm:$0xff]
        %v642 = vld [vmem:[%s217 + $0x230] sm:$0xff]
        %v643 = vld [vmem:[%s217 + $0x238] sm:$0xff]
        %v644 = vld [vmem:[%s217 + $0x240] sm:$0xff]
        %v645 = vld [vmem:[%s217 + $0x248] sm:$0xff]
        %v646 = vld [vmem:[%s217 + $0x250] sm:$0xff]
        %v647 = vld [vmem:[%s217 + $0x258] sm:$0xff]
        %v648 = vld [vmem:[%s217 + $0x260] sm:$0xff]
        %v649 = vld [vmem:[%s217 + $0x268] sm:$0xff]
        %v650 = vld [vmem:[%s217 + $0x270] sm:$0xff]
        %v651 = vld [vmem:[%s217 + $0x278] sm:$0xff]
        %v652 = vld [vmem:[%s217 + $0x280] sm:$0xff]
        %v653 = vld [vmem:[%s217 + $0x288] sm:$0xff]
        %v654 = vld [vmem:[%s217 + $0x290] sm:$0xff]
        %v655 = vld [vmem:[%s217 + $0x298] sm:$0xff]
        %v656 = vld [vmem:[%s217 + $0x2a0] sm:$0xff]
        %v657 = vld [vmem:[%s217 + $0x2a8] sm:$0xff]
        %v658 = vld [vmem:[%s217 + $0x2b0] sm:$0xff]
        %v659 = vld [vmem:[%s217 + $0x2b8] sm:$0xff]
        %v660 = vld [vmem:[%s217 + $0x2c0] sm:$0xff]
        %v661 = vld [vmem:[%s217 + $0x2c8] sm:$0xff]
        %v662 = vld [vmem:[%s217 + $0x2d0] sm:$0xff]
        %v663 = vld [vmem:[%s217 + $0x2d8] sm:$0xff]
        %v664 = vld [vmem:[%s217 + $0x2e0] sm:$0xff]
        %v665 = vld [vmem:[%s217 + $0x2e8] sm:$0xff]
        %v666 = vld [vmem:[%s217 + $0x2f0] sm:$0xff]
        %v667 = vld [vmem:[%s217 + $0x2f8] sm:$0xff]
        %v668 = vmax.f32 %v572, %v218
        %v669 = vmax.f32 %v573, %v219
        %v670 = vmax.f32 %v574, %v220
        %v671 = vmax.f32 %v575, %v221
        %v672 = vmax.f32 %v576, %v222
        %v673 = vmax.f32 %v577, %v223
        %v674 = vmax.f32 %v578, %v224
        %v675 = vmax.f32 %v579, %v225
        %v676 = vmax.f32 %v580, %v226
        %v677 = vmax.f32 %v581, %v227
        %v678 = vmax.f32 %v582, %v228
        %v679 = vmax.f32 %v583, %v229
        %v680 = vmax.f32 %v584, %v230
        %v681 = vmax.f32 %v585, %v231
        %v682 = vmax.f32 %v586, %v232
        %v683 = vmax.f32 %v587, %v233
        %v684 = vmax.f32 %v588, %v234
        %v685 = vmax.f32 %v589, %v235
        %v686 = vmax.f32 %v590, %v236
        %v687 = vmax.f32 %v591, %v237
        %v688 = vmax.f32 %v592, %v238
        %v689 = vmax.f32 %v593, %v239
        %v690 = vmax.f32 %v594, %v240
        %v691 = vmax.f32 %v595, %v241
        %v692 = vmax.f32 %v596, %v242
        %v693 = vmax.f32 %v597, %v243
        %v694 = vmax.f32 %v598, %v244
        %v695 = vmax.f32 %v599, %v245
        %v696 = vmax.f32 %v600, %v246
        %v697 = vmax.f32 %v601, %v247
        %v698 = vmax.f32 %v602, %v248
        %v699 = vmax.f32 %v603, %v249
        %v700 = vmax.f32 %v604, %v250
        %v701 = vmax.f32 %v605, %v251
        %v702 = vmax.f32 %v606, %v252
        %v703 = vmax.f32 %v607, %v253
        %v704 = vmax.f32 %v608, %v254
        %v705 = vmax.f32 %v609, %v255
        %v706 = vmax.f32 %v610, %v256
        %v707 = vmax.f32 %v611, %v257
        %v708 = vmax.f32 %v612, %v258
        %v709 = vmax.f32 %v613, %v259
        %v710 = vmax.f32 %v614, %v260
        %v711 = vmax.f32 %v615, %v261
        %v712 = vmax.f32 %v616, %v262
        %v713 = vmax.f32 %v617, %v263
        %v714 = vmax.f32 %v618, %v264
        %v715 = vmax.f32 %v619, %v265
        %v716 = vmax.f32 %v620, %v266
        %v717 = vmax.f32 %v621, %v267
        %v718 = vmax.f32 %v622, %v268
        %v719 = vmax.f32 %v623, %v269
        %v720 = vmax.f32 %v624, %v270
        %v721 = vmax.f32 %v625, %v271
        %v722 = vmax.f32 %v626, %v272
        %v723 = vmax.f32 %v627, %v273
        %v724 = vmax.f32 %v628, %v274
        %v725 = vmax.f32 %v629, %v275
        %v726 = vmax.f32 %v630, %v276
        %v727 = vmax.f32 %v631, %v277
        %v728 = vmax.f32 %v632, %v278
        %v729 = vmax.f32 %v633, %v279
        %v730 = vmax.f32 %v634, %v280
        %v731 = vmax.f32 %v635, %v281
        %v732 = vmax.f32 %v636, %v282
        %v733 = vmax.f32 %v637, %v283
        %v734 = vmax.f32 %v638, %v284
        %v735 = vmax.f32 %v639, %v285
        %v736 = vmax.f32 %v640, %v286
        %v737 = vmax.f32 %v641, %v287
        %v738 = vmax.f32 %v642, %v288
        %v739 = vmax.f32 %v643, %v289
        %v740 = vmax.f32 %v644, %v290
        %v741 = vmax.f32 %v645, %v291
        %v742 = vmax.f32 %v646, %v292
        %v743 = vmax.f32 %v647, %v293
        %v744 = vmax.f32 %v648, %v294
        %v745 = vmax.f32 %v649, %v295
        %v746 = vmax.f32 %v650, %v296
        %v747 = vmax.f32 %v651, %v297
        %v748 = vmax.f32 %v652, %v298
        %v749 = vmax.f32 %v653, %v299
        %v750 = vmax.f32 %v654, %v300
        %v751 = vmax.f32 %v655, %v301
        %v752 = vmax.f32 %v656, %v302
        %v753 = vmax.f32 %v657, %v303
        %v754 = vmax.f32 %v658, %v304
        %v755 = vmax.f32 %v659, %v305
        %v756 = vmax.f32 %v660, %v306
        %v757 = vmax.f32 %v661, %v307
        %v758 = vmax.f32 %v662, %v308
        %v759 = vmax.f32 %v663, %v309
        %v760 = vmax.f32 %v664, %v310
        %v761 = vmax.f32 %v665, %v311
        %v762 = vmax.f32 %v666, %v312
        %v763 = vmax.f32 %v667, %v313
        %s764 = sld [smem:[#allocation3 + %s26]]
        %p765 = scmp.eq.s32.totalorder %s764, 1
        %s766 = scalar_select %p765, 1, 0
        %v767 = vstv %s766
        %vm768 = vcmp.eq.s32.totalorder %v767, 1
        %vm769 = vmand %vm768, %vm560
        %vm770 = vmand %vm768, %vm561
        %vm771 = vmand %vm768, %vm562
        %vm772 = vmand %vm768, %vm563
        %vm773 = vmand %vm768, %vm564
        %vm774 = vmand %vm768, %vm565
        %vm775 = vmand %vm768, %vm566
        %vm776 = vmand %vm768, %vm567
        %vm777 = vmand %vm768, %vm568
        %vm778 = vmand %vm768, %vm569
        %vm779 = vmand %vm768, %vm570
        %vm780 = vmand %vm768, %vm571
        %s781 = scalar_lea.vmem %s202, 96 [#allocation4]
        %vm782 = vcmask 785408
        %783 = vst.msk [vmem:[%s781] sm:$0xff] %vm782, %v680
        %784 = vst.msk [vmem:[%s781 + $0x8] sm:$0xff] %vm782, %v681
        %785 = vst.msk [vmem:[%s781 + $0x10] sm:$0xff] %vm782, %v682
        %786 = vst.msk [vmem:[%s781 + $0x18] sm:$0xff] %vm782, %v683
        %787 = vst.msk [vmem:[%s781 + $0x20] sm:$0xff] %vm782, %v684
        %788 = vst.msk [vmem:[%s781 + $0x28] sm:$0xff] %vm782, %v685
        %789 = vst.msk [vmem:[%s781 + $0x30] sm:$0xff] %vm782, %v686
        %790 = vst.msk [vmem:[%s781 + $0x38] sm:$0xff] %vm782, %v687
        %791 = vst.msk [vmem:[%s781 + $0x40] sm:$0xff] %vm782, %v688
        %792 = vst.msk [vmem:[%s781 + $0x48] sm:$0xff] %vm782, %v689
        %793 = vst.msk [vmem:[%s781 + $0x50] sm:$0xff] %vm782, %v690
        %794 = vst.msk [vmem:[%s781 + $0x58] sm:$0xff] %vm782, %v691
        %795 = vst.msk [vmem:[%s781 + $0x60] sm:$0xff] %vm782, %v692
        %796 = vst.msk [vmem:[%s781 + $0x68] sm:$0xff] %vm782, %v693
        %797 = vst.msk [vmem:[%s781 + $0x70] sm:$0xff] %vm782, %v694
        %798 = vst.msk [vmem:[%s781 + $0x78] sm:$0xff] %vm782, %v695
        %799 = vst.msk [vmem:[%s781 + $0x80] sm:$0xff] %vm782, %v696
        %800 = vst.msk [vmem:[%s781 + $0x88] sm:$0xff] %vm782, %v697
        %801 = vst.msk [vmem:[%s781 + $0x90] sm:$0xff] %vm782, %v698
        %802 = vst.msk [vmem:[%s781 + $0x98] sm:$0xff] %vm782, %v699
        %803 = vst.msk [vmem:[%s781 + $0xa0] sm:$0xff] %vm782, %v700
        %804 = vst.msk [vmem:[%s781 + $0xa8] sm:$0xff] %vm782, %v701
        %805 = vst.msk [vmem:[%s781 + $0xb0] sm:$0xff] %vm782, %v702
        %806 = vst.msk [vmem:[%s781 + $0xb8] sm:$0xff] %vm782, %v703
        %807 = vst.msk [vmem:[%s781 + $0xc0] sm:$0xff] %vm782, %v704
        %808 = vst.msk [vmem:[%s781 + $0xc8] sm:$0xff] %vm782, %v705
        %809 = vst.msk [vmem:[%s781 + $0xd0] sm:$0xff] %vm782, %v706
        %810 = vst.msk [vmem:[%s781 + $0xd8] sm:$0xff] %vm782, %v707
        %811 = vst.msk [vmem:[%s781 + $0xe0] sm:$0xff] %vm782, %v708
        %812 = vst.msk [vmem:[%s781 + $0xe8] sm:$0xff] %vm782, %v709
        %813 = vst.msk [vmem:[%s781 + $0xf0] sm:$0xff] %vm782, %v710
        %814 = vst.msk [vmem:[%s781 + $0xf8] sm:$0xff] %vm782, %v711
        %815 = vst.msk [vmem:[%s781 + $0x100] sm:$0xff] %vm782, %v712
        %816 = vst.msk [vmem:[%s781 + $0x108] sm:$0xff] %vm782, %v713
        %817 = vst.msk [vmem:[%s781 + $0x110] sm:$0xff] %vm782, %v714
        %818 = vst.msk [vmem:[%s781 + $0x118] sm:$0xff] %vm782, %v715
        %819 = vst.msk [vmem:[%s781 + $0x120] sm:$0xff] %vm782, %v716
        %820 = vst.msk [vmem:[%s781 + $0x128] sm:$0xff] %vm782, %v717
        %821 = vst.msk [vmem:[%s781 + $0x130] sm:$0xff] %vm782, %v718
        %822 = vst.msk [vmem:[%s781 + $0x138] sm:$0xff] %vm782, %v719
        %823 = vst.msk [vmem:[%s781 + $0x140] sm:$0xff] %vm782, %v720
        %824 = vst.msk [vmem:[%s781 + $0x148] sm:$0xff] %vm782, %v721
        %825 = vst.msk [vmem:[%s781 + $0x150] sm:$0xff] %vm782, %v722
        %826 = vst.msk [vmem:[%s781 + $0x158] sm:$0xff] %vm782, %v723
        %827 = vst.msk [vmem:[%s781 + $0x160] sm:$0xff] %vm782, %v724
        %828 = vst.msk [vmem:[%s781 + $0x168] sm:$0xff] %vm782, %v725
        %829 = vst.msk [vmem:[%s781 + $0x170] sm:$0xff] %vm782, %v726
        %830 = vst.msk [vmem:[%s781 + $0x178] sm:$0xff] %vm782, %v727
        %831 = vst.msk [vmem:[%s781 + $0x180] sm:$0xff] %vm782, %v728
        %832 = vst.msk [vmem:[%s781 + $0x188] sm:$0xff] %vm782, %v729
        %833 = vst.msk [vmem:[%s781 + $0x190] sm:$0xff] %vm782, %v730
        %834 = vst.msk [vmem:[%s781 + $0x198] sm:$0xff] %vm782, %v731
        %835 = vst.msk [vmem:[%s781 + $0x1a0] sm:$0xff] %vm782, %v732
        %836 = vst.msk [vmem:[%s781 + $0x1a8] sm:$0xff] %vm782, %v733
        %837 = vst.msk [vmem:[%s781 + $0x1b0] sm:$0xff] %vm782, %v734
        %838 = vst.msk [vmem:[%s781 + $0x1b8] sm:$0xff] %vm782, %v735
        %839 = vst.msk [vmem:[%s781 + $0x1c0] sm:$0xff] %vm782, %v736
        %840 = vst.msk [vmem:[%s781 + $0x1c8] sm:$0xff] %vm782, %v737
        %841 = vst.msk [vmem:[%s781 + $0x1d0] sm:$0xff] %vm782, %v738
        %842 = vst.msk [vmem:[%s781 + $0x1d8] sm:$0xff] %vm782, %v739
        %843 = vst.msk [vmem:[%s781 + $0x1e0] sm:$0xff] %vm782, %v740
        %844 = vst.msk [vmem:[%s781 + $0x1e8] sm:$0xff] %vm782, %v741
        %845 = vst.msk [vmem:[%s781 + $0x1f0] sm:$0xff] %vm782, %v742
        %846 = vst.msk [vmem:[%s781 + $0x1f8] sm:$0xff] %vm782, %v743
        %847 = vst.msk [vmem:[%s781 + $0x200] sm:$0xff] %vm782, %v744
        %848 = vst.msk [vmem:[%s781 + $0x208] sm:$0xff] %vm782, %v745
        %849 = vst.msk [vmem:[%s781 + $0x210] sm:$0xff] %vm782, %v746
        %850 = vst.msk [vmem:[%s781 + $0x218] sm:$0xff] %vm782, %v747
        %851 = vst.msk [vmem:[%s781 + $0x220] sm:$0xff] %vm782, %v748
        %852 = vst.msk [vmem:[%s781 + $0x228] sm:$0xff] %vm782, %v749
        %853 = vst.msk [vmem:[%s781 + $0x230] sm:$0xff] %vm782, %v750
        %854 = vst.msk [vmem:[%s781 + $0x238] sm:$0xff] %vm782, %v751
        %855 = vst.msk [vmem:[%s781 + $0x240] sm:$0xff] %vm782, %v752
        %856 = vst.msk [vmem:[%s781 + $0x248] sm:$0xff] %vm782, %v753
        %857 = vst.msk [vmem:[%s781 + $0x250] sm:$0xff] %vm782, %v754
        %858 = vst.msk [vmem:[%s781 + $0x258] sm:$0xff] %vm782, %v755
        %859 = vst.msk [vmem:[%s781 + $0x260] sm:$0xff] %vm782, %v756
        %860 = vst.msk [vmem:[%s781 + $0x268] sm:$0xff] %vm782, %v757
        %861 = vst.msk [vmem:[%s781 + $0x270] sm:$0xff] %vm782, %v758
        %862 = vst.msk [vmem:[%s781 + $0x278] sm:$0xff] %vm782, %v759
        %863 = vst.msk [vmem:[%s781 + $0x280] sm:$0xff] %vm782, %v760
        %864 = vst.msk [vmem:[%s781 + $0x288] sm:$0xff] %vm782, %v761
        %865 = vst.msk [vmem:[%s781 + $0x290] sm:$0xff] %vm782, %v762
        %866 = vst.msk [vmem:[%s781 + $0x298] sm:$0xff] %vm782, %v763
        %v867 = vsel %vm769, 0.0, %v668
        %v868 = vsel %vm770, 0.0, %v669
        %v869 = vsel %vm771, 0.0, %v670
        %v870 = vsel %vm772, 0.0, %v671
        %v871 = vsel %vm773, 0.0, %v672
        %v872 = vsel %vm774, 0.0, %v673
        %v873 = vsel %vm775, 0.0, %v674
        %v874 = vsel %vm776, 0.0, %v675
        %v875 = vsel %vm777, 0.0, %v676
        %v876 = vsel %vm778, 0.0, %v677
        %v877 = vsel %vm779, 0.0, %v678
        %v878 = vsel %vm780, 0.0, %v679
        %879 = vst.msk [vmem:[%s202] sm:$0xff] %vm782, %v867
        %880 = vst.msk [vmem:[%s202 + $0x8] sm:$0xff] %vm782, %v868
        %881 = vst.msk [vmem:[%s202 + $0x10] sm:$0xff] %vm782, %v869
        %882 = vst.msk [vmem:[%s202 + $0x18] sm:$0xff] %vm782, %v870
        %883 = vst.msk [vmem:[%s202 + $0x20] sm:$0xff] %vm782, %v871
        %884 = vst.msk [vmem:[%s202 + $0x28] sm:$0xff] %vm782, %v872
        %885 = vst.msk [vmem:[%s202 + $0x30] sm:$0xff] %vm782, %v873
        %886 = vst.msk [vmem:[%s202 + $0x38] sm:$0xff] %vm782, %v874
        %887 = vst.msk [vmem:[%s202 + $0x40] sm:$0xff] %vm782, %v875
        %888 = vst.msk [vmem:[%s202 + $0x48] sm:$0xff] %vm782, %v876
        %889 = vst.msk [vmem:[%s202 + $0x50] sm:$0xff] %vm782, %v877
        %890 = vst.msk [vmem:[%s202 + $0x58] sm:$0xff] %vm782, %v878
        %s891 = sand.u32 %s112, 1
        %s892 = scalar_lea.sflag [#allocation5], %s891
        %s893 = sand.u32 %s112, 1
        %s894 = smul.addr %s893, 768
        %s895 = scalar_lea.vmem [#allocation4], %s894
        // Predicated region
        $region33: #{semantic_mapping_forward.10} parent=31 // pred_check
          %p896 = pneg %p122
        $region34: #{semantic_mapping_forward.10} parent=31 // pred_check_branch
          %898 = sbr.rel (%p896) target = $region36
        $region35: #{semantic_mapping_forward.10} parent=31 // pred_region
          %900 = vsyncadd %s892, 0
          %s901 = smul.addr %s26, 96
          %s902 = smul.addr %s901, 8
          %s903 = scalar_lea.hbm %s4, %s902
          %s904 = sshll.u32 %s895, 4
          %s905 = int_to_ptr.vmem [resolvable:$true] %s904
          %s906 = sshll.u32 %s903, 4
          %s907 = int_to_ptr.hbm [resolvable:$true] %s906
          %912 = dma.vmem_to_hbm [thread:$0]  %s905, 12288, %s907, %s892, 128, 128, 8
        $region36: #{semantic_mapping_forward.10} parent=31 // pred_fallthru
          _
      $region32: #{semantic_mapping_forward.10} parent=5 // pred_fallthru
        _
      %p913 = scmp.le.s32.totalorder 2, %s21
      // Predicated region
      $region37: #{semantic_mapping_forward.10} parent=5 // pred_check
        %p914 = pneg %p913
      $region38: #{semantic_mapping_forward.10} parent=5 // pred_check_branch
        %916 = sbr.rel (%p914) target = $region40
      $region39: #{semantic_mapping_forward.10} parent=5 // pred_region
        %s917 = ssub.s32 %s21, 2
        // Predicated region
        $region41: #{semantic_mapping_forward.10} parent=39 // pred_check
          %p918 = pneg %p128
        $region42: #{semantic_mapping_forward.10} parent=39 // pred_check_branch
          %920 = sbr.rel (%p918) target = $region44
        $region43: #{semantic_mapping_forward.10} parent=39 // pred_region
          %s921 = sand.u32 %s113, 1
          %s922 = scalar_lea.sflag [#allocation5], %s921
          %s923 = sand.u32 %s113, 1
          %s924 = smul.addr %s923, 768
          %s925 = scalar_lea.vmem [#allocation4], %s924
          %927 = dma.done %s922, 12288
        $region44: #{semantic_mapping_forward.10} parent=39 // pred_fallthru
          _
      $region40: #{semantic_mapping_forward.10} parent=5 // pred_fallthru
        _
    $region6: #{semantic_mapping_forward.10} parent=1 // loop_footer
      %s25 = sadd.s32 1, %s21
    $region7: #{semantic_mapping_forward.10} parent=1 // loop_footer_branch
      %20 = sbr.rel target = $region3
    $region8: #{semantic_mapping_forward.10} parent=1 // loop_exit
      _
    %928 = vsyncpa [#allocation5], 1
    %s929 = scalar_lea.sflag [#allocation5], 1
    %930 = vsyncpa %s929, 1

</llo_original>
